<compile_context>
chip_gen: v7x
topology: tpu7x:2x2x1
jax: 0.10.0
libtpu: 0.0.40
codegen_flags: <defaults>
</compile_context>

<pallas_src>
import math

import jax
import jax.numpy as jnp
from jax.experimental import pallas as pl
from jax.experimental.pallas import tpu as pltpu


# --------------------------------------------------------------------------
# Kernels
# --------------------------------------------------------------------------
def _matmul_rowmajor_kernel(a_ref, w_ref, o_ref):
    """o = a @ W^T : a (tm, K) bf16, w (K, tn) bf16, o (tm, tn) f32."""
    o_ref[...] = jnp.dot(
        a_ref[...], w_ref[...], preferred_element_type=jnp.float32
    ).astype(o_ref.dtype)


def _matmul_nchw_kernel(x_ref, w_ref, o_ref):
    """o = W @ x : x (C_in, tp) f32, w (C_out, C_in) bf16, o (C_out, tp) f32.

    The activation tile is cast to bf16 in-register (tiny VPU cost vs. the
    MXU work per step) so the dot is a native bf16 matmul while activations
    are read from HBM exactly once, in their original dtype.
    """
    x = x_ref[...].astype(w_ref.dtype)
    o_ref[...] = jnp.dot(
        w_ref[...], x, preferred_element_type=jnp.float32
    ).astype(o_ref.dtype)


# --------------------------------------------------------------------------
# Tiling / budgeting helpers
# --------------------------------------------------------------------------
def _pick_tile(dim, preferred, align):
    """Largest divisor of `dim` <= `preferred`, preferring `align` multiples
    (MXU row alignment) and falling back to multiples of 8."""
    if dim <= preferred:
        return dim
    aligns = (align,) if align <= 8 else (align, 8)
    for a in aligns:
        cand = (preferred // a) * a
        while cand >= a:
            if dim % cand == 0:
                return cand
            cand -= a
    return dim


def _block_bytes(shape, dtype):
    return math.prod(shape) * jnp.dtype(dtype).itemsize


def _vmem_limit(*block_bytes):
    # Double-buffered pipeline for every block + slack for internal scratch.
    return min(2 * sum(block_bytes) + (8 << 20), 100 << 20)


def _vmem_capacity_bytes(default=64 << 20):
    try:
        return pltpu.get_tpu_info().vmem_capacity_bytes
    except Exception:
        return default  # conservative (v7x-sized) fallback


# --------------------------------------------------------------------------
# pallas_call wrappers
# --------------------------------------------------------------------------
def _conv1x1_rowmajor(x_flat, w_t, *, out_dtype=jnp.float32):
    """x_flat: (M, C_in) bf16 pixel-major, w_t: (C_in, C_out) bf16 -> (M, C_out) f32."""
    M, K = x_flat.shape
    K2, N = w_t.shape
    assert K == K2, (K, K2)
    assert K % 128 == 0 and N % 128 == 0, (K, N)

    if M <= 512:
        # Small-M fast path: the whole activation block is VMEM-resident
        # (constant block index) and C_out is split so the grid has >= 2
        # parallel steps for megacore sharding; weights are still read once.
        tm = M
        tn = _pick_tile(N, max(128, N // 2), 128)
        grid = (N // tn,)
        a_spec = pl.BlockSpec((tm, K), lambda j: (0, 0))
        w_spec = pl.BlockSpec((K, tn), lambda j: (0, j))
        o_spec = pl.BlockSpec((tm, tn), lambda j: (0, j))
    else:
        # Large-M path: W^T fully VMEM-resident (constant index, DMA'd once);
        # only activation / output tiles stream.  Bigger M tiles on parts with
        # 128 MiB VMEM (v5e / v6e); 512 keeps v7x (64 MiB) comfortable.
        preferred_tm = 1024 if _vmem_capacity_bytes() >= (100 << 20) else 512
        tm = _pick_tile(M, preferred_tm, 128)
        tn = N
        grid = (M // tm,)
        a_spec = pl.BlockSpec((tm, K), lambda i: (i, 0))
        w_spec = pl.BlockSpec((K, tn), lambda i: (0, 0))
        o_spec = pl.BlockSpec((tm, tn), lambda i: (i, 0))

    vmem = _vmem_limit(
        _block_bytes((tm, K), x_flat.dtype),
        _block_bytes((K, tn), w_t.dtype),
        _block_bytes((tm, tn), out_dtype),
    )
    return pl.pallas_call(
        _matmul_rowmajor_kernel,
        out_shape=jax.ShapeDtypeStruct((M, N), out_dtype),
        grid_spec=pltpu.PrefetchScalarGridSpec(
            num_scalar_prefetch=0,
            grid=grid,
            in_specs=[a_spec, w_spec],
            out_specs=o_spec,
        ),
        compiler_params=pltpu.CompilerParams(
            dimension_semantics=("parallel",),
            vmem_limit_bytes=vmem,
        ),
    )(x_flat, w_t)


def _conv1x1_nchw(x_ncp, w, *, out_dtype=jnp.float32):
    """x_ncp: (B, C_in, P) with P % 128 == 0, w: (C_out, C_in) bf16 -> (B, C_out, P)."""
    B, C, P = x_ncp.shape
    Co, Ci = w.shape
    assert Ci == C, (Ci, C)
    assert P % 128 == 0 and Ci % 128 == 0 and Co % 128 == 0, (P, Ci, Co)

    tp = _pick_tile(P, 512, 128)
    grid = (B, P // tp)

    vmem = _vmem_limit(
        _block_bytes((C, tp), x_ncp.dtype),
        _block_bytes((Co, Ci), w.dtype),
        _block_bytes((Co, tp), out_dtype),
    )
    return pl.pallas_call(
        _matmul_nchw_kernel,
        out_shape=jax.ShapeDtypeStruct((B, Co, P), out_dtype),
        grid_spec=pltpu.PrefetchScalarGridSpec(
            num_scalar_prefetch=0,
            grid=grid,
            in_specs=[
                pl.BlockSpec((None, C, tp), lambda b, p: (b, 0, p)),  # acts (streamed)
                pl.BlockSpec((Co, Ci), lambda b, p: (0, 0)),          # W (resident)
            ],
            out_specs=pl.BlockSpec((None, Co, tp), lambda b, p: (b, 0, p)),
        ),
        compiler_params=pltpu.CompilerParams(
            dimension_semantics=("parallel", "parallel"),
            vmem_limit_bytes=vmem,
        ),
    )(x_ncp, w)


# --------------------------------------------------------------------------
# Module-level forward
# --------------------------------------------------------------------------
def prepare_weights(weight_oc, dtype=jnp.bfloat16):
    """Precompute once per module (hoisted out of the per-call forward).

    Returns (w, w_t):
      w   (C_out, C_in) bf16  -- used by the NCHW-direct path
      w_t (C_in, C_out) bf16  -- used by the pixel-major path
    """
    w = jnp.asarray(weight_oc, dtype=dtype)
    w_t = jnp.asarray(weight_oc.T, dtype=dtype)
    return w, w_t


def adaptor_forward(x_nchw, weights):
    """Forward pass of `adaptor`: 1x1 conv, no bias.

    x_nchw:  (N, C_in, H, W)   PyTorch NCHW convention
    weights: output of prepare_weights
    returns: (N, C_out, H, W)  float32
    """
    w, w_t = weights
    Nb, C, H, W = x_nchw.shape
    Co, Ci = w.shape
    assert Ci == C, (Ci, C)
    P = H * W

    if P % 128 == 0:
        # NCHW-direct: H*W on the lane axis, W resident -> no activation
        # transposes in HBM (reshape N,C,H,W -> N,C,H*W is free).
        y = _conv1x1_nchw(x_nchw.reshape(Nb, C, P), w)
        return y.reshape(Nb, Co, H, W)

    # Small / odd spatial sizes: pixel-major with channels on lanes; the bf16
    # cast fuses into the NCHW->NHWC transpose (one HBM pass).
    x_flat = (
        jnp.transpose(x_nchw, (0, 2, 3, 1)).reshape(Nb * P, C).astype(w_t.dtype)
    )
    y_flat = _conv1x1_rowmajor(x_flat, w_t)
    return y_flat.reshape(Nb, H, W, Co).transpose(0, 3, 1, 2)


def xavier_normal_init(key, out_ch, in_ch, dtype=jnp.float32):
    # PyTorch xavier_normal_ for Conv2d(out, in, 1, 1):
    # std = gain * sqrt(2 / (fan_in + fan_out)), fan_in = in*1*1, fan_out = out*1*1
    std = jnp.sqrt(2.0 / (in_ch + out_ch)).astype(dtype)
    return std * jax.random.normal(key, (out_ch, in_ch), dtype=dtype)


if __name__ == "__main__":
    key = jax.random.PRNGKey(0)
    k_x1, k_x2, k_w = jax.random.split(key, 3)

    # Module is Conv2d(2048, 2048, 1, bias=False); keep channels faithful,
    # use small batch / spatial dims.
    C = 2048
    weight = xavier_normal_init(k_w, C, C)      # (C_out, C_in), 1x1 kernel squeezed
    weights = prepare_weights(weight)           # hoisted: one-time transpose + bf16 cast

    fwd = jax.jit(adaptor_forward)

    # Case 1: shipped tiny shape -> pixel-major small-M fast path (M = 32).
    N1, H1, W1 = 2, 4, 4
    x1 = jax.random.normal(k_x1, (N1, C, H1, W1), dtype=jnp.float32)
    y1 = jax.block_until_ready(fwd(x1, weights))
    assert y1.shape == (N1, C, H1, W1)

    # Case 2: H*W multiple of 128 -> NCHW-direct path (no HBM transposes).
    N2, H2, W2 = 2, 8, 16
    x2 = jax.random.normal(k_x2, (N2, C, H2, W2), dtype=jnp.float32)
    y2 = jax.block_until_ready(fwd(x2, weights))
    assert y2.shape == (N2, C, H2, W2)

    # Reference: plain-JAX 1x1 conv at highest precision.  Tolerance covers the
    # deliberate bf16 activation/weight quantization (f32 accumulation kept).
    y1_ref = jnp.einsum("nchw,oc->nohw", x1, weight,
                        precision=jax.lax.Precision.HIGHEST)
    y2_ref = jnp.einsum("nchw,oc->nohw", x2, weight,
                        precision=jax.lax.Precision.HIGHEST)
    err1 = float(jnp.max(jnp.abs(y1 - y1_ref)))
    err2 = float(jnp.max(jnp.abs(y2 - y2_ref)))
    assert jnp.allclose(y1, y1_ref, atol=3e-2, rtol=3e-2), err1
    assert jnp.allclose(y2, y2_ref, atol=3e-2, rtol=3e-2), err2

    print("KERNEL_OK")
</pallas_src>

<mosaic_0001>
module attributes {stable_mosaic.version = 11 : i64} {
  func.func @_matmul_rowmajor_kernel(%arg0: i32, %arg1: memref<32x2048xbf16, #tpu.memory_space<vmem>>, %arg2: memref<2048x1024xbf16, #tpu.memory_space<vmem>>, %arg3: memref<32x1024xf32, #tpu.memory_space<vmem>>) attributes {dimension_semantics = [#tpu.dimension_semantics<parallel>], iteration_bounds = array<i64: 2>, scalar_prefetch = 0 : i64, scratch_operands = 0 : i64, tpu.core_type = #tpu.core_type<tc>, window_params = [{pipeline_mode = #tpu.pipeline_mode<synchronous>, transform_indices = @transform_0, window_bounds = array<i64: 32, 2048>}, {transform_indices = @transform_1, window_bounds = array<i64: 2048, 1024>}, {transform_indices = @transform_2, window_bounds = array<i64: 32, 1024>}]} {
    %c0 = arith.constant 0 : index
    %c0_0 = arith.constant 0 : index
    %0 = vector.load %arg1[%c0, %c0_0] : memref<32x2048xbf16, #tpu.memory_space<vmem>>, vector<32x2048xbf16>
    %c0_1 = arith.constant 0 : index
    %c0_2 = arith.constant 0 : index
    %1 = vector.load %arg2[%c0_1, %c0_2] : memref<2048x1024xbf16, #tpu.memory_space<vmem>>, vector<2048x1024xbf16>
    %cst = arith.constant dense<0.000000e+00> : vector<32x1024xf32>
    %2 = tpu.matmul %0, %1, %cst {dimension_numbers = #tpu.dot_dimension_numbers<[1], [0], [0], [1], [0, 0, 1, 1], [], []>} : vector<32x2048xbf16>, vector<2048x1024xbf16>, vector<32x1024xf32> -> vector<32x1024xf32>
    %c0_3 = arith.constant 0 : index
    %c0_4 = arith.constant 0 : index
    %3 = vector.load %arg3[%c0_3, %c0_4] : memref<32x1024xf32, #tpu.memory_space<vmem>>, vector<32x1024xf32>
    tpu.vector_store %arg3[%c0_3, %c0_4], %2 {strides = array<i32>} : memref<32x1024xf32, #tpu.memory_space<vmem>>, vector<32x1024xf32>,
    return
  }
  func.func @transform_0(%arg0: i32) -> (i32, i32) {
    %c0_i32 = arith.constant 0 : i32
    %c0_i32_0 = arith.constant 0 : i32
    %c0_i32_1 = arith.constant 0 : i32
    return %c0_i32, %c0_i32_0 : i32, i32
  }
  func.func @transform_1(%arg0: i32) -> (i32, i32) {
    %c0_i32 = arith.constant 0 : i32
    %c0_i32_0 = arith.constant 0 : i32
    return %c0_i32, %arg0 : i32, i32
  }
  func.func @transform_2(%arg0: i32) -> (i32, i32) {
    %c0_i32 = arith.constant 0 : i32
    %c0_i32_0 = arith.constant 0 : i32
    return %c0_i32, %arg0 : i32, i32
  }
}

</mosaic_0001>

<llo_original>
// kernel: adaptor_forward.1
$region0: #{adaptor_forward.1}
  #allocation0 [shape = 'u32[]', space=smem, size = 0x4, offset = 0x4, fixed_abs, tag = 'smem constant byte address 0x4 - core index']
  #allocation1 [shape = 'u32[144,128]{1,0:T(1,128)}', space=vmem, size = 0x12000, scoped, tag = 'internal scratch']
  %s0 = inlined_call_operand.vmem [shape: bf16[32,2048], index: 0, kind: input, shape index: {}]
  %s1 = inlined_call_operand.hbm [shape: bf16[2048,2048], index: 1, kind: input, shape index: {}]
  %s2 = inlined_call_operand.vmem [shape: f32[32,2048], index: 2, kind: output, shape index: {}]
  %s3 = sld [smem:[#allocation0]]
  $region64: #{adaptor_forward.1} parent=0
    _
  %s5 = ssub.s32 1, %s3
  %s6 = scalar_select 0, %s5, %s3
  $region1: #{adaptor_forward.1} parent=0
    #allocation2 [shape = 'u8[8388608]{0}', space=vmem, size = 0x800000, scoped, tag = 'input window, operand 1']
    #allocation3 [shape = 's32[2]{0}', space=sflag, size = 0x8, scoped, tag = 'scoped memory for adaptor_forward.1']
    #allocation4 [shape = 'u8[262144]{0}', space=vmem, size = 0x40000, scoped, tag = 'output window, operand 0']
    %7 = vsyncpa [#allocation3], 0
    %s8 = scalar_lea.sflag [#allocation3], 1
    %9 = vsyncpa %s8, 0
    loop: start=0, step=1, limit=4
    $region2: #{adaptor_forward.1} parent=1 // loop_pre_header
      _
    $region3: #{adaptor_forward.1} parent=1 // loop_header
      %s11 = sphi 0, %s15
      %p12 = scmp.ge.s32.totalorder %s11, 4
      %s19 = sphi 0, %s19
      %s21 = sphi 0, %s19
      %s22 = sphi 0, %s21
      %s36 = sphi 0, %s22
      %s42 = sphi 0, %s44
      %s45 = sphi 0, %s42
      %s46 = sphi 0, %s45
      %s62 = sphi 0, %s46
      %s68 = sphi 0, %s70
      %s71 = sphi 0, %s68
      %s72 = sphi 0, %s71
      %s88 = sphi 0, %s72
    $region4: #{adaptor_forward.1} parent=1 // loop_header_branch
      %14 = sbr.rel (%p12) target = $region8
    $region5: #{adaptor_forward.1} parent=1 // loop_body
      %s16 = ssub.s32 %s11, 1
      %s17 = ssub.s32 %s11, 2
      %s18 = sadd.s32 %s11, 1
      %s20 = sadd.s32 %s19, 1
      %p23 = scmp.eq.s32.totalorder %s11, 1
      %p24 = scmp.ne.s32.totalorder %s19, %s21
      %p25 = scmp.eq.s32.totalorder %s11, 0
      %p26 = por %p24, %p25
      %p27 = scmp.ne.s32.totalorder %s19, %s21
      %p28 = scmp.eq.s32.totalorder %s16, 1
      %p29 = por %p27, %p28
      %p30 = scmp.ne.s32.totalorder %s21, %s22
      %p31 = scmp.eq.s32.totalorder %s16, 0
      %p32 = por %p30, %p31
      %p33 = scmp.ne.s32.totalorder %s21, %s22
      %p34 = scmp.eq.s32.totalorder %s17, 1
      %p35 = por %p33, %p34
      %p37 = scmp.ne.s32.totalorder %s22, %s36
      %p38 = scmp.eq.s32.totalorder %s17, 0
      %p39 = por %p37, %p38
      %s40 = ssub.s32 %s11, %s18
      %p41 = scmp.eq.s32.totalorder %s40, 0
      %s43 = sadd.s32 %s42, 1
      %s44 = scalar_select %p41, %s42, %s43
      %p47 = pneg %p41
      %p48 = scmp.eq.s32.totalorder %s11, 1
      %p49 = por %p47, %p48
      %p50 = scmp.ne.s32.totalorder %s42, %s45
      %p51 = scmp.eq.s32.totalorder %s11, 0
      %p52 = por %p50, %p51
      %p53 = scmp.ne.s32.totalorder %s42, %s45
      %p54 = scmp.eq.s32.totalorder %s16, 1
      %p55 = por %p53, %p54
      %p56 = scmp.ne.s32.totalorder %s45, %s46
      %p57 = scmp.eq.s32.totalorder %s16, 0
      %p58 = por %p56, %p57
      %p59 = scmp.ne.s32.totalorder %s45, %s46
      %p60 = scmp.eq.s32.totalorder %s17, 1
      %p61 = por %p59, %p60
      %p63 = scmp.ne.s32.totalorder %s46, %s62
      %p64 = scmp.eq.s32.totalorder %s17, 0
      %p65 = por %p63, %p64
      %s66 = ssub.s32 %s11, %s18
      %p67 = scmp.eq.s32.totalorder %s66, 0
      %s69 = sadd.s32 %s68, 1
      %s70 = scalar_select %p67, %s68, %s69
      %p73 = pneg %p67
      %p74 = scmp.eq.s32.totalorder %s11, 1
      %p75 = por %p73, %p74
      %p76 = scmp.ne.s32.totalorder %s68, %s71
      %p77 = scmp.eq.s32.totalorder %s11, 0
      %p78 = por %p76, %p77
      %p79 = scmp.ne.s32.totalorder %s68, %s71
      %p80 = scmp.eq.s32.totalorder %s16, 1
      %p81 = por %p79, %p80
      %p82 = scmp.ne.s32.totalorder %s71, %s72
      %p83 = scmp.eq.s32.totalorder %s16, 0
      %p84 = por %p82, %p83
      %p85 = scmp.ne.s32.totalorder %s71, %s72
      %p86 = scmp.eq.s32.totalorder %s17, 1
      %p87 = por %p85, %p86
      %p89 = scmp.ne.s32.totalorder %s72, %s88
      %p90 = scmp.eq.s32.totalorder %s17, 0
      %p91 = por %p89, %p90
      %p92 = scmp.le.s32.totalorder 1, %s11
      %p93 = scmp.lt.s32.totalorder %s11, 3
      %p94 = pnand %p92, %p93
      %p95 = pneg %p94
      // Predicated region
      $region9: #{adaptor_forward.1} parent=5 // pred_check
        _
      $region10: #{adaptor_forward.1} parent=5 // pred_check_branch
        %97 = sbr.rel (%p94) target = $region12
      $region11: #{adaptor_forward.1} parent=5 // pred_region
        %s98 = ssub.s32 %s11, 1
        // Predicated region
        $region13: #{adaptor_forward.1} parent=11 // pred_check
          %p99 = pneg %p32
        $region14: #{adaptor_forward.1} parent=11 // pred_check_branch
          %101 = sbr.rel (%p99) target = $region16
        $region15: #{adaptor_forward.1} parent=11 // pred_region
          _
        $region16: #{adaptor_forward.1} parent=11 // pred_fallthru
          _
      $region12: #{adaptor_forward.1} parent=5 // pred_fallthru
        _
      %p102 = scmp.lt.s32.totalorder %s11, 2
      // Predicated region
      $region17: #{adaptor_forward.1} parent=5 // pred_check
        %p103 = pneg %p102
      $region18: #{adaptor_forward.1} parent=5 // pred_check_branch
        %105 = sbr.rel (%p103) target = $region20
      $region19: #{adaptor_forward.1} parent=5 // pred_region
        // Predicated region
        $region21: #{adaptor_forward.1} parent=19 // pred_check
          %p106 = pneg %p52
        $region22: #{adaptor_forward.1} parent=19 // pred_check_branch
          %108 = sbr.rel (%p106) target = $region24
        $region23: #{adaptor_forward.1} parent=19 // pred_region
          %s109 = sand.u32 %s42, 1
          %s110 = scalar_lea.sflag [#allocation3], %s109
          %s111 = sand.u32 %s42, 1
          %s112 = smul.addr %s111, 8192
          %s113 = scalar_lea.vmem [#allocation2], %s112
          %s114 = smul.u32 8, %s11
          %s116 = ssub.s32 131072, 131072
          %117 = vsyncadd %s110, %s116
          %s118 = smul.addr %s114, 64
          %s119 = scalar_lea.hbm %s1, %s118
          %s120 = sshll.u32 %s113, 4
          %s121 = int_to_ptr.vmem [resolvable:$true] %s120
          %126 = dma.hbm_to_vmem [thread:$0]  %s119, 131072, %s121, %s110, 1024, 512, 32
        $region24: #{adaptor_forward.1} parent=19 // pred_fallthru
          _
      $region20: #{adaptor_forward.1} parent=5 // pred_fallthru
        _
      %p127 = scmp.le.s32.totalorder 1, %s11
      %p128 = scmp.lt.s32.totalorder %s11, 3
      %p129 = pnand %p127, %p128
      %p130 = pneg %p129
      // Predicated region
      $region25: #{adaptor_forward.1} parent=5 // pred_check
        _
      $region26: #{adaptor_forward.1} parent=5 // pred_check_branch
        %132 = sbr.rel (%p129) target = $region28
      $region27: #{adaptor_forward.1} parent=5 // pred_region
        %s133 = ssub.s32 %s11, 1
        %s134 = sand.u32 %s45, 1
        %s135 = scalar_lea.sflag [#allocation3], %s134
        %s136 = sand.u32 %s45, 1
        %s137 = smul.addr %s136, 8192
        %s138 = scalar_lea.vmem [#allocation2], %s137
        // Predicated region
        $region29: #{adaptor_forward.1} parent=27 // pred_check
          %p139 = pneg %p58
        $region30: #{adaptor_forward.1} parent=27 // pred_check_branch
          %141 = sbr.rel (%p139) target = $region32
        $region31: #{adaptor_forward.1} parent=27 // pred_region
          %142 = dma.done %s135, 131072
        $region32: #{adaptor_forward.1} parent=27 // pred_fallthru
          _
        %p143 = pneg %p32
        %p144 = pneg %p29
        %s145 = sand.u32 %s45, 1
        %s146 = scalar_lea.sflag [#allocation3], %s145
        %s147 = sand.u32 %s45, 1
        %s148 = smul.addr %s147, 8192
        %s149 = scalar_lea.vmem [#allocation2], %s148
        %p150 = pneg %p58
        %p151 = pneg %p55
        %p152 = pneg %p84
        %p153 = pneg %p81
        %s154 = sand.u32 %s71, 1
        %s155 = sand.u32 %s71, 1
        %s156 = smul.addr %s155, 256
        %s157 = scalar_lea.vmem [#allocation4], %s156
        %s158 = smul.u32 8, %s16
        %s159 = smul.u32 8, %s16
        %v160 = vld [vmem:[%s0] sm:$0xff]
        %v161 = vld [vmem:[%s0 + $0x8] sm:$0xff]
        %v162 = vld [vmem:[%s0 + $0x10] sm:$0xff]
        %v163 = vld [vmem:[%s0 + $0x18] sm:$0xff]
        %v164 = vld [vmem:[%s0 + $0x20] sm:$0xff]
        %v165 = vld [vmem:[%s0 + $0x28] sm:$0xff]
        %v166 = vld [vmem:[%s0 + $0x30] sm:$0xff]
        %v167 = vld [vmem:[%s0 + $0x38] sm:$0xff]
        %v168 = vld [vmem:[%s0 + $0x40] sm:$0xff]
        %v169 = vld [vmem:[%s0 + $0x48] sm:$0xff]
        %v170 = vld [vmem:[%s0 + $0x50] sm:$0xff]
        %v171 = vld [vmem:[%s0 + $0x58] sm:$0xff]
        %v172 = vld [vmem:[%s0 + $0x60] sm:$0xff]
        %v173 = vld [vmem:[%s0 + $0x68] sm:$0xff]
        %v174 = vld [vmem:[%s0 + $0x70] sm:$0xff]
        %v175 = vld [vmem:[%s0 + $0x78] sm:$0xff]
        %v176 = vld [vmem:[%s0 + $0x80] sm:$0xff]
        %v177 = vld [vmem:[%s0 + $0x88] sm:$0xff]
        %v178 = vld [vmem:[%s0 + $0x90] sm:$0xff]
        %v179 = vld [vmem:[%s0 + $0x98] sm:$0xff]
        %v180 = vld [vmem:[%s0 + $0xa0] sm:$0xff]
        %v181 = vld [vmem:[%s0 + $0xa8] sm:$0xff]
        %v182 = vld [vmem:[%s0 + $0xb0] sm:$0xff]
        %v183 = vld [vmem:[%s0 + $0xb8] sm:$0xff]
        %v184 = vld [vmem:[%s0 + $0xc0] sm:$0xff]
        %v185 = vld [vmem:[%s0 + $0xc8] sm:$0xff]
        %v186 = vld [vmem:[%s0 + $0xd0] sm:$0xff]
        %v187 = vld [vmem:[%s0 + $0xd8] sm:$0xff]
        %v188 = vld [vmem:[%s0 + $0xe0] sm:$0xff]
        %v189 = vld [vmem:[%s0 + $0xe8] sm:$0xff]
        %v190 = vld [vmem:[%s0 + $0xf0] sm:$0xff]
        %v191 = vld [vmem:[%s0 + $0xf8] sm:$0xff]
        %v192 = vld [vmem:[%s138] sm:$0xff]
        %v193 = vld [vmem:[%s138 + $0x8] sm:$0xff]
        %v194 = vld [vmem:[%s138 + $0x10] sm:$0xff]
        %v195 = vld [vmem:[%s138 + $0x18] sm:$0xff]
        %v196 = vld [vmem:[%s138 + $0x20] sm:$0xff]
        %v197 = vld [vmem:[%s138 + $0x28] sm:$0xff]
        %v198 = vld [vmem:[%s138 + $0x30] sm:$0xff]
        %v199 = vld [vmem:[%s138 + $0x38] sm:$0xff]
        %v200 = vld [vmem:[%s138 + $0x40] sm:$0xff]
        %v201 = vld [vmem:[%s138 + $0x48] sm:$0xff]
        %v202 = vld [vmem:[%s138 + $0x50] sm:$0xff]
        %v203 = vld [vmem:[%s138 + $0x58] sm:$0xff]
        %v204 = vld [vmem:[%s138 + $0x60] sm:$0xff]
        %v205 = vld [vmem:[%s138 + $0x68] sm:$0xff]
        %v206 = vld [vmem:[%s138 + $0x70] sm:$0xff]
        %v207 = vld [vmem:[%s138 + $0x78] sm:$0xff]
        %v208 = vld [vmem:[%s138 + $0x80] sm:$0xff]
        %v209 = vld [vmem:[%s138 + $0x88] sm:$0xff]
        %v210 = vld [vmem:[%s138 + $0x90] sm:$0xff]
        %v211 = vld [vmem:[%s138 + $0x98] sm:$0xff]
        %v212 = vld [vmem:[%s138 + $0xa0] sm:$0xff]
        %v213 = vld [vmem:[%s138 + $0xa8] sm:$0xff]
        %v214 = vld [vmem:[%s138 + $0xb0] sm:$0xff]
        %v215 = vld [vmem:[%s138 + $0xb8] sm:$0xff]
        %v216 = vld [vmem:[%s138 + $0xc0] sm:$0xff]
        %v217 = vld [vmem:[%s138 + $0xc8] sm:$0xff]
        %v218 = vld [vmem:[%s138 + $0xd0] sm:$0xff]
        %v219 = vld [vmem:[%s138 + $0xd8] sm:$0xff]
        %v220 = vld [vmem:[%s138 + $0xe0] sm:$0xff]
        %v221 = vld [vmem:[%s138 + $0xe8] sm:$0xff]
        %v222 = vld [vmem:[%s138 + $0xf0] sm:$0xff]
        %v223 = vld [vmem:[%s138 + $0xf8] sm:$0xff]
        %v224 = vld [vmem:[%s138 + $0x100] sm:$0xff]
        %v225 = vld [vmem:[%s138 + $0x108] sm:$0xff]
        %v226 = vld [vmem:[%s138 + $0x110] sm:$0xff]
        %v227 = vld [vmem:[%s138 + $0x118] sm:$0xff]
        %v228 = vld [vmem:[%s138 + $0x120] sm:$0xff]
        %v229 = vld [vmem:[%s138 + $0x128] sm:$0xff]
        %v230 = vld [vmem:[%s138 + $0x130] sm:$0xff]
        %v231 = vld [vmem:[%s138 + $0x138] sm:$0xff]
        %v232 = vld [vmem:[%s138 + $0x140] sm:$0xff]
        %v233 = vld [vmem:[%s138 + $0x148] sm:$0xff]
        %v234 = vld [vmem:[%s138 + $0x150] sm:$0xff]
        %v235 = vld [vmem:[%s138 + $0x158] sm:$0xff]
        %v236 = vld [vmem:[%s138 + $0x160] sm:$0xff]
        %v237 = vld [vmem:[%s138 + $0x168] sm:$0xff]
        %v238 = vld [vmem:[%s138 + $0x170] sm:$0xff]
        %v239 = vld [vmem:[%s138 + $0x178] sm:$0xff]
        %v240 = vld [vmem:[%s138 + $0x180] sm:$0xff]
        %v241 = vld [vmem:[%s138 + $0x188] sm:$0xff]
        %v242 = vld [vmem:[%s138 + $0x190] sm:$0xff]
        %v243 = vld [vmem:[%s138 + $0x198] sm:$0xff]
        %v244 = vld [vmem:[%s138 + $0x1a0] sm:$0xff]
        %v245 = vld [vmem:[%s138 + $0x1a8] sm:$0xff]
        %v246 = vld [vmem:[%s138 + $0x1b0] sm:$0xff]
        %v247 = vld [vmem:[%s138 + $0x1b8] sm:$0xff]
        %v248 = vld [vmem:[%s138 + $0x1c0] sm:$0xff]
        %v249 = vld [vmem:[%s138 + $0x1c8] sm:$0xff]
        %v250 = vld [vmem:[%s138 + $0x1d0] sm:$0xff]
        %v251 = vld [vmem:[%s138 + $0x1d8] sm:$0xff]
        %v252 = vld [vmem:[%s138 + $0x1e0] sm:$0xff]
        %v253 = vld [vmem:[%s138 + $0x1e8] sm:$0xff]
        %v254 = vld [vmem:[%s138 + $0x1f0] sm:$0xff]
        %v255 = vld [vmem:[%s138 + $0x1f8] sm:$0xff]
        %v256 = vld [vmem:[%s138 + $0x200] sm:$0xff]
        %v257 = vld [vmem:[%s138 + $0x208] sm:$0xff]
        %v258 = vld [vmem:[%s138 + $0x210] sm:$0xff]
        %v259 = vld [vmem:[%s138 + $0x218] sm:$0xff]
        %v260 = vld [vmem:[%s138 + $0x220] sm:$0xff]
        %v261 = vld [vmem:[%s138 + $0x228] sm:$0xff]
        %v262 = vld [vmem:[%s138 + $0x230] sm:$0xff]
        %v263 = vld [vmem:[%s138 + $0x238] sm:$0xff]
        %v264 = vld [vmem:[%s138 + $0x240] sm:$0xff]
        %v265 = vld [vmem:[%s138 + $0x248] sm:$0xff]
        %v266 = vld [vmem:[%s138 + $0x250] sm:$0xff]
        %v267 = vld [vmem:[%s138 + $0x258] sm:$0xff]
        %v268 = vld [vmem:[%s138 + $0x260] sm:$0xff]
        %v269 = vld [vmem:[%s138 + $0x268] sm:$0xff]
        %v270 = vld [vmem:[%s138 + $0x270] sm:$0xff]
        %v271 = vld [vmem:[%s138 + $0x278] sm:$0xff]
        %v272 = vld [vmem:[%s138 + $0x280] sm:$0xff]
        %v273 = vld [vmem:[%s138 + $0x288] sm:$0xff]
        %v274 = vld [vmem:[%s138 + $0x290] sm:$0xff]
        %v275 = vld [vmem:[%s138 + $0x298] sm:$0xff]
        %v276 = vld [vmem:[%s138 + $0x2a0] sm:$0xff]
        %v277 = vld [vmem:[%s138 + $0x2a8] sm:$0xff]
        %v278 = vld [vmem:[%s138 + $0x2b0] sm:$0xff]
        %v279 = vld [vmem:[%s138 + $0x2b8] sm:$0xff]
        %v280 = vld [vmem:[%s138 + $0x2c0] sm:$0xff]
        %v281 = vld [vmem:[%s138 + $0x2c8] sm:$0xff]
        %v282 = vld [vmem:[%s138 + $0x2d0] sm:$0xff]
        %v283 = vld [vmem:[%s138 + $0x2d8] sm:$0xff]
        %v284 = vld [vmem:[%s138 + $0x2e0] sm:$0xff]
        %v285 = vld [vmem:[%s138 + $0x2e8] sm:$0xff]
        %v286 = vld [vmem:[%s138 + $0x2f0] sm:$0xff]
        %v287 = vld [vmem:[%s138 + $0x2f8] sm:$0xff]
        %v288 = vld [vmem:[%s138 + $0x300] sm:$0xff]
        %v289 = vld [vmem:[%s138 + $0x308] sm:$0xff]
        %v290 = vld [vmem:[%s138 + $0x310] sm:$0xff]
        %v291 = vld [vmem:[%s138 + $0x318] sm:$0xff]
        %v292 = vld [vmem:[%s138 + $0x320] sm:$0xff]
        %v293 = vld [vmem:[%s138 + $0x328] sm:$0xff]
        %v294 = vld [vmem:[%s138 + $0x330] sm:$0xff]
        %v295 = vld [vmem:[%s138 + $0x338] sm:$0xff]
        %v296 = vld [vmem:[%s138 + $0x340] sm:$0xff]
        %v297 = vld [vmem:[%s138 + $0x348] sm:$0xff]
        %v298 = vld [vmem:[%s138 + $0x350] sm:$0xff]
        %v299 = vld [vmem:[%s138 + $0x358] sm:$0xff]
        %v300 = vld [vmem:[%s138 + $0x360] sm:$0xff]
        %v301 = vld [vmem:[%s138 + $0x368] sm:$0xff]
        %v302 = vld [vmem:[%s138 + $0x370] sm:$0xff]
        %v303 = vld [vmem:[%s138 + $0x378] sm:$0xff]
        %v304 = vld [vmem:[%s138 + $0x380] sm:$0xff]
        %v305 = vld [vmem:[%s138 + $0x388] sm:$0xff]
        %v306 = vld [vmem:[%s138 + $0x390] sm:$0xff]
        %v307 = vld [vmem:[%s138 + $0x398] sm:$0xff]
        %v308 = vld [vmem:[%s138 + $0x3a0] sm:$0xff]
        %v309 = vld [vmem:[%s138 + $0x3a8] sm:$0xff]
        %v310 = vld [vmem:[%s138 + $0x3b0] sm:$0xff]
        %v311 = vld [vmem:[%s138 + $0x3b8] sm:$0xff]
        %v312 = vld [vmem:[%s138 + $0x3c0] sm:$0xff]
        %v313 = vld [vmem:[%s138 + $0x3c8] sm:$0xff]
        %v314 = vld [vmem:[%s138 + $0x3d0] sm:$0xff]
        %v315 = vld [vmem:[%s138 + $0x3d8] sm:$0xff]
        %v316 = vld [vmem:[%s138 + $0x3e0] sm:$0xff]
        %v317 = vld [vmem:[%s138 + $0x3e8] sm:$0xff]
        %v318 = vld [vmem:[%s138 + $0x3f0] sm:$0xff]
        %v319 = vld [vmem:[%s138 + $0x3f8] sm:$0xff]
        %v320 = vld [vmem:[%s138 + $0x400] sm:$0xff]
        %v321 = vld [vmem:[%s138 + $0x408] sm:$0xff]
        %v322 = vld [vmem:[%s138 + $0x410] sm:$0xff]
        %v323 = vld [vmem:[%s138 + $0x418] sm:$0xff]
        %v324 = vld [vmem:[%s138 + $0x420] sm:$0xff]
        %v325 = vld [vmem:[%s138 + $0x428] sm:$0xff]
        %v326 = vld [vmem:[%s138 + $0x430] sm:$0xff]
        %v327 = vld [vmem:[%s138 + $0x438] sm:$0xff]
        %v328 = vld [vmem:[%s138 + $0x440] sm:$0xff]
        %v329 = vld [vmem:[%s138 + $0x448] sm:$0xff]
        %v330 = vld [vmem:[%s138 + $0x450] sm:$0xff]
        %v331 = vld [vmem:[%s138 + $0x458] sm:$0xff]
        %v332 = vld [vmem:[%s138 + $0x460] sm:$0xff]
        %v333 = vld [vmem:[%s138 + $0x468] sm:$0xff]
        %v334 = vld [vmem:[%s138 + $0x470] sm:$0xff]
        %v335 = vld [vmem:[%s138 + $0x478] sm:$0xff]
        %v336 = vld [vmem:[%s138 + $0x480] sm:$0xff]
        %v337 = vld [vmem:[%s138 + $0x488] sm:$0xff]
        %v338 = vld [vmem:[%s138 + $0x490] sm:$0xff]
        %v339 = vld [vmem:[%s138 + $0x498] sm:$0xff]
        %v340 = vld [vmem:[%s138 + $0x4a0] sm:$0xff]
        %v341 = vld [vmem:[%s138 + $0x4a8] sm:$0xff]
        %v342 = vld [vmem:[%s138 + $0x4b0] sm:$0xff]
        %v343 = vld [vmem:[%s138 + $0x4b8] sm:$0xff]
        %v344 = vld [vmem:[%s138 + $0x4c0] sm:$0xff]
        %v345 = vld [vmem:[%s138 + $0x4c8] sm:$0xff]
        %v346 = vld [vmem:[%s138 + $0x4d0] sm:$0xff]
        %v347 = vld [vmem:[%s138 + $0x4d8] sm:$0xff]
        %v348 = vld [vmem:[%s138 + $0x4e0] sm:$0xff]
        %v349 = vld [vmem:[%s138 + $0x4e8] sm:$0xff]
        %v350 = vld [vmem:[%s138 + $0x4f0] sm:$0xff]
        %v351 = vld [vmem:[%s138 + $0x4f8] sm:$0xff]
        %v352 = vld [vmem:[%s138 + $0x500] sm:$0xff]
        %v353 = vld [vmem:[%s138 + $0x508] sm:$0xff]
        %v354 = vld [vmem:[%s138 + $0x510] sm:$0xff]
        %v355 = vld [vmem:[%s138 + $0x518] sm:$0xff]
        %v356 = vld [vmem:[%s138 + $0x520] sm:$0xff]
        %v357 = vld [vmem:[%s138 + $0x528] sm:$0xff]
        %v358 = vld [vmem:[%s138 + $0x530] sm:$0xff]
        %v359 = vld [vmem:[%s138 + $0x538] sm:$0xff]
        %v360 = vld [vmem:[%s138 + $0x540] sm:$0xff]
        %v361 = vld [vmem:[%s138 + $0x548] sm:$0xff]
        %v362 = vld [vmem:[%s138 + $0x550] sm:$0xff]
        %v363 = vld [vmem:[%s138 + $0x558] sm:$0xff]
        %v364 = vld [vmem:[%s138 + $0x560] sm:$0xff]
        %v365 = vld [vmem:[%s138 + $0x568] sm:$0xff]
        %v366 = vld [vmem:[%s138 + $0x570] sm:$0xff]
        %v367 = vld [vmem:[%s138 + $0x578] sm:$0xff]
        %v368 = vld [vmem:[%s138 + $0x580] sm:$0xff]
        %v369 = vld [vmem:[%s138 + $0x588] sm:$0xff]
        %v370 = vld [vmem:[%s138 + $0x590] sm:$0xff]
        %v371 = vld [vmem:[%s138 + $0x598] sm:$0xff]
        %v372 = vld [vmem:[%s138 + $0x5a0] sm:$0xff]
        %v373 = vld [vmem:[%s138 + $0x5a8] sm:$0xff]
        %v374 = vld [vmem:[%s138 + $0x5b0] sm:$0xff]
        %v375 = vld [vmem:[%s138 + $0x5b8] sm:$0xff]
        %v376 = vld [vmem:[%s138 + $0x5c0] sm:$0xff]
        %v377 = vld [vmem:[%s138 + $0x5c8] sm:$0xff]
        %v378 = vld [vmem:[%s138 + $0x5d0] sm:$0xff]
        %v379 = vld [vmem:[%s138 + $0x5d8] sm:$0xff]
        %v380 = vld [vmem:[%s138 + $0x5e0] sm:$0xff]
        %v381 = vld [vmem:[%s138 + $0x5e8] sm:$0xff]
        %v382 = vld [vmem:[%s138 + $0x5f0] sm:$0xff]
        %v383 = vld [vmem:[%s138 + $0x5f8] sm:$0xff]
        %v384 = vld [vmem:[%s138 + $0x600] sm:$0xff]
        %v385 = vld [vmem:[%s138 + $0x608] sm:$0xff]
        %v386 = vld [vmem:[%s138 + $0x610] sm:$0xff]
        %v387 = vld [vmem:[%s138 + $0x618] sm:$0xff]
        %v388 = vld [vmem:[%s138 + $0x620] sm:$0xff]
        %v389 = vld [vmem:[%s138 + $0x628] sm:$0xff]
        %v390 = vld [vmem:[%s138 + $0x630] sm:$0xff]
        %v391 = vld [vmem:[%s138 + $0x638] sm:$0xff]
        %v392 = vld [vmem:[%s138 + $0x640] sm:$0xff]
        %v393 = vld [vmem:[%s138 + $0x648] sm:$0xff]
        %v394 = vld [vmem:[%s138 + $0x650] sm:$0xff]
        %v395 = vld [vmem:[%s138 + $0x658] sm:$0xff]
        %v396 = vld [vmem:[%s138 + $0x660] sm:$0xff]
        %v397 = vld [vmem:[%s138 + $0x668] sm:$0xff]
        %v398 = vld [vmem:[%s138 + $0x670] sm:$0xff]
        %v399 = vld [vmem:[%s138 + $0x678] sm:$0xff]
        %v400 = vld [vmem:[%s138 + $0x680] sm:$0xff]
        %v401 = vld [vmem:[%s138 + $0x688] sm:$0xff]
        %v402 = vld [vmem:[%s138 + $0x690] sm:$0xff]
        %v403 = vld [vmem:[%s138 + $0x698] sm:$0xff]
        %v404 = vld [vmem:[%s138 + $0x6a0] sm:$0xff]
        %v405 = vld [vmem:[%s138 + $0x6a8] sm:$0xff]
        %v406 = vld [vmem:[%s138 + $0x6b0] sm:$0xff]
        %v407 = vld [vmem:[%s138 + $0x6b8] sm:$0xff]
        %v408 = vld [vmem:[%s138 + $0x6c0] sm:$0xff]
        %v409 = vld [vmem:[%s138 + $0x6c8] sm:$0xff]
        %v410 = vld [vmem:[%s138 + $0x6d0] sm:$0xff]
        %v411 = vld [vmem:[%s138 + $0x6d8] sm:$0xff]
        %v412 = vld [vmem:[%s138 + $0x6e0] sm:$0xff]
        %v413 = vld [vmem:[%s138 + $0x6e8] sm:$0xff]
        %v414 = vld [vmem:[%s138 + $0x6f0] sm:$0xff]
        %v415 = vld [vmem:[%s138 + $0x6f8] sm:$0xff]
        %v416 = vld [vmem:[%s138 + $0x700] sm:$0xff]
        %v417 = vld [vmem:[%s138 + $0x708] sm:$0xff]
        %v418 = vld [vmem:[%s138 + $0x710] sm:$0xff]
        %v419 = vld [vmem:[%s138 + $0x718] sm:$0xff]
        %v420 = vld [vmem:[%s138 + $0x720] sm:$0xff]
        %v421 = vld [vmem:[%s138 + $0x728] sm:$0xff]
        %v422 = vld [vmem:[%s138 + $0x730] sm:$0xff]
        %v423 = vld [vmem:[%s138 + $0x738] sm:$0xff]
        %v424 = vld [vmem:[%s138 + $0x740] sm:$0xff]
        %v425 = vld [vmem:[%s138 + $0x748] sm:$0xff]
        %v426 = vld [vmem:[%s138 + $0x750] sm:$0xff]
        %v427 = vld [vmem:[%s138 + $0x758] sm:$0xff]
        %v428 = vld [vmem:[%s138 + $0x760] sm:$0xff]
        %v429 = vld [vmem:[%s138 + $0x768] sm:$0xff]
        %v430 = vld [vmem:[%s138 + $0x770] sm:$0xff]
        %v431 = vld [vmem:[%s138 + $0x778] sm:$0xff]
        %v432 = vld [vmem:[%s138 + $0x780] sm:$0xff]
        %v433 = vld [vmem:[%s138 + $0x788] sm:$0xff]
        %v434 = vld [vmem:[%s138 + $0x790] sm:$0xff]
        %v435 = vld [vmem:[%s138 + $0x798] sm:$0xff]
        %v436 = vld [vmem:[%s138 + $0x7a0] sm:$0xff]
        %v437 = vld [vmem:[%s138 + $0x7a8] sm:$0xff]
        %v438 = vld [vmem:[%s138 + $0x7b0] sm:$0xff]
        %v439 = vld [vmem:[%s138 + $0x7b8] sm:$0xff]
        %v440 = vld [vmem:[%s138 + $0x7c0] sm:$0xff]
        %v441 = vld [vmem:[%s138 + $0x7c8] sm:$0xff]
        %v442 = vld [vmem:[%s138 + $0x7d0] sm:$0xff]
        %v443 = vld [vmem:[%s138 + $0x7d8] sm:$0xff]
        %v444 = vld [vmem:[%s138 + $0x7e0] sm:$0xff]
        %v445 = vld [vmem:[%s138 + $0x7e8] sm:$0xff]
        %v446 = vld [vmem:[%s138 + $0x7f0] sm:$0xff]
        %v447 = vld [vmem:[%s138 + $0x7f8] sm:$0xff]
        %v448 = vld [vmem:[%s138 + $0x800] sm:$0xff]
        %v449 = vld [vmem:[%s138 + $0x808] sm:$0xff]
        %v450 = vld [vmem:[%s138 + $0x810] sm:$0xff]
        %v451 = vld [vmem:[%s138 + $0x818] sm:$0xff]
        %v452 = vld [vmem:[%s138 + $0x820] sm:$0xff]
        %v453 = vld [vmem:[%s138 + $0x828] sm:$0xff]
        %v454 = vld [vmem:[%s138 + $0x830] sm:$0xff]
        %v455 = vld [vmem:[%s138 + $0x838] sm:$0xff]
        %v456 = vld [vmem:[%s138 + $0x840] sm:$0xff]
        %v457 = vld [vmem:[%s138 + $0x848] sm:$0xff]
        %v458 = vld [vmem:[%s138 + $0x850] sm:$0xff]
        %v459 = vld [vmem:[%s138 + $0x858] sm:$0xff]
        %v460 = vld [vmem:[%s138 + $0x860] sm:$0xff]
        %v461 = vld [vmem:[%s138 + $0x868] sm:$0xff]
        %v462 = vld [vmem:[%s138 + $0x870] sm:$0xff]
        %v463 = vld [vmem:[%s138 + $0x878] sm:$0xff]
        %v464 = vld [vmem:[%s138 + $0x880] sm:$0xff]
        %v465 = vld [vmem:[%s138 + $0x888] sm:$0xff]
        %v466 = vld [vmem:[%s138 + $0x890] sm:$0xff]
        %v467 = vld [vmem:[%s138 + $0x898] sm:$0xff]
        %v468 = vld [vmem:[%s138 + $0x8a0] sm:$0xff]
        %v469 = vld [vmem:[%s138 + $0x8a8] sm:$0xff]
        %v470 = vld [vmem:[%s138 + $0x8b0] sm:$0xff]
        %v471 = vld [vmem:[%s138 + $0x8b8] sm:$0xff]
        %v472 = vld [vmem:[%s138 + $0x8c0] sm:$0xff]
        %v473 = vld [vmem:[%s138 + $0x8c8] sm:$0xff]
        %v474 = vld [vmem:[%s138 + $0x8d0] sm:$0xff]
        %v475 = vld [vmem:[%s138 + $0x8d8] sm:$0xff]
        %v476 = vld [vmem:[%s138 + $0x8e0] sm:$0xff]
        %v477 = vld [vmem:[%s138 + $0x8e8] sm:$0xff]
        %v478 = vld [vmem:[%s138 + $0x8f0] sm:$0xff]
        %v479 = vld [vmem:[%s138 + $0x8f8] sm:$0xff]
        %v480 = vld [vmem:[%s138 + $0x900] sm:$0xff]
        %v481 = vld [vmem:[%s138 + $0x908] sm:$0xff]
        %v482 = vld [vmem:[%s138 + $0x910] sm:$0xff]
        %v483 = vld [vmem:[%s138 + $0x918] sm:$0xff]
        %v484 = vld [vmem:[%s138 + $0x920] sm:$0xff]
        %v485 = vld [vmem:[%s138 + $0x928] sm:$0xff]
        %v486 = vld [vmem:[%s138 + $0x930] sm:$0xff]
        %v487 = vld [vmem:[%s138 + $0x938] sm:$0xff]
        %v488 = vld [vmem:[%s138 + $0x940] sm:$0xff]
        %v489 = vld [vmem:[%s138 + $0x948] sm:$0xff]
        %v490 = vld [vmem:[%s138 + $0x950] sm:$0xff]
        %v491 = vld [vmem:[%s138 + $0x958] sm:$0xff]
        %v492 = vld [vmem:[%s138 + $0x960] sm:$0xff]
        %v493 = vld [vmem:[%s138 + $0x968] sm:$0xff]
        %v494 = vld [vmem:[%s138 + $0x970] sm:$0xff]
        %v495 = vld [vmem:[%s138 + $0x978] sm:$0xff]
        %v496 = vld [vmem:[%s138 + $0x980] sm:$0xff]
        %v497 = vld [vmem:[%s138 + $0x988] sm:$0xff]
        %v498 = vld [vmem:[%s138 + $0x990] sm:$0xff]
        %v499 = vld [vmem:[%s138 + $0x998] sm:$0xff]
        %v500 = vld [vmem:[%s138 + $0x9a0] sm:$0xff]
        %v501 = vld [vmem:[%s138 + $0x9a8] sm:$0xff]
        %v502 = vld [vmem:[%s138 + $0x9b0] sm:$0xff]
        %v503 = vld [vmem:[%s138 + $0x9b8] sm:$0xff]
        %v504 = vld [vmem:[%s138 + $0x9c0] sm:$0xff]
        %v505 = vld [vmem:[%s138 + $0x9c8] sm:$0xff]
        %v506 = vld [vmem:[%s138 + $0x9d0] sm:$0xff]
        %v507 = vld [vmem:[%s138 + $0x9d8] sm:$0xff]
        %v508 = vld [vmem:[%s138 + $0x9e0] sm:$0xff]
        %v509 = vld [vmem:[%s138 + $0x9e8] sm:$0xff]
        %v510 = vld [vmem:[%s138 + $0x9f0] sm:$0xff]
        %v511 = vld [vmem:[%s138 + $0x9f8] sm:$0xff]
        %v512 = vld [vmem:[%s138 + $0xa00] sm:$0xff]
        %v513 = vld [vmem:[%s138 + $0xa08] sm:$0xff]
        %v514 = vld [vmem:[%s138 + $0xa10] sm:$0xff]
        %v515 = vld [vmem:[%s138 + $0xa18] sm:$0xff]
        %v516 = vld [vmem:[%s138 + $0xa20] sm:$0xff]
        %v517 = vld [vmem:[%s138 + $0xa28] sm:$0xff]
        %v518 = vld [vmem:[%s138 + $0xa30] sm:$0xff]
        %v519 = vld [vmem:[%s138 + $0xa38] sm:$0xff]
        %v520 = vld [vmem:[%s138 + $0xa40] sm:$0xff]
        %v521 = vld [vmem:[%s138 + $0xa48] sm:$0xff]
        %v522 = vld [vmem:[%s138 + $0xa50] sm:$0xff]
        %v523 = vld [vmem:[%s138 + $0xa58] sm:$0xff]
        %v524 = vld [vmem:[%s138 + $0xa60] sm:$0xff]
        %v525 = vld [vmem:[%s138 + $0xa68] sm:$0xff]
        %v526 = vld [vmem:[%s138 + $0xa70] sm:$0xff]
        %v527 = vld [vmem:[%s138 + $0xa78] sm:$0xff]
        %v528 = vld [vmem:[%s138 + $0xa80] sm:$0xff]
        %v529 = vld [vmem:[%s138 + $0xa88] sm:$0xff]
        %v530 = vld [vmem:[%s138 + $0xa90] sm:$0xff]
        %v531 = vld [vmem:[%s138 + $0xa98] sm:$0xff]
        %v532 = vld [vmem:[%s138 + $0xaa0] sm:$0xff]
        %v533 = vld [vmem:[%s138 + $0xaa8] sm:$0xff]
        %v534 = vld [vmem:[%s138 + $0xab0] sm:$0xff]
        %v535 = vld [vmem:[%s138 + $0xab8] sm:$0xff]
        %v536 = vld [vmem:[%s138 + $0xac0] sm:$0xff]
        %v537 = vld [vmem:[%s138 + $0xac8] sm:$0xff]
        %v538 = vld [vmem:[%s138 + $0xad0] sm:$0xff]
        %v539 = vld [vmem:[%s138 + $0xad8] sm:$0xff]
        %v540 = vld [vmem:[%s138 + $0xae0] sm:$0xff]
        %v541 = vld [vmem:[%s138 + $0xae8] sm:$0xff]
        %v542 = vld [vmem:[%s138 + $0xaf0] sm:$0xff]
        %v543 = vld [vmem:[%s138 + $0xaf8] sm:$0xff]
        %v544 = vld [vmem:[%s138 + $0xb00] sm:$0xff]
        %v545 = vld [vmem:[%s138 + $0xb08] sm:$0xff]
        %v546 = vld [vmem:[%s138 + $0xb10] sm:$0xff]
        %v547 = vld [vmem:[%s138 + $0xb18] sm:$0xff]
        %v548 = vld [vmem:[%s138 + $0xb20] sm:$0xff]
        %v549 = vld [vmem:[%s138 + $0xb28] sm:$0xff]
        %v550 = vld [vmem:[%s138 + $0xb30] sm:$0xff]
        %v551 = vld [vmem:[%s138 + $0xb38] sm:$0xff]
        %v552 = vld [vmem:[%s138 + $0xb40] sm:$0xff]
        %v553 = vld [vmem:[%s138 + $0xb48] sm:$0xff]
        %v554 = vld [vmem:[%s138 + $0xb50] sm:$0xff]
        %v555 = vld [vmem:[%s138 + $0xb58] sm:$0xff]
        %v556 = vld [vmem:[%s138 + $0xb60] sm:$0xff]
        %v557 = vld [vmem:[%s138 + $0xb68] sm:$0xff]
        %v558 = vld [vmem:[%s138 + $0xb70] sm:$0xff]
        %v559 = vld [vmem:[%s138 + $0xb78] sm:$0xff]
        %v560 = vld [vmem:[%s138 + $0xb80] sm:$0xff]
        %v561 = vld [vmem:[%s138 + $0xb88] sm:$0xff]
        %v562 = vld [vmem:[%s138 + $0xb90] sm:$0xff]
        %v563 = vld [vmem:[%s138 + $0xb98] sm:$0xff]
        %v564 = vld [vmem:[%s138 + $0xba0] sm:$0xff]
        %v565 = vld [vmem:[%s138 + $0xba8] sm:$0xff]
        %v566 = vld [vmem:[%s138 + $0xbb0] sm:$0xff]
        %v567 = vld [vmem:[%s138 + $0xbb8] sm:$0xff]
        %v568 = vld [vmem:[%s138 + $0xbc0] sm:$0xff]
        %v569 = vld [vmem:[%s138 + $0xbc8] sm:$0xff]
        %v570 = vld [vmem:[%s138 + $0xbd0] sm:$0xff]
        %v571 = vld [vmem:[%s138 + $0xbd8] sm:$0xff]
        %v572 = vld [vmem:[%s138 + $0xbe0] sm:$0xff]
        %v573 = vld [vmem:[%s138 + $0xbe8] sm:$0xff]
        %v574 = vld [vmem:[%s138 + $0xbf0] sm:$0xff]
        %v575 = vld [vmem:[%s138 + $0xbf8] sm:$0xff]
        %v576 = vld [vmem:[%s138 + $0xc00] sm:$0xff]
        %v577 = vld [vmem:[%s138 + $0xc08] sm:$0xff]
        %v578 = vld [vmem:[%s138 + $0xc10] sm:$0xff]
        %v579 = vld [vmem:[%s138 + $0xc18] sm:$0xff]
        %v580 = vld [vmem:[%s138 + $0xc20] sm:$0xff]
        %v581 = vld [vmem:[%s138 + $0xc28] sm:$0xff]
        %v582 = vld [vmem:[%s138 + $0xc30] sm:$0xff]
        %v583 = vld [vmem:[%s138 + $0xc38] sm:$0xff]
        %v584 = vld [vmem:[%s138 + $0xc40] sm:$0xff]
        %v585 = vld [vmem:[%s138 + $0xc48] sm:$0xff]
        %v586 = vld [vmem:[%s138 + $0xc50] sm:$0xff]
        %v587 = vld [vmem:[%s138 + $0xc58] sm:$0xff]
        %v588 = vld [vmem:[%s138 + $0xc60] sm:$0xff]
        %v589 = vld [vmem:[%s138 + $0xc68] sm:$0xff]
        %v590 = vld [vmem:[%s138 + $0xc70] sm:$0xff]
        %v591 = vld [vmem:[%s138 + $0xc78] sm:$0xff]
        %v592 = vld [vmem:[%s138 + $0xc80] sm:$0xff]
        %v593 = vld [vmem:[%s138 + $0xc88] sm:$0xff]
        %v594 = vld [vmem:[%s138 + $0xc90] sm:$0xff]
        %v595 = vld [vmem:[%s138 + $0xc98] sm:$0xff]
        %v596 = vld [vmem:[%s138 + $0xca0] sm:$0xff]
        %v597 = vld [vmem:[%s138 + $0xca8] sm:$0xff]
        %v598 = vld [vmem:[%s138 + $0xcb0] sm:$0xff]
        %v599 = vld [vmem:[%s138 + $0xcb8] sm:$0xff]
        %v600 = vld [vmem:[%s138 + $0xcc0] sm:$0xff]
        %v601 = vld [vmem:[%s138 + $0xcc8] sm:$0xff]
        %v602 = vld [vmem:[%s138 + $0xcd0] sm:$0xff]
        %v603 = vld [vmem:[%s138 + $0xcd8] sm:$0xff]
        %v604 = vld [vmem:[%s138 + $0xce0] sm:$0xff]
        %v605 = vld [vmem:[%s138 + $0xce8] sm:$0xff]
        %v606 = vld [vmem:[%s138 + $0xcf0] sm:$0xff]
        %v607 = vld [vmem:[%s138 + $0xcf8] sm:$0xff]
        %v608 = vld [vmem:[%s138 + $0xd00] sm:$0xff]
        %v609 = vld [vmem:[%s138 + $0xd08] sm:$0xff]
        %v610 = vld [vmem:[%s138 + $0xd10] sm:$0xff]
        %v611 = vld [vmem:[%s138 + $0xd18] sm:$0xff]
        %v612 = vld [vmem:[%s138 + $0xd20] sm:$0xff]
        %v613 = vld [vmem:[%s138 + $0xd28] sm:$0xff]
        %v614 = vld [vmem:[%s138 + $0xd30] sm:$0xff]
        %v615 = vld [vmem:[%s138 + $0xd38] sm:$0xff]
        %v616 = vld [vmem:[%s138 + $0xd40] sm:$0xff]
        %v617 = vld [vmem:[%s138 + $0xd48] sm:$0xff]
        %v618 = vld [vmem:[%s138 + $0xd50] sm:$0xff]
        %v619 = vld [vmem:[%s138 + $0xd58] sm:$0xff]
        %v620 = vld [vmem:[%s138 + $0xd60] sm:$0xff]
        %v621 = vld [vmem:[%s138 + $0xd68] sm:$0xff]
        %v622 = vld [vmem:[%s138 + $0xd70] sm:$0xff]
        %v623 = vld [vmem:[%s138 + $0xd78] sm:$0xff]
        %v624 = vld [vmem:[%s138 + $0xd80] sm:$0xff]
        %v625 = vld [vmem:[%s138 + $0xd88] sm:$0xff]
        %v626 = vld [vmem:[%s138 + $0xd90] sm:$0xff]
        %v627 = vld [vmem:[%s138 + $0xd98] sm:$0xff]
        %v628 = vld [vmem:[%s138 + $0xda0] sm:$0xff]
        %v629 = vld [vmem:[%s138 + $0xda8] sm:$0xff]
        %v630 = vld [vmem:[%s138 + $0xdb0] sm:$0xff]
        %v631 = vld [vmem:[%s138 + $0xdb8] sm:$0xff]
        %v632 = vld [vmem:[%s138 + $0xdc0] sm:$0xff]
        %v633 = vld [vmem:[%s138 + $0xdc8] sm:$0xff]
        %v634 = vld [vmem:[%s138 + $0xdd0] sm:$0xff]
        %v635 = vld [vmem:[%s138 + $0xdd8] sm:$0xff]
        %v636 = vld [vmem:[%s138 + $0xde0] sm:$0xff]
        %v637 = vld [vmem:[%s138 + $0xde8] sm:$0xff]
        %v638 = vld [vmem:[%s138 + $0xdf0] sm:$0xff]
        %v639 = vld [vmem:[%s138 + $0xdf8] sm:$0xff]
        %v640 = vld [vmem:[%s138 + $0xe00] sm:$0xff]
        %v641 = vld [vmem:[%s138 + $0xe08] sm:$0xff]
        %v642 = vld [vmem:[%s138 + $0xe10] sm:$0xff]
        %v643 = vld [vmem:[%s138 + $0xe18] sm:$0xff]
        %v644 = vld [vmem:[%s138 + $0xe20] sm:$0xff]
        %v645 = vld [vmem:[%s138 + $0xe28] sm:$0xff]
        %v646 = vld [vmem:[%s138 + $0xe30] sm:$0xff]
        %v647 = vld [vmem:[%s138 + $0xe38] sm:$0xff]
        %v648 = vld [vmem:[%s138 + $0xe40] sm:$0xff]
        %v649 = vld [vmem:[%s138 + $0xe48] sm:$0xff]
        %v650 = vld [vmem:[%s138 + $0xe50] sm:$0xff]
        %v651 = vld [vmem:[%s138 + $0xe58] sm:$0xff]
        %v652 = vld [vmem:[%s138 + $0xe60] sm:$0xff]
        %v653 = vld [vmem:[%s138 + $0xe68] sm:$0xff]
        %v654 = vld [vmem:[%s138 + $0xe70] sm:$0xff]
        %v655 = vld [vmem:[%s138 + $0xe78] sm:$0xff]
        %v656 = vld [vmem:[%s138 + $0xe80] sm:$0xff]
        %v657 = vld [vmem:[%s138 + $0xe88] sm:$0xff]
        %v658 = vld [vmem:[%s138 + $0xe90] sm:$0xff]
        %v659 = vld [vmem:[%s138 + $0xe98] sm:$0xff]
        %v660 = vld [vmem:[%s138 + $0xea0] sm:$0xff]
        %v661 = vld [vmem:[%s138 + $0xea8] sm:$0xff]
        %v662 = vld [vmem:[%s138 + $0xeb0] sm:$0xff]
        %v663 = vld [vmem:[%s138 + $0xeb8] sm:$0xff]
        %v664 = vld [vmem:[%s138 + $0xec0] sm:$0xff]
        %v665 = vld [vmem:[%s138 + $0xec8] sm:$0xff]
        %v666 = vld [vmem:[%s138 + $0xed0] sm:$0xff]
        %v667 = vld [vmem:[%s138 + $0xed8] sm:$0xff]
        %v668 = vld [vmem:[%s138 + $0xee0] sm:$0xff]
        %v669 = vld [vmem:[%s138 + $0xee8] sm:$0xff]
        %v670 = vld [vmem:[%s138 + $0xef0] sm:$0xff]
        %v671 = vld [vmem:[%s138 + $0xef8] sm:$0xff]
        %v672 = vld [vmem:[%s138 + $0xf00] sm:$0xff]
        %v673 = vld [vmem:[%s138 + $0xf08] sm:$0xff]
        %v674 = vld [vmem:[%s138 + $0xf10] sm:$0xff]
        %v675 = vld [vmem:[%s138 + $0xf18] sm:$0xff]
        %v676 = vld [vmem:[%s138 + $0xf20] sm:$0xff]
        %v677 = vld [vmem:[%s138 + $0xf28] sm:$0xff]
        %v678 = vld [vmem:[%s138 + $0xf30] sm:$0xff]
        %v679 = vld [vmem:[%s138 + $0xf38] sm:$0xff]
        %v680 = vld [vmem:[%s138 + $0xf40] sm:$0xff]
        %v681 = vld [vmem:[%s138 + $0xf48] sm:$0xff]
        %v682 = vld [vmem:[%s138 + $0xf50] sm:$0xff]
        %v683 = vld [vmem:[%s138 + $0xf58] sm:$0xff]
        %v684 = vld [vmem:[%s138 + $0xf60] sm:$0xff]
        %v685 = vld [vmem:[%s138 + $0xf68] sm:$0xff]
        %v686 = vld [vmem:[%s138 + $0xf70] sm:$0xff]
        %v687 = vld [vmem:[%s138 + $0xf78] sm:$0xff]
        %v688 = vld [vmem:[%s138 + $0xf80] sm:$0xff]
        %v689 = vld [vmem:[%s138 + $0xf88] sm:$0xff]
        %v690 = vld [vmem:[%s138 + $0xf90] sm:$0xff]
        %v691 = vld [vmem:[%s138 + $0xf98] sm:$0xff]
        %v692 = vld [vmem:[%s138 + $0xfa0] sm:$0xff]
        %v693 = vld [vmem:[%s138 + $0xfa8] sm:$0xff]
        %v694 = vld [vmem:[%s138 + $0xfb0] sm:$0xff]
        %v695 = vld [vmem:[%s138 + $0xfb8] sm:$0xff]
        %v696 = vld [vmem:[%s138 + $0xfc0] sm:$0xff]
        %v697 = vld [vmem:[%s138 + $0xfc8] sm:$0xff]
        %v698 = vld [vmem:[%s138 + $0xfd0] sm:$0xff]
        %v699 = vld [vmem:[%s138 + $0xfd8] sm:$0xff]
        %v700 = vld [vmem:[%s138 + $0xfe0] sm:$0xff]
        %v701 = vld [vmem:[%s138 + $0xfe8] sm:$0xff]
        %v702 = vld [vmem:[%s138 + $0xff0] sm:$0xff]
        %v703 = vld [vmem:[%s138 + $0xff8] sm:$0xff]
        %v704 = vld [vmem:[%s138 + $0x1000] sm:$0xff]
        %v705 = vld [vmem:[%s138 + $0x1008] sm:$0xff]
        %v706 = vld [vmem:[%s138 + $0x1010] sm:$0xff]
        %v707 = vld [vmem:[%s138 + $0x1018] sm:$0xff]
        %v708 = vld [vmem:[%s138 + $0x1020] sm:$0xff]
        %v709 = vld [vmem:[%s138 + $0x1028] sm:$0xff]
        %v710 = vld [vmem:[%s138 + $0x1030] sm:$0xff]
        %v711 = vld [vmem:[%s138 + $0x1038] sm:$0xff]
        %v712 = vld [vmem:[%s138 + $0x1040] sm:$0xff]
        %v713 = vld [vmem:[%s138 + $0x1048] sm:$0xff]
        %v714 = vld [vmem:[%s138 + $0x1050] sm:$0xff]
        %v715 = vld [vmem:[%s138 + $0x1058] sm:$0xff]
        %v716 = vld [vmem:[%s138 + $0x1060] sm:$0xff]
        %v717 = vld [vmem:[%s138 + $0x1068] sm:$0xff]
        %v718 = vld [vmem:[%s138 + $0x1070] sm:$0xff]
        %v719 = vld [vmem:[%s138 + $0x1078] sm:$0xff]
        %v720 = vld [vmem:[%s138 + $0x1080] sm:$0xff]
        %v721 = vld [vmem:[%s138 + $0x1088] sm:$0xff]
        %v722 = vld [vmem:[%s138 + $0x1090] sm:$0xff]
        %v723 = vld [vmem:[%s138 + $0x1098] sm:$0xff]
        %v724 = vld [vmem:[%s138 + $0x10a0] sm:$0xff]
        %v725 = vld [vmem:[%s138 + $0x10a8] sm:$0xff]
        %v726 = vld [vmem:[%s138 + $0x10b0] sm:$0xff]
        %v727 = vld [vmem:[%s138 + $0x10b8] sm:$0xff]
        %v728 = vld [vmem:[%s138 + $0x10c0] sm:$0xff]
        %v729 = vld [vmem:[%s138 + $0x10c8] sm:$0xff]
        %v730 = vld [vmem:[%s138 + $0x10d0] sm:$0xff]
        %v731 = vld [vmem:[%s138 + $0x10d8] sm:$0xff]
        %v732 = vld [vmem:[%s138 + $0x10e0] sm:$0xff]
        %v733 = vld [vmem:[%s138 + $0x10e8] sm:$0xff]
        %v734 = vld [vmem:[%s138 + $0x10f0] sm:$0xff]
        %v735 = vld [vmem:[%s138 + $0x10f8] sm:$0xff]
        %v736 = vld [vmem:[%s138 + $0x1100] sm:$0xff]
        %v737 = vld [vmem:[%s138 + $0x1108] sm:$0xff]
        %v738 = vld [vmem:[%s138 + $0x1110] sm:$0xff]
        %v739 = vld [vmem:[%s138 + $0x1118] sm:$0xff]
        %v740 = vld [vmem:[%s138 + $0x1120] sm:$0xff]
        %v741 = vld [vmem:[%s138 + $0x1128] sm:$0xff]
        %v742 = vld [vmem:[%s138 + $0x1130] sm:$0xff]
        %v743 = vld [vmem:[%s138 + $0x1138] sm:$0xff]
        %v744 = vld [vmem:[%s138 + $0x1140] sm:$0xff]
        %v745 = vld [vmem:[%s138 + $0x1148] sm:$0xff]
        %v746 = vld [vmem:[%s138 + $0x1150] sm:$0xff]
        %v747 = vld [vmem:[%s138 + $0x1158] sm:$0xff]
        %v748 = vld [vmem:[%s138 + $0x1160] sm:$0xff]
        %v749 = vld [vmem:[%s138 + $0x1168] sm:$0xff]
        %v750 = vld [vmem:[%s138 + $0x1170] sm:$0xff]
        %v751 = vld [vmem:[%s138 + $0x1178] sm:$0xff]
        %v752 = vld [vmem:[%s138 + $0x1180] sm:$0xff]
        %v753 = vld [vmem:[%s138 + $0x1188] sm:$0xff]
        %v754 = vld [vmem:[%s138 + $0x1190] sm:$0xff]
        %v755 = vld [vmem:[%s138 + $0x1198] sm:$0xff]
        %v756 = vld [vmem:[%s138 + $0x11a0] sm:$0xff]
        %v757 = vld [vmem:[%s138 + $0x11a8] sm:$0xff]
        %v758 = vld [vmem:[%s138 + $0x11b0] sm:$0xff]
        %v759 = vld [vmem:[%s138 + $0x11b8] sm:$0xff]
        %v760 = vld [vmem:[%s138 + $0x11c0] sm:$0xff]
        %v761 = vld [vmem:[%s138 + $0x11c8] sm:$0xff]
        %v762 = vld [vmem:[%s138 + $0x11d0] sm:$0xff]
        %v763 = vld [vmem:[%s138 + $0x11d8] sm:$0xff]
        %v764 = vld [vmem:[%s138 + $0x11e0] sm:$0xff]
        %v765 = vld [vmem:[%s138 + $0x11e8] sm:$0xff]
        %v766 = vld [vmem:[%s138 + $0x11f0] sm:$0xff]
        %v767 = vld [vmem:[%s138 + $0x11f8] sm:$0xff]
        %v768 = vld [vmem:[%s138 + $0x1200] sm:$0xff]
        %v769 = vld [vmem:[%s138 + $0x1208] sm:$0xff]
        %v770 = vld [vmem:[%s138 + $0x1210] sm:$0xff]
        %v771 = vld [vmem:[%s138 + $0x1218] sm:$0xff]
        %v772 = vld [vmem:[%s138 + $0x1220] sm:$0xff]
        %v773 = vld [vmem:[%s138 + $0x1228] sm:$0xff]
        %v774 = vld [vmem:[%s138 + $0x1230] sm:$0xff]
        %v775 = vld [vmem:[%s138 + $0x1238] sm:$0xff]
        %v776 = vld [vmem:[%s138 + $0x1240] sm:$0xff]
        %v777 = vld [vmem:[%s138 + $0x1248] sm:$0xff]
        %v778 = vld [vmem:[%s138 + $0x1250] sm:$0xff]
        %v779 = vld [vmem:[%s138 + $0x1258] sm:$0xff]
        %v780 = vld [vmem:[%s138 + $0x1260] sm:$0xff]
        %v781 = vld [vmem:[%s138 + $0x1268] sm:$0xff]
        %v782 = vld [vmem:[%s138 + $0x1270] sm:$0xff]
        %v783 = vld [vmem:[%s138 + $0x1278] sm:$0xff]
        %v784 = vld [vmem:[%s138 + $0x1280] sm:$0xff]
        %v785 = vld [vmem:[%s138 + $0x1288] sm:$0xff]
        %v786 = vld [vmem:[%s138 + $0x1290] sm:$0xff]
        %v787 = vld [vmem:[%s138 + $0x1298] sm:$0xff]
        %v788 = vld [vmem:[%s138 + $0x12a0] sm:$0xff]
        %v789 = vld [vmem:[%s138 + $0x12a8] sm:$0xff]
        %v790 = vld [vmem:[%s138 + $0x12b0] sm:$0xff]
        %v791 = vld [vmem:[%s138 + $0x12b8] sm:$0xff]
        %v792 = vld [vmem:[%s138 + $0x12c0] sm:$0xff]
        %v793 = vld [vmem:[%s138 + $0x12c8] sm:$0xff]
        %v794 = vld [vmem:[%s138 + $0x12d0] sm:$0xff]
        %v795 = vld [vmem:[%s138 + $0x12d8] sm:$0xff]
        %v796 = vld [vmem:[%s138 + $0x12e0] sm:$0xff]
        %v797 = vld [vmem:[%s138 + $0x12e8] sm:$0xff]
        %v798 = vld [vmem:[%s138 + $0x12f0] sm:$0xff]
        %v799 = vld [vmem:[%s138 + $0x12f8] sm:$0xff]
        %v800 = vld [vmem:[%s138 + $0x1300] sm:$0xff]
        %v801 = vld [vmem:[%s138 + $0x1308] sm:$0xff]
        %v802 = vld [vmem:[%s138 + $0x1310] sm:$0xff]
        %v803 = vld [vmem:[%s138 + $0x1318] sm:$0xff]
        %v804 = vld [vmem:[%s138 + $0x1320] sm:$0xff]
        %v805 = vld [vmem:[%s138 + $0x1328] sm:$0xff]
        %v806 = vld [vmem:[%s138 + $0x1330] sm:$0xff]
        %v807 = vld [vmem:[%s138 + $0x1338] sm:$0xff]
        %v808 = vld [vmem:[%s138 + $0x1340] sm:$0xff]
        %v809 = vld [vmem:[%s138 + $0x1348] sm:$0xff]
        %v810 = vld [vmem:[%s138 + $0x1350] sm:$0xff]
        %v811 = vld [vmem:[%s138 + $0x1358] sm:$0xff]
        %v812 = vld [vmem:[%s138 + $0x1360] sm:$0xff]
        %v813 = vld [vmem:[%s138 + $0x1368] sm:$0xff]
        %v814 = vld [vmem:[%s138 + $0x1370] sm:$0xff]
        %v815 = vld [vmem:[%s138 + $0x1378] sm:$0xff]
        %v816 = vld [vmem:[%s138 + $0x1380] sm:$0xff]
        %v817 = vld [vmem:[%s138 + $0x1388] sm:$0xff]
        %v818 = vld [vmem:[%s138 + $0x1390] sm:$0xff]
        %v819 = vld [vmem:[%s138 + $0x1398] sm:$0xff]
        %v820 = vld [vmem:[%s138 + $0x13a0] sm:$0xff]
        %v821 = vld [vmem:[%s138 + $0x13a8] sm:$0xff]
        %v822 = vld [vmem:[%s138 + $0x13b0] sm:$0xff]
        %v823 = vld [vmem:[%s138 + $0x13b8] sm:$0xff]
        %v824 = vld [vmem:[%s138 + $0x13c0] sm:$0xff]
        %v825 = vld [vmem:[%s138 + $0x13c8] sm:$0xff]
        %v826 = vld [vmem:[%s138 + $0x13d0] sm:$0xff]
        %v827 = vld [vmem:[%s138 + $0x13d8] sm:$0xff]
        %v828 = vld [vmem:[%s138 + $0x13e0] sm:$0xff]
        %v829 = vld [vmem:[%s138 + $0x13e8] sm:$0xff]
        %v830 = vld [vmem:[%s138 + $0x13f0] sm:$0xff]
        %v831 = vld [vmem:[%s138 + $0x13f8] sm:$0xff]
        %v832 = vld [vmem:[%s138 + $0x1400] sm:$0xff]
        %v833 = vld [vmem:[%s138 + $0x1408] sm:$0xff]
        %v834 = vld [vmem:[%s138 + $0x1410] sm:$0xff]
        %v835 = vld [vmem:[%s138 + $0x1418] sm:$0xff]
        %v836 = vld [vmem:[%s138 + $0x1420] sm:$0xff]
        %v837 = vld [vmem:[%s138 + $0x1428] sm:$0xff]
        %v838 = vld [vmem:[%s138 + $0x1430] sm:$0xff]
        %v839 = vld [vmem:[%s138 + $0x1438] sm:$0xff]
        %v840 = vld [vmem:[%s138 + $0x1440] sm:$0xff]
        %v841 = vld [vmem:[%s138 + $0x1448] sm:$0xff]
        %v842 = vld [vmem:[%s138 + $0x1450] sm:$0xff]
        %v843 = vld [vmem:[%s138 + $0x1458] sm:$0xff]
        %v844 = vld [vmem:[%s138 + $0x1460] sm:$0xff]
        %v845 = vld [vmem:[%s138 + $0x1468] sm:$0xff]
        %v846 = vld [vmem:[%s138 + $0x1470] sm:$0xff]
        %v847 = vld [vmem:[%s138 + $0x1478] sm:$0xff]
        %v848 = vld [vmem:[%s138 + $0x1480] sm:$0xff]
        %v849 = vld [vmem:[%s138 + $0x1488] sm:$0xff]
        %v850 = vld [vmem:[%s138 + $0x1490] sm:$0xff]
        %v851 = vld [vmem:[%s138 + $0x1498] sm:$0xff]
        %v852 = vld [vmem:[%s138 + $0x14a0] sm:$0xff]
        %v853 = vld [vmem:[%s138 + $0x14a8] sm:$0xff]
        %v854 = vld [vmem:[%s138 + $0x14b0] sm:$0xff]
        %v855 = vld [vmem:[%s138 + $0x14b8] sm:$0xff]
        %v856 = vld [vmem:[%s138 + $0x14c0] sm:$0xff]
        %v857 = vld [vmem:[%s138 + $0x14c8] sm:$0xff]
        %v858 = vld [vmem:[%s138 + $0x14d0] sm:$0xff]
        %v859 = vld [vmem:[%s138 + $0x14d8] sm:$0xff]
        %v860 = vld [vmem:[%s138 + $0x14e0] sm:$0xff]
        %v861 = vld [vmem:[%s138 + $0x14e8] sm:$0xff]
        %v862 = vld [vmem:[%s138 + $0x14f0] sm:$0xff]
        %v863 = vld [vmem:[%s138 + $0x14f8] sm:$0xff]
        %v864 = vld [vmem:[%s138 + $0x1500] sm:$0xff]
        %v865 = vld [vmem:[%s138 + $0x1508] sm:$0xff]
        %v866 = vld [vmem:[%s138 + $0x1510] sm:$0xff]
        %v867 = vld [vmem:[%s138 + $0x1518] sm:$0xff]
        %v868 = vld [vmem:[%s138 + $0x1520] sm:$0xff]
        %v869 = vld [vmem:[%s138 + $0x1528] sm:$0xff]
        %v870 = vld [vmem:[%s138 + $0x1530] sm:$0xff]
        %v871 = vld [vmem:[%s138 + $0x1538] sm:$0xff]
        %v872 = vld [vmem:[%s138 + $0x1540] sm:$0xff]
        %v873 = vld [vmem:[%s138 + $0x1548] sm:$0xff]
        %v874 = vld [vmem:[%s138 + $0x1550] sm:$0xff]
        %v875 = vld [vmem:[%s138 + $0x1558] sm:$0xff]
        %v876 = vld [vmem:[%s138 + $0x1560] sm:$0xff]
        %v877 = vld [vmem:[%s138 + $0x1568] sm:$0xff]
        %v878 = vld [vmem:[%s138 + $0x1570] sm:$0xff]
        %v879 = vld [vmem:[%s138 + $0x1578] sm:$0xff]
        %v880 = vld [vmem:[%s138 + $0x1580] sm:$0xff]
        %v881 = vld [vmem:[%s138 + $0x1588] sm:$0xff]
        %v882 = vld [vmem:[%s138 + $0x1590] sm:$0xff]
        %v883 = vld [vmem:[%s138 + $0x1598] sm:$0xff]
        %v884 = vld [vmem:[%s138 + $0x15a0] sm:$0xff]
        %v885 = vld [vmem:[%s138 + $0x15a8] sm:$0xff]
        %v886 = vld [vmem:[%s138 + $0x15b0] sm:$0xff]
        %v887 = vld [vmem:[%s138 + $0x15b8] sm:$0xff]
        %v888 = vld [vmem:[%s138 + $0x15c0] sm:$0xff]
        %v889 = vld [vmem:[%s138 + $0x15c8] sm:$0xff]
        %v890 = vld [vmem:[%s138 + $0x15d0] sm:$0xff]
        %v891 = vld [vmem:[%s138 + $0x15d8] sm:$0xff]
        %v892 = vld [vmem:[%s138 + $0x15e0] sm:$0xff]
        %v893 = vld [vmem:[%s138 + $0x15e8] sm:$0xff]
        %v894 = vld [vmem:[%s138 + $0x15f0] sm:$0xff]
        %v895 = vld [vmem:[%s138 + $0x15f8] sm:$0xff]
        %v896 = vld [vmem:[%s138 + $0x1600] sm:$0xff]
        %v897 = vld [vmem:[%s138 + $0x1608] sm:$0xff]
        %v898 = vld [vmem:[%s138 + $0x1610] sm:$0xff]
        %v899 = vld [vmem:[%s138 + $0x1618] sm:$0xff]
        %v900 = vld [vmem:[%s138 + $0x1620] sm:$0xff]
        %v901 = vld [vmem:[%s138 + $0x1628] sm:$0xff]
        %v902 = vld [vmem:[%s138 + $0x1630] sm:$0xff]
        %v903 = vld [vmem:[%s138 + $0x1638] sm:$0xff]
        %v904 = vld [vmem:[%s138 + $0x1640] sm:$0xff]
        %v905 = vld [vmem:[%s138 + $0x1648] sm:$0xff]
        %v906 = vld [vmem:[%s138 + $0x1650] sm:$0xff]
        %v907 = vld [vmem:[%s138 + $0x1658] sm:$0xff]
        %v908 = vld [vmem:[%s138 + $0x1660] sm:$0xff]
        %v909 = vld [vmem:[%s138 + $0x1668] sm:$0xff]
        %v910 = vld [vmem:[%s138 + $0x1670] sm:$0xff]
        %v911 = vld [vmem:[%s138 + $0x1678] sm:$0xff]
        %v912 = vld [vmem:[%s138 + $0x1680] sm:$0xff]
        %v913 = vld [vmem:[%s138 + $0x1688] sm:$0xff]
        %v914 = vld [vmem:[%s138 + $0x1690] sm:$0xff]
        %v915 = vld [vmem:[%s138 + $0x1698] sm:$0xff]
        %v916 = vld [vmem:[%s138 + $0x16a0] sm:$0xff]
        %v917 = vld [vmem:[%s138 + $0x16a8] sm:$0xff]
        %v918 = vld [vmem:[%s138 + $0x16b0] sm:$0xff]
        %v919 = vld [vmem:[%s138 + $0x16b8] sm:$0xff]
        %v920 = vld [vmem:[%s138 + $0x16c0] sm:$0xff]
        %v921 = vld [vmem:[%s138 + $0x16c8] sm:$0xff]
        %v922 = vld [vmem:[%s138 + $0x16d0] sm:$0xff]
        %v923 = vld [vmem:[%s138 + $0x16d8] sm:$0xff]
        %v924 = vld [vmem:[%s138 + $0x16e0] sm:$0xff]
        %v925 = vld [vmem:[%s138 + $0x16e8] sm:$0xff]
        %v926 = vld [vmem:[%s138 + $0x16f0] sm:$0xff]
        %v927 = vld [vmem:[%s138 + $0x16f8] sm:$0xff]
        %v928 = vld [vmem:[%s138 + $0x1700] sm:$0xff]
        %v929 = vld [vmem:[%s138 + $0x1708] sm:$0xff]
        %v930 = vld [vmem:[%s138 + $0x1710] sm:$0xff]
        %v931 = vld [vmem:[%s138 + $0x1718] sm:$0xff]
        %v932 = vld [vmem:[%s138 + $0x1720] sm:$0xff]
        %v933 = vld [vmem:[%s138 + $0x1728] sm:$0xff]
        %v934 = vld [vmem:[%s138 + $0x1730] sm:$0xff]
        %v935 = vld [vmem:[%s138 + $0x1738] sm:$0xff]
        %v936 = vld [vmem:[%s138 + $0x1740] sm:$0xff]
        %v937 = vld [vmem:[%s138 + $0x1748] sm:$0xff]
        %v938 = vld [vmem:[%s138 + $0x1750] sm:$0xff]
        %v939 = vld [vmem:[%s138 + $0x1758] sm:$0xff]
        %v940 = vld [vmem:[%s138 + $0x1760] sm:$0xff]
        %v941 = vld [vmem:[%s138 + $0x1768] sm:$0xff]
        %v942 = vld [vmem:[%s138 + $0x1770] sm:$0xff]
        %v943 = vld [vmem:[%s138 + $0x1778] sm:$0xff]
        %v944 = vld [vmem:[%s138 + $0x1780] sm:$0xff]
        %v945 = vld [vmem:[%s138 + $0x1788] sm:$0xff]
        %v946 = vld [vmem:[%s138 + $0x1790] sm:$0xff]
        %v947 = vld [vmem:[%s138 + $0x1798] sm:$0xff]
        %v948 = vld [vmem:[%s138 + $0x17a0] sm:$0xff]
        %v949 = vld [vmem:[%s138 + $0x17a8] sm:$0xff]
        %v950 = vld [vmem:[%s138 + $0x17b0] sm:$0xff]
        %v951 = vld [vmem:[%s138 + $0x17b8] sm:$0xff]
        %v952 = vld [vmem:[%s138 + $0x17c0] sm:$0xff]
        %v953 = vld [vmem:[%s138 + $0x17c8] sm:$0xff]
        %v954 = vld [vmem:[%s138 + $0x17d0] sm:$0xff]
        %v955 = vld [vmem:[%s138 + $0x17d8] sm:$0xff]
        %v956 = vld [vmem:[%s138 + $0x17e0] sm:$0xff]
        %v957 = vld [vmem:[%s138 + $0x17e8] sm:$0xff]
        %v958 = vld [vmem:[%s138 + $0x17f0] sm:$0xff]
        %v959 = vld [vmem:[%s138 + $0x17f8] sm:$0xff]
        %v960 = vld [vmem:[%s138 + $0x1800] sm:$0xff]
        %v961 = vld [vmem:[%s138 + $0x1808] sm:$0xff]
        %v962 = vld [vmem:[%s138 + $0x1810] sm:$0xff]
        %v963 = vld [vmem:[%s138 + $0x1818] sm:$0xff]
        %v964 = vld [vmem:[%s138 + $0x1820] sm:$0xff]
        %v965 = vld [vmem:[%s138 + $0x1828] sm:$0xff]
        %v966 = vld [vmem:[%s138 + $0x1830] sm:$0xff]
        %v967 = vld [vmem:[%s138 + $0x1838] sm:$0xff]
        %v968 = vld [vmem:[%s138 + $0x1840] sm:$0xff]
        %v969 = vld [vmem:[%s138 + $0x1848] sm:$0xff]
        %v970 = vld [vmem:[%s138 + $0x1850] sm:$0xff]
        %v971 = vld [vmem:[%s138 + $0x1858] sm:$0xff]
        %v972 = vld [vmem:[%s138 + $0x1860] sm:$0xff]
        %v973 = vld [vmem:[%s138 + $0x1868] sm:$0xff]
        %v974 = vld [vmem:[%s138 + $0x1870] sm:$0xff]
        %v975 = vld [vmem:[%s138 + $0x1878] sm:$0xff]
        %v976 = vld [vmem:[%s138 + $0x1880] sm:$0xff]
        %v977 = vld [vmem:[%s138 + $0x1888] sm:$0xff]
        %v978 = vld [vmem:[%s138 + $0x1890] sm:$0xff]
        %v979 = vld [vmem:[%s138 + $0x1898] sm:$0xff]
        %v980 = vld [vmem:[%s138 + $0x18a0] sm:$0xff]
        %v981 = vld [vmem:[%s138 + $0x18a8] sm:$0xff]
        %v982 = vld [vmem:[%s138 + $0x18b0] sm:$0xff]
        %v983 = vld [vmem:[%s138 + $0x18b8] sm:$0xff]
        %v984 = vld [vmem:[%s138 + $0x18c0] sm:$0xff]
        %v985 = vld [vmem:[%s138 + $0x18c8] sm:$0xff]
        %v986 = vld [vmem:[%s138 + $0x18d0] sm:$0xff]
        %v987 = vld [vmem:[%s138 + $0x18d8] sm:$0xff]
        %v988 = vld [vmem:[%s138 + $0x18e0] sm:$0xff]
        %v989 = vld [vmem:[%s138 + $0x18e8] sm:$0xff]
        %v990 = vld [vmem:[%s138 + $0x18f0] sm:$0xff]
        %v991 = vld [vmem:[%s138 + $0x18f8] sm:$0xff]
        %v992 = vld [vmem:[%s138 + $0x1900] sm:$0xff]
        %v993 = vld [vmem:[%s138 + $0x1908] sm:$0xff]
        %v994 = vld [vmem:[%s138 + $0x1910] sm:$0xff]
        %v995 = vld [vmem:[%s138 + $0x1918] sm:$0xff]
        %v996 = vld [vmem:[%s138 + $0x1920] sm:$0xff]
        %v997 = vld [vmem:[%s138 + $0x1928] sm:$0xff]
        %v998 = vld [vmem:[%s138 + $0x1930] sm:$0xff]
        %v999 = vld [vmem:[%s138 + $0x1938] sm:$0xff]
        %v1000 = vld [vmem:[%s138 + $0x1940] sm:$0xff]
        %v1001 = vld [vmem:[%s138 + $0x1948] sm:$0xff]
        %v1002 = vld [vmem:[%s138 + $0x1950] sm:$0xff]
        %v1003 = vld [vmem:[%s138 + $0x1958] sm:$0xff]
        %v1004 = vld [vmem:[%s138 + $0x1960] sm:$0xff]
        %v1005 = vld [vmem:[%s138 + $0x1968] sm:$0xff]
        %v1006 = vld [vmem:[%s138 + $0x1970] sm:$0xff]
        %v1007 = vld [vmem:[%s138 + $0x1978] sm:$0xff]
        %v1008 = vld [vmem:[%s138 + $0x1980] sm:$0xff]
        %v1009 = vld [vmem:[%s138 + $0x1988] sm:$0xff]
        %v1010 = vld [vmem:[%s138 + $0x1990] sm:$0xff]
        %v1011 = vld [vmem:[%s138 + $0x1998] sm:$0xff]
        %v1012 = vld [vmem:[%s138 + $0x19a0] sm:$0xff]
        %v1013 = vld [vmem:[%s138 + $0x19a8] sm:$0xff]
        %v1014 = vld [vmem:[%s138 + $0x19b0] sm:$0xff]
        %v1015 = vld [vmem:[%s138 + $0x19b8] sm:$0xff]
        %v1016 = vld [vmem:[%s138 + $0x19c0] sm:$0xff]
        %v1017 = vld [vmem:[%s138 + $0x19c8] sm:$0xff]
        %v1018 = vld [vmem:[%s138 + $0x19d0] sm:$0xff]
        %v1019 = vld [vmem:[%s138 + $0x19d8] sm:$0xff]
        %v1020 = vld [vmem:[%s138 + $0x19e0] sm:$0xff]
        %v1021 = vld [vmem:[%s138 + $0x19e8] sm:$0xff]
        %v1022 = vld [vmem:[%s138 + $0x19f0] sm:$0xff]
        %v1023 = vld [vmem:[%s138 + $0x19f8] sm:$0xff]
        %v1024 = vld [vmem:[%s138 + $0x1a00] sm:$0xff]
        %v1025 = vld [vmem:[%s138 + $0x1a08] sm:$0xff]
        %v1026 = vld [vmem:[%s138 + $0x1a10] sm:$0xff]
        %v1027 = vld [vmem:[%s138 + $0x1a18] sm:$0xff]
        %v1028 = vld [vmem:[%s138 + $0x1a20] sm:$0xff]
        %v1029 = vld [vmem:[%s138 + $0x1a28] sm:$0xff]
        %v1030 = vld [vmem:[%s138 + $0x1a30] sm:$0xff]
        %v1031 = vld [vmem:[%s138 + $0x1a38] sm:$0xff]
        %v1032 = vld [vmem:[%s138 + $0x1a40] sm:$0xff]
        %v1033 = vld [vmem:[%s138 + $0x1a48] sm:$0xff]
        %v1034 = vld [vmem:[%s138 + $0x1a50] sm:$0xff]
        %v1035 = vld [vmem:[%s138 + $0x1a58] sm:$0xff]
        %v1036 = vld [vmem:[%s138 + $0x1a60] sm:$0xff]
        %v1037 = vld [vmem:[%s138 + $0x1a68] sm:$0xff]
        %v1038 = vld [vmem:[%s138 + $0x1a70] sm:$0xff]
        %v1039 = vld [vmem:[%s138 + $0x1a78] sm:$0xff]
        %v1040 = vld [vmem:[%s138 + $0x1a80] sm:$0xff]
        %v1041 = vld [vmem:[%s138 + $0x1a88] sm:$0xff]
        %v1042 = vld [vmem:[%s138 + $0x1a90] sm:$0xff]
        %v1043 = vld [vmem:[%s138 + $0x1a98] sm:$0xff]
        %v1044 = vld [vmem:[%s138 + $0x1aa0] sm:$0xff]
        %v1045 = vld [vmem:[%s138 + $0x1aa8] sm:$0xff]
        %v1046 = vld [vmem:[%s138 + $0x1ab0] sm:$0xff]
        %v1047 = vld [vmem:[%s138 + $0x1ab8] sm:$0xff]
        %v1048 = vld [vmem:[%s138 + $0x1ac0] sm:$0xff]
        %v1049 = vld [vmem:[%s138 + $0x1ac8] sm:$0xff]
        %v1050 = vld [vmem:[%s138 + $0x1ad0] sm:$0xff]
        %v1051 = vld [vmem:[%s138 + $0x1ad8] sm:$0xff]
        %v1052 = vld [vmem:[%s138 + $0x1ae0] sm:$0xff]
        %v1053 = vld [vmem:[%s138 + $0x1ae8] sm:$0xff]
        %v1054 = vld [vmem:[%s138 + $0x1af0] sm:$0xff]
        %v1055 = vld [vmem:[%s138 + $0x1af8] sm:$0xff]
        %v1056 = vld [vmem:[%s138 + $0x1b00] sm:$0xff]
        %v1057 = vld [vmem:[%s138 + $0x1b08] sm:$0xff]
        %v1058 = vld [vmem:[%s138 + $0x1b10] sm:$0xff]
        %v1059 = vld [vmem:[%s138 + $0x1b18] sm:$0xff]
        %v1060 = vld [vmem:[%s138 + $0x1b20] sm:$0xff]
        %v1061 = vld [vmem:[%s138 + $0x1b28] sm:$0xff]
        %v1062 = vld [vmem:[%s138 + $0x1b30] sm:$0xff]
        %v1063 = vld [vmem:[%s138 + $0x1b38] sm:$0xff]
        %v1064 = vld [vmem:[%s138 + $0x1b40] sm:$0xff]
        %v1065 = vld [vmem:[%s138 + $0x1b48] sm:$0xff]
        %v1066 = vld [vmem:[%s138 + $0x1b50] sm:$0xff]
        %v1067 = vld [vmem:[%s138 + $0x1b58] sm:$0xff]
        %v1068 = vld [vmem:[%s138 + $0x1b60] sm:$0xff]
        %v1069 = vld [vmem:[%s138 + $0x1b68] sm:$0xff]
        %v1070 = vld [vmem:[%s138 + $0x1b70] sm:$0xff]
        %v1071 = vld [vmem:[%s138 + $0x1b78] sm:$0xff]
        %v1072 = vld [vmem:[%s138 + $0x1b80] sm:$0xff]
        %v1073 = vld [vmem:[%s138 + $0x1b88] sm:$0xff]
        %v1074 = vld [vmem:[%s138 + $0x1b90] sm:$0xff]
        %v1075 = vld [vmem:[%s138 + $0x1b98] sm:$0xff]
        %v1076 = vld [vmem:[%s138 + $0x1ba0] sm:$0xff]
        %v1077 = vld [vmem:[%s138 + $0x1ba8] sm:$0xff]
        %v1078 = vld [vmem:[%s138 + $0x1bb0] sm:$0xff]
        %v1079 = vld [vmem:[%s138 + $0x1bb8] sm:$0xff]
        %v1080 = vld [vmem:[%s138 + $0x1bc0] sm:$0xff]
        %v1081 = vld [vmem:[%s138 + $0x1bc8] sm:$0xff]
        %v1082 = vld [vmem:[%s138 + $0x1bd0] sm:$0xff]
        %v1083 = vld [vmem:[%s138 + $0x1bd8] sm:$0xff]
        %v1084 = vld [vmem:[%s138 + $0x1be0] sm:$0xff]
        %v1085 = vld [vmem:[%s138 + $0x1be8] sm:$0xff]
        %v1086 = vld [vmem:[%s138 + $0x1bf0] sm:$0xff]
        %v1087 = vld [vmem:[%s138 + $0x1bf8] sm:$0xff]
        %v1088 = vld [vmem:[%s138 + $0x1c00] sm:$0xff]
        %v1089 = vld [vmem:[%s138 + $0x1c08] sm:$0xff]
        %v1090 = vld [vmem:[%s138 + $0x1c10] sm:$0xff]
        %v1091 = vld [vmem:[%s138 + $0x1c18] sm:$0xff]
        %v1092 = vld [vmem:[%s138 + $0x1c20] sm:$0xff]
        %v1093 = vld [vmem:[%s138 + $0x1c28] sm:$0xff]
        %v1094 = vld [vmem:[%s138 + $0x1c30] sm:$0xff]
        %v1095 = vld [vmem:[%s138 + $0x1c38] sm:$0xff]
        %v1096 = vld [vmem:[%s138 + $0x1c40] sm:$0xff]
        %v1097 = vld [vmem:[%s138 + $0x1c48] sm:$0xff]
        %v1098 = vld [vmem:[%s138 + $0x1c50] sm:$0xff]
        %v1099 = vld [vmem:[%s138 + $0x1c58] sm:$0xff]
        %v1100 = vld [vmem:[%s138 + $0x1c60] sm:$0xff]
        %v1101 = vld [vmem:[%s138 + $0x1c68] sm:$0xff]
        %v1102 = vld [vmem:[%s138 + $0x1c70] sm:$0xff]
        %v1103 = vld [vmem:[%s138 + $0x1c78] sm:$0xff]
        %v1104 = vld [vmem:[%s138 + $0x1c80] sm:$0xff]
        %v1105 = vld [vmem:[%s138 + $0x1c88] sm:$0xff]
        %v1106 = vld [vmem:[%s138 + $0x1c90] sm:$0xff]
        %v1107 = vld [vmem:[%s138 + $0x1c98] sm:$0xff]
        %v1108 = vld [vmem:[%s138 + $0x1ca0] sm:$0xff]
        %v1109 = vld [vmem:[%s138 + $0x1ca8] sm:$0xff]
        %v1110 = vld [vmem:[%s138 + $0x1cb0] sm:$0xff]
        %v1111 = vld [vmem:[%s138 + $0x1cb8] sm:$0xff]
        %v1112 = vld [vmem:[%s138 + $0x1cc0] sm:$0xff]
        %v1113 = vld [vmem:[%s138 + $0x1cc8] sm:$0xff]
        %v1114 = vld [vmem:[%s138 + $0x1cd0] sm:$0xff]
        %v1115 = vld [vmem:[%s138 + $0x1cd8] sm:$0xff]
        %v1116 = vld [vmem:[%s138 + $0x1ce0] sm:$0xff]
        %v1117 = vld [vmem:[%s138 + $0x1ce8] sm:$0xff]
        %v1118 = vld [vmem:[%s138 + $0x1cf0] sm:$0xff]
        %v1119 = vld [vmem:[%s138 + $0x1cf8] sm:$0xff]
        %v1120 = vld [vmem:[%s138 + $0x1d00] sm:$0xff]
        %v1121 = vld [vmem:[%s138 + $0x1d08] sm:$0xff]
        %v1122 = vld [vmem:[%s138 + $0x1d10] sm:$0xff]
        %v1123 = vld [vmem:[%s138 + $0x1d18] sm:$0xff]
        %v1124 = vld [vmem:[%s138 + $0x1d20] sm:$0xff]
        %v1125 = vld [vmem:[%s138 + $0x1d28] sm:$0xff]
        %v1126 = vld [vmem:[%s138 + $0x1d30] sm:$0xff]
        %v1127 = vld [vmem:[%s138 + $0x1d38] sm:$0xff]
        %v1128 = vld [vmem:[%s138 + $0x1d40] sm:$0xff]
        %v1129 = vld [vmem:[%s138 + $0x1d48] sm:$0xff]
        %v1130 = vld [vmem:[%s138 + $0x1d50] sm:$0xff]
        %v1131 = vld [vmem:[%s138 + $0x1d58] sm:$0xff]
        %v1132 = vld [vmem:[%s138 + $0x1d60] sm:$0xff]
        %v1133 = vld [vmem:[%s138 + $0x1d68] sm:$0xff]
        %v1134 = vld [vmem:[%s138 + $0x1d70] sm:$0xff]
        %v1135 = vld [vmem:[%s138 + $0x1d78] sm:$0xff]
        %v1136 = vld [vmem:[%s138 + $0x1d80] sm:$0xff]
        %v1137 = vld [vmem:[%s138 + $0x1d88] sm:$0xff]
        %v1138 = vld [vmem:[%s138 + $0x1d90] sm:$0xff]
        %v1139 = vld [vmem:[%s138 + $0x1d98] sm:$0xff]
        %v1140 = vld [vmem:[%s138 + $0x1da0] sm:$0xff]
        %v1141 = vld [vmem:[%s138 + $0x1da8] sm:$0xff]
        %v1142 = vld [vmem:[%s138 + $0x1db0] sm:$0xff]
        %v1143 = vld [vmem:[%s138 + $0x1db8] sm:$0xff]
        %v1144 = vld [vmem:[%s138 + $0x1dc0] sm:$0xff]
        %v1145 = vld [vmem:[%s138 + $0x1dc8] sm:$0xff]
        %v1146 = vld [vmem:[%s138 + $0x1dd0] sm:$0xff]
        %v1147 = vld [vmem:[%s138 + $0x1dd8] sm:$0xff]
        %v1148 = vld [vmem:[%s138 + $0x1de0] sm:$0xff]
        %v1149 = vld [vmem:[%s138 + $0x1de8] sm:$0xff]
        %v1150 = vld [vmem:[%s138 + $0x1df0] sm:$0xff]
        %v1151 = vld [vmem:[%s138 + $0x1df8] sm:$0xff]
        %v1152 = vld [vmem:[%s138 + $0x1e00] sm:$0xff]
        %v1153 = vld [vmem:[%s138 + $0x1e08] sm:$0xff]
        %v1154 = vld [vmem:[%s138 + $0x1e10] sm:$0xff]
        %v1155 = vld [vmem:[%s138 + $0x1e18] sm:$0xff]
        %v1156 = vld [vmem:[%s138 + $0x1e20] sm:$0xff]
        %v1157 = vld [vmem:[%s138 + $0x1e28] sm:$0xff]
        %v1158 = vld [vmem:[%s138 + $0x1e30] sm:$0xff]
        %v1159 = vld [vmem:[%s138 + $0x1e38] sm:$0xff]
        %v1160 = vld [vmem:[%s138 + $0x1e40] sm:$0xff]
        %v1161 = vld [vmem:[%s138 + $0x1e48] sm:$0xff]
        %v1162 = vld [vmem:[%s138 + $0x1e50] sm:$0xff]
        %v1163 = vld [vmem:[%s138 + $0x1e58] sm:$0xff]
        %v1164 = vld [vmem:[%s138 + $0x1e60] sm:$0xff]
        %v1165 = vld [vmem:[%s138 + $0x1e68] sm:$0xff]
        %v1166 = vld [vmem:[%s138 + $0x1e70] sm:$0xff]
        %v1167 = vld [vmem:[%s138 + $0x1e78] sm:$0xff]
        %v1168 = vld [vmem:[%s138 + $0x1e80] sm:$0xff]
        %v1169 = vld [vmem:[%s138 + $0x1e88] sm:$0xff]
        %v1170 = vld [vmem:[%s138 + $0x1e90] sm:$0xff]
        %v1171 = vld [vmem:[%s138 + $0x1e98] sm:$0xff]
        %v1172 = vld [vmem:[%s138 + $0x1ea0] sm:$0xff]
        %v1173 = vld [vmem:[%s138 + $0x1ea8] sm:$0xff]
        %v1174 = vld [vmem:[%s138 + $0x1eb0] sm:$0xff]
        %v1175 = vld [vmem:[%s138 + $0x1eb8] sm:$0xff]
        %v1176 = vld [vmem:[%s138 + $0x1ec0] sm:$0xff]
        %v1177 = vld [vmem:[%s138 + $0x1ec8] sm:$0xff]
        %v1178 = vld [vmem:[%s138 + $0x1ed0] sm:$0xff]
        %v1179 = vld [vmem:[%s138 + $0x1ed8] sm:$0xff]
        %v1180 = vld [vmem:[%s138 + $0x1ee0] sm:$0xff]
        %v1181 = vld [vmem:[%s138 + $0x1ee8] sm:$0xff]
        %v1182 = vld [vmem:[%s138 + $0x1ef0] sm:$0xff]
        %v1183 = vld [vmem:[%s138 + $0x1ef8] sm:$0xff]
        %v1184 = vld [vmem:[%s138 + $0x1f00] sm:$0xff]
        %v1185 = vld [vmem:[%s138 + $0x1f08] sm:$0xff]
        %v1186 = vld [vmem:[%s138 + $0x1f10] sm:$0xff]
        %v1187 = vld [vmem:[%s138 + $0x1f18] sm:$0xff]
        %v1188 = vld [vmem:[%s138 + $0x1f20] sm:$0xff]
        %v1189 = vld [vmem:[%s138 + $0x1f28] sm:$0xff]
        %v1190 = vld [vmem:[%s138 + $0x1f30] sm:$0xff]
        %v1191 = vld [vmem:[%s138 + $0x1f38] sm:$0xff]
        %v1192 = vld [vmem:[%s138 + $0x1f40] sm:$0xff]
        %v1193 = vld [vmem:[%s138 + $0x1f48] sm:$0xff]
        %v1194 = vld [vmem:[%s138 + $0x1f50] sm:$0xff]
        %v1195 = vld [vmem:[%s138 + $0x1f58] sm:$0xff]
        %v1196 = vld [vmem:[%s138 + $0x1f60] sm:$0xff]
        %v1197 = vld [vmem:[%s138 + $0x1f68] sm:$0xff]
        %v1198 = vld [vmem:[%s138 + $0x1f70] sm:$0xff]
        %v1199 = vld [vmem:[%s138 + $0x1f78] sm:$0xff]
        %v1200 = vld [vmem:[%s138 + $0x1f80] sm:$0xff]
        %v1201 = vld [vmem:[%s138 + $0x1f88] sm:$0xff]
        %v1202 = vld [vmem:[%s138 + $0x1f90] sm:$0xff]
        %v1203 = vld [vmem:[%s138 + $0x1f98] sm:$0xff]
        %v1204 = vld [vmem:[%s138 + $0x1fa0] sm:$0xff]
        %v1205 = vld [vmem:[%s138 + $0x1fa8] sm:$0xff]
        %v1206 = vld [vmem:[%s138 + $0x1fb0] sm:$0xff]
        %v1207 = vld [vmem:[%s138 + $0x1fb8] sm:$0xff]
        %v1208 = vld [vmem:[%s138 + $0x1fc0] sm:$0xff]
        %v1209 = vld [vmem:[%s138 + $0x1fc8] sm:$0xff]
        %v1210 = vld [vmem:[%s138 + $0x1fd0] sm:$0xff]
        %v1211 = vld [vmem:[%s138 + $0x1fd8] sm:$0xff]
        %v1212 = vld [vmem:[%s138 + $0x1fe0] sm:$0xff]
        %v1213 = vld [vmem:[%s138 + $0x1fe8] sm:$0xff]
        %v1214 = vld [vmem:[%s138 + $0x1ff0] sm:$0xff]
        %v1215 = vld [vmem:[%s138 + $0x1ff8] sm:$0xff]
        %v1248 = vunpack.c.l.b16 %v160
        %v1249 = vunpack.c.h.b16 %v160
        %v1250 = vunpack.c.l.b16 %v161
        %v1251 = vunpack.c.h.b16 %v161
        %v1252 = vunpack.c.l.b16 %v162
        %v1253 = vunpack.c.h.b16 %v162
        %v1254 = vunpack.c.l.b16 %v163
        %v1255 = vunpack.c.h.b16 %v163
        %v1256 = vunpack.c.l.b16 %v164
        %v1257 = vunpack.c.h.b16 %v164
        %v1258 = vunpack.c.l.b16 %v165
        %v1259 = vunpack.c.h.b16 %v165
        %v1260 = vunpack.c.l.b16 %v166
        %v1261 = vunpack.c.h.b16 %v166
        %v1262 = vunpack.c.l.b16 %v167
        %v1263 = vunpack.c.h.b16 %v167
        %v1264 = vunpack.c.l.b16 %v168
        %v1265 = vunpack.c.h.b16 %v168
        %v1266 = vunpack.c.l.b16 %v169
        %v1267 = vunpack.c.h.b16 %v169
        %v1268 = vunpack.c.l.b16 %v170
        %v1269 = vunpack.c.h.b16 %v170
        %v1270 = vunpack.c.l.b16 %v171
        %v1271 = vunpack.c.h.b16 %v171
        %v1272 = vunpack.c.l.b16 %v172
        %v1273 = vunpack.c.h.b16 %v172
        %v1274 = vunpack.c.l.b16 %v173
        %v1275 = vunpack.c.h.b16 %v173
        %v1276 = vunpack.c.l.b16 %v174
        %v1277 = vunpack.c.h.b16 %v174
        %v1278 = vunpack.c.l.b16 %v175
        %v1279 = vunpack.c.h.b16 %v175
        %v1280 = vunpack.c.l.b16 %v176
        %v1281 = vunpack.c.h.b16 %v176
        %v1282 = vunpack.c.l.b16 %v177
        %v1283 = vunpack.c.h.b16 %v177
        %v1284 = vunpack.c.l.b16 %v178
        %v1285 = vunpack.c.h.b16 %v178
        %v1286 = vunpack.c.l.b16 %v179
        %v1287 = vunpack.c.h.b16 %v179
        %v1288 = vunpack.c.l.b16 %v180
        %v1289 = vunpack.c.h.b16 %v180
        %v1290 = vunpack.c.l.b16 %v181
        %v1291 = vunpack.c.h.b16 %v181
        %v1292 = vunpack.c.l.b16 %v182
        %v1293 = vunpack.c.h.b16 %v182
        %v1294 = vunpack.c.l.b16 %v183
        %v1295 = vunpack.c.h.b16 %v183
        %v1296 = vunpack.c.l.b16 %v184
        %v1297 = vunpack.c.h.b16 %v184
        %v1298 = vunpack.c.l.b16 %v185
        %v1299 = vunpack.c.h.b16 %v185
        %v1300 = vunpack.c.l.b16 %v186
        %v1301 = vunpack.c.h.b16 %v186
        %v1302 = vunpack.c.l.b16 %v187
        %v1303 = vunpack.c.h.b16 %v187
        %v1304 = vunpack.c.l.b16 %v188
        %v1305 = vunpack.c.h.b16 %v188
        %v1306 = vunpack.c.l.b16 %v189
        %v1307 = vunpack.c.h.b16 %v189
        %v1308 = vunpack.c.l.b16 %v190
        %v1309 = vunpack.c.h.b16 %v190
        %v1310 = vunpack.c.l.b16 %v191
        %v1311 = vunpack.c.h.b16 %v191
        %v1312 = vpack.c.b16 %v1264, %v1248
        %v1313 = vpack.c.b16 %v1265, %v1249
        %v1314 = vpack.c.b16 %v1266, %v1250
        %v1315 = vpack.c.b16 %v1267, %v1251
        %v1316 = vpack.c.b16 %v1268, %v1252
        %v1317 = vpack.c.b16 %v1269, %v1253
        %v1318 = vpack.c.b16 %v1270, %v1254
        %v1319 = vpack.c.b16 %v1271, %v1255
        %v1320 = vpack.c.b16 %v1272, %v1256
        %v1321 = vpack.c.b16 %v1273, %v1257
        %v1322 = vpack.c.b16 %v1274, %v1258
        %v1323 = vpack.c.b16 %v1275, %v1259
        %v1324 = vpack.c.b16 %v1276, %v1260
        %v1325 = vpack.c.b16 %v1277, %v1261
        %v1326 = vpack.c.b16 %v1278, %v1262
        %v1327 = vpack.c.b16 %v1279, %v1263
        %v1328 = vpack.c.b16 %v1296, %v1280
        %v1329 = vpack.c.b16 %v1297, %v1281
        %v1330 = vpack.c.b16 %v1298, %v1282
        %v1331 = vpack.c.b16 %v1299, %v1283
        %v1332 = vpack.c.b16 %v1300, %v1284
        %v1333 = vpack.c.b16 %v1301, %v1285
        %v1334 = vpack.c.b16 %v1302, %v1286
        %v1335 = vpack.c.b16 %v1303, %v1287
        %v1336 = vpack.c.b16 %v1304, %v1288
        %v1337 = vpack.c.b16 %v1305, %v1289
        %v1338 = vpack.c.b16 %v1306, %v1290
        %v1339 = vpack.c.b16 %v1307, %v1291
        %v1340 = vpack.c.b16 %v1308, %v1292
        %v1341 = vpack.c.b16 %v1309, %v1293
        %v1342 = vpack.c.b16 %v1310, %v1294
        %v1343 = vpack.c.b16 %v1311, %v1295
        %v2400 = vunpack.c.l.b16 %v192
        %v2401 = vunpack.c.h.b16 %v192
        %v2402 = vunpack.c.l.b16 %v193
        %v2403 = vunpack.c.h.b16 %v193
        %v2404 = vunpack.c.l.b16 %v194
        %v2405 = vunpack.c.h.b16 %v194
        %v2406 = vunpack.c.l.b16 %v195
        %v2407 = vunpack.c.h.b16 %v195
        %v2408 = vunpack.c.l.b16 %v196
        %v2409 = vunpack.c.h.b16 %v196
        %v2410 = vunpack.c.l.b16 %v197
        %v2411 = vunpack.c.h.b16 %v197
        %v2412 = vunpack.c.l.b16 %v198
        %v2413 = vunpack.c.h.b16 %v198
        %v2414 = vunpack.c.l.b16 %v199
        %v2415 = vunpack.c.h.b16 %v199
        %v2416 = vunpack.c.l.b16 %v200
        %v2417 = vunpack.c.h.b16 %v200
        %v2418 = vunpack.c.l.b16 %v201
        %v2419 = vunpack.c.h.b16 %v201
        %v2420 = vunpack.c.l.b16 %v202
        %v2421 = vunpack.c.h.b16 %v202
        %v2422 = vunpack.c.l.b16 %v203
        %v2423 = vunpack.c.h.b16 %v203
        %v2424 = vunpack.c.l.b16 %v204
        %v2425 = vunpack.c.h.b16 %v204
        %v2426 = vunpack.c.l.b16 %v205
        %v2427 = vunpack.c.h.b16 %v205
        %v2428 = vunpack.c.l.b16 %v206
        %v2429 = vunpack.c.h.b16 %v206
        %v2430 = vunpack.c.l.b16 %v207
        %v2431 = vunpack.c.h.b16 %v207
        %v2432 = vunpack.c.l.b16 %v208
        %v2433 = vunpack.c.h.b16 %v208
        %v2434 = vunpack.c.l.b16 %v209
        %v2435 = vunpack.c.h.b16 %v209
        %v2436 = vunpack.c.l.b16 %v210
        %v2437 = vunpack.c.h.b16 %v210
        %v2438 = vunpack.c.l.b16 %v211
        %v2439 = vunpack.c.h.b16 %v211
        %v2440 = vunpack.c.l.b16 %v212
        %v2441 = vunpack.c.h.b16 %v212
        %v2442 = vunpack.c.l.b16 %v213
        %v2443 = vunpack.c.h.b16 %v213
        %v2444 = vunpack.c.l.b16 %v214
        %v2445 = vunpack.c.h.b16 %v214
        %v2446 = vunpack.c.l.b16 %v215
        %v2447 = vunpack.c.h.b16 %v215
        %v2448 = vunpack.c.l.b16 %v216
        %v2449 = vunpack.c.h.b16 %v216
        %v2450 = vunpack.c.l.b16 %v217
        %v2451 = vunpack.c.h.b16 %v217
        %v2452 = vunpack.c.l.b16 %v218
        %v2453 = vunpack.c.h.b16 %v218
        %v2454 = vunpack.c.l.b16 %v219
        %v2455 = vunpack.c.h.b16 %v219
        %v2456 = vunpack.c.l.b16 %v220
        %v2457 = vunpack.c.h.b16 %v220
        %v2458 = vunpack.c.l.b16 %v221
        %v2459 = vunpack.c.h.b16 %v221
        %v2460 = vunpack.c.l.b16 %v222
        %v2461 = vunpack.c.h.b16 %v222
        %v2462 = vunpack.c.l.b16 %v223
        %v2463 = vunpack.c.h.b16 %v223
        %v2464 = vunpack.c.l.b16 %v224
        %v2465 = vunpack.c.h.b16 %v224
        %v2466 = vunpack.c.l.b16 %v225
        %v2467 = vunpack.c.h.b16 %v225
        %v2468 = vunpack.c.l.b16 %v226
        %v2469 = vunpack.c.h.b16 %v226
        %v2470 = vunpack.c.l.b16 %v227
        %v2471 = vunpack.c.h.b16 %v227
        %v2472 = vunpack.c.l.b16 %v228
        %v2473 = vunpack.c.h.b16 %v228
        %v2474 = vunpack.c.l.b16 %v229
        %v2475 = vunpack.c.h.b16 %v229
        %v2476 = vunpack.c.l.b16 %v230
        %v2477 = vunpack.c.h.b16 %v230
        %v2478 = vunpack.c.l.b16 %v231
        %v2479 = vunpack.c.h.b16 %v231
        %v2480 = vunpack.c.l.b16 %v232
        %v2481 = vunpack.c.h.b16 %v232
        %v2482 = vunpack.c.l.b16 %v233
        %v2483 = vunpack.c.h.b16 %v233
        %v2484 = vunpack.c.l.b16 %v234
        %v2485 = vunpack.c.h.b16 %v234
        %v2486 = vunpack.c.l.b16 %v235
        %v2487 = vunpack.c.h.b16 %v235
        %v2488 = vunpack.c.l.b16 %v236
        %v2489 = vunpack.c.h.b16 %v236
        %v2490 = vunpack.c.l.b16 %v237
        %v2491 = vunpack.c.h.b16 %v237
        %v2492 = vunpack.c.l.b16 %v238
        %v2493 = vunpack.c.h.b16 %v238
        %v2494 = vunpack.c.l.b16 %v239
        %v2495 = vunpack.c.h.b16 %v239
        %v2496 = vunpack.c.l.b16 %v240
        %v2497 = vunpack.c.h.b16 %v240
        %v2498 = vunpack.c.l.b16 %v241
        %v2499 = vunpack.c.h.b16 %v241
        %v2500 = vunpack.c.l.b16 %v242
        %v2501 = vunpack.c.h.b16 %v242
        %v2502 = vunpack.c.l.b16 %v243
        %v2503 = vunpack.c.h.b16 %v243
        %v2504 = vunpack.c.l.b16 %v244
        %v2505 = vunpack.c.h.b16 %v244
        %v2506 = vunpack.c.l.b16 %v245
        %v2507 = vunpack.c.h.b16 %v245
        %v2508 = vunpack.c.l.b16 %v246
        %v2509 = vunpack.c.h.b16 %v246
        %v2510 = vunpack.c.l.b16 %v247
        %v2511 = vunpack.c.h.b16 %v247
        %v2512 = vunpack.c.l.b16 %v248
        %v2513 = vunpack.c.h.b16 %v248
        %v2514 = vunpack.c.l.b16 %v249
        %v2515 = vunpack.c.h.b16 %v249
        %v2516 = vunpack.c.l.b16 %v250
        %v2517 = vunpack.c.h.b16 %v250
        %v2518 = vunpack.c.l.b16 %v251
        %v2519 = vunpack.c.h.b16 %v251
        %v2520 = vunpack.c.l.b16 %v252
        %v2521 = vunpack.c.h.b16 %v252
        %v2522 = vunpack.c.l.b16 %v253
        %v2523 = vunpack.c.h.b16 %v253
        %v2524 = vunpack.c.l.b16 %v254
        %v2525 = vunpack.c.h.b16 %v254
        %v2526 = vunpack.c.l.b16 %v255
        %v2527 = vunpack.c.h.b16 %v255
        %v2528 = vunpack.c.l.b16 %v256
        %v2529 = vunpack.c.h.b16 %v256
        %v2530 = vunpack.c.l.b16 %v257
        %v2531 = vunpack.c.h.b16 %v257
        %v2532 = vunpack.c.l.b16 %v258
        %v2533 = vunpack.c.h.b16 %v258
        %v2534 = vunpack.c.l.b16 %v259
        %v2535 = vunpack.c.h.b16 %v259
        %v2536 = vunpack.c.l.b16 %v260
        %v2537 = vunpack.c.h.b16 %v260
        %v2538 = vunpack.c.l.b16 %v261
        %v2539 = vunpack.c.h.b16 %v261
        %v2540 = vunpack.c.l.b16 %v262
        %v2541 = vunpack.c.h.b16 %v262
        %v2542 = vunpack.c.l.b16 %v263
        %v2543 = vunpack.c.h.b16 %v263
        %v2544 = vunpack.c.l.b16 %v264
        %v2545 = vunpack.c.h.b16 %v264
        %v2546 = vunpack.c.l.b16 %v265
        %v2547 = vunpack.c.h.b16 %v265
        %v2548 = vunpack.c.l.b16 %v266
        %v2549 = vunpack.c.h.b16 %v266
        %v2550 = vunpack.c.l.b16 %v267
        %v2551 = vunpack.c.h.b16 %v267
        %v2552 = vunpack.c.l.b16 %v268
        %v2553 = vunpack.c.h.b16 %v268
        %v2554 = vunpack.c.l.b16 %v269
        %v2555 = vunpack.c.h.b16 %v269
        %v2556 = vunpack.c.l.b16 %v270
        %v2557 = vunpack.c.h.b16 %v270
        %v2558 = vunpack.c.l.b16 %v271
        %v2559 = vunpack.c.h.b16 %v271
        %v2560 = vunpack.c.l.b16 %v272
        %v2561 = vunpack.c.h.b16 %v272
        %v2562 = vunpack.c.l.b16 %v273
        %v2563 = vunpack.c.h.b16 %v273
        %v2564 = vunpack.c.l.b16 %v274
        %v2565 = vunpack.c.h.b16 %v274
        %v2566 = vunpack.c.l.b16 %v275
        %v2567 = vunpack.c.h.b16 %v275
        %v2568 = vunpack.c.l.b16 %v276
        %v2569 = vunpack.c.h.b16 %v276
        %v2570 = vunpack.c.l.b16 %v277
        %v2571 = vunpack.c.h.b16 %v277
        %v2572 = vunpack.c.l.b16 %v278
        %v2573 = vunpack.c.h.b16 %v278
        %v2574 = vunpack.c.l.b16 %v279
        %v2575 = vunpack.c.h.b16 %v279
        %v2576 = vunpack.c.l.b16 %v280
        %v2577 = vunpack.c.h.b16 %v280
        %v2578 = vunpack.c.l.b16 %v281
        %v2579 = vunpack.c.h.b16 %v281
        %v2580 = vunpack.c.l.b16 %v282
        %v2581 = vunpack.c.h.b16 %v282
        %v2582 = vunpack.c.l.b16 %v283
        %v2583 = vunpack.c.h.b16 %v283
        %v2584 = vunpack.c.l.b16 %v284
        %v2585 = vunpack.c.h.b16 %v284
        %v2586 = vunpack.c.l.b16 %v285
        %v2587 = vunpack.c.h.b16 %v285
        %v2588 = vunpack.c.l.b16 %v286
        %v2589 = vunpack.c.h.b16 %v286
        %v2590 = vunpack.c.l.b16 %v287
        %v2591 = vunpack.c.h.b16 %v287
        %v2592 = vunpack.c.l.b16 %v288
        %v2593 = vunpack.c.h.b16 %v288
        %v2594 = vunpack.c.l.b16 %v289
        %v2595 = vunpack.c.h.b16 %v289
        %v2596 = vunpack.c.l.b16 %v290
        %v2597 = vunpack.c.h.b16 %v290
        %v2598 = vunpack.c.l.b16 %v291
        %v2599 = vunpack.c.h.b16 %v291
        %v2600 = vunpack.c.l.b16 %v292
        %v2601 = vunpack.c.h.b16 %v292
        %v2602 = vunpack.c.l.b16 %v293
        %v2603 = vunpack.c.h.b16 %v293
        %v2604 = vunpack.c.l.b16 %v294
        %v2605 = vunpack.c.h.b16 %v294
        %v2606 = vunpack.c.l.b16 %v295
        %v2607 = vunpack.c.h.b16 %v295
        %v2608 = vunpack.c.l.b16 %v296
        %v2609 = vunpack.c.h.b16 %v296
        %v2610 = vunpack.c.l.b16 %v297
        %v2611 = vunpack.c.h.b16 %v297
        %v2612 = vunpack.c.l.b16 %v298
        %v2613 = vunpack.c.h.b16 %v298
        %v2614 = vunpack.c.l.b16 %v299
        %v2615 = vunpack.c.h.b16 %v299
        %v2616 = vunpack.c.l.b16 %v300
        %v2617 = vunpack.c.h.b16 %v300
        %v2618 = vunpack.c.l.b16 %v301
        %v2619 = vunpack.c.h.b16 %v301
        %v2620 = vunpack.c.l.b16 %v302
        %v2621 = vunpack.c.h.b16 %v302
        %v2622 = vunpack.c.l.b16 %v303
        %v2623 = vunpack.c.h.b16 %v303
        %v2624 = vunpack.c.l.b16 %v304
        %v2625 = vunpack.c.h.b16 %v304
        %v2626 = vunpack.c.l.b16 %v305
        %v2627 = vunpack.c.h.b16 %v305
        %v2628 = vunpack.c.l.b16 %v306
        %v2629 = vunpack.c.h.b16 %v306
        %v2630 = vunpack.c.l.b16 %v307
        %v2631 = vunpack.c.h.b16 %v307
        %v2632 = vunpack.c.l.b16 %v308
        %v2633 = vunpack.c.h.b16 %v308
        %v2634 = vunpack.c.l.b16 %v309
        %v2635 = vunpack.c.h.b16 %v309
        %v2636 = vunpack.c.l.b16 %v310
        %v2637 = vunpack.c.h.b16 %v310
        %v2638 = vunpack.c.l.b16 %v311
        %v2639 = vunpack.c.h.b16 %v311
        %v2640 = vunpack.c.l.b16 %v312
        %v2641 = vunpack.c.h.b16 %v312
        %v2642 = vunpack.c.l.b16 %v313
        %v2643 = vunpack.c.h.b16 %v313
        %v2644 = vunpack.c.l.b16 %v314
        %v2645 = vunpack.c.h.b16 %v314
        %v2646 = vunpack.c.l.b16 %v315
        %v2647 = vunpack.c.h.b16 %v315
        %v2648 = vunpack.c.l.b16 %v316
        %v2649 = vunpack.c.h.b16 %v316
        %v2650 = vunpack.c.l.b16 %v317
        %v2651 = vunpack.c.h.b16 %v317
        %v2652 = vunpack.c.l.b16 %v318
        %v2653 = vunpack.c.h.b16 %v318
        %v2654 = vunpack.c.l.b16 %v319
        %v2655 = vunpack.c.h.b16 %v319
        %v2656 = vunpack.c.l.b16 %v320
        %v2657 = vunpack.c.h.b16 %v320
        %v2658 = vunpack.c.l.b16 %v321
        %v2659 = vunpack.c.h.b16 %v321
        %v2660 = vunpack.c.l.b16 %v322
        %v2661 = vunpack.c.h.b16 %v322
        %v2662 = vunpack.c.l.b16 %v323
        %v2663 = vunpack.c.h.b16 %v323
        %v2664 = vunpack.c.l.b16 %v324
        %v2665 = vunpack.c.h.b16 %v324
        %v2666 = vunpack.c.l.b16 %v325
        %v2667 = vunpack.c.h.b16 %v325
        %v2668 = vunpack.c.l.b16 %v326
        %v2669 = vunpack.c.h.b16 %v326
        %v2670 = vunpack.c.l.b16 %v327
        %v2671 = vunpack.c.h.b16 %v327
        %v2672 = vunpack.c.l.b16 %v328
        %v2673 = vunpack.c.h.b16 %v328
        %v2674 = vunpack.c.l.b16 %v329
        %v2675 = vunpack.c.h.b16 %v329
        %v2676 = vunpack.c.l.b16 %v330
        %v2677 = vunpack.c.h.b16 %v330
        %v2678 = vunpack.c.l.b16 %v331
        %v2679 = vunpack.c.h.b16 %v331
        %v2680 = vunpack.c.l.b16 %v332
        %v2681 = vunpack.c.h.b16 %v332
        %v2682 = vunpack.c.l.b16 %v333
        %v2683 = vunpack.c.h.b16 %v333
        %v2684 = vunpack.c.l.b16 %v334
        %v2685 = vunpack.c.h.b16 %v334
        %v2686 = vunpack.c.l.b16 %v335
        %v2687 = vunpack.c.h.b16 %v335
        %v2688 = vunpack.c.l.b16 %v336
        %v2689 = vunpack.c.h.b16 %v336
        %v2690 = vunpack.c.l.b16 %v337
        %v2691 = vunpack.c.h.b16 %v337
        %v2692 = vunpack.c.l.b16 %v338
        %v2693 = vunpack.c.h.b16 %v338
        %v2694 = vunpack.c.l.b16 %v339
        %v2695 = vunpack.c.h.b16 %v339
        %v2696 = vunpack.c.l.b16 %v340
        %v2697 = vunpack.c.h.b16 %v340
        %v2698 = vunpack.c.l.b16 %v341
        %v2699 = vunpack.c.h.b16 %v341
        %v2700 = vunpack.c.l.b16 %v342
        %v2701 = vunpack.c.h.b16 %v342
        %v2702 = vunpack.c.l.b16 %v343
        %v2703 = vunpack.c.h.b16 %v343
        %v2704 = vunpack.c.l.b16 %v344
        %v2705 = vunpack.c.h.b16 %v344
        %v2706 = vunpack.c.l.b16 %v345
        %v2707 = vunpack.c.h.b16 %v345
        %v2708 = vunpack.c.l.b16 %v346
        %v2709 = vunpack.c.h.b16 %v346
        %v2710 = vunpack.c.l.b16 %v347
        %v2711 = vunpack.c.h.b16 %v347
        %v2712 = vunpack.c.l.b16 %v348
        %v2713 = vunpack.c.h.b16 %v348
        %v2714 = vunpack.c.l.b16 %v349
        %v2715 = vunpack.c.h.b16 %v349
        %v2716 = vunpack.c.l.b16 %v350
        %v2717 = vunpack.c.h.b16 %v350
        %v2718 = vunpack.c.l.b16 %v351
        %v2719 = vunpack.c.h.b16 %v351
        %v2720 = vunpack.c.l.b16 %v352
        %v2721 = vunpack.c.h.b16 %v352
        %v2722 = vunpack.c.l.b16 %v353
        %v2723 = vunpack.c.h.b16 %v353
        %v2724 = vunpack.c.l.b16 %v354
        %v2725 = vunpack.c.h.b16 %v354
        %v2726 = vunpack.c.l.b16 %v355
        %v2727 = vunpack.c.h.b16 %v355
        %v2728 = vunpack.c.l.b16 %v356
        %v2729 = vunpack.c.h.b16 %v356
        %v2730 = vunpack.c.l.b16 %v357
        %v2731 = vunpack.c.h.b16 %v357
        %v2732 = vunpack.c.l.b16 %v358
        %v2733 = vunpack.c.h.b16 %v358
        %v2734 = vunpack.c.l.b16 %v359
        %v2735 = vunpack.c.h.b16 %v359
        %v2736 = vunpack.c.l.b16 %v360
        %v2737 = vunpack.c.h.b16 %v360
        %v2738 = vunpack.c.l.b16 %v361
        %v2739 = vunpack.c.h.b16 %v361
        %v2740 = vunpack.c.l.b16 %v362
        %v2741 = vunpack.c.h.b16 %v362
        %v2742 = vunpack.c.l.b16 %v363
        %v2743 = vunpack.c.h.b16 %v363
        %v2744 = vunpack.c.l.b16 %v364
        %v2745 = vunpack.c.h.b16 %v364
        %v2746 = vunpack.c.l.b16 %v365
        %v2747 = vunpack.c.h.b16 %v365
        %v2748 = vunpack.c.l.b16 %v366
        %v2749 = vunpack.c.h.b16 %v366
        %v2750 = vunpack.c.l.b16 %v367
        %v2751 = vunpack.c.h.b16 %v367
        %v2752 = vunpack.c.l.b16 %v368
        %v2753 = vunpack.c.h.b16 %v368
        %v2754 = vunpack.c.l.b16 %v369
        %v2755 = vunpack.c.h.b16 %v369
        %v2756 = vunpack.c.l.b16 %v370
        %v2757 = vunpack.c.h.b16 %v370
        %v2758 = vunpack.c.l.b16 %v371
        %v2759 = vunpack.c.h.b16 %v371
        %v2760 = vunpack.c.l.b16 %v372
        %v2761 = vunpack.c.h.b16 %v372
        %v2762 = vunpack.c.l.b16 %v373
        %v2763 = vunpack.c.h.b16 %v373
        %v2764 = vunpack.c.l.b16 %v374
        %v2765 = vunpack.c.h.b16 %v374
        %v2766 = vunpack.c.l.b16 %v375
        %v2767 = vunpack.c.h.b16 %v375
        %v2768 = vunpack.c.l.b16 %v376
        %v2769 = vunpack.c.h.b16 %v376
        %v2770 = vunpack.c.l.b16 %v377
        %v2771 = vunpack.c.h.b16 %v377
        %v2772 = vunpack.c.l.b16 %v378
        %v2773 = vunpack.c.h.b16 %v378
        %v2774 = vunpack.c.l.b16 %v379
        %v2775 = vunpack.c.h.b16 %v379
        %v2776 = vunpack.c.l.b16 %v380
        %v2777 = vunpack.c.h.b16 %v380
        %v2778 = vunpack.c.l.b16 %v381
        %v2779 = vunpack.c.h.b16 %v381
        %v2780 = vunpack.c.l.b16 %v382
        %v2781 = vunpack.c.h.b16 %v382
        %v2782 = vunpack.c.l.b16 %v383
        %v2783 = vunpack.c.h.b16 %v383
        %v2784 = vunpack.c.l.b16 %v384
        %v2785 = vunpack.c.h.b16 %v384
        %v2786 = vunpack.c.l.b16 %v385
        %v2787 = vunpack.c.h.b16 %v385
        %v2788 = vunpack.c.l.b16 %v386
        %v2789 = vunpack.c.h.b16 %v386
        %v2790 = vunpack.c.l.b16 %v387
        %v2791 = vunpack.c.h.b16 %v387
        %v2792 = vunpack.c.l.b16 %v388
        %v2793 = vunpack.c.h.b16 %v388
        %v2794 = vunpack.c.l.b16 %v389
        %v2795 = vunpack.c.h.b16 %v389
        %v2796 = vunpack.c.l.b16 %v390
        %v2797 = vunpack.c.h.b16 %v390
        %v2798 = vunpack.c.l.b16 %v391
        %v2799 = vunpack.c.h.b16 %v391
        %v2800 = vunpack.c.l.b16 %v392
        %v2801 = vunpack.c.h.b16 %v392
        %v2802 = vunpack.c.l.b16 %v393
        %v2803 = vunpack.c.h.b16 %v393
        %v2804 = vunpack.c.l.b16 %v394
        %v2805 = vunpack.c.h.b16 %v394
        %v2806 = vunpack.c.l.b16 %v395
        %v2807 = vunpack.c.h.b16 %v395
        %v2808 = vunpack.c.l.b16 %v396
        %v2809 = vunpack.c.h.b16 %v396
        %v2810 = vunpack.c.l.b16 %v397
        %v2811 = vunpack.c.h.b16 %v397
        %v2812 = vunpack.c.l.b16 %v398
        %v2813 = vunpack.c.h.b16 %v398
        %v2814 = vunpack.c.l.b16 %v399
        %v2815 = vunpack.c.h.b16 %v399
        %v2816 = vunpack.c.l.b16 %v400
        %v2817 = vunpack.c.h.b16 %v400
        %v2818 = vunpack.c.l.b16 %v401
        %v2819 = vunpack.c.h.b16 %v401
        %v2820 = vunpack.c.l.b16 %v402
        %v2821 = vunpack.c.h.b16 %v402
        %v2822 = vunpack.c.l.b16 %v403
        %v2823 = vunpack.c.h.b16 %v403
        %v2824 = vunpack.c.l.b16 %v404
        %v2825 = vunpack.c.h.b16 %v404
        %v2826 = vunpack.c.l.b16 %v405
        %v2827 = vunpack.c.h.b16 %v405
        %v2828 = vunpack.c.l.b16 %v406
        %v2829 = vunpack.c.h.b16 %v406
        %v2830 = vunpack.c.l.b16 %v407
        %v2831 = vunpack.c.h.b16 %v407
        %v2832 = vunpack.c.l.b16 %v408
        %v2833 = vunpack.c.h.b16 %v408
        %v2834 = vunpack.c.l.b16 %v409
        %v2835 = vunpack.c.h.b16 %v409
        %v2836 = vunpack.c.l.b16 %v410
        %v2837 = vunpack.c.h.b16 %v410
        %v2838 = vunpack.c.l.b16 %v411
        %v2839 = vunpack.c.h.b16 %v411
        %v2840 = vunpack.c.l.b16 %v412
        %v2841 = vunpack.c.h.b16 %v412
        %v2842 = vunpack.c.l.b16 %v413
        %v2843 = vunpack.c.h.b16 %v413
        %v2844 = vunpack.c.l.b16 %v414
        %v2845 = vunpack.c.h.b16 %v414
        %v2846 = vunpack.c.l.b16 %v415
        %v2847 = vunpack.c.h.b16 %v415
        %v2848 = vunpack.c.l.b16 %v416
        %v2849 = vunpack.c.h.b16 %v416
        %v2850 = vunpack.c.l.b16 %v417
        %v2851 = vunpack.c.h.b16 %v417
        %v2852 = vunpack.c.l.b16 %v418
        %v2853 = vunpack.c.h.b16 %v418
        %v2854 = vunpack.c.l.b16 %v419
        %v2855 = vunpack.c.h.b16 %v419
        %v2856 = vunpack.c.l.b16 %v420
        %v2857 = vunpack.c.h.b16 %v420
        %v2858 = vunpack.c.l.b16 %v421
        %v2859 = vunpack.c.h.b16 %v421
        %v2860 = vunpack.c.l.b16 %v422
        %v2861 = vunpack.c.h.b16 %v422
        %v2862 = vunpack.c.l.b16 %v423
        %v2863 = vunpack.c.h.b16 %v423
        %v2864 = vunpack.c.l.b16 %v424
        %v2865 = vunpack.c.h.b16 %v424
        %v2866 = vunpack.c.l.b16 %v425
        %v2867 = vunpack.c.h.b16 %v425
        %v2868 = vunpack.c.l.b16 %v426
        %v2869 = vunpack.c.h.b16 %v426
        %v2870 = vunpack.c.l.b16 %v427
        %v2871 = vunpack.c.h.b16 %v427
        %v2872 = vunpack.c.l.b16 %v428
        %v2873 = vunpack.c.h.b16 %v428
        %v2874 = vunpack.c.l.b16 %v429
        %v2875 = vunpack.c.h.b16 %v429
        %v2876 = vunpack.c.l.b16 %v430
        %v2877 = vunpack.c.h.b16 %v430
        %v2878 = vunpack.c.l.b16 %v431
        %v2879 = vunpack.c.h.b16 %v431
        %v2880 = vunpack.c.l.b16 %v432
        %v2881 = vunpack.c.h.b16 %v432
        %v2882 = vunpack.c.l.b16 %v433
        %v2883 = vunpack.c.h.b16 %v433
        %v2884 = vunpack.c.l.b16 %v434
        %v2885 = vunpack.c.h.b16 %v434
        %v2886 = vunpack.c.l.b16 %v435
        %v2887 = vunpack.c.h.b16 %v435
        %v2888 = vunpack.c.l.b16 %v436
        %v2889 = vunpack.c.h.b16 %v436
        %v2890 = vunpack.c.l.b16 %v437
        %v2891 = vunpack.c.h.b16 %v437
        %v2892 = vunpack.c.l.b16 %v438
        %v2893 = vunpack.c.h.b16 %v438
        %v2894 = vunpack.c.l.b16 %v439
        %v2895 = vunpack.c.h.b16 %v439
        %v2896 = vunpack.c.l.b16 %v440
        %v2897 = vunpack.c.h.b16 %v440
        %v2898 = vunpack.c.l.b16 %v441
        %v2899 = vunpack.c.h.b16 %v441
        %v2900 = vunpack.c.l.b16 %v442
        %v2901 = vunpack.c.h.b16 %v442
        %v2902 = vunpack.c.l.b16 %v443
        %v2903 = vunpack.c.h.b16 %v443
        %v2904 = vunpack.c.l.b16 %v444
        %v2905 = vunpack.c.h.b16 %v444
        %v2906 = vunpack.c.l.b16 %v445
        %v2907 = vunpack.c.h.b16 %v445
        %v2908 = vunpack.c.l.b16 %v446
        %v2909 = vunpack.c.h.b16 %v446
        %v2910 = vunpack.c.l.b16 %v447
        %v2911 = vunpack.c.h.b16 %v447
        %v2912 = vunpack.c.l.b16 %v448
        %v2913 = vunpack.c.h.b16 %v448
        %v2914 = vunpack.c.l.b16 %v449
        %v2915 = vunpack.c.h.b16 %v449
        %v2916 = vunpack.c.l.b16 %v450
        %v2917 = vunpack.c.h.b16 %v450
        %v2918 = vunpack.c.l.b16 %v451
        %v2919 = vunpack.c.h.b16 %v451
        %v2920 = vunpack.c.l.b16 %v452
        %v2921 = vunpack.c.h.b16 %v452
        %v2922 = vunpack.c.l.b16 %v453
        %v2923 = vunpack.c.h.b16 %v453
        %v2924 = vunpack.c.l.b16 %v454
        %v2925 = vunpack.c.h.b16 %v454
        %v2926 = vunpack.c.l.b16 %v455
        %v2927 = vunpack.c.h.b16 %v455
        %v2928 = vunpack.c.l.b16 %v456
        %v2929 = vunpack.c.h.b16 %v456
        %v2930 = vunpack.c.l.b16 %v457
        %v2931 = vunpack.c.h.b16 %v457
        %v2932 = vunpack.c.l.b16 %v458
        %v2933 = vunpack.c.h.b16 %v458
        %v2934 = vunpack.c.l.b16 %v459
        %v2935 = vunpack.c.h.b16 %v459
        %v2936 = vunpack.c.l.b16 %v460
        %v2937 = vunpack.c.h.b16 %v460
        %v2938 = vunpack.c.l.b16 %v461
        %v2939 = vunpack.c.h.b16 %v461
        %v2940 = vunpack.c.l.b16 %v462
        %v2941 = vunpack.c.h.b16 %v462
        %v2942 = vunpack.c.l.b16 %v463
        %v2943 = vunpack.c.h.b16 %v463
        %v2944 = vunpack.c.l.b16 %v464
        %v2945 = vunpack.c.h.b16 %v464
        %v2946 = vunpack.c.l.b16 %v465
        %v2947 = vunpack.c.h.b16 %v465
        %v2948 = vunpack.c.l.b16 %v466
        %v2949 = vunpack.c.h.b16 %v466
        %v2950 = vunpack.c.l.b16 %v467
        %v2951 = vunpack.c.h.b16 %v467
        %v2952 = vunpack.c.l.b16 %v468
        %v2953 = vunpack.c.h.b16 %v468
        %v2954 = vunpack.c.l.b16 %v469
        %v2955 = vunpack.c.h.b16 %v469
        %v2956 = vunpack.c.l.b16 %v470
        %v2957 = vunpack.c.h.b16 %v470
        %v2958 = vunpack.c.l.b16 %v471
        %v2959 = vunpack.c.h.b16 %v471
        %v2960 = vunpack.c.l.b16 %v472
        %v2961 = vunpack.c.h.b16 %v472
        %v2962 = vunpack.c.l.b16 %v473
        %v2963 = vunpack.c.h.b16 %v473
        %v2964 = vunpack.c.l.b16 %v474
        %v2965 = vunpack.c.h.b16 %v474
        %v2966 = vunpack.c.l.b16 %v475
        %v2967 = vunpack.c.h.b16 %v475
        %v2968 = vunpack.c.l.b16 %v476
        %v2969 = vunpack.c.h.b16 %v476
        %v2970 = vunpack.c.l.b16 %v477
        %v2971 = vunpack.c.h.b16 %v477
        %v2972 = vunpack.c.l.b16 %v478
        %v2973 = vunpack.c.h.b16 %v478
        %v2974 = vunpack.c.l.b16 %v479
        %v2975 = vunpack.c.h.b16 %v479
        %v2976 = vunpack.c.l.b16 %v480
        %v2977 = vunpack.c.h.b16 %v480
        %v2978 = vunpack.c.l.b16 %v481
        %v2979 = vunpack.c.h.b16 %v481
        %v2980 = vunpack.c.l.b16 %v482
        %v2981 = vunpack.c.h.b16 %v482
        %v2982 = vunpack.c.l.b16 %v483
        %v2983 = vunpack.c.h.b16 %v483
        %v2984 = vunpack.c.l.b16 %v484
        %v2985 = vunpack.c.h.b16 %v484
        %v2986 = vunpack.c.l.b16 %v485
        %v2987 = vunpack.c.h.b16 %v485
        %v2988 = vunpack.c.l.b16 %v486
        %v2989 = vunpack.c.h.b16 %v486
        %v2990 = vunpack.c.l.b16 %v487
        %v2991 = vunpack.c.h.b16 %v487
        %v2992 = vunpack.c.l.b16 %v488
        %v2993 = vunpack.c.h.b16 %v488
        %v2994 = vunpack.c.l.b16 %v489
        %v2995 = vunpack.c.h.b16 %v489
        %v2996 = vunpack.c.l.b16 %v490
        %v2997 = vunpack.c.h.b16 %v490
        %v2998 = vunpack.c.l.b16 %v491
        %v2999 = vunpack.c.h.b16 %v491
        %v3000 = vunpack.c.l.b16 %v492
        %v3001 = vunpack.c.h.b16 %v492
        %v3002 = vunpack.c.l.b16 %v493
        %v3003 = vunpack.c.h.b16 %v493
        %v3004 = vunpack.c.l.b16 %v494
        %v3005 = vunpack.c.h.b16 %v494
        %v3006 = vunpack.c.l.b16 %v495
        %v3007 = vunpack.c.h.b16 %v495
        %v3008 = vunpack.c.l.b16 %v496
        %v3009 = vunpack.c.h.b16 %v496
        %v3010 = vunpack.c.l.b16 %v497
        %v3011 = vunpack.c.h.b16 %v497
        %v3012 = vunpack.c.l.b16 %v498
        %v3013 = vunpack.c.h.b16 %v498
        %v3014 = vunpack.c.l.b16 %v499
        %v3015 = vunpack.c.h.b16 %v499
        %v3016 = vunpack.c.l.b16 %v500
        %v3017 = vunpack.c.h.b16 %v500
        %v3018 = vunpack.c.l.b16 %v501
        %v3019 = vunpack.c.h.b16 %v501
        %v3020 = vunpack.c.l.b16 %v502
        %v3021 = vunpack.c.h.b16 %v502
        %v3022 = vunpack.c.l.b16 %v503
        %v3023 = vunpack.c.h.b16 %v503
        %v3024 = vunpack.c.l.b16 %v504
        %v3025 = vunpack.c.h.b16 %v504
        %v3026 = vunpack.c.l.b16 %v505
        %v3027 = vunpack.c.h.b16 %v505
        %v3028 = vunpack.c.l.b16 %v506
        %v3029 = vunpack.c.h.b16 %v506
        %v3030 = vunpack.c.l.b16 %v507
        %v3031 = vunpack.c.h.b16 %v507
        %v3032 = vunpack.c.l.b16 %v508
        %v3033 = vunpack.c.h.b16 %v508
        %v3034 = vunpack.c.l.b16 %v509
        %v3035 = vunpack.c.h.b16 %v509
        %v3036 = vunpack.c.l.b16 %v510
        %v3037 = vunpack.c.h.b16 %v510
        %v3038 = vunpack.c.l.b16 %v511
        %v3039 = vunpack.c.h.b16 %v511
        %v3040 = vunpack.c.l.b16 %v512
        %v3041 = vunpack.c.h.b16 %v512
        %v3042 = vunpack.c.l.b16 %v513
        %v3043 = vunpack.c.h.b16 %v513
        %v3044 = vunpack.c.l.b16 %v514
        %v3045 = vunpack.c.h.b16 %v514
        %v3046 = vunpack.c.l.b16 %v515
        %v3047 = vunpack.c.h.b16 %v515
        %v3048 = vunpack.c.l.b16 %v516
        %v3049 = vunpack.c.h.b16 %v516
        %v3050 = vunpack.c.l.b16 %v517
        %v3051 = vunpack.c.h.b16 %v517
        %v3052 = vunpack.c.l.b16 %v518
        %v3053 = vunpack.c.h.b16 %v518
        %v3054 = vunpack.c.l.b16 %v519
        %v3055 = vunpack.c.h.b16 %v519
        %v3056 = vunpack.c.l.b16 %v520
        %v3057 = vunpack.c.h.b16 %v520
        %v3058 = vunpack.c.l.b16 %v521
        %v3059 = vunpack.c.h.b16 %v521
        %v3060 = vunpack.c.l.b16 %v522
        %v3061 = vunpack.c.h.b16 %v522
        %v3062 = vunpack.c.l.b16 %v523
        %v3063 = vunpack.c.h.b16 %v523
        %v3064 = vunpack.c.l.b16 %v524
        %v3065 = vunpack.c.h.b16 %v524
        %v3066 = vunpack.c.l.b16 %v525
        %v3067 = vunpack.c.h.b16 %v525
        %v3068 = vunpack.c.l.b16 %v526
        %v3069 = vunpack.c.h.b16 %v526
        %v3070 = vunpack.c.l.b16 %v527
        %v3071 = vunpack.c.h.b16 %v527
        %v3072 = vunpack.c.l.b16 %v528
        %v3073 = vunpack.c.h.b16 %v528
        %v3074 = vunpack.c.l.b16 %v529
        %v3075 = vunpack.c.h.b16 %v529
        %v3076 = vunpack.c.l.b16 %v530
        %v3077 = vunpack.c.h.b16 %v530
        %v3078 = vunpack.c.l.b16 %v531
        %v3079 = vunpack.c.h.b16 %v531
        %v3080 = vunpack.c.l.b16 %v532
        %v3081 = vunpack.c.h.b16 %v532
        %v3082 = vunpack.c.l.b16 %v533
        %v3083 = vunpack.c.h.b16 %v533
        %v3084 = vunpack.c.l.b16 %v534
        %v3085 = vunpack.c.h.b16 %v534
        %v3086 = vunpack.c.l.b16 %v535
        %v3087 = vunpack.c.h.b16 %v535
        %v3088 = vunpack.c.l.b16 %v536
        %v3089 = vunpack.c.h.b16 %v536
        %v3090 = vunpack.c.l.b16 %v537
        %v3091 = vunpack.c.h.b16 %v537
        %v3092 = vunpack.c.l.b16 %v538
        %v3093 = vunpack.c.h.b16 %v538
        %v3094 = vunpack.c.l.b16 %v539
        %v3095 = vunpack.c.h.b16 %v539
        %v3096 = vunpack.c.l.b16 %v540
        %v3097 = vunpack.c.h.b16 %v540
        %v3098 = vunpack.c.l.b16 %v541
        %v3099 = vunpack.c.h.b16 %v541
        %v3100 = vunpack.c.l.b16 %v542
        %v3101 = vunpack.c.h.b16 %v542
        %v3102 = vunpack.c.l.b16 %v543
        %v3103 = vunpack.c.h.b16 %v543
        %v3104 = vunpack.c.l.b16 %v544
        %v3105 = vunpack.c.h.b16 %v544
        %v3106 = vunpack.c.l.b16 %v545
        %v3107 = vunpack.c.h.b16 %v545
        %v3108 = vunpack.c.l.b16 %v546
        %v3109 = vunpack.c.h.b16 %v546
        %v3110 = vunpack.c.l.b16 %v547
        %v3111 = vunpack.c.h.b16 %v547
        %v3112 = vunpack.c.l.b16 %v548
        %v3113 = vunpack.c.h.b16 %v548
        %v3114 = vunpack.c.l.b16 %v549
        %v3115 = vunpack.c.h.b16 %v549
        %v3116 = vunpack.c.l.b16 %v550
        %v3117 = vunpack.c.h.b16 %v550
        %v3118 = vunpack.c.l.b16 %v551
        %v3119 = vunpack.c.h.b16 %v551
        %v3120 = vunpack.c.l.b16 %v552
        %v3121 = vunpack.c.h.b16 %v552
        %v3122 = vunpack.c.l.b16 %v553
        %v3123 = vunpack.c.h.b16 %v553
        %v3124 = vunpack.c.l.b16 %v554
        %v3125 = vunpack.c.h.b16 %v554
        %v3126 = vunpack.c.l.b16 %v555
        %v3127 = vunpack.c.h.b16 %v555
        %v3128 = vunpack.c.l.b16 %v556
        %v3129 = vunpack.c.h.b16 %v556
        %v3130 = vunpack.c.l.b16 %v557
        %v3131 = vunpack.c.h.b16 %v557
        %v3132 = vunpack.c.l.b16 %v558
        %v3133 = vunpack.c.h.b16 %v558
        %v3134 = vunpack.c.l.b16 %v559
        %v3135 = vunpack.c.h.b16 %v559
        %v3136 = vunpack.c.l.b16 %v560
        %v3137 = vunpack.c.h.b16 %v560
        %v3138 = vunpack.c.l.b16 %v561
        %v3139 = vunpack.c.h.b16 %v561
        %v3140 = vunpack.c.l.b16 %v562
        %v3141 = vunpack.c.h.b16 %v562
        %v3142 = vunpack.c.l.b16 %v563
        %v3143 = vunpack.c.h.b16 %v563
        %v3144 = vunpack.c.l.b16 %v564
        %v3145 = vunpack.c.h.b16 %v564
        %v3146 = vunpack.c.l.b16 %v565
        %v3147 = vunpack.c.h.b16 %v565
        %v3148 = vunpack.c.l.b16 %v566
        %v3149 = vunpack.c.h.b16 %v566
        %v3150 = vunpack.c.l.b16 %v567
        %v3151 = vunpack.c.h.b16 %v567
        %v3152 = vunpack.c.l.b16 %v568
        %v3153 = vunpack.c.h.b16 %v568
        %v3154 = vunpack.c.l.b16 %v569
        %v3155 = vunpack.c.h.b16 %v569
        %v3156 = vunpack.c.l.b16 %v570
        %v3157 = vunpack.c.h.b16 %v570
        %v3158 = vunpack.c.l.b16 %v571
        %v3159 = vunpack.c.h.b16 %v571
        %v3160 = vunpack.c.l.b16 %v572
        %v3161 = vunpack.c.h.b16 %v572
        %v3162 = vunpack.c.l.b16 %v573
        %v3163 = vunpack.c.h.b16 %v573
        %v3164 = vunpack.c.l.b16 %v574
        %v3165 = vunpack.c.h.b16 %v574
        %v3166 = vunpack.c.l.b16 %v575
        %v3167 = vunpack.c.h.b16 %v575
        %v3168 = vunpack.c.l.b16 %v576
        %v3169 = vunpack.c.h.b16 %v576
        %v3170 = vunpack.c.l.b16 %v577
        %v3171 = vunpack.c.h.b16 %v577
        %v3172 = vunpack.c.l.b16 %v578
        %v3173 = vunpack.c.h.b16 %v578
        %v3174 = vunpack.c.l.b16 %v579
        %v3175 = vunpack.c.h.b16 %v579
        %v3176 = vunpack.c.l.b16 %v580
        %v3177 = vunpack.c.h.b16 %v580
        %v3178 = vunpack.c.l.b16 %v581
        %v3179 = vunpack.c.h.b16 %v581
        %v3180 = vunpack.c.l.b16 %v582
        %v3181 = vunpack.c.h.b16 %v582
        %v3182 = vunpack.c.l.b16 %v583
        %v3183 = vunpack.c.h.b16 %v583
        %v3184 = vunpack.c.l.b16 %v584
        %v3185 = vunpack.c.h.b16 %v584
        %v3186 = vunpack.c.l.b16 %v585
        %v3187 = vunpack.c.h.b16 %v585
        %v3188 = vunpack.c.l.b16 %v586
        %v3189 = vunpack.c.h.b16 %v586
        %v3190 = vunpack.c.l.b16 %v587
        %v3191 = vunpack.c.h.b16 %v587
        %v3192 = vunpack.c.l.b16 %v588
        %v3193 = vunpack.c.h.b16 %v588
        %v3194 = vunpack.c.l.b16 %v589
        %v3195 = vunpack.c.h.b16 %v589
        %v3196 = vunpack.c.l.b16 %v590
        %v3197 = vunpack.c.h.b16 %v590
        %v3198 = vunpack.c.l.b16 %v591
        %v3199 = vunpack.c.h.b16 %v591
        %v3200 = vunpack.c.l.b16 %v592
        %v3201 = vunpack.c.h.b16 %v592
        %v3202 = vunpack.c.l.b16 %v593
        %v3203 = vunpack.c.h.b16 %v593
        %v3204 = vunpack.c.l.b16 %v594
        %v3205 = vunpack.c.h.b16 %v594
        %v3206 = vunpack.c.l.b16 %v595
        %v3207 = vunpack.c.h.b16 %v595
        %v3208 = vunpack.c.l.b16 %v596
        %v3209 = vunpack.c.h.b16 %v596
        %v3210 = vunpack.c.l.b16 %v597
        %v3211 = vunpack.c.h.b16 %v597
        %v3212 = vunpack.c.l.b16 %v598
        %v3213 = vunpack.c.h.b16 %v598
        %v3214 = vunpack.c.l.b16 %v599
        %v3215 = vunpack.c.h.b16 %v599
        %v3216 = vunpack.c.l.b16 %v600
        %v3217 = vunpack.c.h.b16 %v600
        %v3218 = vunpack.c.l.b16 %v601
        %v3219 = vunpack.c.h.b16 %v601
        %v3220 = vunpack.c.l.b16 %v602
        %v3221 = vunpack.c.h.b16 %v602
        %v3222 = vunpack.c.l.b16 %v603
        %v3223 = vunpack.c.h.b16 %v603
        %v3224 = vunpack.c.l.b16 %v604
        %v3225 = vunpack.c.h.b16 %v604
        %v3226 = vunpack.c.l.b16 %v605
        %v3227 = vunpack.c.h.b16 %v605
        %v3228 = vunpack.c.l.b16 %v606
        %v3229 = vunpack.c.h.b16 %v606
        %v3230 = vunpack.c.l.b16 %v607
        %v3231 = vunpack.c.h.b16 %v607
        %v3232 = vunpack.c.l.b16 %v608
        %v3233 = vunpack.c.h.b16 %v608
        %v3234 = vunpack.c.l.b16 %v609
        %v3235 = vunpack.c.h.b16 %v609
        %v3236 = vunpack.c.l.b16 %v610
        %v3237 = vunpack.c.h.b16 %v610
        %v3238 = vunpack.c.l.b16 %v611
        %v3239 = vunpack.c.h.b16 %v611
        %v3240 = vunpack.c.l.b16 %v612
        %v3241 = vunpack.c.h.b16 %v612
        %v3242 = vunpack.c.l.b16 %v613
        %v3243 = vunpack.c.h.b16 %v613
        %v3244 = vunpack.c.l.b16 %v614
        %v3245 = vunpack.c.h.b16 %v614
        %v3246 = vunpack.c.l.b16 %v615
        %v3247 = vunpack.c.h.b16 %v615
        %v3248 = vunpack.c.l.b16 %v616
        %v3249 = vunpack.c.h.b16 %v616
        %v3250 = vunpack.c.l.b16 %v617
        %v3251 = vunpack.c.h.b16 %v617
        %v3252 = vunpack.c.l.b16 %v618
        %v3253 = vunpack.c.h.b16 %v618
        %v3254 = vunpack.c.l.b16 %v619
        %v3255 = vunpack.c.h.b16 %v619
        %v3256 = vunpack.c.l.b16 %v620
        %v3257 = vunpack.c.h.b16 %v620
        %v3258 = vunpack.c.l.b16 %v621
        %v3259 = vunpack.c.h.b16 %v621
        %v3260 = vunpack.c.l.b16 %v622
        %v3261 = vunpack.c.h.b16 %v622
        %v3262 = vunpack.c.l.b16 %v623
        %v3263 = vunpack.c.h.b16 %v623
        %v3264 = vunpack.c.l.b16 %v624
        %v3265 = vunpack.c.h.b16 %v624
        %v3266 = vunpack.c.l.b16 %v625
        %v3267 = vunpack.c.h.b16 %v625
        %v3268 = vunpack.c.l.b16 %v626
        %v3269 = vunpack.c.h.b16 %v626
        %v3270 = vunpack.c.l.b16 %v627
        %v3271 = vunpack.c.h.b16 %v627
        %v3272 = vunpack.c.l.b16 %v628
        %v3273 = vunpack.c.h.b16 %v628
        %v3274 = vunpack.c.l.b16 %v629
        %v3275 = vunpack.c.h.b16 %v629
        %v3276 = vunpack.c.l.b16 %v630
        %v3277 = vunpack.c.h.b16 %v630
        %v3278 = vunpack.c.l.b16 %v631
        %v3279 = vunpack.c.h.b16 %v631
        %v3280 = vunpack.c.l.b16 %v632
        %v3281 = vunpack.c.h.b16 %v632
        %v3282 = vunpack.c.l.b16 %v633
        %v3283 = vunpack.c.h.b16 %v633
        %v3284 = vunpack.c.l.b16 %v634
        %v3285 = vunpack.c.h.b16 %v634
        %v3286 = vunpack.c.l.b16 %v635
        %v3287 = vunpack.c.h.b16 %v635
        %v3288 = vunpack.c.l.b16 %v636
        %v3289 = vunpack.c.h.b16 %v636
        %v3290 = vunpack.c.l.b16 %v637
        %v3291 = vunpack.c.h.b16 %v637
        %v3292 = vunpack.c.l.b16 %v638
        %v3293 = vunpack.c.h.b16 %v638
        %v3294 = vunpack.c.l.b16 %v639
        %v3295 = vunpack.c.h.b16 %v639
        %v3296 = vunpack.c.l.b16 %v640
        %v3297 = vunpack.c.h.b16 %v640
        %v3298 = vunpack.c.l.b16 %v641
        %v3299 = vunpack.c.h.b16 %v641
        %v3300 = vunpack.c.l.b16 %v642
        %v3301 = vunpack.c.h.b16 %v642
        %v3302 = vunpack.c.l.b16 %v643
        %v3303 = vunpack.c.h.b16 %v643
        %v3304 = vunpack.c.l.b16 %v644
        %v3305 = vunpack.c.h.b16 %v644
        %v3306 = vunpack.c.l.b16 %v645
        %v3307 = vunpack.c.h.b16 %v645
        %v3308 = vunpack.c.l.b16 %v646
        %v3309 = vunpack.c.h.b16 %v646
        %v3310 = vunpack.c.l.b16 %v647
        %v3311 = vunpack.c.h.b16 %v647
        %v3312 = vunpack.c.l.b16 %v648
        %v3313 = vunpack.c.h.b16 %v648
        %v3314 = vunpack.c.l.b16 %v649
        %v3315 = vunpack.c.h.b16 %v649
        %v3316 = vunpack.c.l.b16 %v650
        %v3317 = vunpack.c.h.b16 %v650
        %v3318 = vunpack.c.l.b16 %v651
        %v3319 = vunpack.c.h.b16 %v651
        %v3320 = vunpack.c.l.b16 %v652
        %v3321 = vunpack.c.h.b16 %v652
        %v3322 = vunpack.c.l.b16 %v653
        %v3323 = vunpack.c.h.b16 %v653
        %v3324 = vunpack.c.l.b16 %v654
        %v3325 = vunpack.c.h.b16 %v654
        %v3326 = vunpack.c.l.b16 %v655
        %v3327 = vunpack.c.h.b16 %v655
        %v3328 = vunpack.c.l.b16 %v656
        %v3329 = vunpack.c.h.b16 %v656
        %v3330 = vunpack.c.l.b16 %v657
        %v3331 = vunpack.c.h.b16 %v657
        %v3332 = vunpack.c.l.b16 %v658
        %v3333 = vunpack.c.h.b16 %v658
        %v3334 = vunpack.c.l.b16 %v659
        %v3335 = vunpack.c.h.b16 %v659
        %v3336 = vunpack.c.l.b16 %v660
        %v3337 = vunpack.c.h.b16 %v660
        %v3338 = vunpack.c.l.b16 %v661
        %v3339 = vunpack.c.h.b16 %v661
        %v3340 = vunpack.c.l.b16 %v662
        %v3341 = vunpack.c.h.b16 %v662
        %v3342 = vunpack.c.l.b16 %v663
        %v3343 = vunpack.c.h.b16 %v663
        %v3344 = vunpack.c.l.b16 %v664
        %v3345 = vunpack.c.h.b16 %v664
        %v3346 = vunpack.c.l.b16 %v665
        %v3347 = vunpack.c.h.b16 %v665
        %v3348 = vunpack.c.l.b16 %v666
        %v3349 = vunpack.c.h.b16 %v666
        %v3350 = vunpack.c.l.b16 %v667
        %v3351 = vunpack.c.h.b16 %v667
        %v3352 = vunpack.c.l.b16 %v668
        %v3353 = vunpack.c.h.b16 %v668
        %v3354 = vunpack.c.l.b16 %v669
        %v3355 = vunpack.c.h.b16 %v669
        %v3356 = vunpack.c.l.b16 %v670
        %v3357 = vunpack.c.h.b16 %v670
        %v3358 = vunpack.c.l.b16 %v671
        %v3359 = vunpack.c.h.b16 %v671
        %v3360 = vunpack.c.l.b16 %v672
        %v3361 = vunpack.c.h.b16 %v672
        %v3362 = vunpack.c.l.b16 %v673
        %v3363 = vunpack.c.h.b16 %v673
        %v3364 = vunpack.c.l.b16 %v674
        %v3365 = vunpack.c.h.b16 %v674
        %v3366 = vunpack.c.l.b16 %v675
        %v3367 = vunpack.c.h.b16 %v675
        %v3368 = vunpack.c.l.b16 %v676
        %v3369 = vunpack.c.h.b16 %v676
        %v3370 = vunpack.c.l.b16 %v677
        %v3371 = vunpack.c.h.b16 %v677
        %v3372 = vunpack.c.l.b16 %v678
        %v3373 = vunpack.c.h.b16 %v678
        %v3374 = vunpack.c.l.b16 %v679
        %v3375 = vunpack.c.h.b16 %v679
        %v3376 = vunpack.c.l.b16 %v680
        %v3377 = vunpack.c.h.b16 %v680
        %v3378 = vunpack.c.l.b16 %v681
        %v3379 = vunpack.c.h.b16 %v681
        %v3380 = vunpack.c.l.b16 %v682
        %v3381 = vunpack.c.h.b16 %v682
        %v3382 = vunpack.c.l.b16 %v683
        %v3383 = vunpack.c.h.b16 %v683
        %v3384 = vunpack.c.l.b16 %v684
        %v3385 = vunpack.c.h.b16 %v684
        %v3386 = vunpack.c.l.b16 %v685
        %v3387 = vunpack.c.h.b16 %v685
        %v3388 = vunpack.c.l.b16 %v686
        %v3389 = vunpack.c.h.b16 %v686
        %v3390 = vunpack.c.l.b16 %v687
        %v3391 = vunpack.c.h.b16 %v687
        %v3392 = vunpack.c.l.b16 %v688
        %v3393 = vunpack.c.h.b16 %v688
        %v3394 = vunpack.c.l.b16 %v689
        %v3395 = vunpack.c.h.b16 %v689
        %v3396 = vunpack.c.l.b16 %v690
        %v3397 = vunpack.c.h.b16 %v690
        %v3398 = vunpack.c.l.b16 %v691
        %v3399 = vunpack.c.h.b16 %v691
        %v3400 = vunpack.c.l.b16 %v692
        %v3401 = vunpack.c.h.b16 %v692
        %v3402 = vunpack.c.l.b16 %v693
        %v3403 = vunpack.c.h.b16 %v693
        %v3404 = vunpack.c.l.b16 %v694
        %v3405 = vunpack.c.h.b16 %v694
        %v3406 = vunpack.c.l.b16 %v695
        %v3407 = vunpack.c.h.b16 %v695
        %v3408 = vunpack.c.l.b16 %v696
        %v3409 = vunpack.c.h.b16 %v696
        %v3410 = vunpack.c.l.b16 %v697
        %v3411 = vunpack.c.h.b16 %v697
        %v3412 = vunpack.c.l.b16 %v698
        %v3413 = vunpack.c.h.b16 %v698
        %v3414 = vunpack.c.l.b16 %v699
        %v3415 = vunpack.c.h.b16 %v699
        %v3416 = vunpack.c.l.b16 %v700
        %v3417 = vunpack.c.h.b16 %v700
        %v3418 = vunpack.c.l.b16 %v701
        %v3419 = vunpack.c.h.b16 %v701
        %v3420 = vunpack.c.l.b16 %v702
        %v3421 = vunpack.c.h.b16 %v702
        %v3422 = vunpack.c.l.b16 %v703
        %v3423 = vunpack.c.h.b16 %v703
        %v3424 = vunpack.c.l.b16 %v704
        %v3425 = vunpack.c.h.b16 %v704
        %v3426 = vunpack.c.l.b16 %v705
        %v3427 = vunpack.c.h.b16 %v705
        %v3428 = vunpack.c.l.b16 %v706
        %v3429 = vunpack.c.h.b16 %v706
        %v3430 = vunpack.c.l.b16 %v707
        %v3431 = vunpack.c.h.b16 %v707
        %v3432 = vunpack.c.l.b16 %v708
        %v3433 = vunpack.c.h.b16 %v708
        %v3434 = vunpack.c.l.b16 %v709
        %v3435 = vunpack.c.h.b16 %v709
        %v3436 = vunpack.c.l.b16 %v710
        %v3437 = vunpack.c.h.b16 %v710
        %v3438 = vunpack.c.l.b16 %v711
        %v3439 = vunpack.c.h.b16 %v711
        %v3440 = vunpack.c.l.b16 %v712
        %v3441 = vunpack.c.h.b16 %v712
        %v3442 = vunpack.c.l.b16 %v713
        %v3443 = vunpack.c.h.b16 %v713
        %v3444 = vunpack.c.l.b16 %v714
        %v3445 = vunpack.c.h.b16 %v714
        %v3446 = vunpack.c.l.b16 %v715
        %v3447 = vunpack.c.h.b16 %v715
        %v3448 = vunpack.c.l.b16 %v716
        %v3449 = vunpack.c.h.b16 %v716
        %v3450 = vunpack.c.l.b16 %v717
        %v3451 = vunpack.c.h.b16 %v717
        %v3452 = vunpack.c.l.b16 %v718
        %v3453 = vunpack.c.h.b16 %v718
        %v3454 = vunpack.c.l.b16 %v719
        %v3455 = vunpack.c.h.b16 %v719
        %v3456 = vunpack.c.l.b16 %v720
        %v3457 = vunpack.c.h.b16 %v720
        %v3458 = vunpack.c.l.b16 %v721
        %v3459 = vunpack.c.h.b16 %v721
        %v3460 = vunpack.c.l.b16 %v722
        %v3461 = vunpack.c.h.b16 %v722
        %v3462 = vunpack.c.l.b16 %v723
        %v3463 = vunpack.c.h.b16 %v723
        %v3464 = vunpack.c.l.b16 %v724
        %v3465 = vunpack.c.h.b16 %v724
        %v3466 = vunpack.c.l.b16 %v725
        %v3467 = vunpack.c.h.b16 %v725
        %v3468 = vunpack.c.l.b16 %v726
        %v3469 = vunpack.c.h.b16 %v726
        %v3470 = vunpack.c.l.b16 %v727
        %v3471 = vunpack.c.h.b16 %v727
        %v3472 = vunpack.c.l.b16 %v728
        %v3473 = vunpack.c.h.b16 %v728
        %v3474 = vunpack.c.l.b16 %v729
        %v3475 = vunpack.c.h.b16 %v729
        %v3476 = vunpack.c.l.b16 %v730
        %v3477 = vunpack.c.h.b16 %v730
        %v3478 = vunpack.c.l.b16 %v731
        %v3479 = vunpack.c.h.b16 %v731
        %v3480 = vunpack.c.l.b16 %v732
        %v3481 = vunpack.c.h.b16 %v732
        %v3482 = vunpack.c.l.b16 %v733
        %v3483 = vunpack.c.h.b16 %v733
        %v3484 = vunpack.c.l.b16 %v734
        %v3485 = vunpack.c.h.b16 %v734
        %v3486 = vunpack.c.l.b16 %v735
        %v3487 = vunpack.c.h.b16 %v735
        %v3488 = vunpack.c.l.b16 %v736
        %v3489 = vunpack.c.h.b16 %v736
        %v3490 = vunpack.c.l.b16 %v737
        %v3491 = vunpack.c.h.b16 %v737
        %v3492 = vunpack.c.l.b16 %v738
        %v3493 = vunpack.c.h.b16 %v738
        %v3494 = vunpack.c.l.b16 %v739
        %v3495 = vunpack.c.h.b16 %v739
        %v3496 = vunpack.c.l.b16 %v740
        %v3497 = vunpack.c.h.b16 %v740
        %v3498 = vunpack.c.l.b16 %v741
        %v3499 = vunpack.c.h.b16 %v741
        %v3500 = vunpack.c.l.b16 %v742
        %v3501 = vunpack.c.h.b16 %v742
        %v3502 = vunpack.c.l.b16 %v743
        %v3503 = vunpack.c.h.b16 %v743
        %v3504 = vunpack.c.l.b16 %v744
        %v3505 = vunpack.c.h.b16 %v744
        %v3506 = vunpack.c.l.b16 %v745
        %v3507 = vunpack.c.h.b16 %v745
        %v3508 = vunpack.c.l.b16 %v746
        %v3509 = vunpack.c.h.b16 %v746
        %v3510 = vunpack.c.l.b16 %v747
        %v3511 = vunpack.c.h.b16 %v747
        %v3512 = vunpack.c.l.b16 %v748
        %v3513 = vunpack.c.h.b16 %v748
        %v3514 = vunpack.c.l.b16 %v749
        %v3515 = vunpack.c.h.b16 %v749
        %v3516 = vunpack.c.l.b16 %v750
        %v3517 = vunpack.c.h.b16 %v750
        %v3518 = vunpack.c.l.b16 %v751
        %v3519 = vunpack.c.h.b16 %v751
        %v3520 = vunpack.c.l.b16 %v752
        %v3521 = vunpack.c.h.b16 %v752
        %v3522 = vunpack.c.l.b16 %v753
        %v3523 = vunpack.c.h.b16 %v753
        %v3524 = vunpack.c.l.b16 %v754
        %v3525 = vunpack.c.h.b16 %v754
        %v3526 = vunpack.c.l.b16 %v755
        %v3527 = vunpack.c.h.b16 %v755
        %v3528 = vunpack.c.l.b16 %v756
        %v3529 = vunpack.c.h.b16 %v756
        %v3530 = vunpack.c.l.b16 %v757
        %v3531 = vunpack.c.h.b16 %v757
        %v3532 = vunpack.c.l.b16 %v758
        %v3533 = vunpack.c.h.b16 %v758
        %v3534 = vunpack.c.l.b16 %v759
        %v3535 = vunpack.c.h.b16 %v759
        %v3536 = vunpack.c.l.b16 %v760
        %v3537 = vunpack.c.h.b16 %v760
        %v3538 = vunpack.c.l.b16 %v761
        %v3539 = vunpack.c.h.b16 %v761
        %v3540 = vunpack.c.l.b16 %v762
        %v3541 = vunpack.c.h.b16 %v762
        %v3542 = vunpack.c.l.b16 %v763
        %v3543 = vunpack.c.h.b16 %v763
        %v3544 = vunpack.c.l.b16 %v764
        %v3545 = vunpack.c.h.b16 %v764
        %v3546 = vunpack.c.l.b16 %v765
        %v3547 = vunpack.c.h.b16 %v765
        %v3548 = vunpack.c.l.b16 %v766
        %v3549 = vunpack.c.h.b16 %v766
        %v3550 = vunpack.c.l.b16 %v767
        %v3551 = vunpack.c.h.b16 %v767
        %v3552 = vunpack.c.l.b16 %v768
        %v3553 = vunpack.c.h.b16 %v768
        %v3554 = vunpack.c.l.b16 %v769
        %v3555 = vunpack.c.h.b16 %v769
        %v3556 = vunpack.c.l.b16 %v770
        %v3557 = vunpack.c.h.b16 %v770
        %v3558 = vunpack.c.l.b16 %v771
        %v3559 = vunpack.c.h.b16 %v771
        %v3560 = vunpack.c.l.b16 %v772
        %v3561 = vunpack.c.h.b16 %v772
        %v3562 = vunpack.c.l.b16 %v773
        %v3563 = vunpack.c.h.b16 %v773
        %v3564 = vunpack.c.l.b16 %v774
        %v3565 = vunpack.c.h.b16 %v774
        %v3566 = vunpack.c.l.b16 %v775
        %v3567 = vunpack.c.h.b16 %v775
        %v3568 = vunpack.c.l.b16 %v776
        %v3569 = vunpack.c.h.b16 %v776
        %v3570 = vunpack.c.l.b16 %v777
        %v3571 = vunpack.c.h.b16 %v777
        %v3572 = vunpack.c.l.b16 %v778
        %v3573 = vunpack.c.h.b16 %v778
        %v3574 = vunpack.c.l.b16 %v779
        %v3575 = vunpack.c.h.b16 %v779
        %v3576 = vunpack.c.l.b16 %v780
        %v3577 = vunpack.c.h.b16 %v780
        %v3578 = vunpack.c.l.b16 %v781
        %v3579 = vunpack.c.h.b16 %v781
        %v3580 = vunpack.c.l.b16 %v782
        %v3581 = vunpack.c.h.b16 %v782
        %v3582 = vunpack.c.l.b16 %v783
        %v3583 = vunpack.c.h.b16 %v783
        %v3584 = vunpack.c.l.b16 %v784
        %v3585 = vunpack.c.h.b16 %v784
        %v3586 = vunpack.c.l.b16 %v785
        %v3587 = vunpack.c.h.b16 %v785
        %v3588 = vunpack.c.l.b16 %v786
        %v3589 = vunpack.c.h.b16 %v786
        %v3590 = vunpack.c.l.b16 %v787
        %v3591 = vunpack.c.h.b16 %v787
        %v3592 = vunpack.c.l.b16 %v788
        %v3593 = vunpack.c.h.b16 %v788
        %v3594 = vunpack.c.l.b16 %v789
        %v3595 = vunpack.c.h.b16 %v789
        %v3596 = vunpack.c.l.b16 %v790
        %v3597 = vunpack.c.h.b16 %v790
        %v3598 = vunpack.c.l.b16 %v791
        %v3599 = vunpack.c.h.b16 %v791
        %v3600 = vunpack.c.l.b16 %v792
        %v3601 = vunpack.c.h.b16 %v792
        %v3602 = vunpack.c.l.b16 %v793
        %v3603 = vunpack.c.h.b16 %v793
        %v3604 = vunpack.c.l.b16 %v794
        %v3605 = vunpack.c.h.b16 %v794
        %v3606 = vunpack.c.l.b16 %v795
        %v3607 = vunpack.c.h.b16 %v795
        %v3608 = vunpack.c.l.b16 %v796
        %v3609 = vunpack.c.h.b16 %v796
        %v3610 = vunpack.c.l.b16 %v797
        %v3611 = vunpack.c.h.b16 %v797
        %v3612 = vunpack.c.l.b16 %v798
        %v3613 = vunpack.c.h.b16 %v798
        %v3614 = vunpack.c.l.b16 %v799
        %v3615 = vunpack.c.h.b16 %v799
        %v3616 = vunpack.c.l.b16 %v800
        %v3617 = vunpack.c.h.b16 %v800
        %v3618 = vunpack.c.l.b16 %v801
        %v3619 = vunpack.c.h.b16 %v801
        %v3620 = vunpack.c.l.b16 %v802
        %v3621 = vunpack.c.h.b16 %v802
        %v3622 = vunpack.c.l.b16 %v803
        %v3623 = vunpack.c.h.b16 %v803
        %v3624 = vunpack.c.l.b16 %v804
        %v3625 = vunpack.c.h.b16 %v804
        %v3626 = vunpack.c.l.b16 %v805
        %v3627 = vunpack.c.h.b16 %v805
        %v3628 = vunpack.c.l.b16 %v806
        %v3629 = vunpack.c.h.b16 %v806
        %v3630 = vunpack.c.l.b16 %v807
        %v3631 = vunpack.c.h.b16 %v807
        %v3632 = vunpack.c.l.b16 %v808
        %v3633 = vunpack.c.h.b16 %v808
        %v3634 = vunpack.c.l.b16 %v809
        %v3635 = vunpack.c.h.b16 %v809
        %v3636 = vunpack.c.l.b16 %v810
        %v3637 = vunpack.c.h.b16 %v810
        %v3638 = vunpack.c.l.b16 %v811
        %v3639 = vunpack.c.h.b16 %v811
        %v3640 = vunpack.c.l.b16 %v812
        %v3641 = vunpack.c.h.b16 %v812
        %v3642 = vunpack.c.l.b16 %v813
        %v3643 = vunpack.c.h.b16 %v813
        %v3644 = vunpack.c.l.b16 %v814
        %v3645 = vunpack.c.h.b16 %v814
        %v3646 = vunpack.c.l.b16 %v815
        %v3647 = vunpack.c.h.b16 %v815
        %v3648 = vunpack.c.l.b16 %v816
        %v3649 = vunpack.c.h.b16 %v816
        %v3650 = vunpack.c.l.b16 %v817
        %v3651 = vunpack.c.h.b16 %v817
        %v3652 = vunpack.c.l.b16 %v818
        %v3653 = vunpack.c.h.b16 %v818
        %v3654 = vunpack.c.l.b16 %v819
        %v3655 = vunpack.c.h.b16 %v819
        %v3656 = vunpack.c.l.b16 %v820
        %v3657 = vunpack.c.h.b16 %v820
        %v3658 = vunpack.c.l.b16 %v821
        %v3659 = vunpack.c.h.b16 %v821
        %v3660 = vunpack.c.l.b16 %v822
        %v3661 = vunpack.c.h.b16 %v822
        %v3662 = vunpack.c.l.b16 %v823
        %v3663 = vunpack.c.h.b16 %v823
        %v3664 = vunpack.c.l.b16 %v824
        %v3665 = vunpack.c.h.b16 %v824
        %v3666 = vunpack.c.l.b16 %v825
        %v3667 = vunpack.c.h.b16 %v825
        %v3668 = vunpack.c.l.b16 %v826
        %v3669 = vunpack.c.h.b16 %v826
        %v3670 = vunpack.c.l.b16 %v827
        %v3671 = vunpack.c.h.b16 %v827
        %v3672 = vunpack.c.l.b16 %v828
        %v3673 = vunpack.c.h.b16 %v828
        %v3674 = vunpack.c.l.b16 %v829
        %v3675 = vunpack.c.h.b16 %v829
        %v3676 = vunpack.c.l.b16 %v830
        %v3677 = vunpack.c.h.b16 %v830
        %v3678 = vunpack.c.l.b16 %v831
        %v3679 = vunpack.c.h.b16 %v831
        %v3680 = vunpack.c.l.b16 %v832
        %v3681 = vunpack.c.h.b16 %v832
        %v3682 = vunpack.c.l.b16 %v833
        %v3683 = vunpack.c.h.b16 %v833
        %v3684 = vunpack.c.l.b16 %v834
        %v3685 = vunpack.c.h.b16 %v834
        %v3686 = vunpack.c.l.b16 %v835
        %v3687 = vunpack.c.h.b16 %v835
        %v3688 = vunpack.c.l.b16 %v836
        %v3689 = vunpack.c.h.b16 %v836
        %v3690 = vunpack.c.l.b16 %v837
        %v3691 = vunpack.c.h.b16 %v837
        %v3692 = vunpack.c.l.b16 %v838
        %v3693 = vunpack.c.h.b16 %v838
        %v3694 = vunpack.c.l.b16 %v839
        %v3695 = vunpack.c.h.b16 %v839
        %v3696 = vunpack.c.l.b16 %v840
        %v3697 = vunpack.c.h.b16 %v840
        %v3698 = vunpack.c.l.b16 %v841
        %v3699 = vunpack.c.h.b16 %v841
        %v3700 = vunpack.c.l.b16 %v842
        %v3701 = vunpack.c.h.b16 %v842
        %v3702 = vunpack.c.l.b16 %v843
        %v3703 = vunpack.c.h.b16 %v843
        %v3704 = vunpack.c.l.b16 %v844
        %v3705 = vunpack.c.h.b16 %v844
        %v3706 = vunpack.c.l.b16 %v845
        %v3707 = vunpack.c.h.b16 %v845
        %v3708 = vunpack.c.l.b16 %v846
        %v3709 = vunpack.c.h.b16 %v846
        %v3710 = vunpack.c.l.b16 %v847
        %v3711 = vunpack.c.h.b16 %v847
        %v3712 = vunpack.c.l.b16 %v848
        %v3713 = vunpack.c.h.b16 %v848
        %v3714 = vunpack.c.l.b16 %v849
        %v3715 = vunpack.c.h.b16 %v849
        %v3716 = vunpack.c.l.b16 %v850
        %v3717 = vunpack.c.h.b16 %v850
        %v3718 = vunpack.c.l.b16 %v851
        %v3719 = vunpack.c.h.b16 %v851
        %v3720 = vunpack.c.l.b16 %v852
        %v3721 = vunpack.c.h.b16 %v852
        %v3722 = vunpack.c.l.b16 %v853
        %v3723 = vunpack.c.h.b16 %v853
        %v3724 = vunpack.c.l.b16 %v854
        %v3725 = vunpack.c.h.b16 %v854
        %v3726 = vunpack.c.l.b16 %v855
        %v3727 = vunpack.c.h.b16 %v855
        %v3728 = vunpack.c.l.b16 %v856
        %v3729 = vunpack.c.h.b16 %v856
        %v3730 = vunpack.c.l.b16 %v857
        %v3731 = vunpack.c.h.b16 %v857
        %v3732 = vunpack.c.l.b16 %v858
        %v3733 = vunpack.c.h.b16 %v858
        %v3734 = vunpack.c.l.b16 %v859
        %v3735 = vunpack.c.h.b16 %v859
        %v3736 = vunpack.c.l.b16 %v860
        %v3737 = vunpack.c.h.b16 %v860
        %v3738 = vunpack.c.l.b16 %v861
        %v3739 = vunpack.c.h.b16 %v861
        %v3740 = vunpack.c.l.b16 %v862
        %v3741 = vunpack.c.h.b16 %v862
        %v3742 = vunpack.c.l.b16 %v863
        %v3743 = vunpack.c.h.b16 %v863
        %v3744 = vunpack.c.l.b16 %v864
        %v3745 = vunpack.c.h.b16 %v864
        %v3746 = vunpack.c.l.b16 %v865
        %v3747 = vunpack.c.h.b16 %v865
        %v3748 = vunpack.c.l.b16 %v866
        %v3749 = vunpack.c.h.b16 %v866
        %v3750 = vunpack.c.l.b16 %v867
        %v3751 = vunpack.c.h.b16 %v867
        %v3752 = vunpack.c.l.b16 %v868
        %v3753 = vunpack.c.h.b16 %v868
        %v3754 = vunpack.c.l.b16 %v869
        %v3755 = vunpack.c.h.b16 %v869
        %v3756 = vunpack.c.l.b16 %v870
        %v3757 = vunpack.c.h.b16 %v870
        %v3758 = vunpack.c.l.b16 %v871
        %v3759 = vunpack.c.h.b16 %v871
        %v3760 = vunpack.c.l.b16 %v872
        %v3761 = vunpack.c.h.b16 %v872
        %v3762 = vunpack.c.l.b16 %v873
        %v3763 = vunpack.c.h.b16 %v873
        %v3764 = vunpack.c.l.b16 %v874
        %v3765 = vunpack.c.h.b16 %v874
        %v3766 = vunpack.c.l.b16 %v875
        %v3767 = vunpack.c.h.b16 %v875
        %v3768 = vunpack.c.l.b16 %v876
        %v3769 = vunpack.c.h.b16 %v876
        %v3770 = vunpack.c.l.b16 %v877
        %v3771 = vunpack.c.h.b16 %v877
        %v3772 = vunpack.c.l.b16 %v878
        %v3773 = vunpack.c.h.b16 %v878
        %v3774 = vunpack.c.l.b16 %v879
        %v3775 = vunpack.c.h.b16 %v879
        %v3776 = vunpack.c.l.b16 %v880
        %v3777 = vunpack.c.h.b16 %v880
        %v3778 = vunpack.c.l.b16 %v881
        %v3779 = vunpack.c.h.b16 %v881
        %v3780 = vunpack.c.l.b16 %v882
        %v3781 = vunpack.c.h.b16 %v882
        %v3782 = vunpack.c.l.b16 %v883
        %v3783 = vunpack.c.h.b16 %v883
        %v3784 = vunpack.c.l.b16 %v884
        %v3785 = vunpack.c.h.b16 %v884
        %v3786 = vunpack.c.l.b16 %v885
        %v3787 = vunpack.c.h.b16 %v885
        %v3788 = vunpack.c.l.b16 %v886
        %v3789 = vunpack.c.h.b16 %v886
        %v3790 = vunpack.c.l.b16 %v887
        %v3791 = vunpack.c.h.b16 %v887
        %v3792 = vunpack.c.l.b16 %v888
        %v3793 = vunpack.c.h.b16 %v888
        %v3794 = vunpack.c.l.b16 %v889
        %v3795 = vunpack.c.h.b16 %v889
        %v3796 = vunpack.c.l.b16 %v890
        %v3797 = vunpack.c.h.b16 %v890
        %v3798 = vunpack.c.l.b16 %v891
        %v3799 = vunpack.c.h.b16 %v891
        %v3800 = vunpack.c.l.b16 %v892
        %v3801 = vunpack.c.h.b16 %v892
        %v3802 = vunpack.c.l.b16 %v893
        %v3803 = vunpack.c.h.b16 %v893
        %v3804 = vunpack.c.l.b16 %v894
        %v3805 = vunpack.c.h.b16 %v894
        %v3806 = vunpack.c.l.b16 %v895
        %v3807 = vunpack.c.h.b16 %v895
        %v3808 = vunpack.c.l.b16 %v896
        %v3809 = vunpack.c.h.b16 %v896
        %v3810 = vunpack.c.l.b16 %v897
        %v3811 = vunpack.c.h.b16 %v897
        %v3812 = vunpack.c.l.b16 %v898
        %v3813 = vunpack.c.h.b16 %v898
        %v3814 = vunpack.c.l.b16 %v899
        %v3815 = vunpack.c.h.b16 %v899
        %v3816 = vunpack.c.l.b16 %v900
        %v3817 = vunpack.c.h.b16 %v900
        %v3818 = vunpack.c.l.b16 %v901
        %v3819 = vunpack.c.h.b16 %v901
        %v3820 = vunpack.c.l.b16 %v902
        %v3821 = vunpack.c.h.b16 %v902
        %v3822 = vunpack.c.l.b16 %v903
        %v3823 = vunpack.c.h.b16 %v903
        %v3824 = vunpack.c.l.b16 %v904
        %v3825 = vunpack.c.h.b16 %v904
        %v3826 = vunpack.c.l.b16 %v905
        %v3827 = vunpack.c.h.b16 %v905
        %v3828 = vunpack.c.l.b16 %v906
        %v3829 = vunpack.c.h.b16 %v906
        %v3830 = vunpack.c.l.b16 %v907
        %v3831 = vunpack.c.h.b16 %v907
        %v3832 = vunpack.c.l.b16 %v908
        %v3833 = vunpack.c.h.b16 %v908
        %v3834 = vunpack.c.l.b16 %v909
        %v3835 = vunpack.c.h.b16 %v909
        %v3836 = vunpack.c.l.b16 %v910
        %v3837 = vunpack.c.h.b16 %v910
        %v3838 = vunpack.c.l.b16 %v911
        %v3839 = vunpack.c.h.b16 %v911
        %v3840 = vunpack.c.l.b16 %v912
        %v3841 = vunpack.c.h.b16 %v912
        %v3842 = vunpack.c.l.b16 %v913
        %v3843 = vunpack.c.h.b16 %v913
        %v3844 = vunpack.c.l.b16 %v914
        %v3845 = vunpack.c.h.b16 %v914
        %v3846 = vunpack.c.l.b16 %v915
        %v3847 = vunpack.c.h.b16 %v915
        %v3848 = vunpack.c.l.b16 %v916
        %v3849 = vunpack.c.h.b16 %v916
        %v3850 = vunpack.c.l.b16 %v917
        %v3851 = vunpack.c.h.b16 %v917
        %v3852 = vunpack.c.l.b16 %v918
        %v3853 = vunpack.c.h.b16 %v918
        %v3854 = vunpack.c.l.b16 %v919
        %v3855 = vunpack.c.h.b16 %v919
        %v3856 = vunpack.c.l.b16 %v920
        %v3857 = vunpack.c.h.b16 %v920
        %v3858 = vunpack.c.l.b16 %v921
        %v3859 = vunpack.c.h.b16 %v921
        %v3860 = vunpack.c.l.b16 %v922
        %v3861 = vunpack.c.h.b16 %v922
        %v3862 = vunpack.c.l.b16 %v923
        %v3863 = vunpack.c.h.b16 %v923
        %v3864 = vunpack.c.l.b16 %v924
        %v3865 = vunpack.c.h.b16 %v924
        %v3866 = vunpack.c.l.b16 %v925
        %v3867 = vunpack.c.h.b16 %v925
        %v3868 = vunpack.c.l.b16 %v926
        %v3869 = vunpack.c.h.b16 %v926
        %v3870 = vunpack.c.l.b16 %v927
        %v3871 = vunpack.c.h.b16 %v927
        %v3872 = vunpack.c.l.b16 %v928
        %v3873 = vunpack.c.h.b16 %v928
        %v3874 = vunpack.c.l.b16 %v929
        %v3875 = vunpack.c.h.b16 %v929
        %v3876 = vunpack.c.l.b16 %v930
        %v3877 = vunpack.c.h.b16 %v930
        %v3878 = vunpack.c.l.b16 %v931
        %v3879 = vunpack.c.h.b16 %v931
        %v3880 = vunpack.c.l.b16 %v932
        %v3881 = vunpack.c.h.b16 %v932
        %v3882 = vunpack.c.l.b16 %v933
        %v3883 = vunpack.c.h.b16 %v933
        %v3884 = vunpack.c.l.b16 %v934
        %v3885 = vunpack.c.h.b16 %v934
        %v3886 = vunpack.c.l.b16 %v935
        %v3887 = vunpack.c.h.b16 %v935
        %v3888 = vunpack.c.l.b16 %v936
        %v3889 = vunpack.c.h.b16 %v936
        %v3890 = vunpack.c.l.b16 %v937
        %v3891 = vunpack.c.h.b16 %v937
        %v3892 = vunpack.c.l.b16 %v938
        %v3893 = vunpack.c.h.b16 %v938
        %v3894 = vunpack.c.l.b16 %v939
        %v3895 = vunpack.c.h.b16 %v939
        %v3896 = vunpack.c.l.b16 %v940
        %v3897 = vunpack.c.h.b16 %v940
        %v3898 = vunpack.c.l.b16 %v941
        %v3899 = vunpack.c.h.b16 %v941
        %v3900 = vunpack.c.l.b16 %v942
        %v3901 = vunpack.c.h.b16 %v942
        %v3902 = vunpack.c.l.b16 %v943
        %v3903 = vunpack.c.h.b16 %v943
        %v3904 = vunpack.c.l.b16 %v944
        %v3905 = vunpack.c.h.b16 %v944
        %v3906 = vunpack.c.l.b16 %v945
        %v3907 = vunpack.c.h.b16 %v945
        %v3908 = vunpack.c.l.b16 %v946
        %v3909 = vunpack.c.h.b16 %v946
        %v3910 = vunpack.c.l.b16 %v947
        %v3911 = vunpack.c.h.b16 %v947
        %v3912 = vunpack.c.l.b16 %v948
        %v3913 = vunpack.c.h.b16 %v948
        %v3914 = vunpack.c.l.b16 %v949
        %v3915 = vunpack.c.h.b16 %v949
        %v3916 = vunpack.c.l.b16 %v950
        %v3917 = vunpack.c.h.b16 %v950
        %v3918 = vunpack.c.l.b16 %v951
        %v3919 = vunpack.c.h.b16 %v951
        %v3920 = vunpack.c.l.b16 %v952
        %v3921 = vunpack.c.h.b16 %v952
        %v3922 = vunpack.c.l.b16 %v953
        %v3923 = vunpack.c.h.b16 %v953
        %v3924 = vunpack.c.l.b16 %v954
        %v3925 = vunpack.c.h.b16 %v954
        %v3926 = vunpack.c.l.b16 %v955
        %v3927 = vunpack.c.h.b16 %v955
        %v3928 = vunpack.c.l.b16 %v956
        %v3929 = vunpack.c.h.b16 %v956
        %v3930 = vunpack.c.l.b16 %v957
        %v3931 = vunpack.c.h.b16 %v957
        %v3932 = vunpack.c.l.b16 %v958
        %v3933 = vunpack.c.h.b16 %v958
        %v3934 = vunpack.c.l.b16 %v959
        %v3935 = vunpack.c.h.b16 %v959
        %v3936 = vunpack.c.l.b16 %v960
        %v3937 = vunpack.c.h.b16 %v960
        %v3938 = vunpack.c.l.b16 %v961
        %v3939 = vunpack.c.h.b16 %v961
        %v3940 = vunpack.c.l.b16 %v962
        %v3941 = vunpack.c.h.b16 %v962
        %v3942 = vunpack.c.l.b16 %v963
        %v3943 = vunpack.c.h.b16 %v963
        %v3944 = vunpack.c.l.b16 %v964
        %v3945 = vunpack.c.h.b16 %v964
        %v3946 = vunpack.c.l.b16 %v965
        %v3947 = vunpack.c.h.b16 %v965
        %v3948 = vunpack.c.l.b16 %v966
        %v3949 = vunpack.c.h.b16 %v966
        %v3950 = vunpack.c.l.b16 %v967
        %v3951 = vunpack.c.h.b16 %v967
        %v3952 = vunpack.c.l.b16 %v968
        %v3953 = vunpack.c.h.b16 %v968
        %v3954 = vunpack.c.l.b16 %v969
        %v3955 = vunpack.c.h.b16 %v969
        %v3956 = vunpack.c.l.b16 %v970
        %v3957 = vunpack.c.h.b16 %v970
        %v3958 = vunpack.c.l.b16 %v971
        %v3959 = vunpack.c.h.b16 %v971
        %v3960 = vunpack.c.l.b16 %v972
        %v3961 = vunpack.c.h.b16 %v972
        %v3962 = vunpack.c.l.b16 %v973
        %v3963 = vunpack.c.h.b16 %v973
        %v3964 = vunpack.c.l.b16 %v974
        %v3965 = vunpack.c.h.b16 %v974
        %v3966 = vunpack.c.l.b16 %v975
        %v3967 = vunpack.c.h.b16 %v975
        %v3968 = vunpack.c.l.b16 %v976
        %v3969 = vunpack.c.h.b16 %v976
        %v3970 = vunpack.c.l.b16 %v977
        %v3971 = vunpack.c.h.b16 %v977
        %v3972 = vunpack.c.l.b16 %v978
        %v3973 = vunpack.c.h.b16 %v978
        %v3974 = vunpack.c.l.b16 %v979
        %v3975 = vunpack.c.h.b16 %v979
        %v3976 = vunpack.c.l.b16 %v980
        %v3977 = vunpack.c.h.b16 %v980
        %v3978 = vunpack.c.l.b16 %v981
        %v3979 = vunpack.c.h.b16 %v981
        %v3980 = vunpack.c.l.b16 %v982
        %v3981 = vunpack.c.h.b16 %v982
        %v3982 = vunpack.c.l.b16 %v983
        %v3983 = vunpack.c.h.b16 %v983
        %v3984 = vunpack.c.l.b16 %v984
        %v3985 = vunpack.c.h.b16 %v984
        %v3986 = vunpack.c.l.b16 %v985
        %v3987 = vunpack.c.h.b16 %v985
        %v3988 = vunpack.c.l.b16 %v986
        %v3989 = vunpack.c.h.b16 %v986
        %v3990 = vunpack.c.l.b16 %v987
        %v3991 = vunpack.c.h.b16 %v987
        %v3992 = vunpack.c.l.b16 %v988
        %v3993 = vunpack.c.h.b16 %v988
        %v3994 = vunpack.c.l.b16 %v989
        %v3995 = vunpack.c.h.b16 %v989
        %v3996 = vunpack.c.l.b16 %v990
        %v3997 = vunpack.c.h.b16 %v990
        %v3998 = vunpack.c.l.b16 %v991
        %v3999 = vunpack.c.h.b16 %v991
        %v4000 = vunpack.c.l.b16 %v992
        %v4001 = vunpack.c.h.b16 %v992
        %v4002 = vunpack.c.l.b16 %v993
        %v4003 = vunpack.c.h.b16 %v993
        %v4004 = vunpack.c.l.b16 %v994
        %v4005 = vunpack.c.h.b16 %v994
        %v4006 = vunpack.c.l.b16 %v995
        %v4007 = vunpack.c.h.b16 %v995
        %v4008 = vunpack.c.l.b16 %v996
        %v4009 = vunpack.c.h.b16 %v996
        %v4010 = vunpack.c.l.b16 %v997
        %v4011 = vunpack.c.h.b16 %v997
        %v4012 = vunpack.c.l.b16 %v998
        %v4013 = vunpack.c.h.b16 %v998
        %v4014 = vunpack.c.l.b16 %v999
        %v4015 = vunpack.c.h.b16 %v999
        %v4016 = vunpack.c.l.b16 %v1000
        %v4017 = vunpack.c.h.b16 %v1000
        %v4018 = vunpack.c.l.b16 %v1001
        %v4019 = vunpack.c.h.b16 %v1001
        %v4020 = vunpack.c.l.b16 %v1002
        %v4021 = vunpack.c.h.b16 %v1002
        %v4022 = vunpack.c.l.b16 %v1003
        %v4023 = vunpack.c.h.b16 %v1003
        %v4024 = vunpack.c.l.b16 %v1004
        %v4025 = vunpack.c.h.b16 %v1004
        %v4026 = vunpack.c.l.b16 %v1005
        %v4027 = vunpack.c.h.b16 %v1005
        %v4028 = vunpack.c.l.b16 %v1006
        %v4029 = vunpack.c.h.b16 %v1006
        %v4030 = vunpack.c.l.b16 %v1007
        %v4031 = vunpack.c.h.b16 %v1007
        %v4032 = vunpack.c.l.b16 %v1008
        %v4033 = vunpack.c.h.b16 %v1008
        %v4034 = vunpack.c.l.b16 %v1009
        %v4035 = vunpack.c.h.b16 %v1009
        %v4036 = vunpack.c.l.b16 %v1010
        %v4037 = vunpack.c.h.b16 %v1010
        %v4038 = vunpack.c.l.b16 %v1011
        %v4039 = vunpack.c.h.b16 %v1011
        %v4040 = vunpack.c.l.b16 %v1012
        %v4041 = vunpack.c.h.b16 %v1012
        %v4042 = vunpack.c.l.b16 %v1013
        %v4043 = vunpack.c.h.b16 %v1013
        %v4044 = vunpack.c.l.b16 %v1014
        %v4045 = vunpack.c.h.b16 %v1014
        %v4046 = vunpack.c.l.b16 %v1015
        %v4047 = vunpack.c.h.b16 %v1015
        %v4048 = vunpack.c.l.b16 %v1016
        %v4049 = vunpack.c.h.b16 %v1016
        %v4050 = vunpack.c.l.b16 %v1017
        %v4051 = vunpack.c.h.b16 %v1017
        %v4052 = vunpack.c.l.b16 %v1018
        %v4053 = vunpack.c.h.b16 %v1018
        %v4054 = vunpack.c.l.b16 %v1019
        %v4055 = vunpack.c.h.b16 %v1019
        %v4056 = vunpack.c.l.b16 %v1020
        %v4057 = vunpack.c.h.b16 %v1020
        %v4058 = vunpack.c.l.b16 %v1021
        %v4059 = vunpack.c.h.b16 %v1021
        %v4060 = vunpack.c.l.b16 %v1022
        %v4061 = vunpack.c.h.b16 %v1022
        %v4062 = vunpack.c.l.b16 %v1023
        %v4063 = vunpack.c.h.b16 %v1023
        %v4064 = vunpack.c.l.b16 %v1024
        %v4065 = vunpack.c.h.b16 %v1024
        %v4066 = vunpack.c.l.b16 %v1025
        %v4067 = vunpack.c.h.b16 %v1025
        %v4068 = vunpack.c.l.b16 %v1026
        %v4069 = vunpack.c.h.b16 %v1026
        %v4070 = vunpack.c.l.b16 %v1027
        %v4071 = vunpack.c.h.b16 %v1027
        %v4072 = vunpack.c.l.b16 %v1028
        %v4073 = vunpack.c.h.b16 %v1028
        %v4074 = vunpack.c.l.b16 %v1029
        %v4075 = vunpack.c.h.b16 %v1029
        %v4076 = vunpack.c.l.b16 %v1030
        %v4077 = vunpack.c.h.b16 %v1030
        %v4078 = vunpack.c.l.b16 %v1031
        %v4079 = vunpack.c.h.b16 %v1031
        %v4080 = vunpack.c.l.b16 %v1032
        %v4081 = vunpack.c.h.b16 %v1032
        %v4082 = vunpack.c.l.b16 %v1033
        %v4083 = vunpack.c.h.b16 %v1033
        %v4084 = vunpack.c.l.b16 %v1034
        %v4085 = vunpack.c.h.b16 %v1034
        %v4086 = vunpack.c.l.b16 %v1035
        %v4087 = vunpack.c.h.b16 %v1035
        %v4088 = vunpack.c.l.b16 %v1036
        %v4089 = vunpack.c.h.b16 %v1036
        %v4090 = vunpack.c.l.b16 %v1037
        %v4091 = vunpack.c.h.b16 %v1037
        %v4092 = vunpack.c.l.b16 %v1038
        %v4093 = vunpack.c.h.b16 %v1038
        %v4094 = vunpack.c.l.b16 %v1039
        %v4095 = vunpack.c.h.b16 %v1039
        %v4096 = vunpack.c.l.b16 %v1040
        %v4097 = vunpack.c.h.b16 %v1040
        %v4098 = vunpack.c.l.b16 %v1041
        %v4099 = vunpack.c.h.b16 %v1041
        %v4100 = vunpack.c.l.b16 %v1042
        %v4101 = vunpack.c.h.b16 %v1042
        %v4102 = vunpack.c.l.b16 %v1043
        %v4103 = vunpack.c.h.b16 %v1043
        %v4104 = vunpack.c.l.b16 %v1044
        %v4105 = vunpack.c.h.b16 %v1044
        %v4106 = vunpack.c.l.b16 %v1045
        %v4107 = vunpack.c.h.b16 %v1045
        %v4108 = vunpack.c.l.b16 %v1046
        %v4109 = vunpack.c.h.b16 %v1046
        %v4110 = vunpack.c.l.b16 %v1047
        %v4111 = vunpack.c.h.b16 %v1047
        %v4112 = vunpack.c.l.b16 %v1048
        %v4113 = vunpack.c.h.b16 %v1048
        %v4114 = vunpack.c.l.b16 %v1049
        %v4115 = vunpack.c.h.b16 %v1049
        %v4116 = vunpack.c.l.b16 %v1050
        %v4117 = vunpack.c.h.b16 %v1050
        %v4118 = vunpack.c.l.b16 %v1051
        %v4119 = vunpack.c.h.b16 %v1051
        %v4120 = vunpack.c.l.b16 %v1052
        %v4121 = vunpack.c.h.b16 %v1052
        %v4122 = vunpack.c.l.b16 %v1053
        %v4123 = vunpack.c.h.b16 %v1053
        %v4124 = vunpack.c.l.b16 %v1054
        %v4125 = vunpack.c.h.b16 %v1054
        %v4126 = vunpack.c.l.b16 %v1055
        %v4127 = vunpack.c.h.b16 %v1055
        %v4128 = vunpack.c.l.b16 %v1056
        %v4129 = vunpack.c.h.b16 %v1056
        %v4130 = vunpack.c.l.b16 %v1057
        %v4131 = vunpack.c.h.b16 %v1057
        %v4132 = vunpack.c.l.b16 %v1058
        %v4133 = vunpack.c.h.b16 %v1058
        %v4134 = vunpack.c.l.b16 %v1059
        %v4135 = vunpack.c.h.b16 %v1059
        %v4136 = vunpack.c.l.b16 %v1060
        %v4137 = vunpack.c.h.b16 %v1060
        %v4138 = vunpack.c.l.b16 %v1061
        %v4139 = vunpack.c.h.b16 %v1061
        %v4140 = vunpack.c.l.b16 %v1062
        %v4141 = vunpack.c.h.b16 %v1062
        %v4142 = vunpack.c.l.b16 %v1063
        %v4143 = vunpack.c.h.b16 %v1063
        %v4144 = vunpack.c.l.b16 %v1064
        %v4145 = vunpack.c.h.b16 %v1064
        %v4146 = vunpack.c.l.b16 %v1065
        %v4147 = vunpack.c.h.b16 %v1065
        %v4148 = vunpack.c.l.b16 %v1066
        %v4149 = vunpack.c.h.b16 %v1066
        %v4150 = vunpack.c.l.b16 %v1067
        %v4151 = vunpack.c.h.b16 %v1067
        %v4152 = vunpack.c.l.b16 %v1068
        %v4153 = vunpack.c.h.b16 %v1068
        %v4154 = vunpack.c.l.b16 %v1069
        %v4155 = vunpack.c.h.b16 %v1069
        %v4156 = vunpack.c.l.b16 %v1070
        %v4157 = vunpack.c.h.b16 %v1070
        %v4158 = vunpack.c.l.b16 %v1071
        %v4159 = vunpack.c.h.b16 %v1071
        %v4160 = vunpack.c.l.b16 %v1072
        %v4161 = vunpack.c.h.b16 %v1072
        %v4162 = vunpack.c.l.b16 %v1073
        %v4163 = vunpack.c.h.b16 %v1073
        %v4164 = vunpack.c.l.b16 %v1074
        %v4165 = vunpack.c.h.b16 %v1074
        %v4166 = vunpack.c.l.b16 %v1075
        %v4167 = vunpack.c.h.b16 %v1075
        %v4168 = vunpack.c.l.b16 %v1076
        %v4169 = vunpack.c.h.b16 %v1076
        %v4170 = vunpack.c.l.b16 %v1077
        %v4171 = vunpack.c.h.b16 %v1077
        %v4172 = vunpack.c.l.b16 %v1078
        %v4173 = vunpack.c.h.b16 %v1078
        %v4174 = vunpack.c.l.b16 %v1079
        %v4175 = vunpack.c.h.b16 %v1079
        %v4176 = vunpack.c.l.b16 %v1080
        %v4177 = vunpack.c.h.b16 %v1080
        %v4178 = vunpack.c.l.b16 %v1081
        %v4179 = vunpack.c.h.b16 %v1081
        %v4180 = vunpack.c.l.b16 %v1082
        %v4181 = vunpack.c.h.b16 %v1082
        %v4182 = vunpack.c.l.b16 %v1083
        %v4183 = vunpack.c.h.b16 %v1083
        %v4184 = vunpack.c.l.b16 %v1084
        %v4185 = vunpack.c.h.b16 %v1084
        %v4186 = vunpack.c.l.b16 %v1085
        %v4187 = vunpack.c.h.b16 %v1085
        %v4188 = vunpack.c.l.b16 %v1086
        %v4189 = vunpack.c.h.b16 %v1086
        %v4190 = vunpack.c.l.b16 %v1087
        %v4191 = vunpack.c.h.b16 %v1087
        %v4192 = vunpack.c.l.b16 %v1088
        %v4193 = vunpack.c.h.b16 %v1088
        %v4194 = vunpack.c.l.b16 %v1089
        %v4195 = vunpack.c.h.b16 %v1089
        %v4196 = vunpack.c.l.b16 %v1090
        %v4197 = vunpack.c.h.b16 %v1090
        %v4198 = vunpack.c.l.b16 %v1091
        %v4199 = vunpack.c.h.b16 %v1091
        %v4200 = vunpack.c.l.b16 %v1092
        %v4201 = vunpack.c.h.b16 %v1092
        %v4202 = vunpack.c.l.b16 %v1093
        %v4203 = vunpack.c.h.b16 %v1093
        %v4204 = vunpack.c.l.b16 %v1094
        %v4205 = vunpack.c.h.b16 %v1094
        %v4206 = vunpack.c.l.b16 %v1095
        %v4207 = vunpack.c.h.b16 %v1095
        %v4208 = vunpack.c.l.b16 %v1096
        %v4209 = vunpack.c.h.b16 %v1096
        %v4210 = vunpack.c.l.b16 %v1097
        %v4211 = vunpack.c.h.b16 %v1097
        %v4212 = vunpack.c.l.b16 %v1098
        %v4213 = vunpack.c.h.b16 %v1098
        %v4214 = vunpack.c.l.b16 %v1099
        %v4215 = vunpack.c.h.b16 %v1099
        %v4216 = vunpack.c.l.b16 %v1100
        %v4217 = vunpack.c.h.b16 %v1100
        %v4218 = vunpack.c.l.b16 %v1101
        %v4219 = vunpack.c.h.b16 %v1101
        %v4220 = vunpack.c.l.b16 %v1102
        %v4221 = vunpack.c.h.b16 %v1102
        %v4222 = vunpack.c.l.b16 %v1103
        %v4223 = vunpack.c.h.b16 %v1103
        %v4224 = vunpack.c.l.b16 %v1104
        %v4225 = vunpack.c.h.b16 %v1104
        %v4226 = vunpack.c.l.b16 %v1105
        %v4227 = vunpack.c.h.b16 %v1105
        %v4228 = vunpack.c.l.b16 %v1106
        %v4229 = vunpack.c.h.b16 %v1106
        %v4230 = vunpack.c.l.b16 %v1107
        %v4231 = vunpack.c.h.b16 %v1107
        %v4232 = vunpack.c.l.b16 %v1108
        %v4233 = vunpack.c.h.b16 %v1108
        %v4234 = vunpack.c.l.b16 %v1109
        %v4235 = vunpack.c.h.b16 %v1109
        %v4236 = vunpack.c.l.b16 %v1110
        %v4237 = vunpack.c.h.b16 %v1110
        %v4238 = vunpack.c.l.b16 %v1111
        %v4239 = vunpack.c.h.b16 %v1111
        %v4240 = vunpack.c.l.b16 %v1112
        %v4241 = vunpack.c.h.b16 %v1112
        %v4242 = vunpack.c.l.b16 %v1113
        %v4243 = vunpack.c.h.b16 %v1113
        %v4244 = vunpack.c.l.b16 %v1114
        %v4245 = vunpack.c.h.b16 %v1114
        %v4246 = vunpack.c.l.b16 %v1115
        %v4247 = vunpack.c.h.b16 %v1115
        %v4248 = vunpack.c.l.b16 %v1116
        %v4249 = vunpack.c.h.b16 %v1116
        %v4250 = vunpack.c.l.b16 %v1117
        %v4251 = vunpack.c.h.b16 %v1117
        %v4252 = vunpack.c.l.b16 %v1118
        %v4253 = vunpack.c.h.b16 %v1118
        %v4254 = vunpack.c.l.b16 %v1119
        %v4255 = vunpack.c.h.b16 %v1119
        %v4256 = vunpack.c.l.b16 %v1120
        %v4257 = vunpack.c.h.b16 %v1120
        %v4258 = vunpack.c.l.b16 %v1121
        %v4259 = vunpack.c.h.b16 %v1121
        %v4260 = vunpack.c.l.b16 %v1122
        %v4261 = vunpack.c.h.b16 %v1122
        %v4262 = vunpack.c.l.b16 %v1123
        %v4263 = vunpack.c.h.b16 %v1123
        %v4264 = vunpack.c.l.b16 %v1124
        %v4265 = vunpack.c.h.b16 %v1124
        %v4266 = vunpack.c.l.b16 %v1125
        %v4267 = vunpack.c.h.b16 %v1125
        %v4268 = vunpack.c.l.b16 %v1126
        %v4269 = vunpack.c.h.b16 %v1126
        %v4270 = vunpack.c.l.b16 %v1127
        %v4271 = vunpack.c.h.b16 %v1127
        %v4272 = vunpack.c.l.b16 %v1128
        %v4273 = vunpack.c.h.b16 %v1128
        %v4274 = vunpack.c.l.b16 %v1129
        %v4275 = vunpack.c.h.b16 %v1129
        %v4276 = vunpack.c.l.b16 %v1130
        %v4277 = vunpack.c.h.b16 %v1130
        %v4278 = vunpack.c.l.b16 %v1131
        %v4279 = vunpack.c.h.b16 %v1131
        %v4280 = vunpack.c.l.b16 %v1132
        %v4281 = vunpack.c.h.b16 %v1132
        %v4282 = vunpack.c.l.b16 %v1133
        %v4283 = vunpack.c.h.b16 %v1133
        %v4284 = vunpack.c.l.b16 %v1134
        %v4285 = vunpack.c.h.b16 %v1134
        %v4286 = vunpack.c.l.b16 %v1135
        %v4287 = vunpack.c.h.b16 %v1135
        %v4288 = vunpack.c.l.b16 %v1136
        %v4289 = vunpack.c.h.b16 %v1136
        %v4290 = vunpack.c.l.b16 %v1137
        %v4291 = vunpack.c.h.b16 %v1137
        %v4292 = vunpack.c.l.b16 %v1138
        %v4293 = vunpack.c.h.b16 %v1138
        %v4294 = vunpack.c.l.b16 %v1139
        %v4295 = vunpack.c.h.b16 %v1139
        %v4296 = vunpack.c.l.b16 %v1140
        %v4297 = vunpack.c.h.b16 %v1140
        %v4298 = vunpack.c.l.b16 %v1141
        %v4299 = vunpack.c.h.b16 %v1141
        %v4300 = vunpack.c.l.b16 %v1142
        %v4301 = vunpack.c.h.b16 %v1142
        %v4302 = vunpack.c.l.b16 %v1143
        %v4303 = vunpack.c.h.b16 %v1143
        %v4304 = vunpack.c.l.b16 %v1144
        %v4305 = vunpack.c.h.b16 %v1144
        %v4306 = vunpack.c.l.b16 %v1145
        %v4307 = vunpack.c.h.b16 %v1145
        %v4308 = vunpack.c.l.b16 %v1146
        %v4309 = vunpack.c.h.b16 %v1146
        %v4310 = vunpack.c.l.b16 %v1147
        %v4311 = vunpack.c.h.b16 %v1147
        %v4312 = vunpack.c.l.b16 %v1148
        %v4313 = vunpack.c.h.b16 %v1148
        %v4314 = vunpack.c.l.b16 %v1149
        %v4315 = vunpack.c.h.b16 %v1149
        %v4316 = vunpack.c.l.b16 %v1150
        %v4317 = vunpack.c.h.b16 %v1150
        %v4318 = vunpack.c.l.b16 %v1151
        %v4319 = vunpack.c.h.b16 %v1151
        %v4320 = vunpack.c.l.b16 %v1152
        %v4321 = vunpack.c.h.b16 %v1152
        %v4322 = vunpack.c.l.b16 %v1153
        %v4323 = vunpack.c.h.b16 %v1153
        %v4324 = vunpack.c.l.b16 %v1154
        %v4325 = vunpack.c.h.b16 %v1154
        %v4326 = vunpack.c.l.b16 %v1155
        %v4327 = vunpack.c.h.b16 %v1155
        %v4328 = vunpack.c.l.b16 %v1156
        %v4329 = vunpack.c.h.b16 %v1156
        %v4330 = vunpack.c.l.b16 %v1157
        %v4331 = vunpack.c.h.b16 %v1157
        %v4332 = vunpack.c.l.b16 %v1158
        %v4333 = vunpack.c.h.b16 %v1158
        %v4334 = vunpack.c.l.b16 %v1159
        %v4335 = vunpack.c.h.b16 %v1159
        %v4336 = vunpack.c.l.b16 %v1160
        %v4337 = vunpack.c.h.b16 %v1160
        %v4338 = vunpack.c.l.b16 %v1161
        %v4339 = vunpack.c.h.b16 %v1161
        %v4340 = vunpack.c.l.b16 %v1162
        %v4341 = vunpack.c.h.b16 %v1162
        %v4342 = vunpack.c.l.b16 %v1163
        %v4343 = vunpack.c.h.b16 %v1163
        %v4344 = vunpack.c.l.b16 %v1164
        %v4345 = vunpack.c.h.b16 %v1164
        %v4346 = vunpack.c.l.b16 %v1165
        %v4347 = vunpack.c.h.b16 %v1165
        %v4348 = vunpack.c.l.b16 %v1166
        %v4349 = vunpack.c.h.b16 %v1166
        %v4350 = vunpack.c.l.b16 %v1167
        %v4351 = vunpack.c.h.b16 %v1167
        %v4352 = vunpack.c.l.b16 %v1168
        %v4353 = vunpack.c.h.b16 %v1168
        %v4354 = vunpack.c.l.b16 %v1169
        %v4355 = vunpack.c.h.b16 %v1169
        %v4356 = vunpack.c.l.b16 %v1170
        %v4357 = vunpack.c.h.b16 %v1170
        %v4358 = vunpack.c.l.b16 %v1171
        %v4359 = vunpack.c.h.b16 %v1171
        %v4360 = vunpack.c.l.b16 %v1172
        %v4361 = vunpack.c.h.b16 %v1172
        %v4362 = vunpack.c.l.b16 %v1173
        %v4363 = vunpack.c.h.b16 %v1173
        %v4364 = vunpack.c.l.b16 %v1174
        %v4365 = vunpack.c.h.b16 %v1174
        %v4366 = vunpack.c.l.b16 %v1175
        %v4367 = vunpack.c.h.b16 %v1175
        %v4368 = vunpack.c.l.b16 %v1176
        %v4369 = vunpack.c.h.b16 %v1176
        %v4370 = vunpack.c.l.b16 %v1177
        %v4371 = vunpack.c.h.b16 %v1177
        %v4372 = vunpack.c.l.b16 %v1178
        %v4373 = vunpack.c.h.b16 %v1178
        %v4374 = vunpack.c.l.b16 %v1179
        %v4375 = vunpack.c.h.b16 %v1179
        %v4376 = vunpack.c.l.b16 %v1180
        %v4377 = vunpack.c.h.b16 %v1180
        %v4378 = vunpack.c.l.b16 %v1181
        %v4379 = vunpack.c.h.b16 %v1181
        %v4380 = vunpack.c.l.b16 %v1182
        %v4381 = vunpack.c.h.b16 %v1182
        %v4382 = vunpack.c.l.b16 %v1183
        %v4383 = vunpack.c.h.b16 %v1183
        %v4384 = vunpack.c.l.b16 %v1184
        %v4385 = vunpack.c.h.b16 %v1184
        %v4386 = vunpack.c.l.b16 %v1185
        %v4387 = vunpack.c.h.b16 %v1185
        %v4388 = vunpack.c.l.b16 %v1186
        %v4389 = vunpack.c.h.b16 %v1186
        %v4390 = vunpack.c.l.b16 %v1187
        %v4391 = vunpack.c.h.b16 %v1187
        %v4392 = vunpack.c.l.b16 %v1188
        %v4393 = vunpack.c.h.b16 %v1188
        %v4394 = vunpack.c.l.b16 %v1189
        %v4395 = vunpack.c.h.b16 %v1189
        %v4396 = vunpack.c.l.b16 %v1190
        %v4397 = vunpack.c.h.b16 %v1190
        %v4398 = vunpack.c.l.b16 %v1191
        %v4399 = vunpack.c.h.b16 %v1191
        %v4400 = vunpack.c.l.b16 %v1192
        %v4401 = vunpack.c.h.b16 %v1192
        %v4402 = vunpack.c.l.b16 %v1193
        %v4403 = vunpack.c.h.b16 %v1193
        %v4404 = vunpack.c.l.b16 %v1194
        %v4405 = vunpack.c.h.b16 %v1194
        %v4406 = vunpack.c.l.b16 %v1195
        %v4407 = vunpack.c.h.b16 %v1195
        %v4408 = vunpack.c.l.b16 %v1196
        %v4409 = vunpack.c.h.b16 %v1196
        %v4410 = vunpack.c.l.b16 %v1197
        %v4411 = vunpack.c.h.b16 %v1197
        %v4412 = vunpack.c.l.b16 %v1198
        %v4413 = vunpack.c.h.b16 %v1198
        %v4414 = vunpack.c.l.b16 %v1199
        %v4415 = vunpack.c.h.b16 %v1199
        %v4416 = vunpack.c.l.b16 %v1200
        %v4417 = vunpack.c.h.b16 %v1200
        %v4418 = vunpack.c.l.b16 %v1201
        %v4419 = vunpack.c.h.b16 %v1201
        %v4420 = vunpack.c.l.b16 %v1202
        %v4421 = vunpack.c.h.b16 %v1202
        %v4422 = vunpack.c.l.b16 %v1203
        %v4423 = vunpack.c.h.b16 %v1203
        %v4424 = vunpack.c.l.b16 %v1204
        %v4425 = vunpack.c.h.b16 %v1204
        %v4426 = vunpack.c.l.b16 %v1205
        %v4427 = vunpack.c.h.b16 %v1205
        %v4428 = vunpack.c.l.b16 %v1206
        %v4429 = vunpack.c.h.b16 %v1206
        %v4430 = vunpack.c.l.b16 %v1207
        %v4431 = vunpack.c.h.b16 %v1207
        %v4432 = vunpack.c.l.b16 %v1208
        %v4433 = vunpack.c.h.b16 %v1208
        %v4434 = vunpack.c.l.b16 %v1209
        %v4435 = vunpack.c.h.b16 %v1209
        %v4436 = vunpack.c.l.b16 %v1210
        %v4437 = vunpack.c.h.b16 %v1210
        %v4438 = vunpack.c.l.b16 %v1211
        %v4439 = vunpack.c.h.b16 %v1211
        %v4440 = vunpack.c.l.b16 %v1212
        %v4441 = vunpack.c.h.b16 %v1212
        %v4442 = vunpack.c.l.b16 %v1213
        %v4443 = vunpack.c.h.b16 %v1213
        %v4444 = vunpack.c.l.b16 %v1214
        %v4445 = vunpack.c.h.b16 %v1214
        %v4446 = vunpack.c.l.b16 %v1215
        %v4447 = vunpack.c.h.b16 %v1215
        %v4448 = vpack.c.b16 %v2408, %v2400
        %v4449 = vpack.c.b16 %v2409, %v2401
        %v4450 = vpack.c.b16 %v2410, %v2402
        %v4451 = vpack.c.b16 %v2411, %v2403
        %v4452 = vpack.c.b16 %v2412, %v2404
        %v4453 = vpack.c.b16 %v2413, %v2405
        %v4454 = vpack.c.b16 %v2414, %v2406
        %v4455 = vpack.c.b16 %v2415, %v2407
        %v4456 = vpack.c.b16 %v2424, %v2416
        %v4457 = vpack.c.b16 %v2425, %v2417
        %v4458 = vpack.c.b16 %v2426, %v2418
        %v4459 = vpack.c.b16 %v2427, %v2419
        %v4460 = vpack.c.b16 %v2428, %v2420
        %v4461 = vpack.c.b16 %v2429, %v2421
        %v4462 = vpack.c.b16 %v2430, %v2422
        %v4463 = vpack.c.b16 %v2431, %v2423
        %v4464 = vpack.c.b16 %v2440, %v2432
        %v4465 = vpack.c.b16 %v2441, %v2433
        %v4466 = vpack.c.b16 %v2442, %v2434
        %v4467 = vpack.c.b16 %v2443, %v2435
        %v4468 = vpack.c.b16 %v2444, %v2436
        %v4469 = vpack.c.b16 %v2445, %v2437
        %v4470 = vpack.c.b16 %v2446, %v2438
        %v4471 = vpack.c.b16 %v2447, %v2439
        %v4472 = vpack.c.b16 %v2456, %v2448
        %v4473 = vpack.c.b16 %v2457, %v2449
        %v4474 = vpack.c.b16 %v2458, %v2450
        %v4475 = vpack.c.b16 %v2459, %v2451
        %v4476 = vpack.c.b16 %v2460, %v2452
        %v4477 = vpack.c.b16 %v2461, %v2453
        %v4478 = vpack.c.b16 %v2462, %v2454
        %v4479 = vpack.c.b16 %v2463, %v2455
        %v4480 = vpack.c.b16 %v2472, %v2464
        %v4481 = vpack.c.b16 %v2473, %v2465
        %v4482 = vpack.c.b16 %v2474, %v2466
        %v4483 = vpack.c.b16 %v2475, %v2467
        %v4484 = vpack.c.b16 %v2476, %v2468
        %v4485 = vpack.c.b16 %v2477, %v2469
        %v4486 = vpack.c.b16 %v2478, %v2470
        %v4487 = vpack.c.b16 %v2479, %v2471
        %v4488 = vpack.c.b16 %v2488, %v2480
        %v4489 = vpack.c.b16 %v2489, %v2481
        %v4490 = vpack.c.b16 %v2490, %v2482
        %v4491 = vpack.c.b16 %v2491, %v2483
        %v4492 = vpack.c.b16 %v2492, %v2484
        %v4493 = vpack.c.b16 %v2493, %v2485
        %v4494 = vpack.c.b16 %v2494, %v2486
        %v4495 = vpack.c.b16 %v2495, %v2487
        %v4496 = vpack.c.b16 %v2504, %v2496
        %v4497 = vpack.c.b16 %v2505, %v2497
        %v4498 = vpack.c.b16 %v2506, %v2498
        %v4499 = vpack.c.b16 %v2507, %v2499
        %v4500 = vpack.c.b16 %v2508, %v2500
        %v4501 = vpack.c.b16 %v2509, %v2501
        %v4502 = vpack.c.b16 %v2510, %v2502
        %v4503 = vpack.c.b16 %v2511, %v2503
        %v4504 = vpack.c.b16 %v2520, %v2512
        %v4505 = vpack.c.b16 %v2521, %v2513
        %v4506 = vpack.c.b16 %v2522, %v2514
        %v4507 = vpack.c.b16 %v2523, %v2515
        %v4508 = vpack.c.b16 %v2524, %v2516
        %v4509 = vpack.c.b16 %v2525, %v2517
        %v4510 = vpack.c.b16 %v2526, %v2518
        %v4511 = vpack.c.b16 %v2527, %v2519
        %v4512 = vpack.c.b16 %v2536, %v2528
        %v4513 = vpack.c.b16 %v2537, %v2529
        %v4514 = vpack.c.b16 %v2538, %v2530
        %v4515 = vpack.c.b16 %v2539, %v2531
        %v4516 = vpack.c.b16 %v2540, %v2532
        %v4517 = vpack.c.b16 %v2541, %v2533
        %v4518 = vpack.c.b16 %v2542, %v2534
        %v4519 = vpack.c.b16 %v2543, %v2535
        %v4520 = vpack.c.b16 %v2552, %v2544
        %v4521 = vpack.c.b16 %v2553, %v2545
        %v4522 = vpack.c.b16 %v2554, %v2546
        %v4523 = vpack.c.b16 %v2555, %v2547
        %v4524 = vpack.c.b16 %v2556, %v2548
        %v4525 = vpack.c.b16 %v2557, %v2549
        %v4526 = vpack.c.b16 %v2558, %v2550
        %v4527 = vpack.c.b16 %v2559, %v2551
        %v4528 = vpack.c.b16 %v2568, %v2560
        %v4529 = vpack.c.b16 %v2569, %v2561
        %v4530 = vpack.c.b16 %v2570, %v2562
        %v4531 = vpack.c.b16 %v2571, %v2563
        %v4532 = vpack.c.b16 %v2572, %v2564
        %v4533 = vpack.c.b16 %v2573, %v2565
        %v4534 = vpack.c.b16 %v2574, %v2566
        %v4535 = vpack.c.b16 %v2575, %v2567
        %v4536 = vpack.c.b16 %v2584, %v2576
        %v4537 = vpack.c.b16 %v2585, %v2577
        %v4538 = vpack.c.b16 %v2586, %v2578
        %v4539 = vpack.c.b16 %v2587, %v2579
        %v4540 = vpack.c.b16 %v2588, %v2580
        %v4541 = vpack.c.b16 %v2589, %v2581
        %v4542 = vpack.c.b16 %v2590, %v2582
        %v4543 = vpack.c.b16 %v2591, %v2583
        %v4544 = vpack.c.b16 %v2600, %v2592
        %v4545 = vpack.c.b16 %v2601, %v2593
        %v4546 = vpack.c.b16 %v2602, %v2594
        %v4547 = vpack.c.b16 %v2603, %v2595
        %v4548 = vpack.c.b16 %v2604, %v2596
        %v4549 = vpack.c.b16 %v2605, %v2597
        %v4550 = vpack.c.b16 %v2606, %v2598
        %v4551 = vpack.c.b16 %v2607, %v2599
        %v4552 = vpack.c.b16 %v2616, %v2608
        %v4553 = vpack.c.b16 %v2617, %v2609
        %v4554 = vpack.c.b16 %v2618, %v2610
        %v4555 = vpack.c.b16 %v2619, %v2611
        %v4556 = vpack.c.b16 %v2620, %v2612
        %v4557 = vpack.c.b16 %v2621, %v2613
        %v4558 = vpack.c.b16 %v2622, %v2614
        %v4559 = vpack.c.b16 %v2623, %v2615
        %v4560 = vpack.c.b16 %v2632, %v2624
        %v4561 = vpack.c.b16 %v2633, %v2625
        %v4562 = vpack.c.b16 %v2634, %v2626
        %v4563 = vpack.c.b16 %v2635, %v2627
        %v4564 = vpack.c.b16 %v2636, %v2628
        %v4565 = vpack.c.b16 %v2637, %v2629
        %v4566 = vpack.c.b16 %v2638, %v2630
        %v4567 = vpack.c.b16 %v2639, %v2631
        %v4568 = vpack.c.b16 %v2648, %v2640
        %v4569 = vpack.c.b16 %v2649, %v2641
        %v4570 = vpack.c.b16 %v2650, %v2642
        %v4571 = vpack.c.b16 %v2651, %v2643
        %v4572 = vpack.c.b16 %v2652, %v2644
        %v4573 = vpack.c.b16 %v2653, %v2645
        %v4574 = vpack.c.b16 %v2654, %v2646
        %v4575 = vpack.c.b16 %v2655, %v2647
        %v4576 = vpack.c.b16 %v2664, %v2656
        %v4577 = vpack.c.b16 %v2665, %v2657
        %v4578 = vpack.c.b16 %v2666, %v2658
        %v4579 = vpack.c.b16 %v2667, %v2659
        %v4580 = vpack.c.b16 %v2668, %v2660
        %v4581 = vpack.c.b16 %v2669, %v2661
        %v4582 = vpack.c.b16 %v2670, %v2662
        %v4583 = vpack.c.b16 %v2671, %v2663
        %v4584 = vpack.c.b16 %v2680, %v2672
        %v4585 = vpack.c.b16 %v2681, %v2673
        %v4586 = vpack.c.b16 %v2682, %v2674
        %v4587 = vpack.c.b16 %v2683, %v2675
        %v4588 = vpack.c.b16 %v2684, %v2676
        %v4589 = vpack.c.b16 %v2685, %v2677
        %v4590 = vpack.c.b16 %v2686, %v2678
        %v4591 = vpack.c.b16 %v2687, %v2679
        %v4592 = vpack.c.b16 %v2696, %v2688
        %v4593 = vpack.c.b16 %v2697, %v2689
        %v4594 = vpack.c.b16 %v2698, %v2690
        %v4595 = vpack.c.b16 %v2699, %v2691
        %v4596 = vpack.c.b16 %v2700, %v2692
        %v4597 = vpack.c.b16 %v2701, %v2693
        %v4598 = vpack.c.b16 %v2702, %v2694
        %v4599 = vpack.c.b16 %v2703, %v2695
        %v4600 = vpack.c.b16 %v2712, %v2704
        %v4601 = vpack.c.b16 %v2713, %v2705
        %v4602 = vpack.c.b16 %v2714, %v2706
        %v4603 = vpack.c.b16 %v2715, %v2707
        %v4604 = vpack.c.b16 %v2716, %v2708
        %v4605 = vpack.c.b16 %v2717, %v2709
        %v4606 = vpack.c.b16 %v2718, %v2710
        %v4607 = vpack.c.b16 %v2719, %v2711
        %v4608 = vpack.c.b16 %v2728, %v2720
        %v4609 = vpack.c.b16 %v2729, %v2721
        %v4610 = vpack.c.b16 %v2730, %v2722
        %v4611 = vpack.c.b16 %v2731, %v2723
        %v4612 = vpack.c.b16 %v2732, %v2724
        %v4613 = vpack.c.b16 %v2733, %v2725
        %v4614 = vpack.c.b16 %v2734, %v2726
        %v4615 = vpack.c.b16 %v2735, %v2727
        %v4616 = vpack.c.b16 %v2744, %v2736
        %v4617 = vpack.c.b16 %v2745, %v2737
        %v4618 = vpack.c.b16 %v2746, %v2738
        %v4619 = vpack.c.b16 %v2747, %v2739
        %v4620 = vpack.c.b16 %v2748, %v2740
        %v4621 = vpack.c.b16 %v2749, %v2741
        %v4622 = vpack.c.b16 %v2750, %v2742
        %v4623 = vpack.c.b16 %v2751, %v2743
        %v4624 = vpack.c.b16 %v2760, %v2752
        %v4625 = vpack.c.b16 %v2761, %v2753
        %v4626 = vpack.c.b16 %v2762, %v2754
        %v4627 = vpack.c.b16 %v2763, %v2755
        %v4628 = vpack.c.b16 %v2764, %v2756
        %v4629 = vpack.c.b16 %v2765, %v2757
        %v4630 = vpack.c.b16 %v2766, %v2758
        %v4631 = vpack.c.b16 %v2767, %v2759
        %v4632 = vpack.c.b16 %v2776, %v2768
        %v4633 = vpack.c.b16 %v2777, %v2769
        %v4634 = vpack.c.b16 %v2778, %v2770
        %v4635 = vpack.c.b16 %v2779, %v2771
        %v4636 = vpack.c.b16 %v2780, %v2772
        %v4637 = vpack.c.b16 %v2781, %v2773
        %v4638 = vpack.c.b16 %v2782, %v2774
        %v4639 = vpack.c.b16 %v2783, %v2775
        %v4640 = vpack.c.b16 %v2792, %v2784
        %v4641 = vpack.c.b16 %v2793, %v2785
        %v4642 = vpack.c.b16 %v2794, %v2786
        %v4643 = vpack.c.b16 %v2795, %v2787
        %v4644 = vpack.c.b16 %v2796, %v2788
        %v4645 = vpack.c.b16 %v2797, %v2789
        %v4646 = vpack.c.b16 %v2798, %v2790
        %v4647 = vpack.c.b16 %v2799, %v2791
        %v4648 = vpack.c.b16 %v2808, %v2800
        %v4649 = vpack.c.b16 %v2809, %v2801
        %v4650 = vpack.c.b16 %v2810, %v2802
        %v4651 = vpack.c.b16 %v2811, %v2803
        %v4652 = vpack.c.b16 %v2812, %v2804
        %v4653 = vpack.c.b16 %v2813, %v2805
        %v4654 = vpack.c.b16 %v2814, %v2806
        %v4655 = vpack.c.b16 %v2815, %v2807
        %v4656 = vpack.c.b16 %v2824, %v2816
        %v4657 = vpack.c.b16 %v2825, %v2817
        %v4658 = vpack.c.b16 %v2826, %v2818
        %v4659 = vpack.c.b16 %v2827, %v2819
        %v4660 = vpack.c.b16 %v2828, %v2820
        %v4661 = vpack.c.b16 %v2829, %v2821
        %v4662 = vpack.c.b16 %v2830, %v2822
        %v4663 = vpack.c.b16 %v2831, %v2823
        %v4664 = vpack.c.b16 %v2840, %v2832
        %v4665 = vpack.c.b16 %v2841, %v2833
        %v4666 = vpack.c.b16 %v2842, %v2834
        %v4667 = vpack.c.b16 %v2843, %v2835
        %v4668 = vpack.c.b16 %v2844, %v2836
        %v4669 = vpack.c.b16 %v2845, %v2837
        %v4670 = vpack.c.b16 %v2846, %v2838
        %v4671 = vpack.c.b16 %v2847, %v2839
        %v4672 = vpack.c.b16 %v2856, %v2848
        %v4673 = vpack.c.b16 %v2857, %v2849
        %v4674 = vpack.c.b16 %v2858, %v2850
        %v4675 = vpack.c.b16 %v2859, %v2851
        %v4676 = vpack.c.b16 %v2860, %v2852
        %v4677 = vpack.c.b16 %v2861, %v2853
        %v4678 = vpack.c.b16 %v2862, %v2854
        %v4679 = vpack.c.b16 %v2863, %v2855
        %v4680 = vpack.c.b16 %v2872, %v2864
        %v4681 = vpack.c.b16 %v2873, %v2865
        %v4682 = vpack.c.b16 %v2874, %v2866
        %v4683 = vpack.c.b16 %v2875, %v2867
        %v4684 = vpack.c.b16 %v2876, %v2868
        %v4685 = vpack.c.b16 %v2877, %v2869
        %v4686 = vpack.c.b16 %v2878, %v2870
        %v4687 = vpack.c.b16 %v2879, %v2871
        %v4688 = vpack.c.b16 %v2888, %v2880
        %v4689 = vpack.c.b16 %v2889, %v2881
        %v4690 = vpack.c.b16 %v2890, %v2882
        %v4691 = vpack.c.b16 %v2891, %v2883
        %v4692 = vpack.c.b16 %v2892, %v2884
        %v4693 = vpack.c.b16 %v2893, %v2885
        %v4694 = vpack.c.b16 %v2894, %v2886
        %v4695 = vpack.c.b16 %v2895, %v2887
        %v4696 = vpack.c.b16 %v2904, %v2896
        %v4697 = vpack.c.b16 %v2905, %v2897
        %v4698 = vpack.c.b16 %v2906, %v2898
        %v4699 = vpack.c.b16 %v2907, %v2899
        %v4700 = vpack.c.b16 %v2908, %v2900
        %v4701 = vpack.c.b16 %v2909, %v2901
        %v4702 = vpack.c.b16 %v2910, %v2902
        %v4703 = vpack.c.b16 %v2911, %v2903
        %v4704 = vpack.c.b16 %v2920, %v2912
        %v4705 = vpack.c.b16 %v2921, %v2913
        %v4706 = vpack.c.b16 %v2922, %v2914
        %v4707 = vpack.c.b16 %v2923, %v2915
        %v4708 = vpack.c.b16 %v2924, %v2916
        %v4709 = vpack.c.b16 %v2925, %v2917
        %v4710 = vpack.c.b16 %v2926, %v2918
        %v4711 = vpack.c.b16 %v2927, %v2919
        %v4712 = vpack.c.b16 %v2936, %v2928
        %v4713 = vpack.c.b16 %v2937, %v2929
        %v4714 = vpack.c.b16 %v2938, %v2930
        %v4715 = vpack.c.b16 %v2939, %v2931
        %v4716 = vpack.c.b16 %v2940, %v2932
        %v4717 = vpack.c.b16 %v2941, %v2933
        %v4718 = vpack.c.b16 %v2942, %v2934
        %v4719 = vpack.c.b16 %v2943, %v2935
        %v4720 = vpack.c.b16 %v2952, %v2944
        %v4721 = vpack.c.b16 %v2953, %v2945
        %v4722 = vpack.c.b16 %v2954, %v2946
        %v4723 = vpack.c.b16 %v2955, %v2947
        %v4724 = vpack.c.b16 %v2956, %v2948
        %v4725 = vpack.c.b16 %v2957, %v2949
        %v4726 = vpack.c.b16 %v2958, %v2950
        %v4727 = vpack.c.b16 %v2959, %v2951
        %v4728 = vpack.c.b16 %v2968, %v2960
        %v4729 = vpack.c.b16 %v2969, %v2961
        %v4730 = vpack.c.b16 %v2970, %v2962
        %v4731 = vpack.c.b16 %v2971, %v2963
        %v4732 = vpack.c.b16 %v2972, %v2964
        %v4733 = vpack.c.b16 %v2973, %v2965
        %v4734 = vpack.c.b16 %v2974, %v2966
        %v4735 = vpack.c.b16 %v2975, %v2967
        %v4736 = vpack.c.b16 %v2984, %v2976
        %v4737 = vpack.c.b16 %v2985, %v2977
        %v4738 = vpack.c.b16 %v2986, %v2978
        %v4739 = vpack.c.b16 %v2987, %v2979
        %v4740 = vpack.c.b16 %v2988, %v2980
        %v4741 = vpack.c.b16 %v2989, %v2981
        %v4742 = vpack.c.b16 %v2990, %v2982
        %v4743 = vpack.c.b16 %v2991, %v2983
        %v4744 = vpack.c.b16 %v3000, %v2992
        %v4745 = vpack.c.b16 %v3001, %v2993
        %v4746 = vpack.c.b16 %v3002, %v2994
        %v4747 = vpack.c.b16 %v3003, %v2995
        %v4748 = vpack.c.b16 %v3004, %v2996
        %v4749 = vpack.c.b16 %v3005, %v2997
        %v4750 = vpack.c.b16 %v3006, %v2998
        %v4751 = vpack.c.b16 %v3007, %v2999
        %v4752 = vpack.c.b16 %v3016, %v3008
        %v4753 = vpack.c.b16 %v3017, %v3009
        %v4754 = vpack.c.b16 %v3018, %v3010
        %v4755 = vpack.c.b16 %v3019, %v3011
        %v4756 = vpack.c.b16 %v3020, %v3012
        %v4757 = vpack.c.b16 %v3021, %v3013
        %v4758 = vpack.c.b16 %v3022, %v3014
        %v4759 = vpack.c.b16 %v3023, %v3015
        %v4760 = vpack.c.b16 %v3032, %v3024
        %v4761 = vpack.c.b16 %v3033, %v3025
        %v4762 = vpack.c.b16 %v3034, %v3026
        %v4763 = vpack.c.b16 %v3035, %v3027
        %v4764 = vpack.c.b16 %v3036, %v3028
        %v4765 = vpack.c.b16 %v3037, %v3029
        %v4766 = vpack.c.b16 %v3038, %v3030
        %v4767 = vpack.c.b16 %v3039, %v3031
        %v4768 = vpack.c.b16 %v3048, %v3040
        %v4769 = vpack.c.b16 %v3049, %v3041
        %v4770 = vpack.c.b16 %v3050, %v3042
        %v4771 = vpack.c.b16 %v3051, %v3043
        %v4772 = vpack.c.b16 %v3052, %v3044
        %v4773 = vpack.c.b16 %v3053, %v3045
        %v4774 = vpack.c.b16 %v3054, %v3046
        %v4775 = vpack.c.b16 %v3055, %v3047
        %v4776 = vpack.c.b16 %v3064, %v3056
        %v4777 = vpack.c.b16 %v3065, %v3057
        %v4778 = vpack.c.b16 %v3066, %v3058
        %v4779 = vpack.c.b16 %v3067, %v3059
        %v4780 = vpack.c.b16 %v3068, %v3060
        %v4781 = vpack.c.b16 %v3069, %v3061
        %v4782 = vpack.c.b16 %v3070, %v3062
        %v4783 = vpack.c.b16 %v3071, %v3063
        %v4784 = vpack.c.b16 %v3080, %v3072
        %v4785 = vpack.c.b16 %v3081, %v3073
        %v4786 = vpack.c.b16 %v3082, %v3074
        %v4787 = vpack.c.b16 %v3083, %v3075
        %v4788 = vpack.c.b16 %v3084, %v3076
        %v4789 = vpack.c.b16 %v3085, %v3077
        %v4790 = vpack.c.b16 %v3086, %v3078
        %v4791 = vpack.c.b16 %v3087, %v3079
        %v4792 = vpack.c.b16 %v3096, %v3088
        %v4793 = vpack.c.b16 %v3097, %v3089
        %v4794 = vpack.c.b16 %v3098, %v3090
        %v4795 = vpack.c.b16 %v3099, %v3091
        %v4796 = vpack.c.b16 %v3100, %v3092
        %v4797 = vpack.c.b16 %v3101, %v3093
        %v4798 = vpack.c.b16 %v3102, %v3094
        %v4799 = vpack.c.b16 %v3103, %v3095
        %v4800 = vpack.c.b16 %v3112, %v3104
        %v4801 = vpack.c.b16 %v3113, %v3105
        %v4802 = vpack.c.b16 %v3114, %v3106
        %v4803 = vpack.c.b16 %v3115, %v3107
        %v4804 = vpack.c.b16 %v3116, %v3108
        %v4805 = vpack.c.b16 %v3117, %v3109
        %v4806 = vpack.c.b16 %v3118, %v3110
        %v4807 = vpack.c.b16 %v3119, %v3111
        %v4808 = vpack.c.b16 %v3128, %v3120
        %v4809 = vpack.c.b16 %v3129, %v3121
        %v4810 = vpack.c.b16 %v3130, %v3122
        %v4811 = vpack.c.b16 %v3131, %v3123
        %v4812 = vpack.c.b16 %v3132, %v3124
        %v4813 = vpack.c.b16 %v3133, %v3125
        %v4814 = vpack.c.b16 %v3134, %v3126
        %v4815 = vpack.c.b16 %v3135, %v3127
        %v4816 = vpack.c.b16 %v3144, %v3136
        %v4817 = vpack.c.b16 %v3145, %v3137
        %v4818 = vpack.c.b16 %v3146, %v3138
        %v4819 = vpack.c.b16 %v3147, %v3139
        %v4820 = vpack.c.b16 %v3148, %v3140
        %v4821 = vpack.c.b16 %v3149, %v3141
        %v4822 = vpack.c.b16 %v3150, %v3142
        %v4823 = vpack.c.b16 %v3151, %v3143
        %v4824 = vpack.c.b16 %v3160, %v3152
        %v4825 = vpack.c.b16 %v3161, %v3153
        %v4826 = vpack.c.b16 %v3162, %v3154
        %v4827 = vpack.c.b16 %v3163, %v3155
        %v4828 = vpack.c.b16 %v3164, %v3156
        %v4829 = vpack.c.b16 %v3165, %v3157
        %v4830 = vpack.c.b16 %v3166, %v3158
        %v4831 = vpack.c.b16 %v3167, %v3159
        %v4832 = vpack.c.b16 %v3176, %v3168
        %v4833 = vpack.c.b16 %v3177, %v3169
        %v4834 = vpack.c.b16 %v3178, %v3170
        %v4835 = vpack.c.b16 %v3179, %v3171
        %v4836 = vpack.c.b16 %v3180, %v3172
        %v4837 = vpack.c.b16 %v3181, %v3173
        %v4838 = vpack.c.b16 %v3182, %v3174
        %v4839 = vpack.c.b16 %v3183, %v3175
        %v4840 = vpack.c.b16 %v3192, %v3184
        %v4841 = vpack.c.b16 %v3193, %v3185
        %v4842 = vpack.c.b16 %v3194, %v3186
        %v4843 = vpack.c.b16 %v3195, %v3187
        %v4844 = vpack.c.b16 %v3196, %v3188
        %v4845 = vpack.c.b16 %v3197, %v3189
        %v4846 = vpack.c.b16 %v3198, %v3190
        %v4847 = vpack.c.b16 %v3199, %v3191
        %v4848 = vpack.c.b16 %v3208, %v3200
        %v4849 = vpack.c.b16 %v3209, %v3201
        %v4850 = vpack.c.b16 %v3210, %v3202
        %v4851 = vpack.c.b16 %v3211, %v3203
        %v4852 = vpack.c.b16 %v3212, %v3204
        %v4853 = vpack.c.b16 %v3213, %v3205
        %v4854 = vpack.c.b16 %v3214, %v3206
        %v4855 = vpack.c.b16 %v3215, %v3207
        %v4856 = vpack.c.b16 %v3224, %v3216
        %v4857 = vpack.c.b16 %v3225, %v3217
        %v4858 = vpack.c.b16 %v3226, %v3218
        %v4859 = vpack.c.b16 %v3227, %v3219
        %v4860 = vpack.c.b16 %v3228, %v3220
        %v4861 = vpack.c.b16 %v3229, %v3221
        %v4862 = vpack.c.b16 %v3230, %v3222
        %v4863 = vpack.c.b16 %v3231, %v3223
        %v4864 = vpack.c.b16 %v3240, %v3232
        %v4865 = vpack.c.b16 %v3241, %v3233
        %v4866 = vpack.c.b16 %v3242, %v3234
        %v4867 = vpack.c.b16 %v3243, %v3235
        %v4868 = vpack.c.b16 %v3244, %v3236
        %v4869 = vpack.c.b16 %v3245, %v3237
        %v4870 = vpack.c.b16 %v3246, %v3238
        %v4871 = vpack.c.b16 %v3247, %v3239
        %v4872 = vpack.c.b16 %v3256, %v3248
        %v4873 = vpack.c.b16 %v3257, %v3249
        %v4874 = vpack.c.b16 %v3258, %v3250
        %v4875 = vpack.c.b16 %v3259, %v3251
        %v4876 = vpack.c.b16 %v3260, %v3252
        %v4877 = vpack.c.b16 %v3261, %v3253
        %v4878 = vpack.c.b16 %v3262, %v3254
        %v4879 = vpack.c.b16 %v3263, %v3255
        %v4880 = vpack.c.b16 %v3272, %v3264
        %v4881 = vpack.c.b16 %v3273, %v3265
        %v4882 = vpack.c.b16 %v3274, %v3266
        %v4883 = vpack.c.b16 %v3275, %v3267
        %v4884 = vpack.c.b16 %v3276, %v3268
        %v4885 = vpack.c.b16 %v3277, %v3269
        %v4886 = vpack.c.b16 %v3278, %v3270
        %v4887 = vpack.c.b16 %v3279, %v3271
        %v4888 = vpack.c.b16 %v3288, %v3280
        %v4889 = vpack.c.b16 %v3289, %v3281
        %v4890 = vpack.c.b16 %v3290, %v3282
        %v4891 = vpack.c.b16 %v3291, %v3283
        %v4892 = vpack.c.b16 %v3292, %v3284
        %v4893 = vpack.c.b16 %v3293, %v3285
        %v4894 = vpack.c.b16 %v3294, %v3286
        %v4895 = vpack.c.b16 %v3295, %v3287
        %v4896 = vpack.c.b16 %v3304, %v3296
        %v4897 = vpack.c.b16 %v3305, %v3297
        %v4898 = vpack.c.b16 %v3306, %v3298
        %v4899 = vpack.c.b16 %v3307, %v3299
        %v4900 = vpack.c.b16 %v3308, %v3300
        %v4901 = vpack.c.b16 %v3309, %v3301
        %v4902 = vpack.c.b16 %v3310, %v3302
        %v4903 = vpack.c.b16 %v3311, %v3303
        %v4904 = vpack.c.b16 %v3320, %v3312
        %v4905 = vpack.c.b16 %v3321, %v3313
        %v4906 = vpack.c.b16 %v3322, %v3314
        %v4907 = vpack.c.b16 %v3323, %v3315
        %v4908 = vpack.c.b16 %v3324, %v3316
        %v4909 = vpack.c.b16 %v3325, %v3317
        %v4910 = vpack.c.b16 %v3326, %v3318
        %v4911 = vpack.c.b16 %v3327, %v3319
        %v4912 = vpack.c.b16 %v3336, %v3328
        %v4913 = vpack.c.b16 %v3337, %v3329
        %v4914 = vpack.c.b16 %v3338, %v3330
        %v4915 = vpack.c.b16 %v3339, %v3331
        %v4916 = vpack.c.b16 %v3340, %v3332
        %v4917 = vpack.c.b16 %v3341, %v3333
        %v4918 = vpack.c.b16 %v3342, %v3334
        %v4919 = vpack.c.b16 %v3343, %v3335
        %v4920 = vpack.c.b16 %v3352, %v3344
        %v4921 = vpack.c.b16 %v3353, %v3345
        %v4922 = vpack.c.b16 %v3354, %v3346
        %v4923 = vpack.c.b16 %v3355, %v3347
        %v4924 = vpack.c.b16 %v3356, %v3348
        %v4925 = vpack.c.b16 %v3357, %v3349
        %v4926 = vpack.c.b16 %v3358, %v3350
        %v4927 = vpack.c.b16 %v3359, %v3351
        %v4928 = vpack.c.b16 %v3368, %v3360
        %v4929 = vpack.c.b16 %v3369, %v3361
        %v4930 = vpack.c.b16 %v3370, %v3362
        %v4931 = vpack.c.b16 %v3371, %v3363
        %v4932 = vpack.c.b16 %v3372, %v3364
        %v4933 = vpack.c.b16 %v3373, %v3365
        %v4934 = vpack.c.b16 %v3374, %v3366
        %v4935 = vpack.c.b16 %v3375, %v3367
        %v4936 = vpack.c.b16 %v3384, %v3376
        %v4937 = vpack.c.b16 %v3385, %v3377
        %v4938 = vpack.c.b16 %v3386, %v3378
        %v4939 = vpack.c.b16 %v3387, %v3379
        %v4940 = vpack.c.b16 %v3388, %v3380
        %v4941 = vpack.c.b16 %v3389, %v3381
        %v4942 = vpack.c.b16 %v3390, %v3382
        %v4943 = vpack.c.b16 %v3391, %v3383
        %v4944 = vpack.c.b16 %v3400, %v3392
        %v4945 = vpack.c.b16 %v3401, %v3393
        %v4946 = vpack.c.b16 %v3402, %v3394
        %v4947 = vpack.c.b16 %v3403, %v3395
        %v4948 = vpack.c.b16 %v3404, %v3396
        %v4949 = vpack.c.b16 %v3405, %v3397
        %v4950 = vpack.c.b16 %v3406, %v3398
        %v4951 = vpack.c.b16 %v3407, %v3399
        %v4952 = vpack.c.b16 %v3416, %v3408
        %v4953 = vpack.c.b16 %v3417, %v3409
        %v4954 = vpack.c.b16 %v3418, %v3410
        %v4955 = vpack.c.b16 %v3419, %v3411
        %v4956 = vpack.c.b16 %v3420, %v3412
        %v4957 = vpack.c.b16 %v3421, %v3413
        %v4958 = vpack.c.b16 %v3422, %v3414
        %v4959 = vpack.c.b16 %v3423, %v3415
        %v4960 = vpack.c.b16 %v3432, %v3424
        %v4961 = vpack.c.b16 %v3433, %v3425
        %v4962 = vpack.c.b16 %v3434, %v3426
        %v4963 = vpack.c.b16 %v3435, %v3427
        %v4964 = vpack.c.b16 %v3436, %v3428
        %v4965 = vpack.c.b16 %v3437, %v3429
        %v4966 = vpack.c.b16 %v3438, %v3430
        %v4967 = vpack.c.b16 %v3439, %v3431
        %v4968 = vpack.c.b16 %v3448, %v3440
        %v4969 = vpack.c.b16 %v3449, %v3441
        %v4970 = vpack.c.b16 %v3450, %v3442
        %v4971 = vpack.c.b16 %v3451, %v3443
        %v4972 = vpack.c.b16 %v3452, %v3444
        %v4973 = vpack.c.b16 %v3453, %v3445
        %v4974 = vpack.c.b16 %v3454, %v3446
        %v4975 = vpack.c.b16 %v3455, %v3447
        %v4976 = vpack.c.b16 %v3464, %v3456
        %v4977 = vpack.c.b16 %v3465, %v3457
        %v4978 = vpack.c.b16 %v3466, %v3458
        %v4979 = vpack.c.b16 %v3467, %v3459
        %v4980 = vpack.c.b16 %v3468, %v3460
        %v4981 = vpack.c.b16 %v3469, %v3461
        %v4982 = vpack.c.b16 %v3470, %v3462
        %v4983 = vpack.c.b16 %v3471, %v3463
        %v4984 = vpack.c.b16 %v3480, %v3472
        %v4985 = vpack.c.b16 %v3481, %v3473
        %v4986 = vpack.c.b16 %v3482, %v3474
        %v4987 = vpack.c.b16 %v3483, %v3475
        %v4988 = vpack.c.b16 %v3484, %v3476
        %v4989 = vpack.c.b16 %v3485, %v3477
        %v4990 = vpack.c.b16 %v3486, %v3478
        %v4991 = vpack.c.b16 %v3487, %v3479
        %v4992 = vpack.c.b16 %v3496, %v3488
        %v4993 = vpack.c.b16 %v3497, %v3489
        %v4994 = vpack.c.b16 %v3498, %v3490
        %v4995 = vpack.c.b16 %v3499, %v3491
        %v4996 = vpack.c.b16 %v3500, %v3492
        %v4997 = vpack.c.b16 %v3501, %v3493
        %v4998 = vpack.c.b16 %v3502, %v3494
        %v4999 = vpack.c.b16 %v3503, %v3495
        %v5000 = vpack.c.b16 %v3512, %v3504
        %v5001 = vpack.c.b16 %v3513, %v3505
        %v5002 = vpack.c.b16 %v3514, %v3506
        %v5003 = vpack.c.b16 %v3515, %v3507
        %v5004 = vpack.c.b16 %v3516, %v3508
        %v5005 = vpack.c.b16 %v3517, %v3509
        %v5006 = vpack.c.b16 %v3518, %v3510
        %v5007 = vpack.c.b16 %v3519, %v3511
        %v5008 = vpack.c.b16 %v3528, %v3520
        %v5009 = vpack.c.b16 %v3529, %v3521
        %v5010 = vpack.c.b16 %v3530, %v3522
        %v5011 = vpack.c.b16 %v3531, %v3523
        %v5012 = vpack.c.b16 %v3532, %v3524
        %v5013 = vpack.c.b16 %v3533, %v3525
        %v5014 = vpack.c.b16 %v3534, %v3526
        %v5015 = vpack.c.b16 %v3535, %v3527
        %v5016 = vpack.c.b16 %v3544, %v3536
        %v5017 = vpack.c.b16 %v3545, %v3537
        %v5018 = vpack.c.b16 %v3546, %v3538
        %v5019 = vpack.c.b16 %v3547, %v3539
        %v5020 = vpack.c.b16 %v3548, %v3540
        %v5021 = vpack.c.b16 %v3549, %v3541
        %v5022 = vpack.c.b16 %v3550, %v3542
        %v5023 = vpack.c.b16 %v3551, %v3543
        %v5024 = vpack.c.b16 %v3560, %v3552
        %v5025 = vpack.c.b16 %v3561, %v3553
        %v5026 = vpack.c.b16 %v3562, %v3554
        %v5027 = vpack.c.b16 %v3563, %v3555
        %v5028 = vpack.c.b16 %v3564, %v3556
        %v5029 = vpack.c.b16 %v3565, %v3557
        %v5030 = vpack.c.b16 %v3566, %v3558
        %v5031 = vpack.c.b16 %v3567, %v3559
        %v5032 = vpack.c.b16 %v3576, %v3568
        %v5033 = vpack.c.b16 %v3577, %v3569
        %v5034 = vpack.c.b16 %v3578, %v3570
        %v5035 = vpack.c.b16 %v3579, %v3571
        %v5036 = vpack.c.b16 %v3580, %v3572
        %v5037 = vpack.c.b16 %v3581, %v3573
        %v5038 = vpack.c.b16 %v3582, %v3574
        %v5039 = vpack.c.b16 %v3583, %v3575
        %v5040 = vpack.c.b16 %v3592, %v3584
        %v5041 = vpack.c.b16 %v3593, %v3585
        %v5042 = vpack.c.b16 %v3594, %v3586
        %v5043 = vpack.c.b16 %v3595, %v3587
        %v5044 = vpack.c.b16 %v3596, %v3588
        %v5045 = vpack.c.b16 %v3597, %v3589
        %v5046 = vpack.c.b16 %v3598, %v3590
        %v5047 = vpack.c.b16 %v3599, %v3591
        %v5048 = vpack.c.b16 %v3608, %v3600
        %v5049 = vpack.c.b16 %v3609, %v3601
        %v5050 = vpack.c.b16 %v3610, %v3602
        %v5051 = vpack.c.b16 %v3611, %v3603
        %v5052 = vpack.c.b16 %v3612, %v3604
        %v5053 = vpack.c.b16 %v3613, %v3605
        %v5054 = vpack.c.b16 %v3614, %v3606
        %v5055 = vpack.c.b16 %v3615, %v3607
        %v5056 = vpack.c.b16 %v3624, %v3616
        %v5057 = vpack.c.b16 %v3625, %v3617
        %v5058 = vpack.c.b16 %v3626, %v3618
        %v5059 = vpack.c.b16 %v3627, %v3619
        %v5060 = vpack.c.b16 %v3628, %v3620
        %v5061 = vpack.c.b16 %v3629, %v3621
        %v5062 = vpack.c.b16 %v3630, %v3622
        %v5063 = vpack.c.b16 %v3631, %v3623
        %v5064 = vpack.c.b16 %v3640, %v3632
        %v5065 = vpack.c.b16 %v3641, %v3633
        %v5066 = vpack.c.b16 %v3642, %v3634
        %v5067 = vpack.c.b16 %v3643, %v3635
        %v5068 = vpack.c.b16 %v3644, %v3636
        %v5069 = vpack.c.b16 %v3645, %v3637
        %v5070 = vpack.c.b16 %v3646, %v3638
        %v5071 = vpack.c.b16 %v3647, %v3639
        %v5072 = vpack.c.b16 %v3656, %v3648
        %v5073 = vpack.c.b16 %v3657, %v3649
        %v5074 = vpack.c.b16 %v3658, %v3650
        %v5075 = vpack.c.b16 %v3659, %v3651
        %v5076 = vpack.c.b16 %v3660, %v3652
        %v5077 = vpack.c.b16 %v3661, %v3653
        %v5078 = vpack.c.b16 %v3662, %v3654
        %v5079 = vpack.c.b16 %v3663, %v3655
        %v5080 = vpack.c.b16 %v3672, %v3664
        %v5081 = vpack.c.b16 %v3673, %v3665
        %v5082 = vpack.c.b16 %v3674, %v3666
        %v5083 = vpack.c.b16 %v3675, %v3667
        %v5084 = vpack.c.b16 %v3676, %v3668
        %v5085 = vpack.c.b16 %v3677, %v3669
        %v5086 = vpack.c.b16 %v3678, %v3670
        %v5087 = vpack.c.b16 %v3679, %v3671
        %v5088 = vpack.c.b16 %v3688, %v3680
        %v5089 = vpack.c.b16 %v3689, %v3681
        %v5090 = vpack.c.b16 %v3690, %v3682
        %v5091 = vpack.c.b16 %v3691, %v3683
        %v5092 = vpack.c.b16 %v3692, %v3684
        %v5093 = vpack.c.b16 %v3693, %v3685
        %v5094 = vpack.c.b16 %v3694, %v3686
        %v5095 = vpack.c.b16 %v3695, %v3687
        %v5096 = vpack.c.b16 %v3704, %v3696
        %v5097 = vpack.c.b16 %v3705, %v3697
        %v5098 = vpack.c.b16 %v3706, %v3698
        %v5099 = vpack.c.b16 %v3707, %v3699
        %v5100 = vpack.c.b16 %v3708, %v3700
        %v5101 = vpack.c.b16 %v3709, %v3701
        %v5102 = vpack.c.b16 %v3710, %v3702
        %v5103 = vpack.c.b16 %v3711, %v3703
        %v5104 = vpack.c.b16 %v3720, %v3712
        %v5105 = vpack.c.b16 %v3721, %v3713
        %v5106 = vpack.c.b16 %v3722, %v3714
        %v5107 = vpack.c.b16 %v3723, %v3715
        %v5108 = vpack.c.b16 %v3724, %v3716
        %v5109 = vpack.c.b16 %v3725, %v3717
        %v5110 = vpack.c.b16 %v3726, %v3718
        %v5111 = vpack.c.b16 %v3727, %v3719
        %v5112 = vpack.c.b16 %v3736, %v3728
        %v5113 = vpack.c.b16 %v3737, %v3729
        %v5114 = vpack.c.b16 %v3738, %v3730
        %v5115 = vpack.c.b16 %v3739, %v3731
        %v5116 = vpack.c.b16 %v3740, %v3732
        %v5117 = vpack.c.b16 %v3741, %v3733
        %v5118 = vpack.c.b16 %v3742, %v3734
        %v5119 = vpack.c.b16 %v3743, %v3735
        %v5120 = vpack.c.b16 %v3752, %v3744
        %v5121 = vpack.c.b16 %v3753, %v3745
        %v5122 = vpack.c.b16 %v3754, %v3746
        %v5123 = vpack.c.b16 %v3755, %v3747
        %v5124 = vpack.c.b16 %v3756, %v3748
        %v5125 = vpack.c.b16 %v3757, %v3749
        %v5126 = vpack.c.b16 %v3758, %v3750
        %v5127 = vpack.c.b16 %v3759, %v3751
        %v5128 = vpack.c.b16 %v3768, %v3760
        %v5129 = vpack.c.b16 %v3769, %v3761
        %v5130 = vpack.c.b16 %v3770, %v3762
        %v5131 = vpack.c.b16 %v3771, %v3763
        %v5132 = vpack.c.b16 %v3772, %v3764
        %v5133 = vpack.c.b16 %v3773, %v3765
        %v5134 = vpack.c.b16 %v3774, %v3766
        %v5135 = vpack.c.b16 %v3775, %v3767
        %v5136 = vpack.c.b16 %v3784, %v3776
        %v5137 = vpack.c.b16 %v3785, %v3777
        %v5138 = vpack.c.b16 %v3786, %v3778
        %v5139 = vpack.c.b16 %v3787, %v3779
        %v5140 = vpack.c.b16 %v3788, %v3780
        %v5141 = vpack.c.b16 %v3789, %v3781
        %v5142 = vpack.c.b16 %v3790, %v3782
        %v5143 = vpack.c.b16 %v3791, %v3783
        %v5144 = vpack.c.b16 %v3800, %v3792
        %v5145 = vpack.c.b16 %v3801, %v3793
        %v5146 = vpack.c.b16 %v3802, %v3794
        %v5147 = vpack.c.b16 %v3803, %v3795
        %v5148 = vpack.c.b16 %v3804, %v3796
        %v5149 = vpack.c.b16 %v3805, %v3797
        %v5150 = vpack.c.b16 %v3806, %v3798
        %v5151 = vpack.c.b16 %v3807, %v3799
        %v5152 = vpack.c.b16 %v3816, %v3808
        %v5153 = vpack.c.b16 %v3817, %v3809
        %v5154 = vpack.c.b16 %v3818, %v3810
        %v5155 = vpack.c.b16 %v3819, %v3811
        %v5156 = vpack.c.b16 %v3820, %v3812
        %v5157 = vpack.c.b16 %v3821, %v3813
        %v5158 = vpack.c.b16 %v3822, %v3814
        %v5159 = vpack.c.b16 %v3823, %v3815
        %v5160 = vpack.c.b16 %v3832, %v3824
        %v5161 = vpack.c.b16 %v3833, %v3825
        %v5162 = vpack.c.b16 %v3834, %v3826
        %v5163 = vpack.c.b16 %v3835, %v3827
        %v5164 = vpack.c.b16 %v3836, %v3828
        %v5165 = vpack.c.b16 %v3837, %v3829
        %v5166 = vpack.c.b16 %v3838, %v3830
        %v5167 = vpack.c.b16 %v3839, %v3831
        %v5168 = vpack.c.b16 %v3848, %v3840
        %v5169 = vpack.c.b16 %v3849, %v3841
        %v5170 = vpack.c.b16 %v3850, %v3842
        %v5171 = vpack.c.b16 %v3851, %v3843
        %v5172 = vpack.c.b16 %v3852, %v3844
        %v5173 = vpack.c.b16 %v3853, %v3845
        %v5174 = vpack.c.b16 %v3854, %v3846
        %v5175 = vpack.c.b16 %v3855, %v3847
        %v5176 = vpack.c.b16 %v3864, %v3856
        %v5177 = vpack.c.b16 %v3865, %v3857
        %v5178 = vpack.c.b16 %v3866, %v3858
        %v5179 = vpack.c.b16 %v3867, %v3859
        %v5180 = vpack.c.b16 %v3868, %v3860
        %v5181 = vpack.c.b16 %v3869, %v3861
        %v5182 = vpack.c.b16 %v3870, %v3862
        %v5183 = vpack.c.b16 %v3871, %v3863
        %v5184 = vpack.c.b16 %v3880, %v3872
        %v5185 = vpack.c.b16 %v3881, %v3873
        %v5186 = vpack.c.b16 %v3882, %v3874
        %v5187 = vpack.c.b16 %v3883, %v3875
        %v5188 = vpack.c.b16 %v3884, %v3876
        %v5189 = vpack.c.b16 %v3885, %v3877
        %v5190 = vpack.c.b16 %v3886, %v3878
        %v5191 = vpack.c.b16 %v3887, %v3879
        %v5192 = vpack.c.b16 %v3896, %v3888
        %v5193 = vpack.c.b16 %v3897, %v3889
        %v5194 = vpack.c.b16 %v3898, %v3890
        %v5195 = vpack.c.b16 %v3899, %v3891
        %v5196 = vpack.c.b16 %v3900, %v3892
        %v5197 = vpack.c.b16 %v3901, %v3893
        %v5198 = vpack.c.b16 %v3902, %v3894
        %v5199 = vpack.c.b16 %v3903, %v3895
        %v5200 = vpack.c.b16 %v3912, %v3904
        %v5201 = vpack.c.b16 %v3913, %v3905
        %v5202 = vpack.c.b16 %v3914, %v3906
        %v5203 = vpack.c.b16 %v3915, %v3907
        %v5204 = vpack.c.b16 %v3916, %v3908
        %v5205 = vpack.c.b16 %v3917, %v3909
        %v5206 = vpack.c.b16 %v3918, %v3910
        %v5207 = vpack.c.b16 %v3919, %v3911
        %v5208 = vpack.c.b16 %v3928, %v3920
        %v5209 = vpack.c.b16 %v3929, %v3921
        %v5210 = vpack.c.b16 %v3930, %v3922
        %v5211 = vpack.c.b16 %v3931, %v3923
        %v5212 = vpack.c.b16 %v3932, %v3924
        %v5213 = vpack.c.b16 %v3933, %v3925
        %v5214 = vpack.c.b16 %v3934, %v3926
        %v5215 = vpack.c.b16 %v3935, %v3927
        %v5216 = vpack.c.b16 %v3944, %v3936
        %v5217 = vpack.c.b16 %v3945, %v3937
        %v5218 = vpack.c.b16 %v3946, %v3938
        %v5219 = vpack.c.b16 %v3947, %v3939
        %v5220 = vpack.c.b16 %v3948, %v3940
        %v5221 = vpack.c.b16 %v3949, %v3941
        %v5222 = vpack.c.b16 %v3950, %v3942
        %v5223 = vpack.c.b16 %v3951, %v3943
        %v5224 = vpack.c.b16 %v3960, %v3952
        %v5225 = vpack.c.b16 %v3961, %v3953
        %v5226 = vpack.c.b16 %v3962, %v3954
        %v5227 = vpack.c.b16 %v3963, %v3955
        %v5228 = vpack.c.b16 %v3964, %v3956
        %v5229 = vpack.c.b16 %v3965, %v3957
        %v5230 = vpack.c.b16 %v3966, %v3958
        %v5231 = vpack.c.b16 %v3967, %v3959
        %v5232 = vpack.c.b16 %v3976, %v3968
        %v5233 = vpack.c.b16 %v3977, %v3969
        %v5234 = vpack.c.b16 %v3978, %v3970
        %v5235 = vpack.c.b16 %v3979, %v3971
        %v5236 = vpack.c.b16 %v3980, %v3972
        %v5237 = vpack.c.b16 %v3981, %v3973
        %v5238 = vpack.c.b16 %v3982, %v3974
        %v5239 = vpack.c.b16 %v3983, %v3975
        %v5240 = vpack.c.b16 %v3992, %v3984
        %v5241 = vpack.c.b16 %v3993, %v3985
        %v5242 = vpack.c.b16 %v3994, %v3986
        %v5243 = vpack.c.b16 %v3995, %v3987
        %v5244 = vpack.c.b16 %v3996, %v3988
        %v5245 = vpack.c.b16 %v3997, %v3989
        %v5246 = vpack.c.b16 %v3998, %v3990
        %v5247 = vpack.c.b16 %v3999, %v3991
        %v5248 = vpack.c.b16 %v4008, %v4000
        %v5249 = vpack.c.b16 %v4009, %v4001
        %v5250 = vpack.c.b16 %v4010, %v4002
        %v5251 = vpack.c.b16 %v4011, %v4003
        %v5252 = vpack.c.b16 %v4012, %v4004
        %v5253 = vpack.c.b16 %v4013, %v4005
        %v5254 = vpack.c.b16 %v4014, %v4006
        %v5255 = vpack.c.b16 %v4015, %v4007
        %v5256 = vpack.c.b16 %v4024, %v4016
        %v5257 = vpack.c.b16 %v4025, %v4017
        %v5258 = vpack.c.b16 %v4026, %v4018
        %v5259 = vpack.c.b16 %v4027, %v4019
        %v5260 = vpack.c.b16 %v4028, %v4020
        %v5261 = vpack.c.b16 %v4029, %v4021
        %v5262 = vpack.c.b16 %v4030, %v4022
        %v5263 = vpack.c.b16 %v4031, %v4023
        %v5264 = vpack.c.b16 %v4040, %v4032
        %v5265 = vpack.c.b16 %v4041, %v4033
        %v5266 = vpack.c.b16 %v4042, %v4034
        %v5267 = vpack.c.b16 %v4043, %v4035
        %v5268 = vpack.c.b16 %v4044, %v4036
        %v5269 = vpack.c.b16 %v4045, %v4037
        %v5270 = vpack.c.b16 %v4046, %v4038
        %v5271 = vpack.c.b16 %v4047, %v4039
        %v5272 = vpack.c.b16 %v4056, %v4048
        %v5273 = vpack.c.b16 %v4057, %v4049
        %v5274 = vpack.c.b16 %v4058, %v4050
        %v5275 = vpack.c.b16 %v4059, %v4051
        %v5276 = vpack.c.b16 %v4060, %v4052
        %v5277 = vpack.c.b16 %v4061, %v4053
        %v5278 = vpack.c.b16 %v4062, %v4054
        %v5279 = vpack.c.b16 %v4063, %v4055
        %v5280 = vpack.c.b16 %v4072, %v4064
        %v5281 = vpack.c.b16 %v4073, %v4065
        %v5282 = vpack.c.b16 %v4074, %v4066
        %v5283 = vpack.c.b16 %v4075, %v4067
        %v5284 = vpack.c.b16 %v4076, %v4068
        %v5285 = vpack.c.b16 %v4077, %v4069
        %v5286 = vpack.c.b16 %v4078, %v4070
        %v5287 = vpack.c.b16 %v4079, %v4071
        %v5288 = vpack.c.b16 %v4088, %v4080
        %v5289 = vpack.c.b16 %v4089, %v4081
        %v5290 = vpack.c.b16 %v4090, %v4082
        %v5291 = vpack.c.b16 %v4091, %v4083
        %v5292 = vpack.c.b16 %v4092, %v4084
        %v5293 = vpack.c.b16 %v4093, %v4085
        %v5294 = vpack.c.b16 %v4094, %v4086
        %v5295 = vpack.c.b16 %v4095, %v4087
        %v5296 = vpack.c.b16 %v4104, %v4096
        %v5297 = vpack.c.b16 %v4105, %v4097
        %v5298 = vpack.c.b16 %v4106, %v4098
        %v5299 = vpack.c.b16 %v4107, %v4099
        %v5300 = vpack.c.b16 %v4108, %v4100
        %v5301 = vpack.c.b16 %v4109, %v4101
        %v5302 = vpack.c.b16 %v4110, %v4102
        %v5303 = vpack.c.b16 %v4111, %v4103
        %v5304 = vpack.c.b16 %v4120, %v4112
        %v5305 = vpack.c.b16 %v4121, %v4113
        %v5306 = vpack.c.b16 %v4122, %v4114
        %v5307 = vpack.c.b16 %v4123, %v4115
        %v5308 = vpack.c.b16 %v4124, %v4116
        %v5309 = vpack.c.b16 %v4125, %v4117
        %v5310 = vpack.c.b16 %v4126, %v4118
        %v5311 = vpack.c.b16 %v4127, %v4119
        %v5312 = vpack.c.b16 %v4136, %v4128
        %v5313 = vpack.c.b16 %v4137, %v4129
        %v5314 = vpack.c.b16 %v4138, %v4130
        %v5315 = vpack.c.b16 %v4139, %v4131
        %v5316 = vpack.c.b16 %v4140, %v4132
        %v5317 = vpack.c.b16 %v4141, %v4133
        %v5318 = vpack.c.b16 %v4142, %v4134
        %v5319 = vpack.c.b16 %v4143, %v4135
        %v5320 = vpack.c.b16 %v4152, %v4144
        %v5321 = vpack.c.b16 %v4153, %v4145
        %v5322 = vpack.c.b16 %v4154, %v4146
        %v5323 = vpack.c.b16 %v4155, %v4147
        %v5324 = vpack.c.b16 %v4156, %v4148
        %v5325 = vpack.c.b16 %v4157, %v4149
        %v5326 = vpack.c.b16 %v4158, %v4150
        %v5327 = vpack.c.b16 %v4159, %v4151
        %v5328 = vpack.c.b16 %v4168, %v4160
        %v5329 = vpack.c.b16 %v4169, %v4161
        %v5330 = vpack.c.b16 %v4170, %v4162
        %v5331 = vpack.c.b16 %v4171, %v4163
        %v5332 = vpack.c.b16 %v4172, %v4164
        %v5333 = vpack.c.b16 %v4173, %v4165
        %v5334 = vpack.c.b16 %v4174, %v4166
        %v5335 = vpack.c.b16 %v4175, %v4167
        %v5336 = vpack.c.b16 %v4184, %v4176
        %v5337 = vpack.c.b16 %v4185, %v4177
        %v5338 = vpack.c.b16 %v4186, %v4178
        %v5339 = vpack.c.b16 %v4187, %v4179
        %v5340 = vpack.c.b16 %v4188, %v4180
        %v5341 = vpack.c.b16 %v4189, %v4181
        %v5342 = vpack.c.b16 %v4190, %v4182
        %v5343 = vpack.c.b16 %v4191, %v4183
        %v5344 = vpack.c.b16 %v4200, %v4192
        %v5345 = vpack.c.b16 %v4201, %v4193
        %v5346 = vpack.c.b16 %v4202, %v4194
        %v5347 = vpack.c.b16 %v4203, %v4195
        %v5348 = vpack.c.b16 %v4204, %v4196
        %v5349 = vpack.c.b16 %v4205, %v4197
        %v5350 = vpack.c.b16 %v4206, %v4198
        %v5351 = vpack.c.b16 %v4207, %v4199
        %v5352 = vpack.c.b16 %v4216, %v4208
        %v5353 = vpack.c.b16 %v4217, %v4209
        %v5354 = vpack.c.b16 %v4218, %v4210
        %v5355 = vpack.c.b16 %v4219, %v4211
        %v5356 = vpack.c.b16 %v4220, %v4212
        %v5357 = vpack.c.b16 %v4221, %v4213
        %v5358 = vpack.c.b16 %v4222, %v4214
        %v5359 = vpack.c.b16 %v4223, %v4215
        %v5360 = vpack.c.b16 %v4232, %v4224
        %v5361 = vpack.c.b16 %v4233, %v4225
        %v5362 = vpack.c.b16 %v4234, %v4226
        %v5363 = vpack.c.b16 %v4235, %v4227
        %v5364 = vpack.c.b16 %v4236, %v4228
        %v5365 = vpack.c.b16 %v4237, %v4229
        %v5366 = vpack.c.b16 %v4238, %v4230
        %v5367 = vpack.c.b16 %v4239, %v4231
        %v5368 = vpack.c.b16 %v4248, %v4240
        %v5369 = vpack.c.b16 %v4249, %v4241
        %v5370 = vpack.c.b16 %v4250, %v4242
        %v5371 = vpack.c.b16 %v4251, %v4243
        %v5372 = vpack.c.b16 %v4252, %v4244
        %v5373 = vpack.c.b16 %v4253, %v4245
        %v5374 = vpack.c.b16 %v4254, %v4246
        %v5375 = vpack.c.b16 %v4255, %v4247
        %v5376 = vpack.c.b16 %v4264, %v4256
        %v5377 = vpack.c.b16 %v4265, %v4257
        %v5378 = vpack.c.b16 %v4266, %v4258
        %v5379 = vpack.c.b16 %v4267, %v4259
        %v5380 = vpack.c.b16 %v4268, %v4260
        %v5381 = vpack.c.b16 %v4269, %v4261
        %v5382 = vpack.c.b16 %v4270, %v4262
        %v5383 = vpack.c.b16 %v4271, %v4263
        %v5384 = vpack.c.b16 %v4280, %v4272
        %v5385 = vpack.c.b16 %v4281, %v4273
        %v5386 = vpack.c.b16 %v4282, %v4274
        %v5387 = vpack.c.b16 %v4283, %v4275
        %v5388 = vpack.c.b16 %v4284, %v4276
        %v5389 = vpack.c.b16 %v4285, %v4277
        %v5390 = vpack.c.b16 %v4286, %v4278
        %v5391 = vpack.c.b16 %v4287, %v4279
        %v5392 = vpack.c.b16 %v4296, %v4288
        %v5393 = vpack.c.b16 %v4297, %v4289
        %v5394 = vpack.c.b16 %v4298, %v4290
        %v5395 = vpack.c.b16 %v4299, %v4291
        %v5396 = vpack.c.b16 %v4300, %v4292
        %v5397 = vpack.c.b16 %v4301, %v4293
        %v5398 = vpack.c.b16 %v4302, %v4294
        %v5399 = vpack.c.b16 %v4303, %v4295
        %v5400 = vpack.c.b16 %v4312, %v4304
        %v5401 = vpack.c.b16 %v4313, %v4305
        %v5402 = vpack.c.b16 %v4314, %v4306
        %v5403 = vpack.c.b16 %v4315, %v4307
        %v5404 = vpack.c.b16 %v4316, %v4308
        %v5405 = vpack.c.b16 %v4317, %v4309
        %v5406 = vpack.c.b16 %v4318, %v4310
        %v5407 = vpack.c.b16 %v4319, %v4311
        %v5408 = vpack.c.b16 %v4328, %v4320
        %v5409 = vpack.c.b16 %v4329, %v4321
        %v5410 = vpack.c.b16 %v4330, %v4322
        %v5411 = vpack.c.b16 %v4331, %v4323
        %v5412 = vpack.c.b16 %v4332, %v4324
        %v5413 = vpack.c.b16 %v4333, %v4325
        %v5414 = vpack.c.b16 %v4334, %v4326
        %v5415 = vpack.c.b16 %v4335, %v4327
        %v5416 = vpack.c.b16 %v4344, %v4336
        %v5417 = vpack.c.b16 %v4345, %v4337
        %v5418 = vpack.c.b16 %v4346, %v4338
        %v5419 = vpack.c.b16 %v4347, %v4339
        %v5420 = vpack.c.b16 %v4348, %v4340
        %v5421 = vpack.c.b16 %v4349, %v4341
        %v5422 = vpack.c.b16 %v4350, %v4342
        %v5423 = vpack.c.b16 %v4351, %v4343
        %v5424 = vpack.c.b16 %v4360, %v4352
        %v5425 = vpack.c.b16 %v4361, %v4353
        %v5426 = vpack.c.b16 %v4362, %v4354
        %v5427 = vpack.c.b16 %v4363, %v4355
        %v5428 = vpack.c.b16 %v4364, %v4356
        %v5429 = vpack.c.b16 %v4365, %v4357
        %v5430 = vpack.c.b16 %v4366, %v4358
        %v5431 = vpack.c.b16 %v4367, %v4359
        %v5432 = vpack.c.b16 %v4376, %v4368
        %v5433 = vpack.c.b16 %v4377, %v4369
        %v5434 = vpack.c.b16 %v4378, %v4370
        %v5435 = vpack.c.b16 %v4379, %v4371
        %v5436 = vpack.c.b16 %v4380, %v4372
        %v5437 = vpack.c.b16 %v4381, %v4373
        %v5438 = vpack.c.b16 %v4382, %v4374
        %v5439 = vpack.c.b16 %v4383, %v4375
        %v5440 = vpack.c.b16 %v4392, %v4384
        %v5441 = vpack.c.b16 %v4393, %v4385
        %v5442 = vpack.c.b16 %v4394, %v4386
        %v5443 = vpack.c.b16 %v4395, %v4387
        %v5444 = vpack.c.b16 %v4396, %v4388
        %v5445 = vpack.c.b16 %v4397, %v4389
        %v5446 = vpack.c.b16 %v4398, %v4390
        %v5447 = vpack.c.b16 %v4399, %v4391
        %v5448 = vpack.c.b16 %v4408, %v4400
        %v5449 = vpack.c.b16 %v4409, %v4401
        %v5450 = vpack.c.b16 %v4410, %v4402
        %v5451 = vpack.c.b16 %v4411, %v4403
        %v5452 = vpack.c.b16 %v4412, %v4404
        %v5453 = vpack.c.b16 %v4413, %v4405
        %v5454 = vpack.c.b16 %v4414, %v4406
        %v5455 = vpack.c.b16 %v4415, %v4407
        %v5456 = vpack.c.b16 %v4424, %v4416
        %v5457 = vpack.c.b16 %v4425, %v4417
        %v5458 = vpack.c.b16 %v4426, %v4418
        %v5459 = vpack.c.b16 %v4427, %v4419
        %v5460 = vpack.c.b16 %v4428, %v4420
        %v5461 = vpack.c.b16 %v4429, %v4421
        %v5462 = vpack.c.b16 %v4430, %v4422
        %v5463 = vpack.c.b16 %v4431, %v4423
        %v5464 = vpack.c.b16 %v4440, %v4432
        %v5465 = vpack.c.b16 %v4441, %v4433
        %v5466 = vpack.c.b16 %v4442, %v4434
        %v5467 = vpack.c.b16 %v4443, %v4435
        %v5468 = vpack.c.b16 %v4444, %v4436
        %v5469 = vpack.c.b16 %v4445, %v4437
        %v5470 = vpack.c.b16 %v4446, %v4438
        %v5471 = vpack.c.b16 %v4447, %v4439
        %6496 = vmatprep.subr.bf16.mxu0 %v4449
        %6497 = vmatpush1.bf16.msra.mxu0 %v4448
        %6498 = vmatprep.subr.bf16.mxu0 %v4457
        %6499 = vmatpush1.bf16.msra.mxu0 %v4456
        %6500 = vmatprep.subr.bf16.mxu0 %v4465
        %6501 = vmatpush1.bf16.msra.mxu0 %v4464
        %6502 = vmatprep.subr.bf16.mxu0 %v4473
        %6503 = vmatpush1.bf16.msra.mxu0 %v4472
        %6504 = vmatprep.subr.bf16.mxu0 %v4481
        %6505 = vmatpush1.bf16.msra.mxu0 %v4480
        %6506 = vmatprep.subr.bf16.mxu0 %v4489
        %6507 = vmatpush1.bf16.msra.mxu0 %v4488
        %6508 = vmatprep.subr.bf16.mxu0 %v4497
        %6509 = vmatpush1.bf16.msra.mxu0 %v4496
        %6510 = vmatprep.subr.bf16.mxu0 %v4505
        %6511 = vmatpush1.bf16.msra.mxu0 %v4504
        %6512 = vmatprep.subr.bf16.mxu0 %v4513
        %6513 = vmatpush1.bf16.msra.mxu0 %v4512
        %6514 = vmatprep.subr.bf16.mxu0 %v4521
        %6515 = vmatpush1.bf16.msra.mxu0 %v4520
        %6516 = vmatprep.subr.bf16.mxu0 %v4529
        %6517 = vmatpush1.bf16.msra.mxu0 %v4528
        %6518 = vmatprep.subr.bf16.mxu0 %v4537
        %6519 = vmatpush1.bf16.msra.mxu0 %v4536
        %6520 = vmatprep.subr.bf16.mxu0 %v4545
        %6521 = vmatpush1.bf16.msra.mxu0 %v4544
        %6522 = vmatprep.subr.bf16.mxu0 %v4553
        %6523 = vmatpush1.bf16.msra.mxu0 %v4552
        %6524 = vmatprep.subr.bf16.mxu0 %v4561
        %6525 = vmatpush1.bf16.msra.mxu0 %v4560
        %6526 = vmatprep.subr.bf16.mxu0 %v4569
        %6527 = vmatpush1.bf16.msra.mxu0 %v4568
        %6528 = vmatprep.mubr.bf16.mxu0 %v1313
        %6529 = vmatmul.mubr.bf16.gmra.mrb[0].mxu0 %v1312
        %v6530 = vpop.f32.mrb[0].mxu0
        %v6531 = vadd.f32 0.0, %v6530
        %v6532 = vpop.f32.mrb[0].mxu0
        %v6533 = vadd.f32 0.0, %v6532
        %v6534 = vpop.f32.mrb[0].mxu0
        %v6535 = vadd.f32 0.0, %v6534
        %v6536 = vpop.f32.mrb[0].mxu0
        %v6537 = vadd.f32 0.0, %v6536
        %6538 = vmatprep.mubr.bf16.mxu0 %v1329
        %6539 = vmatmul.mubr.bf16.gmra.mrb[0].mxu0 %v1328
        %v6540 = vpop.f32.mrb[0].mxu0
        %v6541 = vadd.f32 0.0, %v6540
        %v6542 = vpop.f32.mrb[0].mxu0
        %v6543 = vadd.f32 0.0, %v6542
        %v6544 = vpop.f32.mrb[0].mxu0
        %v6545 = vadd.f32 0.0, %v6544
        %v6546 = vpop.f32.mrb[0].mxu0
        %v6547 = vadd.f32 0.0, %v6546
        %6548 = vdwg.mxu0
        %6549 = vmatprep.subr.bf16.mxu0 %v4577
        %6550 = vmatpush1.bf16.msra.mxu0 %v4576
        %6551 = vmatprep.subr.bf16.mxu0 %v4585
        %6552 = vmatpush1.bf16.msra.mxu0 %v4584
        %6553 = vmatprep.subr.bf16.mxu0 %v4593
        %6554 = vmatpush1.bf16.msra.mxu0 %v4592
        %6555 = vmatprep.subr.bf16.mxu0 %v4601
        %6556 = vmatpush1.bf16.msra.mxu0 %v4600
        %6557 = vmatprep.subr.bf16.mxu0 %v4609
        %6558 = vmatpush1.bf16.msra.mxu0 %v4608
        %6559 = vmatprep.subr.bf16.mxu0 %v4617
        %6560 = vmatpush1.bf16.msra.mxu0 %v4616
        %6561 = vmatprep.subr.bf16.mxu0 %v4625
        %6562 = vmatpush1.bf16.msra.mxu0 %v4624
        %6563 = vmatprep.subr.bf16.mxu0 %v4633
        %6564 = vmatpush1.bf16.msra.mxu0 %v4632
        %6565 = vmatprep.subr.bf16.mxu0 %v4641
        %6566 = vmatpush1.bf16.msra.mxu0 %v4640
        %6567 = vmatprep.subr.bf16.mxu0 %v4649
        %6568 = vmatpush1.bf16.msra.mxu0 %v4648
        %6569 = vmatprep.subr.bf16.mxu0 %v4657
        %6570 = vmatpush1.bf16.msra.mxu0 %v4656
        %6571 = vmatprep.subr.bf16.mxu0 %v4665
        %6572 = vmatpush1.bf16.msra.mxu0 %v4664
        %6573 = vmatprep.subr.bf16.mxu0 %v4673
        %6574 = vmatpush1.bf16.msra.mxu0 %v4672
        %6575 = vmatprep.subr.bf16.mxu0 %v4681
        %6576 = vmatpush1.bf16.msra.mxu0 %v4680
        %6577 = vmatprep.subr.bf16.mxu0 %v4689
        %6578 = vmatpush1.bf16.msra.mxu0 %v4688
        %6579 = vmatprep.subr.bf16.mxu0 %v4697
        %6580 = vmatpush1.bf16.msra.mxu0 %v4696
        %6581 = vmatprep.mubr.bf16.mxu0 %v1315
        %6582 = vmatmul.mubr.bf16.gmra.mrb[0].mxu0 %v1314
        %v6583 = vpop.f32.mrb[0].mxu0
        %v6584 = vadd.f32 %v6531, %v6583
        %v6585 = vpop.f32.mrb[0].mxu0
        %v6586 = vadd.f32 %v6533, %v6585
        %v6587 = vpop.f32.mrb[0].mxu0
        %v6588 = vadd.f32 %v6535, %v6587
        %v6589 = vpop.f32.mrb[0].mxu0
        %v6590 = vadd.f32 %v6537, %v6589
        %6591 = vmatprep.mubr.bf16.mxu0 %v1331
        %6592 = vmatmul.mubr.bf16.gmra.mrb[0].mxu0 %v1330
        %v6593 = vpop.f32.mrb[0].mxu0
        %v6594 = vadd.f32 %v6541, %v6593
        %v6595 = vpop.f32.mrb[0].mxu0
        %v6596 = vadd.f32 %v6543, %v6595
        %v6597 = vpop.f32.mrb[0].mxu0
        %v6598 = vadd.f32 %v6545, %v6597
        %v6599 = vpop.f32.mrb[0].mxu0
        %v6600 = vadd.f32 %v6547, %v6599
        %6601 = vdwg.mxu0
        %6602 = vmatprep.subr.bf16.mxu0 %v4705
        %6603 = vmatpush1.bf16.msra.mxu0 %v4704
        %6604 = vmatprep.subr.bf16.mxu0 %v4713
        %6605 = vmatpush1.bf16.msra.mxu0 %v4712
        %6606 = vmatprep.subr.bf16.mxu0 %v4721
        %6607 = vmatpush1.bf16.msra.mxu0 %v4720
        %6608 = vmatprep.subr.bf16.mxu0 %v4729
        %6609 = vmatpush1.bf16.msra.mxu0 %v4728
        %6610 = vmatprep.subr.bf16.mxu0 %v4737
        %6611 = vmatpush1.bf16.msra.mxu0 %v4736
        %6612 = vmatprep.subr.bf16.mxu0 %v4745
        %6613 = vmatpush1.bf16.msra.mxu0 %v4744
        %6614 = vmatprep.subr.bf16.mxu0 %v4753
        %6615 = vmatpush1.bf16.msra.mxu0 %v4752
        %6616 = vmatprep.subr.bf16.mxu0 %v4761
        %6617 = vmatpush1.bf16.msra.mxu0 %v4760
        %6618 = vmatprep.subr.bf16.mxu0 %v4769
        %6619 = vmatpush1.bf16.msra.mxu0 %v4768
        %6620 = vmatprep.subr.bf16.mxu0 %v4777
        %6621 = vmatpush1.bf16.msra.mxu0 %v4776
        %6622 = vmatprep.subr.bf16.mxu0 %v4785
        %6623 = vmatpush1.bf16.msra.mxu0 %v4784
        %6624 = vmatprep.subr.bf16.mxu0 %v4793
        %6625 = vmatpush1.bf16.msra.mxu0 %v4792
        %6626 = vmatprep.subr.bf16.mxu0 %v4801
        %6627 = vmatpush1.bf16.msra.mxu0 %v4800
        %6628 = vmatprep.subr.bf16.mxu0 %v4809
        %6629 = vmatpush1.bf16.msra.mxu0 %v4808
        %6630 = vmatprep.subr.bf16.mxu0 %v4817
        %6631 = vmatpush1.bf16.msra.mxu0 %v4816
        %6632 = vmatprep.subr.bf16.mxu0 %v4825
        %6633 = vmatpush1.bf16.msra.mxu0 %v4824
        %6634 = vmatprep.mubr.bf16.mxu0 %v1317
        %6635 = vmatmul.mubr.bf16.gmra.mrb[0].mxu0 %v1316
        %v6636 = vpop.f32.mrb[0].mxu0
        %v6637 = vadd.f32 %v6584, %v6636
        %v6638 = vpop.f32.mrb[0].mxu0
        %v6639 = vadd.f32 %v6586, %v6638
        %v6640 = vpop.f32.mrb[0].mxu0
        %v6641 = vadd.f32 %v6588, %v6640
        %v6642 = vpop.f32.mrb[0].mxu0
        %v6643 = vadd.f32 %v6590, %v6642
        %6644 = vmatprep.mubr.bf16.mxu0 %v1333
        %6645 = vmatmul.mubr.bf16.gmra.mrb[0].mxu0 %v1332
        %v6646 = vpop.f32.mrb[0].mxu0
        %v6647 = vadd.f32 %v6594, %v6646
        %v6648 = vpop.f32.mrb[0].mxu0
        %v6649 = vadd.f32 %v6596, %v6648
        %v6650 = vpop.f32.mrb[0].mxu0
        %v6651 = vadd.f32 %v6598, %v6650
        %v6652 = vpop.f32.mrb[0].mxu0
        %v6653 = vadd.f32 %v6600, %v6652
        %6654 = vdwg.mxu0
        %6655 = vmatprep.subr.bf16.mxu0 %v4833
        %6656 = vmatpush1.bf16.msra.mxu0 %v4832
        %6657 = vmatprep.subr.bf16.mxu0 %v4841
        %6658 = vmatpush1.bf16.msra.mxu0 %v4840
        %6659 = vmatprep.subr.bf16.mxu0 %v4849
        %6660 = vmatpush1.bf16.msra.mxu0 %v4848
        %6661 = vmatprep.subr.bf16.mxu0 %v4857
        %6662 = vmatpush1.bf16.msra.mxu0 %v4856
        %6663 = vmatprep.subr.bf16.mxu0 %v4865
        %6664 = vmatpush1.bf16.msra.mxu0 %v4864
        %6665 = vmatprep.subr.bf16.mxu0 %v4873
        %6666 = vmatpush1.bf16.msra.mxu0 %v4872
        %6667 = vmatprep.subr.bf16.mxu0 %v4881
        %6668 = vmatpush1.bf16.msra.mxu0 %v4880
        %6669 = vmatprep.subr.bf16.mxu0 %v4889
        %6670 = vmatpush1.bf16.msra.mxu0 %v4888
        %6671 = vmatprep.subr.bf16.mxu0 %v4897
        %6672 = vmatpush1.bf16.msra.mxu0 %v4896
        %6673 = vmatprep.subr.bf16.mxu0 %v4905
        %6674 = vmatpush1.bf16.msra.mxu0 %v4904
        %6675 = vmatprep.subr.bf16.mxu0 %v4913
        %6676 = vmatpush1.bf16.msra.mxu0 %v4912
        %6677 = vmatprep.subr.bf16.mxu0 %v4921
        %6678 = vmatpush1.bf16.msra.mxu0 %v4920
        %6679 = vmatprep.subr.bf16.mxu0 %v4929
        %6680 = vmatpush1.bf16.msra.mxu0 %v4928
        %6681 = vmatprep.subr.bf16.mxu0 %v4937
        %6682 = vmatpush1.bf16.msra.mxu0 %v4936
        %6683 = vmatprep.subr.bf16.mxu0 %v4945
        %6684 = vmatpush1.bf16.msra.mxu0 %v4944
        %6685 = vmatprep.subr.bf16.mxu0 %v4953
        %6686 = vmatpush1.bf16.msra.mxu0 %v4952
        %6687 = vmatprep.mubr.bf16.mxu0 %v1319
        %6688 = vmatmul.mubr.bf16.gmra.mrb[0].mxu0 %v1318
        %v6689 = vpop.f32.mrb[0].mxu0
        %v6690 = vadd.f32 %v6637, %v6689
        %v6691 = vpop.f32.mrb[0].mxu0
        %v6692 = vadd.f32 %v6639, %v6691
        %v6693 = vpop.f32.mrb[0].mxu0
        %v6694 = vadd.f32 %v6641, %v6693
        %v6695 = vpop.f32.mrb[0].mxu0
        %v6696 = vadd.f32 %v6643, %v6695
        %6697 = vmatprep.mubr.bf16.mxu0 %v1335
        %6698 = vmatmul.mubr.bf16.gmra.mrb[0].mxu0 %v1334
        %v6699 = vpop.f32.mrb[0].mxu0
        %v6700 = vadd.f32 %v6647, %v6699
        %v6701 = vpop.f32.mrb[0].mxu0
        %v6702 = vadd.f32 %v6649, %v6701
        %v6703 = vpop.f32.mrb[0].mxu0
        %v6704 = vadd.f32 %v6651, %v6703
        %v6705 = vpop.f32.mrb[0].mxu0
        %v6706 = vadd.f32 %v6653, %v6705
        %6707 = vdwg.mxu0
        %6708 = vmatprep.subr.bf16.mxu0 %v4961
        %6709 = vmatpush1.bf16.msra.mxu0 %v4960
        %6710 = vmatprep.subr.bf16.mxu0 %v4969
        %6711 = vmatpush1.bf16.msra.mxu0 %v4968
        %6712 = vmatprep.subr.bf16.mxu0 %v4977
        %6713 = vmatpush1.bf16.msra.mxu0 %v4976
        %6714 = vmatprep.subr.bf16.mxu0 %v4985
        %6715 = vmatpush1.bf16.msra.mxu0 %v4984
        %6716 = vmatprep.subr.bf16.mxu0 %v4993
        %6717 = vmatpush1.bf16.msra.mxu0 %v4992
        %6718 = vmatprep.subr.bf16.mxu0 %v5001
        %6719 = vmatpush1.bf16.msra.mxu0 %v5000
        %6720 = vmatprep.subr.bf16.mxu0 %v5009
        %6721 = vmatpush1.bf16.msra.mxu0 %v5008
        %6722 = vmatprep.subr.bf16.mxu0 %v5017
        %6723 = vmatpush1.bf16.msra.mxu0 %v5016
        %6724 = vmatprep.subr.bf16.mxu0 %v5025
        %6725 = vmatpush1.bf16.msra.mxu0 %v5024
        %6726 = vmatprep.subr.bf16.mxu0 %v5033
        %6727 = vmatpush1.bf16.msra.mxu0 %v5032
        %6728 = vmatprep.subr.bf16.mxu0 %v5041
        %6729 = vmatpush1.bf16.msra.mxu0 %v5040
        %6730 = vmatprep.subr.bf16.mxu0 %v5049
        %6731 = vmatpush1.bf16.msra.mxu0 %v5048
        %6732 = vmatprep.subr.bf16.mxu0 %v5057
        %6733 = vmatpush1.bf16.msra.mxu0 %v5056
        %6734 = vmatprep.subr.bf16.mxu0 %v5065
        %6735 = vmatpush1.bf16.msra.mxu0 %v5064
        %6736 = vmatprep.subr.bf16.mxu0 %v5073
        %6737 = vmatpush1.bf16.msra.mxu0 %v5072
        %6738 = vmatprep.subr.bf16.mxu0 %v5081
        %6739 = vmatpush1.bf16.msra.mxu0 %v5080
        %6740 = vmatprep.mubr.bf16.mxu0 %v1321
        %6741 = vmatmul.mubr.bf16.gmra.mrb[0].mxu0 %v1320
        %v6742 = vpop.f32.mrb[0].mxu0
        %v6743 = vadd.f32 %v6690, %v6742
        %v6744 = vpop.f32.mrb[0].mxu0
        %v6745 = vadd.f32 %v6692, %v6744
        %v6746 = vpop.f32.mrb[0].mxu0
        %v6747 = vadd.f32 %v6694, %v6746
        %v6748 = vpop.f32.mrb[0].mxu0
        %v6749 = vadd.f32 %v6696, %v6748
        %6750 = vmatprep.mubr.bf16.mxu0 %v1337
        %6751 = vmatmul.mubr.bf16.gmra.mrb[0].mxu0 %v1336
        %v6752 = vpop.f32.mrb[0].mxu0
        %v6753 = vadd.f32 %v6700, %v6752
        %v6754 = vpop.f32.mrb[0].mxu0
        %v6755 = vadd.f32 %v6702, %v6754
        %v6756 = vpop.f32.mrb[0].mxu0
        %v6757 = vadd.f32 %v6704, %v6756
        %v6758 = vpop.f32.mrb[0].mxu0
        %v6759 = vadd.f32 %v6706, %v6758
        %6760 = vdwg.mxu0
        %6761 = vmatprep.subr.bf16.mxu0 %v5089
        %6762 = vmatpush1.bf16.msra.mxu0 %v5088
        %6763 = vmatprep.subr.bf16.mxu0 %v5097
        %6764 = vmatpush1.bf16.msra.mxu0 %v5096
        %6765 = vmatprep.subr.bf16.mxu0 %v5105
        %6766 = vmatpush1.bf16.msra.mxu0 %v5104
        %6767 = vmatprep.subr.bf16.mxu0 %v5113
        %6768 = vmatpush1.bf16.msra.mxu0 %v5112
        %6769 = vmatprep.subr.bf16.mxu0 %v5121
        %6770 = vmatpush1.bf16.msra.mxu0 %v5120
        %6771 = vmatprep.subr.bf16.mxu0 %v5129
        %6772 = vmatpush1.bf16.msra.mxu0 %v5128
        %6773 = vmatprep.subr.bf16.mxu0 %v5137
        %6774 = vmatpush1.bf16.msra.mxu0 %v5136
        %6775 = vmatprep.subr.bf16.mxu0 %v5145
        %6776 = vmatpush1.bf16.msra.mxu0 %v5144
        %6777 = vmatprep.subr.bf16.mxu0 %v5153
        %6778 = vmatpush1.bf16.msra.mxu0 %v5152
        %6779 = vmatprep.subr.bf16.mxu0 %v5161
        %6780 = vmatpush1.bf16.msra.mxu0 %v5160
        %6781 = vmatprep.subr.bf16.mxu0 %v5169
        %6782 = vmatpush1.bf16.msra.mxu0 %v5168
        %6783 = vmatprep.subr.bf16.mxu0 %v5177
        %6784 = vmatpush1.bf16.msra.mxu0 %v5176
        %6785 = vmatprep.subr.bf16.mxu0 %v5185
        %6786 = vmatpush1.bf16.msra.mxu0 %v5184
        %6787 = vmatprep.subr.bf16.mxu0 %v5193
        %6788 = vmatpush1.bf16.msra.mxu0 %v5192
        %6789 = vmatprep.subr.bf16.mxu0 %v5201
        %6790 = vmatpush1.bf16.msra.mxu0 %v5200
        %6791 = vmatprep.subr.bf16.mxu0 %v5209
        %6792 = vmatpush1.bf16.msra.mxu0 %v5208
        %6793 = vmatprep.mubr.bf16.mxu0 %v1323
        %6794 = vmatmul.mubr.bf16.gmra.mrb[0].mxu0 %v1322
        %v6795 = vpop.f32.mrb[0].mxu0
        %v6796 = vadd.f32 %v6743, %v6795
        %v6797 = vpop.f32.mrb[0].mxu0
        %v6798 = vadd.f32 %v6745, %v6797
        %v6799 = vpop.f32.mrb[0].mxu0
        %v6800 = vadd.f32 %v6747, %v6799
        %v6801 = vpop.f32.mrb[0].mxu0
        %v6802 = vadd.f32 %v6749, %v6801
        %6803 = vmatprep.mubr.bf16.mxu0 %v1339
        %6804 = vmatmul.mubr.bf16.gmra.mrb[0].mxu0 %v1338
        %v6805 = vpop.f32.mrb[0].mxu0
        %v6806 = vadd.f32 %v6753, %v6805
        %v6807 = vpop.f32.mrb[0].mxu0
        %v6808 = vadd.f32 %v6755, %v6807
        %v6809 = vpop.f32.mrb[0].mxu0
        %v6810 = vadd.f32 %v6757, %v6809
        %v6811 = vpop.f32.mrb[0].mxu0
        %v6812 = vadd.f32 %v6759, %v6811
        %6813 = vdwg.mxu0
        %6814 = vmatprep.subr.bf16.mxu0 %v5217
        %6815 = vmatpush1.bf16.msra.mxu0 %v5216
        %6816 = vmatprep.subr.bf16.mxu0 %v5225
        %6817 = vmatpush1.bf16.msra.mxu0 %v5224
        %6818 = vmatprep.subr.bf16.mxu0 %v5233
        %6819 = vmatpush1.bf16.msra.mxu0 %v5232
        %6820 = vmatprep.subr.bf16.mxu0 %v5241
        %6821 = vmatpush1.bf16.msra.mxu0 %v5240
        %6822 = vmatprep.subr.bf16.mxu0 %v5249
        %6823 = vmatpush1.bf16.msra.mxu0 %v5248
        %6824 = vmatprep.subr.bf16.mxu0 %v5257
        %6825 = vmatpush1.bf16.msra.mxu0 %v5256
        %6826 = vmatprep.subr.bf16.mxu0 %v5265
        %6827 = vmatpush1.bf16.msra.mxu0 %v5264
        %6828 = vmatprep.subr.bf16.mxu0 %v5273
        %6829 = vmatpush1.bf16.msra.mxu0 %v5272
        %6830 = vmatprep.subr.bf16.mxu0 %v5281
        %6831 = vmatpush1.bf16.msra.mxu0 %v5280
        %6832 = vmatprep.subr.bf16.mxu0 %v5289
        %6833 = vmatpush1.bf16.msra.mxu0 %v5288
        %6834 = vmatprep.subr.bf16.mxu0 %v5297
        %6835 = vmatpush1.bf16.msra.mxu0 %v5296
        %6836 = vmatprep.subr.bf16.mxu0 %v5305
        %6837 = vmatpush1.bf16.msra.mxu0 %v5304
        %6838 = vmatprep.subr.bf16.mxu0 %v5313
        %6839 = vmatpush1.bf16.msra.mxu0 %v5312
        %6840 = vmatprep.subr.bf16.mxu0 %v5321
        %6841 = vmatpush1.bf16.msra.mxu0 %v5320
        %6842 = vmatprep.subr.bf16.mxu0 %v5329
        %6843 = vmatpush1.bf16.msra.mxu0 %v5328
        %6844 = vmatprep.subr.bf16.mxu0 %v5337
        %6845 = vmatpush1.bf16.msra.mxu0 %v5336
        %6846 = vmatprep.mubr.bf16.mxu0 %v1325
        %6847 = vmatmul.mubr.bf16.gmra.mrb[0].mxu0 %v1324
        %v6848 = vpop.f32.mrb[0].mxu0
        %v6849 = vadd.f32 %v6796, %v6848
        %v6850 = vpop.f32.mrb[0].mxu0
        %v6851 = vadd.f32 %v6798, %v6850
        %v6852 = vpop.f32.mrb[0].mxu0
        %v6853 = vadd.f32 %v6800, %v6852
        %v6854 = vpop.f32.mrb[0].mxu0
        %v6855 = vadd.f32 %v6802, %v6854
        %6856 = vmatprep.mubr.bf16.mxu0 %v1341
        %6857 = vmatmul.mubr.bf16.gmra.mrb[0].mxu0 %v1340
        %v6858 = vpop.f32.mrb[0].mxu0
        %v6859 = vadd.f32 %v6806, %v6858
        %v6860 = vpop.f32.mrb[0].mxu0
        %v6861 = vadd.f32 %v6808, %v6860
        %v6862 = vpop.f32.mrb[0].mxu0
        %v6863 = vadd.f32 %v6810, %v6862
        %v6864 = vpop.f32.mrb[0].mxu0
        %v6865 = vadd.f32 %v6812, %v6864
        %6866 = vdwg.mxu0
        %6867 = vmatprep.subr.bf16.mxu0 %v5345
        %6868 = vmatpush1.bf16.msra.mxu0 %v5344
        %6869 = vmatprep.subr.bf16.mxu0 %v5353
        %6870 = vmatpush1.bf16.msra.mxu0 %v5352
        %6871 = vmatprep.subr.bf16.mxu0 %v5361
        %6872 = vmatpush1.bf16.msra.mxu0 %v5360
        %6873 = vmatprep.subr.bf16.mxu0 %v5369
        %6874 = vmatpush1.bf16.msra.mxu0 %v5368
        %6875 = vmatprep.subr.bf16.mxu0 %v5377
        %6876 = vmatpush1.bf16.msra.mxu0 %v5376
        %6877 = vmatprep.subr.bf16.mxu0 %v5385
        %6878 = vmatpush1.bf16.msra.mxu0 %v5384
        %6879 = vmatprep.subr.bf16.mxu0 %v5393
        %6880 = vmatpush1.bf16.msra.mxu0 %v5392
        %6881 = vmatprep.subr.bf16.mxu0 %v5401
        %6882 = vmatpush1.bf16.msra.mxu0 %v5400
        %6883 = vmatprep.subr.bf16.mxu0 %v5409
        %6884 = vmatpush1.bf16.msra.mxu0 %v5408
        %6885 = vmatprep.subr.bf16.mxu0 %v5417
        %6886 = vmatpush1.bf16.msra.mxu0 %v5416
        %6887 = vmatprep.subr.bf16.mxu0 %v5425
        %6888 = vmatpush1.bf16.msra.mxu0 %v5424
        %6889 = vmatprep.subr.bf16.mxu0 %v5433
        %6890 = vmatpush1.bf16.msra.mxu0 %v5432
        %6891 = vmatprep.subr.bf16.mxu0 %v5441
        %6892 = vmatpush1.bf16.msra.mxu0 %v5440
        %6893 = vmatprep.subr.bf16.mxu0 %v5449
        %6894 = vmatpush1.bf16.msra.mxu0 %v5448
        %6895 = vmatprep.subr.bf16.mxu0 %v5457
        %6896 = vmatpush1.bf16.msra.mxu0 %v5456
        %6897 = vmatprep.subr.bf16.mxu0 %v5465
        %6898 = vmatpush1.bf16.msra.mxu0 %v5464
        %6899 = vmatprep.mubr.bf16.mxu0 %v1327
        %6900 = vmatmul.mubr.bf16.gmra.mrb[0].mxu0 %v1326
        %v6901 = vpop.f32.mrb[0].mxu0
        %v6902 = vadd.f32 %v6849, %v6901
        %v6903 = vpop.f32.mrb[0].mxu0
        %v6904 = vadd.f32 %v6851, %v6903
        %v6905 = vpop.f32.mrb[0].mxu0
        %v6906 = vadd.f32 %v6853, %v6905
        %v6907 = vpop.f32.mrb[0].mxu0
        %v6908 = vadd.f32 %v6855, %v6907
        %6909 = vmatprep.mubr.bf16.mxu0 %v1343
        %6910 = vmatmul.mubr.bf16.gmra.mrb[0].mxu0 %v1342
        %v6911 = vpop.f32.mrb[0].mxu0
        %v6912 = vadd.f32 %v6859, %v6911
        %v6913 = vpop.f32.mrb[0].mxu0
        %v6914 = vadd.f32 %v6861, %v6913
        %v6915 = vpop.f32.mrb[0].mxu0
        %v6916 = vadd.f32 %v6863, %v6915
        %v6917 = vpop.f32.mrb[0].mxu0
        %v6918 = vadd.f32 %v6865, %v6917
        %6919 = vdwg.mxu0
        %6920 = vmatprep.subr.bf16.mxu0 %v4451
        %6921 = vmatpush1.bf16.msra.mxu0 %v4450
        %6922 = vmatprep.subr.bf16.mxu0 %v4459
        %6923 = vmatpush1.bf16.msra.mxu0 %v4458
        %6924 = vmatprep.subr.bf16.mxu0 %v4467
        %6925 = vmatpush1.bf16.msra.mxu0 %v4466
        %6926 = vmatprep.subr.bf16.mxu0 %v4475
        %6927 = vmatpush1.bf16.msra.mxu0 %v4474
        %6928 = vmatprep.subr.bf16.mxu0 %v4483
        %6929 = vmatpush1.bf16.msra.mxu0 %v4482
        %6930 = vmatprep.subr.bf16.mxu0 %v4491
        %6931 = vmatpush1.bf16.msra.mxu0 %v4490
        %6932 = vmatprep.subr.bf16.mxu0 %v4499
        %6933 = vmatpush1.bf16.msra.mxu0 %v4498
        %6934 = vmatprep.subr.bf16.mxu0 %v4507
        %6935 = vmatpush1.bf16.msra.mxu0 %v4506
        %6936 = vmatprep.subr.bf16.mxu0 %v4515
        %6937 = vmatpush1.bf16.msra.mxu0 %v4514
        %6938 = vmatprep.subr.bf16.mxu0 %v4523
        %6939 = vmatpush1.bf16.msra.mxu0 %v4522
        %6940 = vmatprep.subr.bf16.mxu0 %v4531
        %6941 = vmatpush1.bf16.msra.mxu0 %v4530
        %6942 = vmatprep.subr.bf16.mxu0 %v4539
        %6943 = vmatpush1.bf16.msra.mxu0 %v4538
        %6944 = vmatprep.subr.bf16.mxu0 %v4547
        %6945 = vmatpush1.bf16.msra.mxu0 %v4546
        %6946 = vmatprep.subr.bf16.mxu0 %v4555
        %6947 = vmatpush1.bf16.msra.mxu0 %v4554
        %6948 = vmatprep.subr.bf16.mxu0 %v4563
        %6949 = vmatpush1.bf16.msra.mxu0 %v4562
        %6950 = vmatprep.subr.bf16.mxu0 %v4571
        %6951 = vmatpush1.bf16.msra.mxu0 %v4570
        %6952 = vmatprep.mubr.bf16.mxu0 %v1313
        %6953 = vmatmul.mubr.bf16.gmra.mrb[0].mxu0 %v1312
        %v6954 = vpop.f32.mrb[0].mxu0
        %v6955 = vadd.f32 0.0, %v6954
        %v6956 = vpop.f32.mrb[0].mxu0
        %v6957 = vadd.f32 0.0, %v6956
        %v6958 = vpop.f32.mrb[0].mxu0
        %v6959 = vadd.f32 0.0, %v6958
        %v6960 = vpop.f32.mrb[0].mxu0
        %v6961 = vadd.f32 0.0, %v6960
        %6962 = vmatprep.mubr.bf16.mxu0 %v1329
        %6963 = vmatmul.mubr.bf16.gmra.mrb[0].mxu0 %v1328
        %v6964 = vpop.f32.mrb[0].mxu0
        %v6965 = vadd.f32 0.0, %v6964
        %v6966 = vpop.f32.mrb[0].mxu0
        %v6967 = vadd.f32 0.0, %v6966
        %v6968 = vpop.f32.mrb[0].mxu0
        %v6969 = vadd.f32 0.0, %v6968
        %v6970 = vpop.f32.mrb[0].mxu0
        %v6971 = vadd.f32 0.0, %v6970
        %6972 = vdwg.mxu0
        %6973 = vmatprep.subr.bf16.mxu0 %v4579
        %6974 = vmatpush1.bf16.msra.mxu0 %v4578
        %6975 = vmatprep.subr.bf16.mxu0 %v4587
        %6976 = vmatpush1.bf16.msra.mxu0 %v4586
        %6977 = vmatprep.subr.bf16.mxu0 %v4595
        %6978 = vmatpush1.bf16.msra.mxu0 %v4594
        %6979 = vmatprep.subr.bf16.mxu0 %v4603
        %6980 = vmatpush1.bf16.msra.mxu0 %v4602
        %6981 = vmatprep.subr.bf16.mxu0 %v4611
        %6982 = vmatpush1.bf16.msra.mxu0 %v4610
        %6983 = vmatprep.subr.bf16.mxu0 %v4619
        %6984 = vmatpush1.bf16.msra.mxu0 %v4618
        %6985 = vmatprep.subr.bf16.mxu0 %v4627
        %6986 = vmatpush1.bf16.msra.mxu0 %v4626
        %6987 = vmatprep.subr.bf16.mxu0 %v4635
        %6988 = vmatpush1.bf16.msra.mxu0 %v4634
        %6989 = vmatprep.subr.bf16.mxu0 %v4643
        %6990 = vmatpush1.bf16.msra.mxu0 %v4642
        %6991 = vmatprep.subr.bf16.mxu0 %v4651
        %6992 = vmatpush1.bf16.msra.mxu0 %v4650
        %6993 = vmatprep.subr.bf16.mxu0 %v4659
        %6994 = vmatpush1.bf16.msra.mxu0 %v4658
        %6995 = vmatprep.subr.bf16.mxu0 %v4667
        %6996 = vmatpush1.bf16.msra.mxu0 %v4666
        %6997 = vmatprep.subr.bf16.mxu0 %v4675
        %6998 = vmatpush1.bf16.msra.mxu0 %v4674
        %6999 = vmatprep.subr.bf16.mxu0 %v4683
        %7000 = vmatpush1.bf16.msra.mxu0 %v4682
        %7001 = vmatprep.subr.bf16.mxu0 %v4691
        %7002 = vmatpush1.bf16.msra.mxu0 %v4690
        %7003 = vmatprep.subr.bf16.mxu0 %v4699
        %7004 = vmatpush1.bf16.msra.mxu0 %v4698
        %7005 = vmatprep.mubr.bf16.mxu0 %v1315
        %7006 = vmatmul.mubr.bf16.gmra.mrb[0].mxu0 %v1314
        %v7007 = vpop.f32.mrb[0].mxu0
        %v7008 = vadd.f32 %v6955, %v7007
        %v7009 = vpop.f32.mrb[0].mxu0
        %v7010 = vadd.f32 %v6957, %v7009
        %v7011 = vpop.f32.mrb[0].mxu0
        %v7012 = vadd.f32 %v6959, %v7011
        %v7013 = vpop.f32.mrb[0].mxu0
        %v7014 = vadd.f32 %v6961, %v7013
        %7015 = vmatprep.mubr.bf16.mxu0 %v1331
        %7016 = vmatmul.mubr.bf16.gmra.mrb[0].mxu0 %v1330
        %v7017 = vpop.f32.mrb[0].mxu0
        %v7018 = vadd.f32 %v6965, %v7017
        %v7019 = vpop.f32.mrb[0].mxu0
        %v7020 = vadd.f32 %v6967, %v7019
        %v7021 = vpop.f32.mrb[0].mxu0
        %v7022 = vadd.f32 %v6969, %v7021
        %v7023 = vpop.f32.mrb[0].mxu0
        %v7024 = vadd.f32 %v6971, %v7023
        %7025 = vdwg.mxu0
        %7026 = vmatprep.subr.bf16.mxu0 %v4707
        %7027 = vmatpush1.bf16.msra.mxu0 %v4706
        %7028 = vmatprep.subr.bf16.mxu0 %v4715
        %7029 = vmatpush1.bf16.msra.mxu0 %v4714
        %7030 = vmatprep.subr.bf16.mxu0 %v4723
        %7031 = vmatpush1.bf16.msra.mxu0 %v4722
        %7032 = vmatprep.subr.bf16.mxu0 %v4731
        %7033 = vmatpush1.bf16.msra.mxu0 %v4730
        %7034 = vmatprep.subr.bf16.mxu0 %v4739
        %7035 = vmatpush1.bf16.msra.mxu0 %v4738
        %7036 = vmatprep.subr.bf16.mxu0 %v4747
        %7037 = vmatpush1.bf16.msra.mxu0 %v4746
        %7038 = vmatprep.subr.bf16.mxu0 %v4755
        %7039 = vmatpush1.bf16.msra.mxu0 %v4754
        %7040 = vmatprep.subr.bf16.mxu0 %v4763
        %7041 = vmatpush1.bf16.msra.mxu0 %v4762
        %7042 = vmatprep.subr.bf16.mxu0 %v4771
        %7043 = vmatpush1.bf16.msra.mxu0 %v4770
        %7044 = vmatprep.subr.bf16.mxu0 %v4779
        %7045 = vmatpush1.bf16.msra.mxu0 %v4778
        %7046 = vmatprep.subr.bf16.mxu0 %v4787
        %7047 = vmatpush1.bf16.msra.mxu0 %v4786
        %7048 = vmatprep.subr.bf16.mxu0 %v4795
        %7049 = vmatpush1.bf16.msra.mxu0 %v4794
        %7050 = vmatprep.subr.bf16.mxu0 %v4803
        %7051 = vmatpush1.bf16.msra.mxu0 %v4802
        %7052 = vmatprep.subr.bf16.mxu0 %v4811
        %7053 = vmatpush1.bf16.msra.mxu0 %v4810
        %7054 = vmatprep.subr.bf16.mxu0 %v4819
        %7055 = vmatpush1.bf16.msra.mxu0 %v4818
        %7056 = vmatprep.subr.bf16.mxu0 %v4827
        %7057 = vmatpush1.bf16.msra.mxu0 %v4826
        %7058 = vmatprep.mubr.bf16.mxu0 %v1317
        %7059 = vmatmul.mubr.bf16.gmra.mrb[0].mxu0 %v1316
        %v7060 = vpop.f32.mrb[0].mxu0
        %v7061 = vadd.f32 %v7008, %v7060
        %v7062 = vpop.f32.mrb[0].mxu0
        %v7063 = vadd.f32 %v7010, %v7062
        %v7064 = vpop.f32.mrb[0].mxu0
        %v7065 = vadd.f32 %v7012, %v7064
        %v7066 = vpop.f32.mrb[0].mxu0
        %v7067 = vadd.f32 %v7014, %v7066
        %7068 = vmatprep.mubr.bf16.mxu0 %v1333
        %7069 = vmatmul.mubr.bf16.gmra.mrb[0].mxu0 %v1332
        %v7070 = vpop.f32.mrb[0].mxu0
        %v7071 = vadd.f32 %v7018, %v7070
        %v7072 = vpop.f32.mrb[0].mxu0
        %v7073 = vadd.f32 %v7020, %v7072
        %v7074 = vpop.f32.mrb[0].mxu0
        %v7075 = vadd.f32 %v7022, %v7074
        %v7076 = vpop.f32.mrb[0].mxu0
        %v7077 = vadd.f32 %v7024, %v7076
        %7078 = vdwg.mxu0
        %7079 = vmatprep.subr.bf16.mxu0 %v4835
        %7080 = vmatpush1.bf16.msra.mxu0 %v4834
        %7081 = vmatprep.subr.bf16.mxu0 %v4843
        %7082 = vmatpush1.bf16.msra.mxu0 %v4842
        %7083 = vmatprep.subr.bf16.mxu0 %v4851
        %7084 = vmatpush1.bf16.msra.mxu0 %v4850
        %7085 = vmatprep.subr.bf16.mxu0 %v4859
        %7086 = vmatpush1.bf16.msra.mxu0 %v4858
        %7087 = vmatprep.subr.bf16.mxu0 %v4867
        %7088 = vmatpush1.bf16.msra.mxu0 %v4866
        %7089 = vmatprep.subr.bf16.mxu0 %v4875
        %7090 = vmatpush1.bf16.msra.mxu0 %v4874
        %7091 = vmatprep.subr.bf16.mxu0 %v4883
        %7092 = vmatpush1.bf16.msra.mxu0 %v4882
        %7093 = vmatprep.subr.bf16.mxu0 %v4891
        %7094 = vmatpush1.bf16.msra.mxu0 %v4890
        %7095 = vmatprep.subr.bf16.mxu0 %v4899
        %7096 = vmatpush1.bf16.msra.mxu0 %v4898
        %7097 = vmatprep.subr.bf16.mxu0 %v4907
        %7098 = vmatpush1.bf16.msra.mxu0 %v4906
        %7099 = vmatprep.subr.bf16.mxu0 %v4915
        %7100 = vmatpush1.bf16.msra.mxu0 %v4914
        %7101 = vmatprep.subr.bf16.mxu0 %v4923
        %7102 = vmatpush1.bf16.msra.mxu0 %v4922
        %7103 = vmatprep.subr.bf16.mxu0 %v4931
        %7104 = vmatpush1.bf16.msra.mxu0 %v4930
        %7105 = vmatprep.subr.bf16.mxu0 %v4939
        %7106 = vmatpush1.bf16.msra.mxu0 %v4938
        %7107 = vmatprep.subr.bf16.mxu0 %v4947
        %7108 = vmatpush1.bf16.msra.mxu0 %v4946
        %7109 = vmatprep.subr.bf16.mxu0 %v4955
        %7110 = vmatpush1.bf16.msra.mxu0 %v4954
        %7111 = vmatprep.mubr.bf16.mxu0 %v1319
        %7112 = vmatmul.mubr.bf16.gmra.mrb[0].mxu0 %v1318
        %v7113 = vpop.f32.mrb[0].mxu0
        %v7114 = vadd.f32 %v7061, %v7113
        %v7115 = vpop.f32.mrb[0].mxu0
        %v7116 = vadd.f32 %v7063, %v7115
        %v7117 = vpop.f32.mrb[0].mxu0
        %v7118 = vadd.f32 %v7065, %v7117
        %v7119 = vpop.f32.mrb[0].mxu0
        %v7120 = vadd.f32 %v7067, %v7119
        %7121 = vmatprep.mubr.bf16.mxu0 %v1335
        %7122 = vmatmul.mubr.bf16.gmra.mrb[0].mxu0 %v1334
        %v7123 = vpop.f32.mrb[0].mxu0
        %v7124 = vadd.f32 %v7071, %v7123
        %v7125 = vpop.f32.mrb[0].mxu0
        %v7126 = vadd.f32 %v7073, %v7125
        %v7127 = vpop.f32.mrb[0].mxu0
        %v7128 = vadd.f32 %v7075, %v7127
        %v7129 = vpop.f32.mrb[0].mxu0
        %v7130 = vadd.f32 %v7077, %v7129
        %7131 = vdwg.mxu0
        %7132 = vmatprep.subr.bf16.mxu0 %v4963
        %7133 = vmatpush1.bf16.msra.mxu0 %v4962
        %7134 = vmatprep.subr.bf16.mxu0 %v4971
        %7135 = vmatpush1.bf16.msra.mxu0 %v4970
        %7136 = vmatprep.subr.bf16.mxu0 %v4979
        %7137 = vmatpush1.bf16.msra.mxu0 %v4978
        %7138 = vmatprep.subr.bf16.mxu0 %v4987
        %7139 = vmatpush1.bf16.msra.mxu0 %v4986
        %7140 = vmatprep.subr.bf16.mxu0 %v4995
        %7141 = vmatpush1.bf16.msra.mxu0 %v4994
        %7142 = vmatprep.subr.bf16.mxu0 %v5003
        %7143 = vmatpush1.bf16.msra.mxu0 %v5002
        %7144 = vmatprep.subr.bf16.mxu0 %v5011
        %7145 = vmatpush1.bf16.msra.mxu0 %v5010
        %7146 = vmatprep.subr.bf16.mxu0 %v5019
        %7147 = vmatpush1.bf16.msra.mxu0 %v5018
        %7148 = vmatprep.subr.bf16.mxu0 %v5027
        %7149 = vmatpush1.bf16.msra.mxu0 %v5026
        %7150 = vmatprep.subr.bf16.mxu0 %v5035
        %7151 = vmatpush1.bf16.msra.mxu0 %v5034
        %7152 = vmatprep.subr.bf16.mxu0 %v5043
        %7153 = vmatpush1.bf16.msra.mxu0 %v5042
        %7154 = vmatprep.subr.bf16.mxu0 %v5051
        %7155 = vmatpush1.bf16.msra.mxu0 %v5050
        %7156 = vmatprep.subr.bf16.mxu0 %v5059
        %7157 = vmatpush1.bf16.msra.mxu0 %v5058
        %7158 = vmatprep.subr.bf16.mxu0 %v5067
        %7159 = vmatpush1.bf16.msra.mxu0 %v5066
        %7160 = vmatprep.subr.bf16.mxu0 %v5075
        %7161 = vmatpush1.bf16.msra.mxu0 %v5074
        %7162 = vmatprep.subr.bf16.mxu0 %v5083
        %7163 = vmatpush1.bf16.msra.mxu0 %v5082
        %7164 = vmatprep.mubr.bf16.mxu0 %v1321
        %7165 = vmatmul.mubr.bf16.gmra.mrb[0].mxu0 %v1320
        %v7166 = vpop.f32.mrb[0].mxu0
        %v7167 = vadd.f32 %v7114, %v7166
        %v7168 = vpop.f32.mrb[0].mxu0
        %v7169 = vadd.f32 %v7116, %v7168
        %v7170 = vpop.f32.mrb[0].mxu0
        %v7171 = vadd.f32 %v7118, %v7170
        %v7172 = vpop.f32.mrb[0].mxu0
        %v7173 = vadd.f32 %v7120, %v7172
        %7174 = vmatprep.mubr.bf16.mxu0 %v1337
        %7175 = vmatmul.mubr.bf16.gmra.mrb[0].mxu0 %v1336
        %v7176 = vpop.f32.mrb[0].mxu0
        %v7177 = vadd.f32 %v7124, %v7176
        %v7178 = vpop.f32.mrb[0].mxu0
        %v7179 = vadd.f32 %v7126, %v7178
        %v7180 = vpop.f32.mrb[0].mxu0
        %v7181 = vadd.f32 %v7128, %v7180
        %v7182 = vpop.f32.mrb[0].mxu0
        %v7183 = vadd.f32 %v7130, %v7182
        %7184 = vdwg.mxu0
        %7185 = vmatprep.subr.bf16.mxu0 %v5091
        %7186 = vmatpush1.bf16.msra.mxu0 %v5090
        %7187 = vmatprep.subr.bf16.mxu0 %v5099
        %7188 = vmatpush1.bf16.msra.mxu0 %v5098
        %7189 = vmatprep.subr.bf16.mxu0 %v5107
        %7190 = vmatpush1.bf16.msra.mxu0 %v5106
        %7191 = vmatprep.subr.bf16.mxu0 %v5115
        %7192 = vmatpush1.bf16.msra.mxu0 %v5114
        %7193 = vmatprep.subr.bf16.mxu0 %v5123
        %7194 = vmatpush1.bf16.msra.mxu0 %v5122
        %7195 = vmatprep.subr.bf16.mxu0 %v5131
        %7196 = vmatpush1.bf16.msra.mxu0 %v5130
        %7197 = vmatprep.subr.bf16.mxu0 %v5139
        %7198 = vmatpush1.bf16.msra.mxu0 %v5138
        %7199 = vmatprep.subr.bf16.mxu0 %v5147
        %7200 = vmatpush1.bf16.msra.mxu0 %v5146
        %7201 = vmatprep.subr.bf16.mxu0 %v5155
        %7202 = vmatpush1.bf16.msra.mxu0 %v5154
        %7203 = vmatprep.subr.bf16.mxu0 %v5163
        %7204 = vmatpush1.bf16.msra.mxu0 %v5162
        %7205 = vmatprep.subr.bf16.mxu0 %v5171
        %7206 = vmatpush1.bf16.msra.mxu0 %v5170
        %7207 = vmatprep.subr.bf16.mxu0 %v5179
        %7208 = vmatpush1.bf16.msra.mxu0 %v5178
        %7209 = vmatprep.subr.bf16.mxu0 %v5187
        %7210 = vmatpush1.bf16.msra.mxu0 %v5186
        %7211 = vmatprep.subr.bf16.mxu0 %v5195
        %7212 = vmatpush1.bf16.msra.mxu0 %v5194
        %7213 = vmatprep.subr.bf16.mxu0 %v5203
        %7214 = vmatpush1.bf16.msra.mxu0 %v5202
        %7215 = vmatprep.subr.bf16.mxu0 %v5211
        %7216 = vmatpush1.bf16.msra.mxu0 %v5210
        %7217 = vmatprep.mubr.bf16.mxu0 %v1323
        %7218 = vmatmul.mubr.bf16.gmra.mrb[0].mxu0 %v1322
        %v7219 = vpop.f32.mrb[0].mxu0
        %v7220 = vadd.f32 %v7167, %v7219
        %v7221 = vpop.f32.mrb[0].mxu0
        %v7222 = vadd.f32 %v7169, %v7221
        %v7223 = vpop.f32.mrb[0].mxu0
        %v7224 = vadd.f32 %v7171, %v7223
        %v7225 = vpop.f32.mrb[0].mxu0
        %v7226 = vadd.f32 %v7173, %v7225
        %7227 = vmatprep.mubr.bf16.mxu0 %v1339
        %7228 = vmatmul.mubr.bf16.gmra.mrb[0].mxu0 %v1338
        %v7229 = vpop.f32.mrb[0].mxu0
        %v7230 = vadd.f32 %v7177, %v7229
        %v7231 = vpop.f32.mrb[0].mxu0
        %v7232 = vadd.f32 %v7179, %v7231
        %v7233 = vpop.f32.mrb[0].mxu0
        %v7234 = vadd.f32 %v7181, %v7233
        %v7235 = vpop.f32.mrb[0].mxu0
        %v7236 = vadd.f32 %v7183, %v7235
        %7237 = vdwg.mxu0
        %7238 = vmatprep.subr.bf16.mxu0 %v5219
        %7239 = vmatpush1.bf16.msra.mxu0 %v5218
        %7240 = vmatprep.subr.bf16.mxu0 %v5227
        %7241 = vmatpush1.bf16.msra.mxu0 %v5226
        %7242 = vmatprep.subr.bf16.mxu0 %v5235
        %7243 = vmatpush1.bf16.msra.mxu0 %v5234
        %7244 = vmatprep.subr.bf16.mxu0 %v5243
        %7245 = vmatpush1.bf16.msra.mxu0 %v5242
        %7246 = vmatprep.subr.bf16.mxu0 %v5251
        %7247 = vmatpush1.bf16.msra.mxu0 %v5250
        %7248 = vmatprep.subr.bf16.mxu0 %v5259
        %7249 = vmatpush1.bf16.msra.mxu0 %v5258
        %7250 = vmatprep.subr.bf16.mxu0 %v5267
        %7251 = vmatpush1.bf16.msra.mxu0 %v5266
        %7252 = vmatprep.subr.bf16.mxu0 %v5275
        %7253 = vmatpush1.bf16.msra.mxu0 %v5274
        %7254 = vmatprep.subr.bf16.mxu0 %v5283
        %7255 = vmatpush1.bf16.msra.mxu0 %v5282
        %7256 = vmatprep.subr.bf16.mxu0 %v5291
        %7257 = vmatpush1.bf16.msra.mxu0 %v5290
        %7258 = vmatprep.subr.bf16.mxu0 %v5299
        %7259 = vmatpush1.bf16.msra.mxu0 %v5298
        %7260 = vmatprep.subr.bf16.mxu0 %v5307
        %7261 = vmatpush1.bf16.msra.mxu0 %v5306
        %7262 = vmatprep.subr.bf16.mxu0 %v5315
        %7263 = vmatpush1.bf16.msra.mxu0 %v5314
        %7264 = vmatprep.subr.bf16.mxu0 %v5323
        %7265 = vmatpush1.bf16.msra.mxu0 %v5322
        %7266 = vmatprep.subr.bf16.mxu0 %v5331
        %7267 = vmatpush1.bf16.msra.mxu0 %v5330
        %7268 = vmatprep.subr.bf16.mxu0 %v5339
        %7269 = vmatpush1.bf16.msra.mxu0 %v5338
        %7270 = vmatprep.mubr.bf16.mxu0 %v1325
        %7271 = vmatmul.mubr.bf16.gmra.mrb[0].mxu0 %v1324
        %v7272 = vpop.f32.mrb[0].mxu0
        %v7273 = vadd.f32 %v7220, %v7272
        %v7274 = vpop.f32.mrb[0].mxu0
        %v7275 = vadd.f32 %v7222, %v7274
        %v7276 = vpop.f32.mrb[0].mxu0
        %v7277 = vadd.f32 %v7224, %v7276
        %v7278 = vpop.f32.mrb[0].mxu0
        %v7279 = vadd.f32 %v7226, %v7278
        %7280 = vmatprep.mubr.bf16.mxu0 %v1341
        %7281 = vmatmul.mubr.bf16.gmra.mrb[0].mxu0 %v1340
        %v7282 = vpop.f32.mrb[0].mxu0
        %v7283 = vadd.f32 %v7230, %v7282
        %v7284 = vpop.f32.mrb[0].mxu0
        %v7285 = vadd.f32 %v7232, %v7284
        %v7286 = vpop.f32.mrb[0].mxu0
        %v7287 = vadd.f32 %v7234, %v7286
        %v7288 = vpop.f32.mrb[0].mxu0
        %v7289 = vadd.f32 %v7236, %v7288
        %7290 = vdwg.mxu0
        %7291 = vmatprep.subr.bf16.mxu0 %v5347
        %7292 = vmatpush1.bf16.msra.mxu0 %v5346
        %7293 = vmatprep.subr.bf16.mxu0 %v5355
        %7294 = vmatpush1.bf16.msra.mxu0 %v5354
        %7295 = vmatprep.subr.bf16.mxu0 %v5363
        %7296 = vmatpush1.bf16.msra.mxu0 %v5362
        %7297 = vmatprep.subr.bf16.mxu0 %v5371
        %7298 = vmatpush1.bf16.msra.mxu0 %v5370
        %7299 = vmatprep.subr.bf16.mxu0 %v5379
        %7300 = vmatpush1.bf16.msra.mxu0 %v5378
        %7301 = vmatprep.subr.bf16.mxu0 %v5387
        %7302 = vmatpush1.bf16.msra.mxu0 %v5386
        %7303 = vmatprep.subr.bf16.mxu0 %v5395
        %7304 = vmatpush1.bf16.msra.mxu0 %v5394
        %7305 = vmatprep.subr.bf16.mxu0 %v5403
        %7306 = vmatpush1.bf16.msra.mxu0 %v5402
        %7307 = vmatprep.subr.bf16.mxu0 %v5411
        %7308 = vmatpush1.bf16.msra.mxu0 %v5410
        %7309 = vmatprep.subr.bf16.mxu0 %v5419
        %7310 = vmatpush1.bf16.msra.mxu0 %v5418
        %7311 = vmatprep.subr.bf16.mxu0 %v5427
        %7312 = vmatpush1.bf16.msra.mxu0 %v5426
        %7313 = vmatprep.subr.bf16.mxu0 %v5435
        %7314 = vmatpush1.bf16.msra.mxu0 %v5434
        %7315 = vmatprep.subr.bf16.mxu0 %v5443
        %7316 = vmatpush1.bf16.msra.mxu0 %v5442
        %7317 = vmatprep.subr.bf16.mxu0 %v5451
        %7318 = vmatpush1.bf16.msra.mxu0 %v5450
        %7319 = vmatprep.subr.bf16.mxu0 %v5459
        %7320 = vmatpush1.bf16.msra.mxu0 %v5458
        %7321 = vmatprep.subr.bf16.mxu0 %v5467
        %7322 = vmatpush1.bf16.msra.mxu0 %v5466
        %7323 = vmatprep.mubr.bf16.mxu0 %v1327
        %7324 = vmatmul.mubr.bf16.gmra.mrb[0].mxu0 %v1326
        %v7325 = vpop.f32.mrb[0].mxu0
        %v7326 = vadd.f32 %v7273, %v7325
        %v7327 = vpop.f32.mrb[0].mxu0
        %v7328 = vadd.f32 %v7275, %v7327
        %v7329 = vpop.f32.mrb[0].mxu0
        %v7330 = vadd.f32 %v7277, %v7329
        %v7331 = vpop.f32.mrb[0].mxu0
        %v7332 = vadd.f32 %v7279, %v7331
        %7333 = vmatprep.mubr.bf16.mxu0 %v1343
        %7334 = vmatmul.mubr.bf16.gmra.mrb[0].mxu0 %v1342
        %v7335 = vpop.f32.mrb[0].mxu0
        %v7336 = vadd.f32 %v7283, %v7335
        %v7337 = vpop.f32.mrb[0].mxu0
        %v7338 = vadd.f32 %v7285, %v7337
        %v7339 = vpop.f32.mrb[0].mxu0
        %v7340 = vadd.f32 %v7287, %v7339
        %v7341 = vpop.f32.mrb[0].mxu0
        %v7342 = vadd.f32 %v7289, %v7341
        %7343 = vdwg.mxu0
        %7344 = vmatprep.subr.bf16.mxu0 %v4453
        %7345 = vmatpush1.bf16.msra.mxu0 %v4452
        %7346 = vmatprep.subr.bf16.mxu0 %v4461
        %7347 = vmatpush1.bf16.msra.mxu0 %v4460
        %7348 = vmatprep.subr.bf16.mxu0 %v4469
        %7349 = vmatpush1.bf16.msra.mxu0 %v4468
        %7350 = vmatprep.subr.bf16.mxu0 %v4477
        %7351 = vmatpush1.bf16.msra.mxu0 %v4476
        %7352 = vmatprep.subr.bf16.mxu0 %v4485
        %7353 = vmatpush1.bf16.msra.mxu0 %v4484
        %7354 = vmatprep.subr.bf16.mxu0 %v4493
        %7355 = vmatpush1.bf16.msra.mxu0 %v4492
        %7356 = vmatprep.subr.bf16.mxu0 %v4501
        %7357 = vmatpush1.bf16.msra.mxu0 %v4500
        %7358 = vmatprep.subr.bf16.mxu0 %v4509
        %7359 = vmatpush1.bf16.msra.mxu0 %v4508
        %7360 = vmatprep.subr.bf16.mxu0 %v4517
        %7361 = vmatpush1.bf16.msra.mxu0 %v4516
        %7362 = vmatprep.subr.bf16.mxu0 %v4525
        %7363 = vmatpush1.bf16.msra.mxu0 %v4524
        %7364 = vmatprep.subr.bf16.mxu0 %v4533
        %7365 = vmatpush1.bf16.msra.mxu0 %v4532
        %7366 = vmatprep.subr.bf16.mxu0 %v4541
        %7367 = vmatpush1.bf16.msra.mxu0 %v4540
        %7368 = vmatprep.subr.bf16.mxu0 %v4549
        %7369 = vmatpush1.bf16.msra.mxu0 %v4548
        %7370 = vmatprep.subr.bf16.mxu0 %v4557
        %7371 = vmatpush1.bf16.msra.mxu0 %v4556
        %7372 = vmatprep.subr.bf16.mxu0 %v4565
        %7373 = vmatpush1.bf16.msra.mxu0 %v4564
        %7374 = vmatprep.subr.bf16.mxu0 %v4573
        %7375 = vmatpush1.bf16.msra.mxu0 %v4572
        %7376 = vmatprep.mubr.bf16.mxu0 %v1313
        %7377 = vmatmul.mubr.bf16.gmra.mrb[0].mxu0 %v1312
        %v7378 = vpop.f32.mrb[0].mxu0
        %v7379 = vadd.f32 0.0, %v7378
        %v7380 = vpop.f32.mrb[0].mxu0
        %v7381 = vadd.f32 0.0, %v7380
        %v7382 = vpop.f32.mrb[0].mxu0
        %v7383 = vadd.f32 0.0, %v7382
        %v7384 = vpop.f32.mrb[0].mxu0
        %v7385 = vadd.f32 0.0, %v7384
        %7386 = vmatprep.mubr.bf16.mxu0 %v1329
        %7387 = vmatmul.mubr.bf16.gmra.mrb[0].mxu0 %v1328
        %v7388 = vpop.f32.mrb[0].mxu0
        %v7389 = vadd.f32 0.0, %v7388
        %v7390 = vpop.f32.mrb[0].mxu0
        %v7391 = vadd.f32 0.0, %v7390
        %v7392 = vpop.f32.mrb[0].mxu0
        %v7393 = vadd.f32 0.0, %v7392
        %v7394 = vpop.f32.mrb[0].mxu0
        %v7395 = vadd.f32 0.0, %v7394
        %7396 = vdwg.mxu0
        %7397 = vmatprep.subr.bf16.mxu0 %v4581
        %7398 = vmatpush1.bf16.msra.mxu0 %v4580
        %7399 = vmatprep.subr.bf16.mxu0 %v4589
        %7400 = vmatpush1.bf16.msra.mxu0 %v4588
        %7401 = vmatprep.subr.bf16.mxu0 %v4597
        %7402 = vmatpush1.bf16.msra.mxu0 %v4596
        %7403 = vmatprep.subr.bf16.mxu0 %v4605
        %7404 = vmatpush1.bf16.msra.mxu0 %v4604
        %7405 = vmatprep.subr.bf16.mxu0 %v4613
        %7406 = vmatpush1.bf16.msra.mxu0 %v4612
        %7407 = vmatprep.subr.bf16.mxu0 %v4621
        %7408 = vmatpush1.bf16.msra.mxu0 %v4620
        %7409 = vmatprep.subr.bf16.mxu0 %v4629
        %7410 = vmatpush1.bf16.msra.mxu0 %v4628
        %7411 = vmatprep.subr.bf16.mxu0 %v4637
        %7412 = vmatpush1.bf16.msra.mxu0 %v4636
        %7413 = vmatprep.subr.bf16.mxu0 %v4645
        %7414 = vmatpush1.bf16.msra.mxu0 %v4644
        %7415 = vmatprep.subr.bf16.mxu0 %v4653
        %7416 = vmatpush1.bf16.msra.mxu0 %v4652
        %7417 = vmatprep.subr.bf16.mxu0 %v4661
        %7418 = vmatpush1.bf16.msra.mxu0 %v4660
        %7419 = vmatprep.subr.bf16.mxu0 %v4669
        %7420 = vmatpush1.bf16.msra.mxu0 %v4668
        %7421 = vmatprep.subr.bf16.mxu0 %v4677
        %7422 = vmatpush1.bf16.msra.mxu0 %v4676
        %7423 = vmatprep.subr.bf16.mxu0 %v4685
        %7424 = vmatpush1.bf16.msra.mxu0 %v4684
        %7425 = vmatprep.subr.bf16.mxu0 %v4693
        %7426 = vmatpush1.bf16.msra.mxu0 %v4692
        %7427 = vmatprep.subr.bf16.mxu0 %v4701
        %7428 = vmatpush1.bf16.msra.mxu0 %v4700
        %7429 = vmatprep.mubr.bf16.mxu0 %v1315
        %7430 = vmatmul.mubr.bf16.gmra.mrb[0].mxu0 %v1314
        %v7431 = vpop.f32.mrb[0].mxu0
        %v7432 = vadd.f32 %v7379, %v7431
        %v7433 = vpop.f32.mrb[0].mxu0
        %v7434 = vadd.f32 %v7381, %v7433
        %v7435 = vpop.f32.mrb[0].mxu0
        %v7436 = vadd.f32 %v7383, %v7435
        %v7437 = vpop.f32.mrb[0].mxu0
        %v7438 = vadd.f32 %v7385, %v7437
        %7439 = vmatprep.mubr.bf16.mxu0 %v1331
        %7440 = vmatmul.mubr.bf16.gmra.mrb[0].mxu0 %v1330
        %v7441 = vpop.f32.mrb[0].mxu0
        %v7442 = vadd.f32 %v7389, %v7441
        %v7443 = vpop.f32.mrb[0].mxu0
        %v7444 = vadd.f32 %v7391, %v7443
        %v7445 = vpop.f32.mrb[0].mxu0
        %v7446 = vadd.f32 %v7393, %v7445
        %v7447 = vpop.f32.mrb[0].mxu0
        %v7448 = vadd.f32 %v7395, %v7447
        %7449 = vdwg.mxu0
        %7450 = vmatprep.subr.bf16.mxu0 %v4709
        %7451 = vmatpush1.bf16.msra.mxu0 %v4708
        %7452 = vmatprep.subr.bf16.mxu0 %v4717
        %7453 = vmatpush1.bf16.msra.mxu0 %v4716
        %7454 = vmatprep.subr.bf16.mxu0 %v4725
        %7455 = vmatpush1.bf16.msra.mxu0 %v4724
        %7456 = vmatprep.subr.bf16.mxu0 %v4733
        %7457 = vmatpush1.bf16.msra.mxu0 %v4732
        %7458 = vmatprep.subr.bf16.mxu0 %v4741
        %7459 = vmatpush1.bf16.msra.mxu0 %v4740
        %7460 = vmatprep.subr.bf16.mxu0 %v4749
        %7461 = vmatpush1.bf16.msra.mxu0 %v4748
        %7462 = vmatprep.subr.bf16.mxu0 %v4757
        %7463 = vmatpush1.bf16.msra.mxu0 %v4756
        %7464 = vmatprep.subr.bf16.mxu0 %v4765
        %7465 = vmatpush1.bf16.msra.mxu0 %v4764
        %7466 = vmatprep.subr.bf16.mxu0 %v4773
        %7467 = vmatpush1.bf16.msra.mxu0 %v4772
        %7468 = vmatprep.subr.bf16.mxu0 %v4781
        %7469 = vmatpush1.bf16.msra.mxu0 %v4780
        %7470 = vmatprep.subr.bf16.mxu0 %v4789
        %7471 = vmatpush1.bf16.msra.mxu0 %v4788
        %7472 = vmatprep.subr.bf16.mxu0 %v4797
        %7473 = vmatpush1.bf16.msra.mxu0 %v4796
        %7474 = vmatprep.subr.bf16.mxu0 %v4805
        %7475 = vmatpush1.bf16.msra.mxu0 %v4804
        %7476 = vmatprep.subr.bf16.mxu0 %v4813
        %7477 = vmatpush1.bf16.msra.mxu0 %v4812
        %7478 = vmatprep.subr.bf16.mxu0 %v4821
        %7479 = vmatpush1.bf16.msra.mxu0 %v4820
        %7480 = vmatprep.subr.bf16.mxu0 %v4829
        %7481 = vmatpush1.bf16.msra.mxu0 %v4828
        %7482 = vmatprep.mubr.bf16.mxu0 %v1317
        %7483 = vmatmul.mubr.bf16.gmra.mrb[0].mxu0 %v1316
        %v7484 = vpop.f32.mrb[0].mxu0
        %v7485 = vadd.f32 %v7432, %v7484
        %v7486 = vpop.f32.mrb[0].mxu0
        %v7487 = vadd.f32 %v7434, %v7486
        %v7488 = vpop.f32.mrb[0].mxu0
        %v7489 = vadd.f32 %v7436, %v7488
        %v7490 = vpop.f32.mrb[0].mxu0
        %v7491 = vadd.f32 %v7438, %v7490
        %7492 = vmatprep.mubr.bf16.mxu0 %v1333
        %7493 = vmatmul.mubr.bf16.gmra.mrb[0].mxu0 %v1332
        %v7494 = vpop.f32.mrb[0].mxu0
        %v7495 = vadd.f32 %v7442, %v7494
        %v7496 = vpop.f32.mrb[0].mxu0
        %v7497 = vadd.f32 %v7444, %v7496
        %v7498 = vpop.f32.mrb[0].mxu0
        %v7499 = vadd.f32 %v7446, %v7498
        %v7500 = vpop.f32.mrb[0].mxu0
        %v7501 = vadd.f32 %v7448, %v7500
        %7502 = vdwg.mxu0
        %7503 = vmatprep.subr.bf16.mxu0 %v4837
        %7504 = vmatpush1.bf16.msra.mxu0 %v4836
        %7505 = vmatprep.subr.bf16.mxu0 %v4845
        %7506 = vmatpush1.bf16.msra.mxu0 %v4844
        %7507 = vmatprep.subr.bf16.mxu0 %v4853
        %7508 = vmatpush1.bf16.msra.mxu0 %v4852
        %7509 = vmatprep.subr.bf16.mxu0 %v4861
        %7510 = vmatpush1.bf16.msra.mxu0 %v4860
        %7511 = vmatprep.subr.bf16.mxu0 %v4869
        %7512 = vmatpush1.bf16.msra.mxu0 %v4868
        %7513 = vmatprep.subr.bf16.mxu0 %v4877
        %7514 = vmatpush1.bf16.msra.mxu0 %v4876
        %7515 = vmatprep.subr.bf16.mxu0 %v4885
        %7516 = vmatpush1.bf16.msra.mxu0 %v4884
        %7517 = vmatprep.subr.bf16.mxu0 %v4893
        %7518 = vmatpush1.bf16.msra.mxu0 %v4892
        %7519 = vmatprep.subr.bf16.mxu0 %v4901
        %7520 = vmatpush1.bf16.msra.mxu0 %v4900
        %7521 = vmatprep.subr.bf16.mxu0 %v4909
        %7522 = vmatpush1.bf16.msra.mxu0 %v4908
        %7523 = vmatprep.subr.bf16.mxu0 %v4917
        %7524 = vmatpush1.bf16.msra.mxu0 %v4916
        %7525 = vmatprep.subr.bf16.mxu0 %v4925
        %7526 = vmatpush1.bf16.msra.mxu0 %v4924
        %7527 = vmatprep.subr.bf16.mxu0 %v4933
        %7528 = vmatpush1.bf16.msra.mxu0 %v4932
        %7529 = vmatprep.subr.bf16.mxu0 %v4941
        %7530 = vmatpush1.bf16.msra.mxu0 %v4940
        %7531 = vmatprep.subr.bf16.mxu0 %v4949
        %7532 = vmatpush1.bf16.msra.mxu0 %v4948
        %7533 = vmatprep.subr.bf16.mxu0 %v4957
        %7534 = vmatpush1.bf16.msra.mxu0 %v4956
        %7535 = vmatprep.mubr.bf16.mxu0 %v1319
        %7536 = vmatmul.mubr.bf16.gmra.mrb[0].mxu0 %v1318
        %v7537 = vpop.f32.mrb[0].mxu0
        %v7538 = vadd.f32 %v7485, %v7537
        %v7539 = vpop.f32.mrb[0].mxu0
        %v7540 = vadd.f32 %v7487, %v7539
        %v7541 = vpop.f32.mrb[0].mxu0
        %v7542 = vadd.f32 %v7489, %v7541
        %v7543 = vpop.f32.mrb[0].mxu0
        %v7544 = vadd.f32 %v7491, %v7543
        %7545 = vmatprep.mubr.bf16.mxu0 %v1335
        %7546 = vmatmul.mubr.bf16.gmra.mrb[0].mxu0 %v1334
        %v7547 = vpop.f32.mrb[0].mxu0
        %v7548 = vadd.f32 %v7495, %v7547
        %v7549 = vpop.f32.mrb[0].mxu0
        %v7550 = vadd.f32 %v7497, %v7549
        %v7551 = vpop.f32.mrb[0].mxu0
        %v7552 = vadd.f32 %v7499, %v7551
        %v7553 = vpop.f32.mrb[0].mxu0
        %v7554 = vadd.f32 %v7501, %v7553
        %7555 = vdwg.mxu0
        %7556 = vmatprep.subr.bf16.mxu0 %v4965
        %7557 = vmatpush1.bf16.msra.mxu0 %v4964
        %7558 = vmatprep.subr.bf16.mxu0 %v4973
        %7559 = vmatpush1.bf16.msra.mxu0 %v4972
        %7560 = vmatprep.subr.bf16.mxu0 %v4981
        %7561 = vmatpush1.bf16.msra.mxu0 %v4980
        %7562 = vmatprep.subr.bf16.mxu0 %v4989
        %7563 = vmatpush1.bf16.msra.mxu0 %v4988
        %7564 = vmatprep.subr.bf16.mxu0 %v4997
        %7565 = vmatpush1.bf16.msra.mxu0 %v4996
        %7566 = vmatprep.subr.bf16.mxu0 %v5005
        %7567 = vmatpush1.bf16.msra.mxu0 %v5004
        %7568 = vmatprep.subr.bf16.mxu0 %v5013
        %7569 = vmatpush1.bf16.msra.mxu0 %v5012
        %7570 = vmatprep.subr.bf16.mxu0 %v5021
        %7571 = vmatpush1.bf16.msra.mxu0 %v5020
        %7572 = vmatprep.subr.bf16.mxu0 %v5029
        %7573 = vmatpush1.bf16.msra.mxu0 %v5028
        %7574 = vmatprep.subr.bf16.mxu0 %v5037
        %7575 = vmatpush1.bf16.msra.mxu0 %v5036
        %7576 = vmatprep.subr.bf16.mxu0 %v5045
        %7577 = vmatpush1.bf16.msra.mxu0 %v5044
        %7578 = vmatprep.subr.bf16.mxu0 %v5053
        %7579 = vmatpush1.bf16.msra.mxu0 %v5052
        %7580 = vmatprep.subr.bf16.mxu0 %v5061
        %7581 = vmatpush1.bf16.msra.mxu0 %v5060
        %7582 = vmatprep.subr.bf16.mxu0 %v5069
        %7583 = vmatpush1.bf16.msra.mxu0 %v5068
        %7584 = vmatprep.subr.bf16.mxu0 %v5077
        %7585 = vmatpush1.bf16.msra.mxu0 %v5076
        %7586 = vmatprep.subr.bf16.mxu0 %v5085
        %7587 = vmatpush1.bf16.msra.mxu0 %v5084
        %7588 = vmatprep.mubr.bf16.mxu0 %v1321
        %7589 = vmatmul.mubr.bf16.gmra.mrb[0].mxu0 %v1320
        %v7590 = vpop.f32.mrb[0].mxu0
        %v7591 = vadd.f32 %v7538, %v7590
        %v7592 = vpop.f32.mrb[0].mxu0
        %v7593 = vadd.f32 %v7540, %v7592
        %v7594 = vpop.f32.mrb[0].mxu0
        %v7595 = vadd.f32 %v7542, %v7594
        %v7596 = vpop.f32.mrb[0].mxu0
        %v7597 = vadd.f32 %v7544, %v7596
        %7598 = vmatprep.mubr.bf16.mxu0 %v1337
        %7599 = vmatmul.mubr.bf16.gmra.mrb[0].mxu0 %v1336
        %v7600 = vpop.f32.mrb[0].mxu0
        %v7601 = vadd.f32 %v7548, %v7600
        %v7602 = vpop.f32.mrb[0].mxu0
        %v7603 = vadd.f32 %v7550, %v7602
        %v7604 = vpop.f32.mrb[0].mxu0
        %v7605 = vadd.f32 %v7552, %v7604
        %v7606 = vpop.f32.mrb[0].mxu0
        %v7607 = vadd.f32 %v7554, %v7606
        %7608 = vdwg.mxu0
        %7609 = vmatprep.subr.bf16.mxu0 %v5093
        %7610 = vmatpush1.bf16.msra.mxu0 %v5092
        %7611 = vmatprep.subr.bf16.mxu0 %v5101
        %7612 = vmatpush1.bf16.msra.mxu0 %v5100
        %7613 = vmatprep.subr.bf16.mxu0 %v5109
        %7614 = vmatpush1.bf16.msra.mxu0 %v5108
        %7615 = vmatprep.subr.bf16.mxu0 %v5117
        %7616 = vmatpush1.bf16.msra.mxu0 %v5116
        %7617 = vmatprep.subr.bf16.mxu0 %v5125
        %7618 = vmatpush1.bf16.msra.mxu0 %v5124
        %7619 = vmatprep.subr.bf16.mxu0 %v5133
        %7620 = vmatpush1.bf16.msra.mxu0 %v5132
        %7621 = vmatprep.subr.bf16.mxu0 %v5141
        %7622 = vmatpush1.bf16.msra.mxu0 %v5140
        %7623 = vmatprep.subr.bf16.mxu0 %v5149
        %7624 = vmatpush1.bf16.msra.mxu0 %v5148
        %7625 = vmatprep.subr.bf16.mxu0 %v5157
        %7626 = vmatpush1.bf16.msra.mxu0 %v5156
        %7627 = vmatprep.subr.bf16.mxu0 %v5165
        %7628 = vmatpush1.bf16.msra.mxu0 %v5164
        %7629 = vmatprep.subr.bf16.mxu0 %v5173
        %7630 = vmatpush1.bf16.msra.mxu0 %v5172
        %7631 = vmatprep.subr.bf16.mxu0 %v5181
        %7632 = vmatpush1.bf16.msra.mxu0 %v5180
        %7633 = vmatprep.subr.bf16.mxu0 %v5189
        %7634 = vmatpush1.bf16.msra.mxu0 %v5188
        %7635 = vmatprep.subr.bf16.mxu0 %v5197
        %7636 = vmatpush1.bf16.msra.mxu0 %v5196
        %7637 = vmatprep.subr.bf16.mxu0 %v5205
        %7638 = vmatpush1.bf16.msra.mxu0 %v5204
        %7639 = vmatprep.subr.bf16.mxu0 %v5213
        %7640 = vmatpush1.bf16.msra.mxu0 %v5212
        %7641 = vmatprep.mubr.bf16.mxu0 %v1323
        %7642 = vmatmul.mubr.bf16.gmra.mrb[0].mxu0 %v1322
        %v7643 = vpop.f32.mrb[0].mxu0
        %v7644 = vadd.f32 %v7591, %v7643
        %v7645 = vpop.f32.mrb[0].mxu0
        %v7646 = vadd.f32 %v7593, %v7645
        %v7647 = vpop.f32.mrb[0].mxu0
        %v7648 = vadd.f32 %v7595, %v7647
        %v7649 = vpop.f32.mrb[0].mxu0
        %v7650 = vadd.f32 %v7597, %v7649
        %7651 = vmatprep.mubr.bf16.mxu0 %v1339
        %7652 = vmatmul.mubr.bf16.gmra.mrb[0].mxu0 %v1338
        %v7653 = vpop.f32.mrb[0].mxu0
        %v7654 = vadd.f32 %v7601, %v7653
        %v7655 = vpop.f32.mrb[0].mxu0
        %v7656 = vadd.f32 %v7603, %v7655
        %v7657 = vpop.f32.mrb[0].mxu0
        %v7658 = vadd.f32 %v7605, %v7657
        %v7659 = vpop.f32.mrb[0].mxu0
        %v7660 = vadd.f32 %v7607, %v7659
        %7661 = vdwg.mxu0
        %7662 = vmatprep.subr.bf16.mxu0 %v5221
        %7663 = vmatpush1.bf16.msra.mxu0 %v5220
        %7664 = vmatprep.subr.bf16.mxu0 %v5229
        %7665 = vmatpush1.bf16.msra.mxu0 %v5228
        %7666 = vmatprep.subr.bf16.mxu0 %v5237
        %7667 = vmatpush1.bf16.msra.mxu0 %v5236
        %7668 = vmatprep.subr.bf16.mxu0 %v5245
        %7669 = vmatpush1.bf16.msra.mxu0 %v5244
        %7670 = vmatprep.subr.bf16.mxu0 %v5253
        %7671 = vmatpush1.bf16.msra.mxu0 %v5252
        %7672 = vmatprep.subr.bf16.mxu0 %v5261
        %7673 = vmatpush1.bf16.msra.mxu0 %v5260
        %7674 = vmatprep.subr.bf16.mxu0 %v5269
        %7675 = vmatpush1.bf16.msra.mxu0 %v5268
        %7676 = vmatprep.subr.bf16.mxu0 %v5277
        %7677 = vmatpush1.bf16.msra.mxu0 %v5276
        %7678 = vmatprep.subr.bf16.mxu0 %v5285
        %7679 = vmatpush1.bf16.msra.mxu0 %v5284
        %7680 = vmatprep.subr.bf16.mxu0 %v5293
        %7681 = vmatpush1.bf16.msra.mxu0 %v5292
        %7682 = vmatprep.subr.bf16.mxu0 %v5301
        %7683 = vmatpush1.bf16.msra.mxu0 %v5300
        %7684 = vmatprep.subr.bf16.mxu0 %v5309
        %7685 = vmatpush1.bf16.msra.mxu0 %v5308
        %7686 = vmatprep.subr.bf16.mxu0 %v5317
        %7687 = vmatpush1.bf16.msra.mxu0 %v5316
        %7688 = vmatprep.subr.bf16.mxu0 %v5325
        %7689 = vmatpush1.bf16.msra.mxu0 %v5324
        %7690 = vmatprep.subr.bf16.mxu0 %v5333
        %7691 = vmatpush1.bf16.msra.mxu0 %v5332
        %7692 = vmatprep.subr.bf16.mxu0 %v5341
        %7693 = vmatpush1.bf16.msra.mxu0 %v5340
        %7694 = vmatprep.mubr.bf16.mxu0 %v1325
        %7695 = vmatmul.mubr.bf16.gmra.mrb[0].mxu0 %v1324
        %v7696 = vpop.f32.mrb[0].mxu0
        %v7697 = vadd.f32 %v7644, %v7696
        %v7698 = vpop.f32.mrb[0].mxu0
        %v7699 = vadd.f32 %v7646, %v7698
        %v7700 = vpop.f32.mrb[0].mxu0
        %v7701 = vadd.f32 %v7648, %v7700
        %v7702 = vpop.f32.mrb[0].mxu0
        %v7703 = vadd.f32 %v7650, %v7702
        %7704 = vmatprep.mubr.bf16.mxu0 %v1341
        %7705 = vmatmul.mubr.bf16.gmra.mrb[0].mxu0 %v1340
        %v7706 = vpop.f32.mrb[0].mxu0
        %v7707 = vadd.f32 %v7654, %v7706
        %v7708 = vpop.f32.mrb[0].mxu0
        %v7709 = vadd.f32 %v7656, %v7708
        %v7710 = vpop.f32.mrb[0].mxu0
        %v7711 = vadd.f32 %v7658, %v7710
        %v7712 = vpop.f32.mrb[0].mxu0
        %v7713 = vadd.f32 %v7660, %v7712
        %7714 = vdwg.mxu0
        %7715 = vmatprep.subr.bf16.mxu0 %v5349
        %7716 = vmatpush1.bf16.msra.mxu0 %v5348
        %7717 = vmatprep.subr.bf16.mxu0 %v5357
        %7718 = vmatpush1.bf16.msra.mxu0 %v5356
        %7719 = vmatprep.subr.bf16.mxu0 %v5365
        %7720 = vmatpush1.bf16.msra.mxu0 %v5364
        %7721 = vmatprep.subr.bf16.mxu0 %v5373
        %7722 = vmatpush1.bf16.msra.mxu0 %v5372
        %7723 = vmatprep.subr.bf16.mxu0 %v5381
        %7724 = vmatpush1.bf16.msra.mxu0 %v5380
        %7725 = vmatprep.subr.bf16.mxu0 %v5389
        %7726 = vmatpush1.bf16.msra.mxu0 %v5388
        %7727 = vmatprep.subr.bf16.mxu0 %v5397
        %7728 = vmatpush1.bf16.msra.mxu0 %v5396
        %7729 = vmatprep.subr.bf16.mxu0 %v5405
        %7730 = vmatpush1.bf16.msra.mxu0 %v5404
        %7731 = vmatprep.subr.bf16.mxu0 %v5413
        %7732 = vmatpush1.bf16.msra.mxu0 %v5412
        %7733 = vmatprep.subr.bf16.mxu0 %v5421
        %7734 = vmatpush1.bf16.msra.mxu0 %v5420
        %7735 = vmatprep.subr.bf16.mxu0 %v5429
        %7736 = vmatpush1.bf16.msra.mxu0 %v5428
        %7737 = vmatprep.subr.bf16.mxu0 %v5437
        %7738 = vmatpush1.bf16.msra.mxu0 %v5436
        %7739 = vmatprep.subr.bf16.mxu0 %v5445
        %7740 = vmatpush1.bf16.msra.mxu0 %v5444
        %7741 = vmatprep.subr.bf16.mxu0 %v5453
        %7742 = vmatpush1.bf16.msra.mxu0 %v5452
        %7743 = vmatprep.subr.bf16.mxu0 %v5461
        %7744 = vmatpush1.bf16.msra.mxu0 %v5460
        %7745 = vmatprep.subr.bf16.mxu0 %v5469
        %7746 = vmatpush1.bf16.msra.mxu0 %v5468
        %7747 = vmatprep.mubr.bf16.mxu0 %v1327
        %7748 = vmatmul.mubr.bf16.gmra.mrb[0].mxu0 %v1326
        %v7749 = vpop.f32.mrb[0].mxu0
        %v7750 = vadd.f32 %v7697, %v7749
        %v7751 = vpop.f32.mrb[0].mxu0
        %v7752 = vadd.f32 %v7699, %v7751
        %v7753 = vpop.f32.mrb[0].mxu0
        %v7754 = vadd.f32 %v7701, %v7753
        %v7755 = vpop.f32.mrb[0].mxu0
        %v7756 = vadd.f32 %v7703, %v7755
        %7757 = vmatprep.mubr.bf16.mxu0 %v1343
        %7758 = vmatmul.mubr.bf16.gmra.mrb[0].mxu0 %v1342
        %v7759 = vpop.f32.mrb[0].mxu0
        %v7760 = vadd.f32 %v7707, %v7759
        %v7761 = vpop.f32.mrb[0].mxu0
        %v7762 = vadd.f32 %v7709, %v7761
        %v7763 = vpop.f32.mrb[0].mxu0
        %v7764 = vadd.f32 %v7711, %v7763
        %v7765 = vpop.f32.mrb[0].mxu0
        %v7766 = vadd.f32 %v7713, %v7765
        %7767 = vdwg.mxu0
        %7768 = vmatprep.subr.bf16.mxu0 %v4455
        %7769 = vmatpush1.bf16.msra.mxu0 %v4454
        %7770 = vmatprep.subr.bf16.mxu0 %v4463
        %7771 = vmatpush1.bf16.msra.mxu0 %v4462
        %7772 = vmatprep.subr.bf16.mxu0 %v4471
        %7773 = vmatpush1.bf16.msra.mxu0 %v4470
        %7774 = vmatprep.subr.bf16.mxu0 %v4479
        %7775 = vmatpush1.bf16.msra.mxu0 %v4478
        %7776 = vmatprep.subr.bf16.mxu0 %v4487
        %7777 = vmatpush1.bf16.msra.mxu0 %v4486
        %7778 = vmatprep.subr.bf16.mxu0 %v4495
        %7779 = vmatpush1.bf16.msra.mxu0 %v4494
        %7780 = vmatprep.subr.bf16.mxu0 %v4503
        %7781 = vmatpush1.bf16.msra.mxu0 %v4502
        %7782 = vmatprep.subr.bf16.mxu0 %v4511
        %7783 = vmatpush1.bf16.msra.mxu0 %v4510
        %7784 = vmatprep.subr.bf16.mxu0 %v4519
        %7785 = vmatpush1.bf16.msra.mxu0 %v4518
        %7786 = vmatprep.subr.bf16.mxu0 %v4527
        %7787 = vmatpush1.bf16.msra.mxu0 %v4526
        %7788 = vmatprep.subr.bf16.mxu0 %v4535
        %7789 = vmatpush1.bf16.msra.mxu0 %v4534
        %7790 = vmatprep.subr.bf16.mxu0 %v4543
        %7791 = vmatpush1.bf16.msra.mxu0 %v4542
        %7792 = vmatprep.subr.bf16.mxu0 %v4551
        %7793 = vmatpush1.bf16.msra.mxu0 %v4550
        %7794 = vmatprep.subr.bf16.mxu0 %v4559
        %7795 = vmatpush1.bf16.msra.mxu0 %v4558
        %7796 = vmatprep.subr.bf16.mxu0 %v4567
        %7797 = vmatpush1.bf16.msra.mxu0 %v4566
        %7798 = vmatprep.subr.bf16.mxu0 %v4575
        %7799 = vmatpush1.bf16.msra.mxu0 %v4574
        %7800 = vmatprep.mubr.bf16.mxu0 %v1313
        %7801 = vmatmul.mubr.bf16.gmra.mrb[0].mxu0 %v1312
        %v7802 = vpop.f32.mrb[0].mxu0
        %v7803 = vadd.f32 0.0, %v7802
        %v7804 = vpop.f32.mrb[0].mxu0
        %v7805 = vadd.f32 0.0, %v7804
        %v7806 = vpop.f32.mrb[0].mxu0
        %v7807 = vadd.f32 0.0, %v7806
        %v7808 = vpop.f32.mrb[0].mxu0
        %v7809 = vadd.f32 0.0, %v7808
        %7810 = vmatprep.mubr.bf16.mxu0 %v1329
        %7811 = vmatmul.mubr.bf16.gmra.mrb[0].mxu0 %v1328
        %v7812 = vpop.f32.mrb[0].mxu0
        %v7813 = vadd.f32 0.0, %v7812
        %v7814 = vpop.f32.mrb[0].mxu0
        %v7815 = vadd.f32 0.0, %v7814
        %v7816 = vpop.f32.mrb[0].mxu0
        %v7817 = vadd.f32 0.0, %v7816
        %v7818 = vpop.f32.mrb[0].mxu0
        %v7819 = vadd.f32 0.0, %v7818
        %7820 = vdwg.mxu0
        %7821 = vmatprep.subr.bf16.mxu0 %v4583
        %7822 = vmatpush1.bf16.msra.mxu0 %v4582
        %7823 = vmatprep.subr.bf16.mxu0 %v4591
        %7824 = vmatpush1.bf16.msra.mxu0 %v4590
        %7825 = vmatprep.subr.bf16.mxu0 %v4599
        %7826 = vmatpush1.bf16.msra.mxu0 %v4598
        %7827 = vmatprep.subr.bf16.mxu0 %v4607
        %7828 = vmatpush1.bf16.msra.mxu0 %v4606
        %7829 = vmatprep.subr.bf16.mxu0 %v4615
        %7830 = vmatpush1.bf16.msra.mxu0 %v4614
        %7831 = vmatprep.subr.bf16.mxu0 %v4623
        %7832 = vmatpush1.bf16.msra.mxu0 %v4622
        %7833 = vmatprep.subr.bf16.mxu0 %v4631
        %7834 = vmatpush1.bf16.msra.mxu0 %v4630
        %7835 = vmatprep.subr.bf16.mxu0 %v4639
        %7836 = vmatpush1.bf16.msra.mxu0 %v4638
        %7837 = vmatprep.subr.bf16.mxu0 %v4647
        %7838 = vmatpush1.bf16.msra.mxu0 %v4646
        %7839 = vmatprep.subr.bf16.mxu0 %v4655
        %7840 = vmatpush1.bf16.msra.mxu0 %v4654
        %7841 = vmatprep.subr.bf16.mxu0 %v4663
        %7842 = vmatpush1.bf16.msra.mxu0 %v4662
        %7843 = vmatprep.subr.bf16.mxu0 %v4671
        %7844 = vmatpush1.bf16.msra.mxu0 %v4670
        %7845 = vmatprep.subr.bf16.mxu0 %v4679
        %7846 = vmatpush1.bf16.msra.mxu0 %v4678
        %7847 = vmatprep.subr.bf16.mxu0 %v4687
        %7848 = vmatpush1.bf16.msra.mxu0 %v4686
        %7849 = vmatprep.subr.bf16.mxu0 %v4695
        %7850 = vmatpush1.bf16.msra.mxu0 %v4694
        %7851 = vmatprep.subr.bf16.mxu0 %v4703
        %7852 = vmatpush1.bf16.msra.mxu0 %v4702
        %7853 = vmatprep.mubr.bf16.mxu0 %v1315
        %7854 = vmatmul.mubr.bf16.gmra.mrb[0].mxu0 %v1314
        %v7855 = vpop.f32.mrb[0].mxu0
        %v7856 = vadd.f32 %v7803, %v7855
        %v7857 = vpop.f32.mrb[0].mxu0
        %v7858 = vadd.f32 %v7805, %v7857
        %v7859 = vpop.f32.mrb[0].mxu0
        %v7860 = vadd.f32 %v7807, %v7859
        %v7861 = vpop.f32.mrb[0].mxu0
        %v7862 = vadd.f32 %v7809, %v7861
        %7863 = vmatprep.mubr.bf16.mxu0 %v1331
        %7864 = vmatmul.mubr.bf16.gmra.mrb[0].mxu0 %v1330
        %v7865 = vpop.f32.mrb[0].mxu0
        %v7866 = vadd.f32 %v7813, %v7865
        %v7867 = vpop.f32.mrb[0].mxu0
        %v7868 = vadd.f32 %v7815, %v7867
        %v7869 = vpop.f32.mrb[0].mxu0
        %v7870 = vadd.f32 %v7817, %v7869
        %v7871 = vpop.f32.mrb[0].mxu0
        %v7872 = vadd.f32 %v7819, %v7871
        %7873 = vdwg.mxu0
        %7874 = vmatprep.subr.bf16.mxu0 %v4711
        %7875 = vmatpush1.bf16.msra.mxu0 %v4710
        %7876 = vmatprep.subr.bf16.mxu0 %v4719
        %7877 = vmatpush1.bf16.msra.mxu0 %v4718
        %7878 = vmatprep.subr.bf16.mxu0 %v4727
        %7879 = vmatpush1.bf16.msra.mxu0 %v4726
        %7880 = vmatprep.subr.bf16.mxu0 %v4735
        %7881 = vmatpush1.bf16.msra.mxu0 %v4734
        %7882 = vmatprep.subr.bf16.mxu0 %v4743
        %7883 = vmatpush1.bf16.msra.mxu0 %v4742
        %7884 = vmatprep.subr.bf16.mxu0 %v4751
        %7885 = vmatpush1.bf16.msra.mxu0 %v4750
        %7886 = vmatprep.subr.bf16.mxu0 %v4759
        %7887 = vmatpush1.bf16.msra.mxu0 %v4758
        %7888 = vmatprep.subr.bf16.mxu0 %v4767
        %7889 = vmatpush1.bf16.msra.mxu0 %v4766
        %7890 = vmatprep.subr.bf16.mxu0 %v4775
        %7891 = vmatpush1.bf16.msra.mxu0 %v4774
        %7892 = vmatprep.subr.bf16.mxu0 %v4783
        %7893 = vmatpush1.bf16.msra.mxu0 %v4782
        %7894 = vmatprep.subr.bf16.mxu0 %v4791
        %7895 = vmatpush1.bf16.msra.mxu0 %v4790
        %7896 = vmatprep.subr.bf16.mxu0 %v4799
        %7897 = vmatpush1.bf16.msra.mxu0 %v4798
        %7898 = vmatprep.subr.bf16.mxu0 %v4807
        %7899 = vmatpush1.bf16.msra.mxu0 %v4806
        %7900 = vmatprep.subr.bf16.mxu0 %v4815
        %7901 = vmatpush1.bf16.msra.mxu0 %v4814
        %7902 = vmatprep.subr.bf16.mxu0 %v4823
        %7903 = vmatpush1.bf16.msra.mxu0 %v4822
        %7904 = vmatprep.subr.bf16.mxu0 %v4831
        %7905 = vmatpush1.bf16.msra.mxu0 %v4830
        %7906 = vmatprep.mubr.bf16.mxu0 %v1317
        %7907 = vmatmul.mubr.bf16.gmra.mrb[0].mxu0 %v1316
        %v7908 = vpop.f32.mrb[0].mxu0
        %v7909 = vadd.f32 %v7856, %v7908
        %v7910 = vpop.f32.mrb[0].mxu0
        %v7911 = vadd.f32 %v7858, %v7910
        %v7912 = vpop.f32.mrb[0].mxu0
        %v7913 = vadd.f32 %v7860, %v7912
        %v7914 = vpop.f32.mrb[0].mxu0
        %v7915 = vadd.f32 %v7862, %v7914
        %7916 = vmatprep.mubr.bf16.mxu0 %v1333
        %7917 = vmatmul.mubr.bf16.gmra.mrb[0].mxu0 %v1332
        %v7918 = vpop.f32.mrb[0].mxu0
        %v7919 = vadd.f32 %v7866, %v7918
        %v7920 = vpop.f32.mrb[0].mxu0
        %v7921 = vadd.f32 %v7868, %v7920
        %v7922 = vpop.f32.mrb[0].mxu0
        %v7923 = vadd.f32 %v7870, %v7922
        %v7924 = vpop.f32.mrb[0].mxu0
        %v7925 = vadd.f32 %v7872, %v7924
        %7926 = vdwg.mxu0
        %7927 = vmatprep.subr.bf16.mxu0 %v4839
        %7928 = vmatpush1.bf16.msra.mxu0 %v4838
        %7929 = vmatprep.subr.bf16.mxu0 %v4847
        %7930 = vmatpush1.bf16.msra.mxu0 %v4846
        %7931 = vmatprep.subr.bf16.mxu0 %v4855
        %7932 = vmatpush1.bf16.msra.mxu0 %v4854
        %7933 = vmatprep.subr.bf16.mxu0 %v4863
        %7934 = vmatpush1.bf16.msra.mxu0 %v4862
        %7935 = vmatprep.subr.bf16.mxu0 %v4871
        %7936 = vmatpush1.bf16.msra.mxu0 %v4870
        %7937 = vmatprep.subr.bf16.mxu0 %v4879
        %7938 = vmatpush1.bf16.msra.mxu0 %v4878
        %7939 = vmatprep.subr.bf16.mxu0 %v4887
        %7940 = vmatpush1.bf16.msra.mxu0 %v4886
        %7941 = vmatprep.subr.bf16.mxu0 %v4895
        %7942 = vmatpush1.bf16.msra.mxu0 %v4894
        %7943 = vmatprep.subr.bf16.mxu0 %v4903
        %7944 = vmatpush1.bf16.msra.mxu0 %v4902
        %7945 = vmatprep.subr.bf16.mxu0 %v4911
        %7946 = vmatpush1.bf16.msra.mxu0 %v4910
        %7947 = vmatprep.subr.bf16.mxu0 %v4919
        %7948 = vmatpush1.bf16.msra.mxu0 %v4918
        %7949 = vmatprep.subr.bf16.mxu0 %v4927
        %7950 = vmatpush1.bf16.msra.mxu0 %v4926
        %7951 = vmatprep.subr.bf16.mxu0 %v4935
        %7952 = vmatpush1.bf16.msra.mxu0 %v4934
        %7953 = vmatprep.subr.bf16.mxu0 %v4943
        %7954 = vmatpush1.bf16.msra.mxu0 %v4942
        %7955 = vmatprep.subr.bf16.mxu0 %v4951
        %7956 = vmatpush1.bf16.msra.mxu0 %v4950
        %7957 = vmatprep.subr.bf16.mxu0 %v4959
        %7958 = vmatpush1.bf16.msra.mxu0 %v4958
        %7959 = vmatprep.mubr.bf16.mxu0 %v1319
        %7960 = vmatmul.mubr.bf16.gmra.mrb[0].mxu0 %v1318
        %v7961 = vpop.f32.mrb[0].mxu0
        %v7962 = vadd.f32 %v7909, %v7961
        %v7963 = vpop.f32.mrb[0].mxu0
        %v7964 = vadd.f32 %v7911, %v7963
        %v7965 = vpop.f32.mrb[0].mxu0
        %v7966 = vadd.f32 %v7913, %v7965
        %v7967 = vpop.f32.mrb[0].mxu0
        %v7968 = vadd.f32 %v7915, %v7967
        %7969 = vmatprep.mubr.bf16.mxu0 %v1335
        %7970 = vmatmul.mubr.bf16.gmra.mrb[0].mxu0 %v1334
        %v7971 = vpop.f32.mrb[0].mxu0
        %v7972 = vadd.f32 %v7919, %v7971
        %v7973 = vpop.f32.mrb[0].mxu0
        %v7974 = vadd.f32 %v7921, %v7973
        %v7975 = vpop.f32.mrb[0].mxu0
        %v7976 = vadd.f32 %v7923, %v7975
        %v7977 = vpop.f32.mrb[0].mxu0
        %v7978 = vadd.f32 %v7925, %v7977
        %7979 = vdwg.mxu0
        %7980 = vmatprep.subr.bf16.mxu0 %v4967
        %7981 = vmatpush1.bf16.msra.mxu0 %v4966
        %7982 = vmatprep.subr.bf16.mxu0 %v4975
        %7983 = vmatpush1.bf16.msra.mxu0 %v4974
        %7984 = vmatprep.subr.bf16.mxu0 %v4983
        %7985 = vmatpush1.bf16.msra.mxu0 %v4982
        %7986 = vmatprep.subr.bf16.mxu0 %v4991
        %7987 = vmatpush1.bf16.msra.mxu0 %v4990
        %7988 = vmatprep.subr.bf16.mxu0 %v4999
        %7989 = vmatpush1.bf16.msra.mxu0 %v4998
        %7990 = vmatprep.subr.bf16.mxu0 %v5007
        %7991 = vmatpush1.bf16.msra.mxu0 %v5006
        %7992 = vmatprep.subr.bf16.mxu0 %v5015
        %7993 = vmatpush1.bf16.msra.mxu0 %v5014
        %7994 = vmatprep.subr.bf16.mxu0 %v5023
        %7995 = vmatpush1.bf16.msra.mxu0 %v5022
        %7996 = vmatprep.subr.bf16.mxu0 %v5031
        %7997 = vmatpush1.bf16.msra.mxu0 %v5030
        %7998 = vmatprep.subr.bf16.mxu0 %v5039
        %7999 = vmatpush1.bf16.msra.mxu0 %v5038
        %8000 = vmatprep.subr.bf16.mxu0 %v5047
        %8001 = vmatpush1.bf16.msra.mxu0 %v5046
        %8002 = vmatprep.subr.bf16.mxu0 %v5055
        %8003 = vmatpush1.bf16.msra.mxu0 %v5054
        %8004 = vmatprep.subr.bf16.mxu0 %v5063
        %8005 = vmatpush1.bf16.msra.mxu0 %v5062
        %8006 = vmatprep.subr.bf16.mxu0 %v5071
        %8007 = vmatpush1.bf16.msra.mxu0 %v5070
        %8008 = vmatprep.subr.bf16.mxu0 %v5079
        %8009 = vmatpush1.bf16.msra.mxu0 %v5078
        %8010 = vmatprep.subr.bf16.mxu0 %v5087
        %8011 = vmatpush1.bf16.msra.mxu0 %v5086
        %8012 = vmatprep.mubr.bf16.mxu0 %v1321
        %8013 = vmatmul.mubr.bf16.gmra.mrb[0].mxu0 %v1320
        %v8014 = vpop.f32.mrb[0].mxu0
        %v8015 = vadd.f32 %v7962, %v8014
        %v8016 = vpop.f32.mrb[0].mxu0
        %v8017 = vadd.f32 %v7964, %v8016
        %v8018 = vpop.f32.mrb[0].mxu0
        %v8019 = vadd.f32 %v7966, %v8018
        %v8020 = vpop.f32.mrb[0].mxu0
        %v8021 = vadd.f32 %v7968, %v8020
        %8022 = vmatprep.mubr.bf16.mxu0 %v1337
        %8023 = vmatmul.mubr.bf16.gmra.mrb[0].mxu0 %v1336
        %v8024 = vpop.f32.mrb[0].mxu0
        %v8025 = vadd.f32 %v7972, %v8024
        %v8026 = vpop.f32.mrb[0].mxu0
        %v8027 = vadd.f32 %v7974, %v8026
        %v8028 = vpop.f32.mrb[0].mxu0
        %v8029 = vadd.f32 %v7976, %v8028
        %v8030 = vpop.f32.mrb[0].mxu0
        %v8031 = vadd.f32 %v7978, %v8030
        %8032 = vdwg.mxu0
        %8033 = vmatprep.subr.bf16.mxu0 %v5095
        %8034 = vmatpush1.bf16.msra.mxu0 %v5094
        %8035 = vmatprep.subr.bf16.mxu0 %v5103
        %8036 = vmatpush1.bf16.msra.mxu0 %v5102
        %8037 = vmatprep.subr.bf16.mxu0 %v5111
        %8038 = vmatpush1.bf16.msra.mxu0 %v5110
        %8039 = vmatprep.subr.bf16.mxu0 %v5119
        %8040 = vmatpush1.bf16.msra.mxu0 %v5118
        %8041 = vmatprep.subr.bf16.mxu0 %v5127
        %8042 = vmatpush1.bf16.msra.mxu0 %v5126
        %8043 = vmatprep.subr.bf16.mxu0 %v5135
        %8044 = vmatpush1.bf16.msra.mxu0 %v5134
        %8045 = vmatprep.subr.bf16.mxu0 %v5143
        %8046 = vmatpush1.bf16.msra.mxu0 %v5142
        %8047 = vmatprep.subr.bf16.mxu0 %v5151
        %8048 = vmatpush1.bf16.msra.mxu0 %v5150
        %8049 = vmatprep.subr.bf16.mxu0 %v5159
        %8050 = vmatpush1.bf16.msra.mxu0 %v5158
        %8051 = vmatprep.subr.bf16.mxu0 %v5167
        %8052 = vmatpush1.bf16.msra.mxu0 %v5166
        %8053 = vmatprep.subr.bf16.mxu0 %v5175
        %8054 = vmatpush1.bf16.msra.mxu0 %v5174
        %8055 = vmatprep.subr.bf16.mxu0 %v5183
        %8056 = vmatpush1.bf16.msra.mxu0 %v5182
        %8057 = vmatprep.subr.bf16.mxu0 %v5191
        %8058 = vmatpush1.bf16.msra.mxu0 %v5190
        %8059 = vmatprep.subr.bf16.mxu0 %v5199
        %8060 = vmatpush1.bf16.msra.mxu0 %v5198
        %8061 = vmatprep.subr.bf16.mxu0 %v5207
        %8062 = vmatpush1.bf16.msra.mxu0 %v5206
        %8063 = vmatprep.subr.bf16.mxu0 %v5215
        %8064 = vmatpush1.bf16.msra.mxu0 %v5214
        %8065 = vmatprep.mubr.bf16.mxu0 %v1323
        %8066 = vmatmul.mubr.bf16.gmra.mrb[0].mxu0 %v1322
        %v8067 = vpop.f32.mrb[0].mxu0
        %v8068 = vadd.f32 %v8015, %v8067
        %v8069 = vpop.f32.mrb[0].mxu0
        %v8070 = vadd.f32 %v8017, %v8069
        %v8071 = vpop.f32.mrb[0].mxu0
        %v8072 = vadd.f32 %v8019, %v8071
        %v8073 = vpop.f32.mrb[0].mxu0
        %v8074 = vadd.f32 %v8021, %v8073
        %8075 = vmatprep.mubr.bf16.mxu0 %v1339
        %8076 = vmatmul.mubr.bf16.gmra.mrb[0].mxu0 %v1338
        %v8077 = vpop.f32.mrb[0].mxu0
        %v8078 = vadd.f32 %v8025, %v8077
        %v8079 = vpop.f32.mrb[0].mxu0
        %v8080 = vadd.f32 %v8027, %v8079
        %v8081 = vpop.f32.mrb[0].mxu0
        %v8082 = vadd.f32 %v8029, %v8081
        %v8083 = vpop.f32.mrb[0].mxu0
        %v8084 = vadd.f32 %v8031, %v8083
        %8085 = vdwg.mxu0
        %8086 = vmatprep.subr.bf16.mxu0 %v5223
        %8087 = vmatpush1.bf16.msra.mxu0 %v5222
        %8088 = vmatprep.subr.bf16.mxu0 %v5231
        %8089 = vmatpush1.bf16.msra.mxu0 %v5230
        %8090 = vmatprep.subr.bf16.mxu0 %v5239
        %8091 = vmatpush1.bf16.msra.mxu0 %v5238
        %8092 = vmatprep.subr.bf16.mxu0 %v5247
        %8093 = vmatpush1.bf16.msra.mxu0 %v5246
        %8094 = vmatprep.subr.bf16.mxu0 %v5255
        %8095 = vmatpush1.bf16.msra.mxu0 %v5254
        %8096 = vmatprep.subr.bf16.mxu0 %v5263
        %8097 = vmatpush1.bf16.msra.mxu0 %v5262
        %8098 = vmatprep.subr.bf16.mxu0 %v5271
        %8099 = vmatpush1.bf16.msra.mxu0 %v5270
        %8100 = vmatprep.subr.bf16.mxu0 %v5279
        %8101 = vmatpush1.bf16.msra.mxu0 %v5278
        %8102 = vmatprep.subr.bf16.mxu0 %v5287
        %8103 = vmatpush1.bf16.msra.mxu0 %v5286
        %8104 = vmatprep.subr.bf16.mxu0 %v5295
        %8105 = vmatpush1.bf16.msra.mxu0 %v5294
        %8106 = vmatprep.subr.bf16.mxu0 %v5303
        %8107 = vmatpush1.bf16.msra.mxu0 %v5302
        %8108 = vmatprep.subr.bf16.mxu0 %v5311
        %8109 = vmatpush1.bf16.msra.mxu0 %v5310
        %8110 = vmatprep.subr.bf16.mxu0 %v5319
        %8111 = vmatpush1.bf16.msra.mxu0 %v5318
        %8112 = vmatprep.subr.bf16.mxu0 %v5327
        %8113 = vmatpush1.bf16.msra.mxu0 %v5326
        %8114 = vmatprep.subr.bf16.mxu0 %v5335
        %8115 = vmatpush1.bf16.msra.mxu0 %v5334
        %8116 = vmatprep.subr.bf16.mxu0 %v5343
        %8117 = vmatpush1.bf16.msra.mxu0 %v5342
        %8118 = vmatprep.mubr.bf16.mxu0 %v1325
        %8119 = vmatmul.mubr.bf16.gmra.mrb[0].mxu0 %v1324
        %v8120 = vpop.f32.mrb[0].mxu0
        %v8121 = vadd.f32 %v8068, %v8120
        %v8122 = vpop.f32.mrb[0].mxu0
        %v8123 = vadd.f32 %v8070, %v8122
        %v8124 = vpop.f32.mrb[0].mxu0
        %v8125 = vadd.f32 %v8072, %v8124
        %v8126 = vpop.f32.mrb[0].mxu0
        %v8127 = vadd.f32 %v8074, %v8126
        %8128 = vmatprep.mubr.bf16.mxu0 %v1341
        %8129 = vmatmul.mubr.bf16.gmra.mrb[0].mxu0 %v1340
        %v8130 = vpop.f32.mrb[0].mxu0
        %v8131 = vadd.f32 %v8078, %v8130
        %v8132 = vpop.f32.mrb[0].mxu0
        %v8133 = vadd.f32 %v8080, %v8132
        %v8134 = vpop.f32.mrb[0].mxu0
        %v8135 = vadd.f32 %v8082, %v8134
        %v8136 = vpop.f32.mrb[0].mxu0
        %v8137 = vadd.f32 %v8084, %v8136
        %8138 = vdwg.mxu0
        %8139 = vmatprep.subr.bf16.mxu0 %v5351
        %8140 = vmatpush1.bf16.msra.mxu0 %v5350
        %8141 = vmatprep.subr.bf16.mxu0 %v5359
        %8142 = vmatpush1.bf16.msra.mxu0 %v5358
        %8143 = vmatprep.subr.bf16.mxu0 %v5367
        %8144 = vmatpush1.bf16.msra.mxu0 %v5366
        %8145 = vmatprep.subr.bf16.mxu0 %v5375
        %8146 = vmatpush1.bf16.msra.mxu0 %v5374
        %8147 = vmatprep.subr.bf16.mxu0 %v5383
        %8148 = vmatpush1.bf16.msra.mxu0 %v5382
        %8149 = vmatprep.subr.bf16.mxu0 %v5391
        %8150 = vmatpush1.bf16.msra.mxu0 %v5390
        %8151 = vmatprep.subr.bf16.mxu0 %v5399
        %8152 = vmatpush1.bf16.msra.mxu0 %v5398
        %8153 = vmatprep.subr.bf16.mxu0 %v5407
        %8154 = vmatpush1.bf16.msra.mxu0 %v5406
        %8155 = vmatprep.subr.bf16.mxu0 %v5415
        %8156 = vmatpush1.bf16.msra.mxu0 %v5414
        %8157 = vmatprep.subr.bf16.mxu0 %v5423
        %8158 = vmatpush1.bf16.msra.mxu0 %v5422
        %8159 = vmatprep.subr.bf16.mxu0 %v5431
        %8160 = vmatpush1.bf16.msra.mxu0 %v5430
        %8161 = vmatprep.subr.bf16.mxu0 %v5439
        %8162 = vmatpush1.bf16.msra.mxu0 %v5438
        %8163 = vmatprep.subr.bf16.mxu0 %v5447
        %8164 = vmatpush1.bf16.msra.mxu0 %v5446
        %8165 = vmatprep.subr.bf16.mxu0 %v5455
        %8166 = vmatpush1.bf16.msra.mxu0 %v5454
        %8167 = vmatprep.subr.bf16.mxu0 %v5463
        %8168 = vmatpush1.bf16.msra.mxu0 %v5462
        %8169 = vmatprep.subr.bf16.mxu0 %v5471
        %8170 = vmatpush1.bf16.msra.mxu0 %v5470
        %8171 = vmatprep.mubr.bf16.mxu0 %v1327
        %8172 = vmatmul.mubr.bf16.gmra.mrb[0].mxu0 %v1326
        %v8173 = vpop.f32.mrb[0].mxu0
        %v8174 = vadd.f32 %v8121, %v8173
        %v8175 = vpop.f32.mrb[0].mxu0
        %v8176 = vadd.f32 %v8123, %v8175
        %v8177 = vpop.f32.mrb[0].mxu0
        %v8178 = vadd.f32 %v8125, %v8177
        %v8179 = vpop.f32.mrb[0].mxu0
        %v8180 = vadd.f32 %v8127, %v8179
        %8181 = vmatprep.mubr.bf16.mxu0 %v1343
        %8182 = vmatmul.mubr.bf16.gmra.mrb[0].mxu0 %v1342
        %v8183 = vpop.f32.mrb[0].mxu0
        %v8184 = vadd.f32 %v8131, %v8183
        %v8185 = vpop.f32.mrb[0].mxu0
        %v8186 = vadd.f32 %v8133, %v8185
        %v8187 = vpop.f32.mrb[0].mxu0
        %v8188 = vadd.f32 %v8135, %v8187
        %v8189 = vpop.f32.mrb[0].mxu0
        %v8190 = vadd.f32 %v8137, %v8189
        %8191 = vdwg.mxu0
        %8192 = vst [vmem:[%s157] sm:$0xff] %v6902
        %8193 = vst [vmem:[%s157 + $0x8] sm:$0xff] %v6904
        %8194 = vst [vmem:[%s157 + $0x10] sm:$0xff] %v7326
        %8195 = vst [vmem:[%s157 + $0x18] sm:$0xff] %v7328
        %8196 = vst [vmem:[%s157 + $0x20] sm:$0xff] %v7750
        %8197 = vst [vmem:[%s157 + $0x28] sm:$0xff] %v7752
        %8198 = vst [vmem:[%s157 + $0x30] sm:$0xff] %v8174
        %8199 = vst [vmem:[%s157 + $0x38] sm:$0xff] %v8176
        %8200 = vst [vmem:[%s157 + $0x40] sm:$0xff] %v6906
        %8201 = vst [vmem:[%s157 + $0x48] sm:$0xff] %v6908
        %8202 = vst [vmem:[%s157 + $0x50] sm:$0xff] %v7330
        %8203 = vst [vmem:[%s157 + $0x58] sm:$0xff] %v7332
        %8204 = vst [vmem:[%s157 + $0x60] sm:$0xff] %v7754
        %8205 = vst [vmem:[%s157 + $0x68] sm:$0xff] %v7756
        %8206 = vst [vmem:[%s157 + $0x70] sm:$0xff] %v8178
        %8207 = vst [vmem:[%s157 + $0x78] sm:$0xff] %v8180
        %8208 = vst [vmem:[%s157 + $0x80] sm:$0xff] %v6912
        %8209 = vst [vmem:[%s157 + $0x88] sm:$0xff] %v6914
        %8210 = vst [vmem:[%s157 + $0x90] sm:$0xff] %v7336
        %8211 = vst [vmem:[%s157 + $0x98] sm:$0xff] %v7338
        %8212 = vst [vmem:[%s157 + $0xa0] sm:$0xff] %v7760
        %8213 = vst [vmem:[%s157 + $0xa8] sm:$0xff] %v7762
        %8214 = vst [vmem:[%s157 + $0xb0] sm:$0xff] %v8184
        %8215 = vst [vmem:[%s157 + $0xb8] sm:$0xff] %v8186
        %8216 = vst [vmem:[%s157 + $0xc0] sm:$0xff] %v6916
        %8217 = vst [vmem:[%s157 + $0xc8] sm:$0xff] %v6918
        %8218 = vst [vmem:[%s157 + $0xd0] sm:$0xff] %v7340
        %8219 = vst [vmem:[%s157 + $0xd8] sm:$0xff] %v7342
        %8220 = vst [vmem:[%s157 + $0xe0] sm:$0xff] %v7764
        %8221 = vst [vmem:[%s157 + $0xe8] sm:$0xff] %v7766
        %8222 = vst [vmem:[%s157 + $0xf0] sm:$0xff] %v8188
        %8223 = vst [vmem:[%s157 + $0xf8] sm:$0xff] %v8190
        %s8224 = sand.u32 %s71, 1
        %s8225 = sand.u32 %s71, 1
        %s8226 = smul.addr %s8225, 256
        %s8227 = scalar_lea.vmem [#allocation4], %s8226
        // Predicated region
        $region33: #{adaptor_forward.1} parent=27 // pred_check
          %p8228 = pneg %p81
        $region34: #{adaptor_forward.1} parent=27 // pred_check_branch
          %8230 = sbr.rel (%p8228) target = $region36
        $region35: #{adaptor_forward.1} parent=27 // pred_region
          %s8231 = smul.u32 8, %s16
          %s8232 = smul.addr %s8231, 8
          %s8233 = scalar_lea.vmem %s2, %s8232
          // Predicated region
          $region37: #{adaptor_forward.1} parent=35 // pred_check
            _
          $region38: #{adaptor_forward.1} parent=35 // pred_check_branch
            %8235 = sbr.rel (0) target = $region40
          $region39: #{adaptor_forward.1} parent=35 // pred_region
            // Predicated region
            $region41: #{adaptor_forward.1} parent=39 // pred_check
              _
            $region42: #{adaptor_forward.1} parent=39 // pred_check_branch
              %8237 = sbr.rel (0) target = $region44
            $region43: #{adaptor_forward.1} parent=39 // pred_region
              loop: start=0, step=1, limit=1
              $region45: #{adaptor_forward.1} parent=43 // loop_pre_header
                _
              $region46: #{adaptor_forward.1} parent=43 // loop_header
                %s8239 = sphi 0, %s8243
                %p8240 = scmp.ge.s32.totalorder %s8239, 1
                %s8244 = sphi %s8227, %s8227
                %s8245 = sphi %s8233, %s8233
              $region47: #{adaptor_forward.1} parent=43 // loop_header_branch
                %8242 = sbr.rel (%p8240) target = $region51
              $region48: #{adaptor_forward.1} parent=43 // loop_body
                %v8246 = vld [vmem:[%s8244] sm:$0xff]
                %8247 = vst [vmem:[%s8245] sm:$0xff] %v8246
                %v8248 = vld [vmem:[%s8244 + $0x8] sm:$0xff]
                %8249 = vst [vmem:[%s8245 + $0x8] sm:$0xff] %v8248
                %v8250 = vld [vmem:[%s8244 + $0x10] sm:$0xff]
                %8251 = vst [vmem:[%s8245 + $0x10] sm:$0xff] %v8250
                %v8252 = vld [vmem:[%s8244 + $0x18] sm:$0xff]
                %8253 = vst [vmem:[%s8245 + $0x18] sm:$0xff] %v8252
                %v8254 = vld [vmem:[%s8244 + $0x20] sm:$0xff]
                %8255 = vst [vmem:[%s8245 + $0x20] sm:$0xff] %v8254
                %v8256 = vld [vmem:[%s8244 + $0x28] sm:$0xff]
                %8257 = vst [vmem:[%s8245 + $0x28] sm:$0xff] %v8256
                %v8258 = vld [vmem:[%s8244 + $0x30] sm:$0xff]
                %8259 = vst [vmem:[%s8245 + $0x30] sm:$0xff] %v8258
                %v8260 = vld [vmem:[%s8244 + $0x38] sm:$0xff]
                %8261 = vst [vmem:[%s8245 + $0x38] sm:$0xff] %v8260
                %v8262 = vld [vmem:[%s8244 + $0x40] sm:$0xff]
                %8263 = vst [vmem:[%s8245 + $0x80] sm:$0xff] %v8262
                %v8264 = vld [vmem:[%s8244 + $0x48] sm:$0xff]
                %8265 = vst [vmem:[%s8245 + $0x88] sm:$0xff] %v8264
                %v8266 = vld [vmem:[%s8244 + $0x50] sm:$0xff]
                %8267 = vst [vmem:[%s8245 + $0x90] sm:$0xff] %v8266
                %v8268 = vld [vmem:[%s8244 + $0x58] sm:$0xff]
                %8269 = vst [vmem:[%s8245 + $0x98] sm:$0xff] %v8268
                %v8270 = vld [vmem:[%s8244 + $0x60] sm:$0xff]
                %8271 = vst [vmem:[%s8245 + $0xa0] sm:$0xff] %v8270
                %v8272 = vld [vmem:[%s8244 + $0x68] sm:$0xff]
                %8273 = vst [vmem:[%s8245 + $0xa8] sm:$0xff] %v8272
                %v8274 = vld [vmem:[%s8244 + $0x70] sm:$0xff]
                %8275 = vst [vmem:[%s8245 + $0xb0] sm:$0xff] %v8274
                %v8276 = vld [vmem:[%s8244 + $0x78] sm:$0xff]
                %8277 = vst [vmem:[%s8245 + $0xb8] sm:$0xff] %v8276
                %v8278 = vld [vmem:[%s8244 + $0x80] sm:$0xff]
                %8279 = vst [vmem:[%s8245 + $0x100] sm:$0xff] %v8278
                %v8280 = vld [vmem:[%s8244 + $0x88] sm:$0xff]
                %8281 = vst [vmem:[%s8245 + $0x108] sm:$0xff] %v8280
                %v8282 = vld [vmem:[%s8244 + $0x90] sm:$0xff]
                %8283 = vst [vmem:[%s8245 + $0x110] sm:$0xff] %v8282
                %v8284 = vld [vmem:[%s8244 + $0x98] sm:$0xff]
                %8285 = vst [vmem:[%s8245 + $0x118] sm:$0xff] %v8284
                %v8286 = vld [vmem:[%s8244 + $0xa0] sm:$0xff]
                %8287 = vst [vmem:[%s8245 + $0x120] sm:$0xff] %v8286
                %v8288 = vld [vmem:[%s8244 + $0xa8] sm:$0xff]
                %8289 = vst [vmem:[%s8245 + $0x128] sm:$0xff] %v8288
                %v8290 = vld [vmem:[%s8244 + $0xb0] sm:$0xff]
                %8291 = vst [vmem:[%s8245 + $0x130] sm:$0xff] %v8290
                %v8292 = vld [vmem:[%s8244 + $0xb8] sm:$0xff]
                %8293 = vst [vmem:[%s8245 + $0x138] sm:$0xff] %v8292
                %v8294 = vld [vmem:[%s8244 + $0xc0] sm:$0xff]
                %8295 = vst [vmem:[%s8245 + $0x180] sm:$0xff] %v8294
                %v8296 = vld [vmem:[%s8244 + $0xc8] sm:$0xff]
                %8297 = vst [vmem:[%s8245 + $0x188] sm:$0xff] %v8296
                %v8298 = vld [vmem:[%s8244 + $0xd0] sm:$0xff]
                %8299 = vst [vmem:[%s8245 + $0x190] sm:$0xff] %v8298
                %v8300 = vld [vmem:[%s8244 + $0xd8] sm:$0xff]
                %8301 = vst [vmem:[%s8245 + $0x198] sm:$0xff] %v8300
                %v8302 = vld [vmem:[%s8244 + $0xe0] sm:$0xff]
                %8303 = vst [vmem:[%s8245 + $0x1a0] sm:$0xff] %v8302
                %v8304 = vld [vmem:[%s8244 + $0xe8] sm:$0xff]
                %8305 = vst [vmem:[%s8245 + $0x1a8] sm:$0xff] %v8304
                %v8306 = vld [vmem:[%s8244 + $0xf0] sm:$0xff]
                %8307 = vst [vmem:[%s8245 + $0x1b0] sm:$0xff] %v8306
                %v8308 = vld [vmem:[%s8244 + $0xf8] sm:$0xff]
                %8309 = vst [vmem:[%s8245 + $0x1b8] sm:$0xff] %v8308
              $region49: #{adaptor_forward.1} parent=43 // loop_footer
                %s8243 = sadd.s32 1, %s8239
              $region50: #{adaptor_forward.1} parent=43 // loop_footer_branch
                %8238 = sbr.rel target = $region46
              $region51: #{adaptor_forward.1} parent=43 // loop_exit
                _
            $region44: #{adaptor_forward.1} parent=39 // pred_fallthru
              _
            // Predicated region
            $region52: #{adaptor_forward.1} parent=39 // pred_check
              _
            $region53: #{adaptor_forward.1} parent=39 // pred_check_branch
              %8311 = sbr.rel target = $region55
            $region54: #{adaptor_forward.1} parent=39 // pred_region
              _
            $region55: #{adaptor_forward.1} parent=39 // pred_fallthru
              _
          $region40: #{adaptor_forward.1} parent=35 // pred_fallthru
            _
          %8312 = vnop
        $region36: #{adaptor_forward.1} parent=27 // pred_fallthru
          _
      $region28: #{adaptor_forward.1} parent=5 // pred_fallthru
        _
      %p8313 = scmp.le.s32.totalorder 2, %s11
      // Predicated region
      $region56: #{adaptor_forward.1} parent=5 // pred_check
        %p8314 = pneg %p8313
      $region57: #{adaptor_forward.1} parent=5 // pred_check_branch
        %8316 = sbr.rel (%p8314) target = $region59
      $region58: #{adaptor_forward.1} parent=5 // pred_region
        %s8317 = ssub.s32 %s11, 2
        // Predicated region
        $region60: #{adaptor_forward.1} parent=58 // pred_check
          %p8318 = pneg %p87
        $region61: #{adaptor_forward.1} parent=58 // pred_check_branch
          %8320 = sbr.rel (%p8318) target = $region63
        $region62: #{adaptor_forward.1} parent=58 // pred_region
          %s8321 = sand.u32 %s72, 1
          %s8322 = sand.u32 %s72, 1
          %s8323 = smul.addr %s8322, 256
          %s8324 = scalar_lea.vmem [#allocation4], %s8323
        $region63: #{adaptor_forward.1} parent=58 // pred_fallthru
          _
      $region59: #{adaptor_forward.1} parent=5 // pred_fallthru
        _
    $region6: #{adaptor_forward.1} parent=1 // loop_footer
      %s15 = sadd.s32 1, %s11
    $region7: #{adaptor_forward.1} parent=1 // loop_footer_branch
      %10 = sbr.rel target = $region3
    $region8: #{adaptor_forward.1} parent=1 // loop_exit
      _
    %8325 = vsyncpa [#allocation3], 1
    %s8326 = scalar_lea.sflag [#allocation3], 1
    %8327 = vsyncpa %s8326, 1

</llo_original>
